<compile_context>
chip_gen: v7x
topology: tpu7x:2x2x1
jax: 0.10.0
libtpu: 0.0.40
codegen_flags: <defaults>
</compile_context>

<pallas_src>
import jax
import jax.numpy as jnp
from jax.experimental import pallas as pl
from jax.experimental.pallas import tpu as pltpu

# ---- constants from the PyTorch module --------------------------------------
BLOCK_SIZE = 256                  # max sequence length (causal mask buffer size)
N_EMBD = 384
NUM_HEADS = 6
HEAD_SIZE = N_EMBD // NUM_HEADS   # 64
PAIR_W = 2 * HEAD_SIZE            # 128 (lane-aligned head pair)
N_PAIRS = NUM_HEADS // 2          # 3


# ---- fused kernel: QKV + all heads + output projection -----------------------
def _mha_fused_kernel(x_ref, wqkv_ref, wproj_ref, bproj_ref, o_ref, ctx_ref):
    # x_ref    : (1, T, C)   bf16
    # wqkv_ref : (C, 3*C)    bf16, pair-major: [Q(2p,2p+1) | K(2p,2p+1) | V(2p,2p+1)] * 3
    #            (softmax scale already folded into the Q columns)
    # wproj_ref: (C, C)      bf16
    # bproj_ref: (1, C)      f32
    # o_ref    : (1, T, C)   f32
    # ctx_ref  : (q_tile, C) bf16 VMEM scratch (head-concat buffer, 128-aligned writes)
    x = x_ref[0]                                   # (T, C) bf16
    T = x.shape[0]
    q_tile = min(128, T)

    # One lane-dense (T,384)x(384,1152) MXU matmul for Q,K,V of every head,
    # then a single f32 -> bf16 cast of the whole result.
    qkv = jnp.dot(x, wqkv_ref[...], preferred_element_type=jnp.float32)
    qkv = qkv.astype(jnp.bfloat16)                 # (T, 3C) bf16, persistent

    wproj = wproj_ref[...]                         # (C, C) bf16, resident
    bias = bproj_ref[...]                          # (1, C) f32

    n_q_tiles = (T + q_tile - 1) // q_tile         # static Python loop bounds
    for t in range(n_q_tiles):
        q_lo = t * q_tile
        tq = min(q_tile, T - q_lo)
        kv_len = q_lo + tq                         # causal: keys/values rows [0, kv_len)

        # Causal mask for this q tile, shared by all 6 heads.
        row = jax.lax.broadcasted_iota(jnp.int32, (tq, kv_len), 0) + q_lo
        col = jax.lax.broadcasted_iota(jnp.int32, (tq, kv_len), 1)
        causal = col <= row

        for p in range(N_PAIRS):                   # 128-lane-aligned head pairs
            base = p * 3 * PAIR_W
            q_pair = qkv[q_lo:q_lo + tq, base:base + PAIR_W]              # (tq, 128)
            k_pair = qkv[0:kv_len, base + PAIR_W:base + 2 * PAIR_W]       # (kv, 128)
            v_pair = qkv[0:kv_len, base + 2 * PAIR_W:base + 3 * PAIR_W]   # (kv, 128)

            parts = []
            for hh in range(2):                    # two K=64 score matmuls per pair
                lo, hi = hh * HEAD_SIZE, (hh + 1) * HEAD_SIZE
                # q @ k.T without an explicit transpose; scale pre-folded into Wq.
                s = jax.lax.dot_general(
                    q_pair[:, lo:hi], k_pair[:, lo:hi],
                    (((1,), (1,)), ((), ())),
                    preferred_element_type=jnp.float32)                   # (tq, kv)
                s = jnp.where(causal, s, -jnp.inf)
                # numerically-stable softmax; reciprocal on the EUP slot
                s = s - jnp.max(s, axis=-1, keepdims=True)
                pr = jnp.exp(s)
                pr = pr * pl.reciprocal(jnp.sum(pr, axis=-1, keepdims=True),
                                        approx=True)
                # TODO(synk): attention-weight dropout (training mode) omitted;
                #             nn.Dropout is identity in eval mode.
                parts.append(jnp.dot(pr.astype(jnp.bfloat16), v_pair[:, lo:hi],
                                     preferred_element_type=jnp.float32))  # (tq, 64)

            # One lane-dense (tq, 128) chunk per pair, stored at a 128-aligned
            # column offset in the scratch (replaces the 6-way concatenate).
            ctx_ref[0:tq, p * PAIR_W:(p + 1) * PAIR_W] = (
                jnp.concatenate(parts, axis=-1).astype(jnp.bfloat16))

        # Output projection (K = 384) straight from the scratch, plus bias.
        out = jnp.dot(ctx_ref[0:tq, :], wproj,
                      preferred_element_type=jnp.float32) + bias           # (tq, C)
        o_ref[0, q_lo:q_lo + tq, :] = out
        # TODO(synk): final nn.Dropout (training mode) omitted; eval semantics.


# ---- one-time parameter preparation (hoisted out of the forward call) --------
def prepare_mha_params(wq, wk, wv, w_proj, b_proj):
    """wq/wk/wv: (H, C, hs) per-head Linear weights, already transposed so that
    q = x @ wq[h]. Returns (wqkv_bf16, wproj_bf16, bproj_f32) with the pair-major
    column layout the kernel expects and the softmax scale folded into Q."""
    H, C, hs = wq.shape
    assert C == N_EMBD and H == NUM_HEADS and hs == HEAD_SIZE
    # NOTE: the PyTorch code scales scores by C ** -0.5 with C = n_embd (NOT
    # head_size) -- intentionally reproduced; do not "fix" to hs ** -0.5.
    scale = jnp.float32(C) ** -0.5

    def fuse_pair(w, p):                       # heads (2p, 2p+1) -> (C, 128)
        return jnp.concatenate([w[2 * p], w[2 * p + 1]], axis=1)

    blocks = []
    for p in range(H // 2):
        blocks.append(fuse_pair(wq, p) * scale)    # fold softmax scale into Q
        blocks.append(fuse_pair(wk, p))
        blocks.append(fuse_pair(wv, p))
    wqkv = jnp.concatenate(blocks, axis=1)         # (C, 3C), pair-major layout

    return (wqkv.astype(jnp.bfloat16),
            w_proj.astype(jnp.bfloat16),
            b_proj.astype(jnp.float32))


# ---- forward wrapper ----------------------------------------------------------
def multi_head_attention(x, wqkv_bf, wproj_bf, bproj_f32):
    """x: (B, T, C) f32; remaining args from prepare_mha_params()."""
    B, T, C = x.shape
    assert C == N_EMBD and T <= BLOCK_SIZE
    q_tile = min(128, T)

    x_bf = x.astype(jnp.bfloat16)                  # fused into the jitted call

    return pl.pallas_call(
        _mha_fused_kernel,
        out_shape=jax.ShapeDtypeStruct((B, T, C), jnp.float32),
        grid_spec=pltpu.PrefetchScalarGridSpec(
            num_scalar_prefetch=0,
            grid=(B,),
            in_specs=[
                pl.BlockSpec((1, T, C), lambda b: (b, 0, 0)),      # x (per batch)
                pl.BlockSpec((C, 3 * C), lambda b: (0, 0)),        # Wqkv (resident)
                pl.BlockSpec((C, C), lambda b: (0, 0)),            # Wproj (resident)
                pl.BlockSpec((1, C), lambda b: (0, 0)),            # bias (resident)
            ],
            out_specs=pl.BlockSpec((1, T, C), lambda b: (b, 0, 0)),
            scratch_shapes=[pltpu.VMEM((q_tile, C), jnp.bfloat16)],
        ),
        compiler_params=pltpu.CompilerParams(
            dimension_semantics=("parallel",)),
    )(x_bf, wqkv_bf, wproj_bf, bproj_f32)


multi_head_attention_jit = jax.jit(multi_head_attention)


# ---- pure-JAX f32 reference (mirrors the PyTorch forward exactly) -------------
def _reference(x, wq, wk, wv, w_proj, b_proj):
    B, T, C = x.shape
    outs = []
    for h in range(wq.shape[0]):
        q = x @ wq[h]
        k = x @ wk[h]
        v = x @ wv[h]
        wei = q @ jnp.swapaxes(k, -2, -1) * (C ** -0.5)
        mask = jnp.tril(jnp.ones((T, T), jnp.float32))
        wei = jnp.where(mask == 0, -jnp.inf, wei)
        wei = jax.nn.softmax(wei, axis=-1)
        outs.append(wei @ v)
    cat = jnp.concatenate(outs, axis=-1)
    return cat @ w_proj + b_proj


if __name__ == "__main__":
    key = jax.random.PRNGKey(0)
    B, T = 2, 128                          # T <= block_size (256)
    C, H, hs = N_EMBD, NUM_HEADS, HEAD_SIZE

    kx, kq, kk, kv, kw, kb = jax.random.split(key, 6)
    bound = 1.0 / (C ** 0.5)               # nn.Linear default uniform bound
    x      = jax.random.normal(kx, (B, T, C), jnp.float32)
    wq     = jax.random.uniform(kq, (H, C, hs), jnp.float32, -bound, bound)
    wk     = jax.random.uniform(kk, (H, C, hs), jnp.float32, -bound, bound)
    wv     = jax.random.uniform(kv, (H, C, hs), jnp.float32, -bound, bound)
    w_proj = jax.random.uniform(kw, (C, C), jnp.float32, -bound, bound)
    b_proj = jax.random.uniform(kb, (1, C), jnp.float32, -bound, bound)

    # One-time parameter preparation (fusion / layout / bf16 casts hoisted here).
    params = prepare_mha_params(wq, wk, wv, w_proj, b_proj)

    out = multi_head_attention_jit(x, *params)
    out = jax.block_until_ready(out)

    ref = _reference(x, wq, wk, wv, w_proj, b_proj)
    assert out.shape == (B, T, C)
    # bf16 MXU operands (f32 accumulate) + approx reciprocal -> loosened tolerance.
    assert jnp.allclose(out, ref, atol=3e-2, rtol=2e-2), "mismatch vs reference"

    print("KERNEL_OK")
</pallas_src>

<mosaic_0001>
module attributes {stable_mosaic.version = 11 : i64} {
  func.func @_mha_fused_kernel(%arg0: i32, %arg1: memref<1x128x384xbf16, #tpu.memory_space<vmem>>, %arg2: memref<384x1152xbf16, #tpu.memory_space<vmem>>, %arg3: memref<384x384xbf16, #tpu.memory_space<vmem>>, %arg4: memref<1x384xf32, #tpu.memory_space<vmem>>, %arg5: memref<1x128x384xf32, #tpu.memory_space<vmem>>, %arg6: memref<128x384xbf16, #tpu.memory_space<vmem>>) attributes {dimension_semantics = [#tpu.dimension_semantics<parallel>], iteration_bounds = array<i64: 2>, scalar_prefetch = 0 : i64, scratch_operands = 1 : i64, tpu.core_type = #tpu.core_type<tc>, window_params = [{transform_indices = @transform_0, window_bounds = array<i64: 1, 128, 384>}, {pipeline_mode = #tpu.pipeline_mode<synchronous>, transform_indices = @transform_1, window_bounds = array<i64: 384, 1152>}, {pipeline_mode = #tpu.pipeline_mode<synchronous>, transform_indices = @transform_2, window_bounds = array<i64: 384, 384>}, {pipeline_mode = #tpu.pipeline_mode<synchronous>, transform_indices = @transform_3, window_bounds = array<i64: 1, 384>}, {transform_indices = @transform_4, window_bounds = array<i64: 1, 128, 384>}]} {
    %c0 = arith.constant 0 : index
    %c0_0 = arith.constant 0 : index
    %c0_1 = arith.constant 0 : index
    %0 = vector.load %arg1[%c0, %c0_0, %c0_1] : memref<1x128x384xbf16, #tpu.memory_space<vmem>>, vector<1x128x384xbf16>
    %1 = vector.shape_cast %0 : vector<1x128x384xbf16> to vector<128x384xbf16>
    %c0_2 = arith.constant 0 : index
    %c0_3 = arith.constant 0 : index
    %2 = vector.load %arg2[%c0_2, %c0_3] : memref<384x1152xbf16, #tpu.memory_space<vmem>>, vector<384x1152xbf16>
    %cst = arith.constant dense<0.000000e+00> : vector<128x1152xf32>
    %3 = tpu.matmul %1, %2, %cst {dimension_numbers = #tpu.dot_dimension_numbers<[1], [0], [0], [1], [0, 0, 1, 1], [], []>} : vector<128x384xbf16>, vector<384x1152xbf16>, vector<128x1152xf32> -> vector<128x1152xf32>
    %4 = arith.truncf %3 : vector<128x1152xf32> to vector<128x1152xbf16>
    %c0_4 = arith.constant 0 : index
    %c0_5 = arith.constant 0 : index
    %5 = vector.load %arg3[%c0_4, %c0_5] : memref<384x384xbf16, #tpu.memory_space<vmem>>, vector<384x384xbf16>
    %c0_6 = arith.constant 0 : index
    %c0_7 = arith.constant 0 : index
    %6 = vector.load %arg4[%c0_6, %c0_7] : memref<1x384xf32, #tpu.memory_space<vmem>>, vector<1x384xf32>
    %7 = tpu.iota {dimensions = array<i32: 0>} : vector<128x128xi32>
    %c0_i32 = arith.constant 0 : i32
    %8 = vector.broadcast %c0_i32 : i32 to vector<128x128xi32>
    %9 = arith.addi %7, %8 : vector<128x128xi32>
    %10 = tpu.iota {dimensions = array<i32: 1>} : vector<128x128xi32>
    %11 = arith.cmpi sle, %10, %9 : vector<128x128xi32>
    %12 = vector.extract_strided_slice %4 {offsets = [0, 0], sizes = [128, 128], strides = [1, 1]} : vector<128x1152xbf16> to vector<128x128xbf16>
    %13 = vector.extract_strided_slice %4 {offsets = [0, 128], sizes = [128, 128], strides = [1, 1]} : vector<128x1152xbf16> to vector<128x128xbf16>
    %14 = vector.extract_strided_slice %4 {offsets = [0, 256], sizes = [128, 128], strides = [1, 1]} : vector<128x1152xbf16> to vector<128x128xbf16>
    %15 = vector.extract_strided_slice %12 {offsets = [0, 0], sizes = [128, 64], strides = [1, 1]} : vector<128x128xbf16> to vector<128x64xbf16>
    %16 = vector.extract_strided_slice %13 {offsets = [0, 0], sizes = [128, 64], strides = [1, 1]} : vector<128x128xbf16> to vector<128x64xbf16>
    %cst_8 = arith.constant dense<0.000000e+00> : vector<128x128xf32>
    %17 = tpu.matmul %15, %16, %cst_8 {dimension_numbers = #tpu.dot_dimension_numbers<[1], [1], [0], [0], [0, 0, 1, 0], [], []>} : vector<128x64xbf16>, vector<128x64xbf16>, vector<128x128xf32> -> vector<128x128xf32>
    %cst_9 = arith.constant 0xFF800000 : f32
    %18 = vector.broadcast %cst_9 : f32 to vector<128x128xf32>
    %19 = arith.select %11, %17, %18 : vector<128x128xi1>, vector<128x128xf32>
    %cst_10 = arith.constant dense<0xFF800000> : vector<128xf32>
    %20 = vector.multi_reduction <maximumf>, %19, %cst_10 [1] : vector<128x128xf32> to vector<128xf32>
    %21 = vector.shape_cast %20 : vector<128xf32> to vector<128x1xf32>
    %22 = vector.broadcast %21 : vector<128x1xf32> to vector<128x128xf32>
    %23 = arith.subf %19, %22 : vector<128x128xf32>
    %24 = math.exp %23 : vector<128x128xf32>
    %cst_11 = arith.constant dense<0.000000e+00> : vector<128xf32>
    %25 = vector.multi_reduction <add>, %24, %cst_11 [1] : vector<128x128xf32> to vector<128xf32>
    %26 = vector.shape_cast %25 : vector<128xf32> to vector<128x1xf32>
    %27 = tpu.reciprocal %26 {approx = true} : vector<128x1xf32> -> vector<128x1xf32>
    %28 = vector.broadcast %27 : vector<128x1xf32> to vector<128x128xf32>
    %29 = arith.mulf %24, %28 : vector<128x128xf32>
    %30 = arith.truncf %29 : vector<128x128xf32> to vector<128x128xbf16>
    %31 = vector.extract_strided_slice %14 {offsets = [0, 0], sizes = [128, 64], strides = [1, 1]} : vector<128x128xbf16> to vector<128x64xbf16>
    %cst_12 = arith.constant dense<0.000000e+00> : vector<128x64xf32>
    %32 = tpu.matmul %30, %31, %cst_12 {dimension_numbers = #tpu.dot_dimension_numbers<[1], [0], [0], [1], [0, 0, 1, 1], [], []>} : vector<128x128xbf16>, vector<128x64xbf16>, vector<128x64xf32> -> vector<128x64xf32>
    %33 = vector.extract_strided_slice %12 {offsets = [0, 64], sizes = [128, 64], strides = [1, 1]} : vector<128x128xbf16> to vector<128x64xbf16>
    %34 = vector.extract_strided_slice %13 {offsets = [0, 64], sizes = [128, 64], strides = [1, 1]} : vector<128x128xbf16> to vector<128x64xbf16>
    %cst_13 = arith.constant dense<0.000000e+00> : vector<128x128xf32>
    %35 = tpu.matmul %33, %34, %cst_13 {dimension_numbers = #tpu.dot_dimension_numbers<[1], [1], [0], [0], [0, 0, 1, 0], [], []>} : vector<128x64xbf16>, vector<128x64xbf16>, vector<128x128xf32> -> vector<128x128xf32>
    %cst_14 = arith.constant 0xFF800000 : f32
    %36 = vector.broadcast %cst_14 : f32 to vector<128x128xf32>
    %37 = arith.select %11, %35, %36 : vector<128x128xi1>, vector<128x128xf32>
    %cst_15 = arith.constant dense<0xFF800000> : vector<128xf32>
    %38 = vector.multi_reduction <maximumf>, %37, %cst_15 [1] : vector<128x128xf32> to vector<128xf32>
    %39 = vector.shape_cast %38 : vector<128xf32> to vector<128x1xf32>
    %40 = vector.broadcast %39 : vector<128x1xf32> to vector<128x128xf32>
    %41 = arith.subf %37, %40 : vector<128x128xf32>
    %42 = math.exp %41 : vector<128x128xf32>
    %cst_16 = arith.constant dense<0.000000e+00> : vector<128xf32>
    %43 = vector.multi_reduction <add>, %42, %cst_16 [1] : vector<128x128xf32> to vector<128xf32>
    %44 = vector.shape_cast %43 : vector<128xf32> to vector<128x1xf32>
    %45 = tpu.reciprocal %44 {approx = true} : vector<128x1xf32> -> vector<128x1xf32>
    %46 = vector.broadcast %45 : vector<128x1xf32> to vector<128x128xf32>
    %47 = arith.mulf %42, %46 : vector<128x128xf32>
    %48 = arith.truncf %47 : vector<128x128xf32> to vector<128x128xbf16>
    %49 = vector.extract_strided_slice %14 {offsets = [0, 64], sizes = [128, 64], strides = [1, 1]} : vector<128x128xbf16> to vector<128x64xbf16>
    %cst_17 = arith.constant dense<0.000000e+00> : vector<128x64xf32>
    %50 = tpu.matmul %48, %49, %cst_17 {dimension_numbers = #tpu.dot_dimension_numbers<[1], [0], [0], [1], [0, 0, 1, 1], [], []>} : vector<128x128xbf16>, vector<128x64xbf16>, vector<128x64xf32> -> vector<128x64xf32>
    %51 = tpu.concatenate %32, %50 in 1 : vector<128x64xf32>, vector<128x64xf32> -> vector<128x128xf32>
    %52 = arith.truncf %51 : vector<128x128xf32> to vector<128x128xbf16>
    %c0_18 = arith.constant 0 : index
    %c0_19 = arith.constant 0 : index
    %53 = vector.load %arg6[%c0_18, %c0_19] : memref<128x384xbf16, #tpu.memory_space<vmem>>, vector<128x128xbf16>
    tpu.vector_store %arg6[%c0_18, %c0_19], %52 {strides = array<i32>} : memref<128x384xbf16, #tpu.memory_space<vmem>>, vector<128x128xbf16>,
    %54 = vector.extract_strided_slice %4 {offsets = [0, 384], sizes = [128, 128], strides = [1, 1]} : vector<128x1152xbf16> to vector<128x128xbf16>
    %55 = vector.extract_strided_slice %4 {offsets = [0, 512], sizes = [128, 128], strides = [1, 1]} : vector<128x1152xbf16> to vector<128x128xbf16>
    %56 = vector.extract_strided_slice %4 {offsets = [0, 640], sizes = [128, 128], strides = [1, 1]} : vector<128x1152xbf16> to vector<128x128xbf16>
    %57 = vector.extract_strided_slice %54 {offsets = [0, 0], sizes = [128, 64], strides = [1, 1]} : vector<128x128xbf16> to vector<128x64xbf16>
    %58 = vector.extract_strided_slice %55 {offsets = [0, 0], sizes = [128, 64], strides = [1, 1]} : vector<128x128xbf16> to vector<128x64xbf16>
    %cst_20 = arith.constant dense<0.000000e+00> : vector<128x128xf32>
    %59 = tpu.matmul %57, %58, %cst_20 {dimension_numbers = #tpu.dot_dimension_numbers<[1], [1], [0], [0], [0, 0, 1, 0], [], []>} : vector<128x64xbf16>, vector<128x64xbf16>, vector<128x128xf32> -> vector<128x128xf32>
    %cst_21 = arith.constant 0xFF800000 : f32
    %60 = vector.broadcast %cst_21 : f32 to vector<128x128xf32>
    %61 = arith.select %11, %59, %60 : vector<128x128xi1>, vector<128x128xf32>
    %cst_22 = arith.constant dense<0xFF800000> : vector<128xf32>
    %62 = vector.multi_reduction <maximumf>, %61, %cst_22 [1] : vector<128x128xf32> to vector<128xf32>
    %63 = vector.shape_cast %62 : vector<128xf32> to vector<128x1xf32>
    %64 = vector.broadcast %63 : vector<128x1xf32> to vector<128x128xf32>
    %65 = arith.subf %61, %64 : vector<128x128xf32>
    %66 = math.exp %65 : vector<128x128xf32>
    %cst_23 = arith.constant dense<0.000000e+00> : vector<128xf32>
    %67 = vector.multi_reduction <add>, %66, %cst_23 [1] : vector<128x128xf32> to vector<128xf32>
    %68 = vector.shape_cast %67 : vector<128xf32> to vector<128x1xf32>
    %69 = tpu.reciprocal %68 {approx = true} : vector<128x1xf32> -> vector<128x1xf32>
    %70 = vector.broadcast %69 : vector<128x1xf32> to vector<128x128xf32>
    %71 = arith.mulf %66, %70 : vector<128x128xf32>
    %72 = arith.truncf %71 : vector<128x128xf32> to vector<128x128xbf16>
    %73 = vector.extract_strided_slice %56 {offsets = [0, 0], sizes = [128, 64], strides = [1, 1]} : vector<128x128xbf16> to vector<128x64xbf16>
    %cst_24 = arith.constant dense<0.000000e+00> : vector<128x64xf32>
    %74 = tpu.matmul %72, %73, %cst_24 {dimension_numbers = #tpu.dot_dimension_numbers<[1], [0], [0], [1], [0, 0, 1, 1], [], []>} : vector<128x128xbf16>, vector<128x64xbf16>, vector<128x64xf32> -> vector<128x64xf32>
    %75 = vector.extract_strided_slice %54 {offsets = [0, 64], sizes = [128, 64], strides = [1, 1]} : vector<128x128xbf16> to vector<128x64xbf16>
    %76 = vector.extract_strided_slice %55 {offsets = [0, 64], sizes = [128, 64], strides = [1, 1]} : vector<128x128xbf16> to vector<128x64xbf16>
    %cst_25 = arith.constant dense<0.000000e+00> : vector<128x128xf32>
    %77 = tpu.matmul %75, %76, %cst_25 {dimension_numbers = #tpu.dot_dimension_numbers<[1], [1], [0], [0], [0, 0, 1, 0], [], []>} : vector<128x64xbf16>, vector<128x64xbf16>, vector<128x128xf32> -> vector<128x128xf32>
    %cst_26 = arith.constant 0xFF800000 : f32
    %78 = vector.broadcast %cst_26 : f32 to vector<128x128xf32>
    %79 = arith.select %11, %77, %78 : vector<128x128xi1>, vector<128x128xf32>
    %cst_27 = arith.constant dense<0xFF800000> : vector<128xf32>
    %80 = vector.multi_reduction <maximumf>, %79, %cst_27 [1] : vector<128x128xf32> to vector<128xf32>
    %81 = vector.shape_cast %80 : vector<128xf32> to vector<128x1xf32>
    %82 = vector.broadcast %81 : vector<128x1xf32> to vector<128x128xf32>
    %83 = arith.subf %79, %82 : vector<128x128xf32>
    %84 = math.exp %83 : vector<128x128xf32>
    %cst_28 = arith.constant dense<0.000000e+00> : vector<128xf32>
    %85 = vector.multi_reduction <add>, %84, %cst_28 [1] : vector<128x128xf32> to vector<128xf32>
    %86 = vector.shape_cast %85 : vector<128xf32> to vector<128x1xf32>
    %87 = tpu.reciprocal %86 {approx = true} : vector<128x1xf32> -> vector<128x1xf32>
    %88 = vector.broadcast %87 : vector<128x1xf32> to vector<128x128xf32>
    %89 = arith.mulf %84, %88 : vector<128x128xf32>
    %90 = arith.truncf %89 : vector<128x128xf32> to vector<128x128xbf16>
    %91 = vector.extract_strided_slice %56 {offsets = [0, 64], sizes = [128, 64], strides = [1, 1]} : vector<128x128xbf16> to vector<128x64xbf16>
    %cst_29 = arith.constant dense<0.000000e+00> : vector<128x64xf32>
    %92 = tpu.matmul %90, %91, %cst_29 {dimension_numbers = #tpu.dot_dimension_numbers<[1], [0], [0], [1], [0, 0, 1, 1], [], []>} : vector<128x128xbf16>, vector<128x64xbf16>, vector<128x64xf32> -> vector<128x64xf32>
    %93 = tpu.concatenate %74, %92 in 1 : vector<128x64xf32>, vector<128x64xf32> -> vector<128x128xf32>
    %94 = arith.truncf %93 : vector<128x128xf32> to vector<128x128xbf16>
    %c0_30 = arith.constant 0 : index
    %c128 = arith.constant 128 : index
    %95 = vector.load %arg6[%c0_30, %c128] : memref<128x384xbf16, #tpu.memory_space<vmem>>, vector<128x128xbf16>
    tpu.vector_store %arg6[%c0_30, %c128], %94 {strides = array<i32>} : memref<128x384xbf16, #tpu.memory_space<vmem>>, vector<128x128xbf16>,
    %96 = vector.extract_strided_slice %4 {offsets = [0, 768], sizes = [128, 128], strides = [1, 1]} : vector<128x1152xbf16> to vector<128x128xbf16>
    %97 = vector.extract_strided_slice %4 {offsets = [0, 896], sizes = [128, 128], strides = [1, 1]} : vector<128x1152xbf16> to vector<128x128xbf16>
    %98 = vector.extract_strided_slice %4 {offsets = [0, 1024], sizes = [128, 128], strides = [1, 1]} : vector<128x1152xbf16> to vector<128x128xbf16>
    %99 = vector.extract_strided_slice %96 {offsets = [0, 0], sizes = [128, 64], strides = [1, 1]} : vector<128x128xbf16> to vector<128x64xbf16>
    %100 = vector.extract_strided_slice %97 {offsets = [0, 0], sizes = [128, 64], strides = [1, 1]} : vector<128x128xbf16> to vector<128x64xbf16>
    %cst_31 = arith.constant dense<0.000000e+00> : vector<128x128xf32>
    %101 = tpu.matmul %99, %100, %cst_31 {dimension_numbers = #tpu.dot_dimension_numbers<[1], [1], [0], [0], [0, 0, 1, 0], [], []>} : vector<128x64xbf16>, vector<128x64xbf16>, vector<128x128xf32> -> vector<128x128xf32>
    %cst_32 = arith.constant 0xFF800000 : f32
    %102 = vector.broadcast %cst_32 : f32 to vector<128x128xf32>
    %103 = arith.select %11, %101, %102 : vector<128x128xi1>, vector<128x128xf32>
    %cst_33 = arith.constant dense<0xFF800000> : vector<128xf32>
    %104 = vector.multi_reduction <maximumf>, %103, %cst_33 [1] : vector<128x128xf32> to vector<128xf32>
    %105 = vector.shape_cast %104 : vector<128xf32> to vector<128x1xf32>
    %106 = vector.broadcast %105 : vector<128x1xf32> to vector<128x128xf32>
    %107 = arith.subf %103, %106 : vector<128x128xf32>
    %108 = math.exp %107 : vector<128x128xf32>
    %cst_34 = arith.constant dense<0.000000e+00> : vector<128xf32>
    %109 = vector.multi_reduction <add>, %108, %cst_34 [1] : vector<128x128xf32> to vector<128xf32>
    %110 = vector.shape_cast %109 : vector<128xf32> to vector<128x1xf32>
    %111 = tpu.reciprocal %110 {approx = true} : vector<128x1xf32> -> vector<128x1xf32>
    %112 = vector.broadcast %111 : vector<128x1xf32> to vector<128x128xf32>
    %113 = arith.mulf %108, %112 : vector<128x128xf32>
    %114 = arith.truncf %113 : vector<128x128xf32> to vector<128x128xbf16>
    %115 = vector.extract_strided_slice %98 {offsets = [0, 0], sizes = [128, 64], strides = [1, 1]} : vector<128x128xbf16> to vector<128x64xbf16>
    %cst_35 = arith.constant dense<0.000000e+00> : vector<128x64xf32>
    %116 = tpu.matmul %114, %115, %cst_35 {dimension_numbers = #tpu.dot_dimension_numbers<[1], [0], [0], [1], [0, 0, 1, 1], [], []>} : vector<128x128xbf16>, vector<128x64xbf16>, vector<128x64xf32> -> vector<128x64xf32>
    %117 = vector.extract_strided_slice %96 {offsets = [0, 64], sizes = [128, 64], strides = [1, 1]} : vector<128x128xbf16> to vector<128x64xbf16>
    %118 = vector.extract_strided_slice %97 {offsets = [0, 64], sizes = [128, 64], strides = [1, 1]} : vector<128x128xbf16> to vector<128x64xbf16>
    %cst_36 = arith.constant dense<0.000000e+00> : vector<128x128xf32>
    %119 = tpu.matmul %117, %118, %cst_36 {dimension_numbers = #tpu.dot_dimension_numbers<[1], [1], [0], [0], [0, 0, 1, 0], [], []>} : vector<128x64xbf16>, vector<128x64xbf16>, vector<128x128xf32> -> vector<128x128xf32>
    %cst_37 = arith.constant 0xFF800000 : f32
    %120 = vector.broadcast %cst_37 : f32 to vector<128x128xf32>
    %121 = arith.select %11, %119, %120 : vector<128x128xi1>, vector<128x128xf32>
    %cst_38 = arith.constant dense<0xFF800000> : vector<128xf32>
    %122 = vector.multi_reduction <maximumf>, %121, %cst_38 [1] : vector<128x128xf32> to vector<128xf32>
    %123 = vector.shape_cast %122 : vector<128xf32> to vector<128x1xf32>
    %124 = vector.broadcast %123 : vector<128x1xf32> to vector<128x128xf32>
    %125 = arith.subf %121, %124 : vector<128x128xf32>
    %126 = math.exp %125 : vector<128x128xf32>
    %cst_39 = arith.constant dense<0.000000e+00> : vector<128xf32>
    %127 = vector.multi_reduction <add>, %126, %cst_39 [1] : vector<128x128xf32> to vector<128xf32>
    %128 = vector.shape_cast %127 : vector<128xf32> to vector<128x1xf32>
    %129 = tpu.reciprocal %128 {approx = true} : vector<128x1xf32> -> vector<128x1xf32>
    %130 = vector.broadcast %129 : vector<128x1xf32> to vector<128x128xf32>
    %131 = arith.mulf %126, %130 : vector<128x128xf32>
    %132 = arith.truncf %131 : vector<128x128xf32> to vector<128x128xbf16>
    %133 = vector.extract_strided_slice %98 {offsets = [0, 64], sizes = [128, 64], strides = [1, 1]} : vector<128x128xbf16> to vector<128x64xbf16>
    %cst_40 = arith.constant dense<0.000000e+00> : vector<128x64xf32>
    %134 = tpu.matmul %132, %133, %cst_40 {dimension_numbers = #tpu.dot_dimension_numbers<[1], [0], [0], [1], [0, 0, 1, 1], [], []>} : vector<128x128xbf16>, vector<128x64xbf16>, vector<128x64xf32> -> vector<128x64xf32>
    %135 = tpu.concatenate %116, %134 in 1 : vector<128x64xf32>, vector<128x64xf32> -> vector<128x128xf32>
    %136 = arith.truncf %135 : vector<128x128xf32> to vector<128x128xbf16>
    %c0_41 = arith.constant 0 : index
    %c256 = arith.constant 256 : index
    %137 = vector.load %arg6[%c0_41, %c256] : memref<128x384xbf16, #tpu.memory_space<vmem>>, vector<128x128xbf16>
    tpu.vector_store %arg6[%c0_41, %c256], %136 {strides = array<i32>} : memref<128x384xbf16, #tpu.memory_space<vmem>>, vector<128x128xbf16>,
    %c0_42 = arith.constant 0 : index
    %c0_43 = arith.constant 0 : index
    %138 = vector.load %arg6[%c0_42, %c0_43] : memref<128x384xbf16, #tpu.memory_space<vmem>>, vector<128x384xbf16>
    %cst_44 = arith.constant dense<0.000000e+00> : vector<128x384xf32>
    %139 = tpu.matmul %138, %5, %cst_44 {dimension_numbers = #tpu.dot_dimension_numbers<[1], [0], [0], [1], [0, 0, 1, 1], [], []>} : vector<128x384xbf16>, vector<384x384xbf16>, vector<128x384xf32> -> vector<128x384xf32>
    %140 = vector.broadcast %6 : vector<1x384xf32> to vector<128x384xf32>
    %141 = arith.addf %139, %140 : vector<128x384xf32>
    %c0_45 = arith.constant 0 : index
    %c0_46 = arith.constant 0 : index
    %c0_47 = arith.constant 0 : index
    %142 = vector.load %arg5[%c0_45, %c0_46, %c0_47] : memref<1x128x384xf32, #tpu.memory_space<vmem>>, vector<1x128x384xf32>
    %143 = vector.shape_cast %142 : vector<1x128x384xf32> to vector<128x384xf32>
    %144 = vector.shape_cast %141 : vector<128x384xf32> to vector<1x128x384xf32>
    tpu.vector_store %arg5[%c0_45, %c0_46, %c0_47], %144 {strides = array<i32>} : memref<1x128x384xf32, #tpu.memory_space<vmem>>, vector<1x128x384xf32>,
    return
  }
  func.func @transform_0(%arg0: i32) -> (i32, i32, i32) {
    %c0_i32 = arith.constant 0 : i32
    %c0_i32_0 = arith.constant 0 : i32
    %c0_i32_1 = arith.constant 0 : i32
    return %arg0, %c0_i32, %c0_i32_0 : i32, i32, i32
  }
  func.func @transform_1(%arg0: i32) -> (i32, i32) {
    %c0_i32 = arith.constant 0 : i32
    %c0_i32_0 = arith.constant 0 : i32
    %c0_i32_1 = arith.constant 0 : i32
    return %c0_i32, %c0_i32_0 : i32, i32
  }
  func.func @transform_2(%arg0: i32) -> (i32, i32) {
    %c0_i32 = arith.constant 0 : i32
    %c0_i32_0 = arith.constant 0 : i32
    %c0_i32_1 = arith.constant 0 : i32
    return %c0_i32, %c0_i32_0 : i32, i32
  }
  func.func @transform_3(%arg0: i32) -> (i32, i32) {
    %c0_i32 = arith.constant 0 : i32
    %c0_i32_0 = arith.constant 0 : i32
    %c0_i32_1 = arith.constant 0 : i32
    return %c0_i32, %c0_i32_0 : i32, i32
  }
  func.func @transform_4(%arg0: i32) -> (i32, i32, i32) {
    %c0_i32 = arith.constant 0 : i32
    %c0_i32_0 = arith.constant 0 : i32
    %c0_i32_1 = arith.constant 0 : i32
    return %arg0, %c0_i32, %c0_i32_0 : i32, i32, i32
  }
}

</mosaic_0001>

<llo_original>
// kernel: multi_head_attention.1
$region0: #{multi_head_attention.1}
  #allocation0 [shape = 'u32[]', space=smem, size = 0x4, offset = 0x4, fixed_abs, tag = 'smem constant byte address 0x4 - core index']
  #allocation1 [shape = 'u32[144,128]{1,0:T(1,128)}', space=vmem, size = 0x12000, scoped, tag = 'internal scratch']
  #allocation2 [shape = 'bf16[128,384]{1,0:T(16,128)(2,1)}', space=vmem, size = 0x18000, scoped, tag = 'scratch operand']
  %s0 = inlined_call_operand.vmem [shape: bf16[2,128,384], index: 0, kind: input, shape index: {}]
  %s1 = inlined_call_operand.hbm [shape: bf16[384,1152], index: 1, kind: input, shape index: {}]
  %s2 = inlined_call_operand.vmem [shape: bf16[384,384], index: 2, kind: input, shape index: {}]
  %s3 = inlined_call_operand.vmem [shape: f32[1,384], index: 3, kind: input, shape index: {}]
  %s4 = inlined_call_operand.hbm [shape: f32[2,128,384], index: 4, kind: output, shape index: {}]
  %s5 = sld [smem:[#allocation0]]
  $region53: #{multi_head_attention.1} parent=0
    _
  %s7 = ssub.s32 1, %s5
  %s8 = scalar_select 0, %s7, %s5
  $region1: #{multi_head_attention.1} parent=0
    #allocation3 [shape = 'u8[884736]{0}', space=vmem, size = 0xd8000, scoped, tag = 'input window, operand 1, single buffered']
    #allocation4 [shape = 's32[2]{0}', space=sflag, size = 0x8, scoped, tag = 'scoped memory for multi_head_attention.1']
    #allocation5 [shape = 's32[2]{0}', space=sflag, size = 0x8, scoped, tag = 'scoped memory for multi_head_attention.1']
    #allocation6 [shape = 'u8[393216]{0}', space=vmem, size = 0x60000, scoped, tag = 'output window, operand 0']
    %9 = vsyncpa [#allocation4], 0
    %10 = vsyncpa [#allocation5], 0
    %s11 = scalar_lea.sflag [#allocation5], 1
    %12 = vsyncpa %s11, 0
    loop: start=0, step=1, limit=4
    $region2: #{multi_head_attention.1} parent=1 // loop_pre_header
      _
    $region3: #{multi_head_attention.1} parent=1 // loop_header
      %s14 = sphi 0, %s18
      %p15 = scmp.ge.s32.totalorder %s14, 4
      %s24 = sphi 0, %s26
      %s27 = sphi 0, %s24
      %s28 = sphi 0, %s27
      %s44 = sphi 0, %s28
      %s48 = sphi 0, %s48
      %s50 = sphi 0, %s48
      %s51 = sphi 0, %s50
      %s65 = sphi 0, %s51
      %s69 = sphi 0, %s69
      %s71 = sphi 0, %s69
      %s72 = sphi 0, %s71
      %s86 = sphi 0, %s72
      %s90 = sphi 0, %s90
      %s92 = sphi 0, %s90
      %s93 = sphi 0, %s92
      %s107 = sphi 0, %s93
      %s113 = sphi 0, %s115
      %s116 = sphi 0, %s113
      %s117 = sphi 0, %s116
      %s133 = sphi 0, %s117
    $region4: #{multi_head_attention.1} parent=1 // loop_header_branch
      %17 = sbr.rel (%p15) target = $region8
    $region5: #{multi_head_attention.1} parent=1 // loop_body
      %s19 = ssub.s32 %s14, 1
      %s20 = ssub.s32 %s14, 2
      %s21 = sadd.s32 %s14, 1
      %s22 = ssub.s32 %s14, %s21
      %p23 = scmp.eq.s32.totalorder %s22, 0
      %s25 = sadd.s32 %s24, 1
      %s26 = scalar_select %p23, %s24, %s25
      %p29 = pneg %p23
      %p30 = scmp.eq.s32.totalorder %s14, 1
      %p31 = por %p29, %p30
      %p32 = scmp.ne.s32.totalorder %s24, %s27
      %p33 = scmp.eq.s32.totalorder %s14, 0
      %p34 = por %p32, %p33
      %p35 = scmp.ne.s32.totalorder %s24, %s27
      %p36 = scmp.eq.s32.totalorder %s19, 1
      %p37 = por %p35, %p36
      %p38 = scmp.ne.s32.totalorder %s27, %s28
      %p39 = scmp.eq.s32.totalorder %s19, 0
      %p40 = por %p38, %p39
      %p41 = scmp.ne.s32.totalorder %s27, %s28
      %p42 = scmp.eq.s32.totalorder %s20, 1
      %p43 = por %p41, %p42
      %p45 = scmp.ne.s32.totalorder %s28, %s44
      %p46 = scmp.eq.s32.totalorder %s20, 0
      %p47 = por %p45, %p46
      %s49 = sadd.s32 %s48, 1
      %p52 = scmp.eq.s32.totalorder %s14, 1
      %p53 = scmp.ne.s32.totalorder %s48, %s50
      %p54 = scmp.eq.s32.totalorder %s14, 0
      %p55 = por %p53, %p54
      %p56 = scmp.ne.s32.totalorder %s48, %s50
      %p57 = scmp.eq.s32.totalorder %s19, 1
      %p58 = por %p56, %p57
      %p59 = scmp.ne.s32.totalorder %s50, %s51
      %p60 = scmp.eq.s32.totalorder %s19, 0
      %p61 = por %p59, %p60
      %p62 = scmp.ne.s32.totalorder %s50, %s51
      %p63 = scmp.eq.s32.totalorder %s20, 1
      %p64 = por %p62, %p63
      %p66 = scmp.ne.s32.totalorder %s51, %s65
      %p67 = scmp.eq.s32.totalorder %s20, 0
      %p68 = por %p66, %p67
      %s70 = sadd.s32 %s69, 1
      %p73 = scmp.eq.s32.totalorder %s14, 1
      %p74 = scmp.ne.s32.totalorder %s69, %s71
      %p75 = scmp.eq.s32.totalorder %s14, 0
      %p76 = por %p74, %p75
      %p77 = scmp.ne.s32.totalorder %s69, %s71
      %p78 = scmp.eq.s32.totalorder %s19, 1
      %p79 = por %p77, %p78
      %p80 = scmp.ne.s32.totalorder %s71, %s72
      %p81 = scmp.eq.s32.totalorder %s19, 0
      %p82 = por %p80, %p81
      %p83 = scmp.ne.s32.totalorder %s71, %s72
      %p84 = scmp.eq.s32.totalorder %s20, 1
      %p85 = por %p83, %p84
      %p87 = scmp.ne.s32.totalorder %s72, %s86
      %p88 = scmp.eq.s32.totalorder %s20, 0
      %p89 = por %p87, %p88
      %s91 = sadd.s32 %s90, 1
      %p94 = scmp.eq.s32.totalorder %s14, 1
      %p95 = scmp.ne.s32.totalorder %s90, %s92
      %p96 = scmp.eq.s32.totalorder %s14, 0
      %p97 = por %p95, %p96
      %p98 = scmp.ne.s32.totalorder %s90, %s92
      %p99 = scmp.eq.s32.totalorder %s19, 1
      %p100 = por %p98, %p99
      %p101 = scmp.ne.s32.totalorder %s92, %s93
      %p102 = scmp.eq.s32.totalorder %s19, 0
      %p103 = por %p101, %p102
      %p104 = scmp.ne.s32.totalorder %s92, %s93
      %p105 = scmp.eq.s32.totalorder %s20, 1
      %p106 = por %p104, %p105
      %p108 = scmp.ne.s32.totalorder %s93, %s107
      %p109 = scmp.eq.s32.totalorder %s20, 0
      %p110 = por %p108, %p109
      %s111 = ssub.s32 %s14, %s21
      %p112 = scmp.eq.s32.totalorder %s111, 0
      %s114 = sadd.s32 %s113, 1
      %s115 = scalar_select %p112, %s113, %s114
      %p118 = pneg %p112
      %p119 = scmp.eq.s32.totalorder %s14, 1
      %p120 = por %p118, %p119
      %p121 = scmp.ne.s32.totalorder %s113, %s116
      %p122 = scmp.eq.s32.totalorder %s14, 0
      %p123 = por %p121, %p122
      %p124 = scmp.ne.s32.totalorder %s113, %s116
      %p125 = scmp.eq.s32.totalorder %s19, 1
      %p126 = por %p124, %p125
      %p127 = scmp.ne.s32.totalorder %s116, %s117
      %p128 = scmp.eq.s32.totalorder %s19, 0
      %p129 = por %p127, %p128
      %p130 = scmp.ne.s32.totalorder %s116, %s117
      %p131 = scmp.eq.s32.totalorder %s20, 1
      %p132 = por %p130, %p131
      %p134 = scmp.ne.s32.totalorder %s117, %s133
      %p135 = scmp.eq.s32.totalorder %s20, 0
      %p136 = por %p134, %p135
      %p137 = scmp.le.s32.totalorder 1, %s14
      %p138 = scmp.lt.s32.totalorder %s14, 3
      %p139 = pnand %p137, %p138
      %p140 = pneg %p139
      // Predicated region
      $region9: #{multi_head_attention.1} parent=5 // pred_check
        _
      $region10: #{multi_head_attention.1} parent=5 // pred_check_branch
        %142 = sbr.rel (%p139) target = $region12
      $region11: #{multi_head_attention.1} parent=5 // pred_region
        %s143 = ssub.s32 %s14, 1
        // Predicated region
        $region13: #{multi_head_attention.1} parent=11 // pred_check
          %p144 = pneg %p61
        $region14: #{multi_head_attention.1} parent=11 // pred_check_branch
          %146 = sbr.rel (%p144) target = $region16
        $region15: #{multi_head_attention.1} parent=11 // pred_region
          %s148 = ssub.s32 27648, 27648
          %149 = vsyncadd [#allocation4], %s148
          %s150 = sshll.u32 [#allocation3], 4
          %s151 = int_to_ptr.vmem [resolvable:$true] %s150
          %156 = dma.hbm_to_vmem [thread:$0]  %s1, 27648, %s151, [#allocation4], 576, 576, 36
        $region16: #{multi_head_attention.1} parent=11 // pred_fallthru
          _
        // Predicated region
        $region17: #{multi_head_attention.1} parent=11 // pred_check
          %p157 = pneg %p82
        $region18: #{multi_head_attention.1} parent=11 // pred_check_branch
          %159 = sbr.rel (%p157) target = $region20
        $region19: #{multi_head_attention.1} parent=11 // pred_region
          _
        $region20: #{multi_head_attention.1} parent=11 // pred_fallthru
          _
        // Predicated region
        $region21: #{multi_head_attention.1} parent=11 // pred_check
          %p160 = pneg %p103
        $region22: #{multi_head_attention.1} parent=11 // pred_check_branch
          %162 = sbr.rel (%p160) target = $region24
        $region23: #{multi_head_attention.1} parent=11 // pred_region
          _
        $region24: #{multi_head_attention.1} parent=11 // pred_fallthru
          _
      $region12: #{multi_head_attention.1} parent=5 // pred_fallthru
        _
      %p163 = scmp.lt.s32.totalorder %s14, 2
      // Predicated region
      $region25: #{multi_head_attention.1} parent=5 // pred_check
        %p164 = pneg %p163
      $region26: #{multi_head_attention.1} parent=5 // pred_check_branch
        %166 = sbr.rel (%p164) target = $region28
      $region27: #{multi_head_attention.1} parent=5 // pred_region
        // Predicated region
        $region29: #{multi_head_attention.1} parent=27 // pred_check
          %p167 = pneg %p34
        $region30: #{multi_head_attention.1} parent=27 // pred_check_branch
          %169 = sbr.rel (%p167) target = $region32
        $region31: #{multi_head_attention.1} parent=27 // pred_region
          %p170 = scmp.lt.s32.totalorder %s14, 1
          %s171 = scalar_select %p170, %s14, 1
          %s172 = smul.addr %s171, 48
          %s173 = smul.addr %s172, 4
          %s174 = scalar_lea.vmem %s0, %s173
        $region32: #{multi_head_attention.1} parent=27 // pred_fallthru
          _
      $region28: #{multi_head_attention.1} parent=5 // pred_fallthru
        _
      %p175 = scmp.le.s32.totalorder 1, %s14
      %p176 = scmp.lt.s32.totalorder %s14, 3
      %p177 = pnand %p175, %p176
      %p178 = pneg %p177
      // Predicated region
      $region33: #{multi_head_attention.1} parent=5 // pred_check
        _
      $region34: #{multi_head_attention.1} parent=5 // pred_check_branch
        %180 = sbr.rel (%p177) target = $region36
      $region35: #{multi_head_attention.1} parent=5 // pred_region
        %s181 = ssub.s32 %s14, 1
        // Predicated region
        $region37: #{multi_head_attention.1} parent=35 // pred_check
          %p182 = pneg %p61
        $region38: #{multi_head_attention.1} parent=35 // pred_check_branch
          %184 = sbr.rel (%p182) target = $region40
        $region39: #{multi_head_attention.1} parent=35 // pred_region
          %185 = dma.done [#allocation4], 27648
        $region40: #{multi_head_attention.1} parent=35 // pred_fallthru
          _
        %p186 = scmp.lt.s32.totalorder %s19, 1
        %s187 = scalar_select %p186, %s19, 1
        %s188 = smul.addr %s187, 48
        %s189 = smul.addr %s188, 4
        %s190 = scalar_lea.vmem %s0, %s189
        %p191 = pneg %p40
        %p192 = pneg %p37
        %p193 = pneg %p61
        %p194 = pneg %p58
        %p195 = pneg %p82
        %p196 = pneg %p79
        %p197 = pneg %p103
        %p198 = pneg %p100
        %p199 = pneg %p129
        %p200 = pneg %p126
        %s201 = sand.u32 %s116, 1
        %s202 = scalar_lea.sflag [#allocation5], %s201
        %s203 = sand.u32 %s116, 1
        %s204 = smul.addr %s203, 384
        %s205 = scalar_lea.vmem [#allocation6], %s204
        %p206 = scmp.lt.s32.totalorder %s19, 1
        %s207 = scalar_select %p206, %s19, 1
        %s208 = smul.addr %s207, 48
        %s209 = smul.addr %s208, 4
        %s210 = scalar_lea.vmem %s0, %s209
        %v212 = vld [vmem:[%s210] sm:$0xff]
        %v213 = vld [vmem:[%s210 + $0x8] sm:$0xf]
        %v214 = vld [vmem:[%s210 + $0xc] sm:$0xff]
        %v215 = vld [vmem:[%s210 + $0x14] sm:$0xf]
        %v216 = vld [vmem:[%s210 + $0x18] sm:$0xff]
        %v217 = vld [vmem:[%s210 + $0x20] sm:$0xf]
        %v218 = vld [vmem:[%s210 + $0x24] sm:$0xff]
        %v219 = vld [vmem:[%s210 + $0x2c] sm:$0xf]
        %v220 = vld [vmem:[%s210 + $0x30] sm:$0xff]
        %v221 = vld [vmem:[%s210 + $0x38] sm:$0xf]
        %v222 = vld [vmem:[%s210 + $0x3c] sm:$0xff]
        %v223 = vld [vmem:[%s210 + $0x44] sm:$0xf]
        %v224 = vld [vmem:[%s210 + $0x48] sm:$0xff]
        %v225 = vld [vmem:[%s210 + $0x50] sm:$0xf]
        %v226 = vld [vmem:[%s210 + $0x54] sm:$0xff]
        %v227 = vld [vmem:[%s210 + $0x5c] sm:$0xf]
        %v228 = vld [vmem:[%s210 + $0x60] sm:$0xff]
        %v229 = vld [vmem:[%s210 + $0x68] sm:$0xf]
        %v230 = vld [vmem:[%s210 + $0x6c] sm:$0xff]
        %v231 = vld [vmem:[%s210 + $0x74] sm:$0xf]
        %v232 = vld [vmem:[%s210 + $0x78] sm:$0xff]
        %v233 = vld [vmem:[%s210 + $0x80] sm:$0xf]
        %v234 = vld [vmem:[%s210 + $0x84] sm:$0xff]
        %v235 = vld [vmem:[%s210 + $0x8c] sm:$0xf]
        %v236 = vld [vmem:[%s210 + $0x90] sm:$0xff]
        %v237 = vld [vmem:[%s210 + $0x98] sm:$0xf]
        %v238 = vld [vmem:[%s210 + $0x9c] sm:$0xff]
        %v239 = vld [vmem:[%s210 + $0xa4] sm:$0xf]
        %v240 = vld [vmem:[%s210 + $0xa8] sm:$0xff]
        %v241 = vld [vmem:[%s210 + $0xb0] sm:$0xf]
        %v242 = vld [vmem:[%s210 + $0xb4] sm:$0xff]
        %v243 = vld [vmem:[%s210 + $0xbc] sm:$0xf]
        %v244 = vld [vmem:[#allocation3] sm:$0xff]
        %v245 = vld [vmem:[#allocation3 + $0x8] sm:$0xff]
        %v246 = vld [vmem:[#allocation3 + $0x10] sm:$0xff]
        %v247 = vld [vmem:[#allocation3 + $0x18] sm:$0xff]
        %v248 = vld [vmem:[#allocation3 + $0x20] sm:$0xf]
        %v249 = vld [vmem:[#allocation3 + $0x24] sm:$0xff]
        %v250 = vld [vmem:[#allocation3 + $0x2c] sm:$0xff]
        %v251 = vld [vmem:[#allocation3 + $0x34] sm:$0xff]
        %v252 = vld [vmem:[#allocation3 + $0x3c] sm:$0xff]
        %v253 = vld [vmem:[#allocation3 + $0x44] sm:$0xf]
        %v254 = vld [vmem:[#allocation3 + $0x48] sm:$0xff]
        %v255 = vld [vmem:[#allocation3 + $0x50] sm:$0xff]
        %v256 = vld [vmem:[#allocation3 + $0x58] sm:$0xff]
        %v257 = vld [vmem:[#allocation3 + $0x60] sm:$0xff]
        %v258 = vld [vmem:[#allocation3 + $0x68] sm:$0xf]
        %v259 = vld [vmem:[#allocation3 + $0x6c] sm:$0xff]
        %v260 = vld [vmem:[#allocation3 + $0x74] sm:$0xff]
        %v261 = vld [vmem:[#allocation3 + $0x7c] sm:$0xff]
        %v262 = vld [vmem:[#allocation3 + $0x84] sm:$0xff]
        %v263 = vld [vmem:[#allocation3 + $0x8c] sm:$0xf]
        %v264 = vld [vmem:[#allocation3 + $0x90] sm:$0xff]
        %v265 = vld [vmem:[#allocation3 + $0x98] sm:$0xff]
        %v266 = vld [vmem:[#allocation3 + $0xa0] sm:$0xff]
        %v267 = vld [vmem:[#allocation3 + $0xa8] sm:$0xff]
        %v268 = vld [vmem:[#allocation3 + $0xb0] sm:$0xf]
        %v269 = vld [vmem:[#allocation3 + $0xb4] sm:$0xff]
        %v270 = vld [vmem:[#allocation3 + $0xbc] sm:$0xff]
        %v271 = vld [vmem:[#allocation3 + $0xc4] sm:$0xff]
        %v272 = vld [vmem:[#allocation3 + $0xcc] sm:$0xff]
        %v273 = vld [vmem:[#allocation3 + $0xd4] sm:$0xf]
        %v274 = vld [vmem:[#allocation3 + $0xd8] sm:$0xff]
        %v275 = vld [vmem:[#allocation3 + $0xe0] sm:$0xff]
        %v276 = vld [vmem:[#allocation3 + $0xe8] sm:$0xff]
        %v277 = vld [vmem:[#allocation3 + $0xf0] sm:$0xff]
        %v278 = vld [vmem:[#allocation3 + $0xf8] sm:$0xf]
        %v279 = vld [vmem:[#allocation3 + $0xfc] sm:$0xff]
        %v280 = vld [vmem:[#allocation3 + $0x104] sm:$0xff]
        %v281 = vld [vmem:[#allocation3 + $0x10c] sm:$0xff]
        %v282 = vld [vmem:[#allocation3 + $0x114] sm:$0xff]
        %v283 = vld [vmem:[#allocation3 + $0x11c] sm:$0xf]
        %v284 = vld [vmem:[#allocation3 + $0x120] sm:$0xff]
        %v285 = vld [vmem:[#allocation3 + $0x128] sm:$0xff]
        %v286 = vld [vmem:[#allocation3 + $0x130] sm:$0xff]
        %v287 = vld [vmem:[#allocation3 + $0x138] sm:$0xff]
        %v288 = vld [vmem:[#allocation3 + $0x140] sm:$0xf]
        %v289 = vld [vmem:[#allocation3 + $0x144] sm:$0xff]
        %v290 = vld [vmem:[#allocation3 + $0x14c] sm:$0xff]
        %v291 = vld [vmem:[#allocation3 + $0x154] sm:$0xff]
        %v292 = vld [vmem:[#allocation3 + $0x15c] sm:$0xff]
        %v293 = vld [vmem:[#allocation3 + $0x164] sm:$0xf]
        %v294 = vld [vmem:[#allocation3 + $0x168] sm:$0xff]
        %v295 = vld [vmem:[#allocation3 + $0x170] sm:$0xff]
        %v296 = vld [vmem:[#allocation3 + $0x178] sm:$0xff]
        %v297 = vld [vmem:[#allocation3 + $0x180] sm:$0xff]
        %v298 = vld [vmem:[#allocation3 + $0x188] sm:$0xf]
        %v299 = vld [vmem:[#allocation3 + $0x18c] sm:$0xff]
        %v300 = vld [vmem:[#allocation3 + $0x194] sm:$0xff]
        %v301 = vld [vmem:[#allocation3 + $0x19c] sm:$0xff]
        %v302 = vld [vmem:[#allocation3 + $0x1a4] sm:$0xff]
        %v303 = vld [vmem:[#allocation3 + $0x1ac] sm:$0xf]
        %v304 = vld [vmem:[#allocation3 + $0x1b0] sm:$0xff]
        %v305 = vld [vmem:[#allocation3 + $0x1b8] sm:$0xff]
        %v306 = vld [vmem:[#allocation3 + $0x1c0] sm:$0xff]
        %v307 = vld [vmem:[#allocation3 + $0x1c8] sm:$0xff]
        %v308 = vld [vmem:[#allocation3 + $0x1d0] sm:$0xf]
        %v309 = vld [vmem:[#allocation3 + $0x1d4] sm:$0xff]
        %v310 = vld [vmem:[#allocation3 + $0x1dc] sm:$0xff]
        %v311 = vld [vmem:[#allocation3 + $0x1e4] sm:$0xff]
        %v312 = vld [vmem:[#allocation3 + $0x1ec] sm:$0xff]
        %v313 = vld [vmem:[#allocation3 + $0x1f4] sm:$0xf]
        %v314 = vld [vmem:[#allocation3 + $0x1f8] sm:$0xff]
        %v315 = vld [vmem:[#allocation3 + $0x200] sm:$0xff]
        %v316 = vld [vmem:[#allocation3 + $0x208] sm:$0xff]
        %v317 = vld [vmem:[#allocation3 + $0x210] sm:$0xff]
        %v318 = vld [vmem:[#allocation3 + $0x218] sm:$0xf]
        %v319 = vld [vmem:[#allocation3 + $0x21c] sm:$0xff]
        %v320 = vld [vmem:[#allocation3 + $0x224] sm:$0xff]
        %v321 = vld [vmem:[#allocation3 + $0x22c] sm:$0xff]
        %v322 = vld [vmem:[#allocation3 + $0x234] sm:$0xff]
        %v323 = vld [vmem:[#allocation3 + $0x23c] sm:$0xf]
        %v324 = vld [vmem:[#allocation3 + $0x240] sm:$0xff]
        %v325 = vld [vmem:[#allocation3 + $0x248] sm:$0xff]
        %v326 = vld [vmem:[#allocation3 + $0x250] sm:$0xff]
        %v327 = vld [vmem:[#allocation3 + $0x258] sm:$0xff]
        %v328 = vld [vmem:[#allocation3 + $0x260] sm:$0xf]
        %v329 = vld [vmem:[#allocation3 + $0x264] sm:$0xff]
        %v330 = vld [vmem:[#allocation3 + $0x26c] sm:$0xff]
        %v331 = vld [vmem:[#allocation3 + $0x274] sm:$0xff]
        %v332 = vld [vmem:[#allocation3 + $0x27c] sm:$0xff]
        %v333 = vld [vmem:[#allocation3 + $0x284] sm:$0xf]
        %v334 = vld [vmem:[#allocation3 + $0x288] sm:$0xff]
        %v335 = vld [vmem:[#allocation3 + $0x290] sm:$0xff]
        %v336 = vld [vmem:[#allocation3 + $0x298] sm:$0xff]
        %v337 = vld [vmem:[#allocation3 + $0x2a0] sm:$0xff]
        %v338 = vld [vmem:[#allocation3 + $0x2a8] sm:$0xf]
        %v339 = vld [vmem:[#allocation3 + $0x2ac] sm:$0xff]
        %v340 = vld [vmem:[#allocation3 + $0x2b4] sm:$0xff]
        %v341 = vld [vmem:[#allocation3 + $0x2bc] sm:$0xff]
        %v342 = vld [vmem:[#allocation3 + $0x2c4] sm:$0xff]
        %v343 = vld [vmem:[#allocation3 + $0x2cc] sm:$0xf]
        %v344 = vld [vmem:[#allocation3 + $0x2d0] sm:$0xff]
        %v345 = vld [vmem:[#allocation3 + $0x2d8] sm:$0xff]
        %v346 = vld [vmem:[#allocation3 + $0x2e0] sm:$0xff]
        %v347 = vld [vmem:[#allocation3 + $0x2e8] sm:$0xff]
        %v348 = vld [vmem:[#allocation3 + $0x2f0] sm:$0xf]
        %v349 = vld [vmem:[#allocation3 + $0x2f4] sm:$0xff]
        %v350 = vld [vmem:[#allocation3 + $0x2fc] sm:$0xff]
        %v351 = vld [vmem:[#allocation3 + $0x304] sm:$0xff]
        %v352 = vld [vmem:[#allocation3 + $0x30c] sm:$0xff]
        %v353 = vld [vmem:[#allocation3 + $0x314] sm:$0xf]
        %v354 = vld [vmem:[#allocation3 + $0x318] sm:$0xff]
        %v355 = vld [vmem:[#allocation3 + $0x320] sm:$0xff]
        %v356 = vld [vmem:[#allocation3 + $0x328] sm:$0xff]
        %v357 = vld [vmem:[#allocation3 + $0x330] sm:$0xff]
        %v358 = vld [vmem:[#allocation3 + $0x338] sm:$0xf]
        %v359 = vld [vmem:[#allocation3 + $0x33c] sm:$0xff]
        %v360 = vld [vmem:[#allocation3 + $0x344] sm:$0xff]
        %v361 = vld [vmem:[#allocation3 + $0x34c] sm:$0xff]
        %v362 = vld [vmem:[#allocation3 + $0x354] sm:$0xff]
        %v363 = vld [vmem:[#allocation3 + $0x35c] sm:$0xf]
        %v364 = vld [vmem:[#allocation3 + $0x360] sm:$0xff]
        %v365 = vld [vmem:[#allocation3 + $0x368] sm:$0xff]
        %v366 = vld [vmem:[#allocation3 + $0x370] sm:$0xff]
        %v367 = vld [vmem:[#allocation3 + $0x378] sm:$0xff]
        %v368 = vld [vmem:[#allocation3 + $0x380] sm:$0xf]
        %v369 = vld [vmem:[#allocation3 + $0x384] sm:$0xff]
        %v370 = vld [vmem:[#allocation3 + $0x38c] sm:$0xff]
        %v371 = vld [vmem:[#allocation3 + $0x394] sm:$0xff]
        %v372 = vld [vmem:[#allocation3 + $0x39c] sm:$0xff]
        %v373 = vld [vmem:[#allocation3 + $0x3a4] sm:$0xf]
        %v374 = vld [vmem:[#allocation3 + $0x3a8] sm:$0xff]
        %v375 = vld [vmem:[#allocation3 + $0x3b0] sm:$0xff]
        %v376 = vld [vmem:[#allocation3 + $0x3b8] sm:$0xff]
        %v377 = vld [vmem:[#allocation3 + $0x3c0] sm:$0xff]
        %v378 = vld [vmem:[#allocation3 + $0x3c8] sm:$0xf]
        %v379 = vld [vmem:[#allocation3 + $0x3cc] sm:$0xff]
        %v380 = vld [vmem:[#allocation3 + $0x3d4] sm:$0xff]
        %v381 = vld [vmem:[#allocation3 + $0x3dc] sm:$0xff]
        %v382 = vld [vmem:[#allocation3 + $0x3e4] sm:$0xff]
        %v383 = vld [vmem:[#allocation3 + $0x3ec] sm:$0xf]
        %v384 = vld [vmem:[#allocation3 + $0x3f0] sm:$0xff]
        %v385 = vld [vmem:[#allocation3 + $0x3f8] sm:$0xff]
        %v386 = vld [vmem:[#allocation3 + $0x400] sm:$0xff]
        %v387 = vld [vmem:[#allocation3 + $0x408] sm:$0xff]
        %v388 = vld [vmem:[#allocation3 + $0x410] sm:$0xf]
        %v389 = vld [vmem:[#allocation3 + $0x414] sm:$0xff]
        %v390 = vld [vmem:[#allocation3 + $0x41c] sm:$0xff]
        %v391 = vld [vmem:[#allocation3 + $0x424] sm:$0xff]
        %v392 = vld [vmem:[#allocation3 + $0x42c] sm:$0xff]
        %v393 = vld [vmem:[#allocation3 + $0x434] sm:$0xf]
        %v394 = vld [vmem:[#allocation3 + $0x438] sm:$0xff]
        %v395 = vld [vmem:[#allocation3 + $0x440] sm:$0xff]
        %v396 = vld [vmem:[#allocation3 + $0x448] sm:$0xff]
        %v397 = vld [vmem:[#allocation3 + $0x450] sm:$0xff]
        %v398 = vld [vmem:[#allocation3 + $0x458] sm:$0xf]
        %v399 = vld [vmem:[#allocation3 + $0x45c] sm:$0xff]
        %v400 = vld [vmem:[#allocation3 + $0x464] sm:$0xff]
        %v401 = vld [vmem:[#allocation3 + $0x46c] sm:$0xff]
        %v402 = vld [vmem:[#allocation3 + $0x474] sm:$0xff]
        %v403 = vld [vmem:[#allocation3 + $0x47c] sm:$0xf]
        %v404 = vld [vmem:[#allocation3 + $0x480] sm:$0xff]
        %v405 = vld [vmem:[#allocation3 + $0x488] sm:$0xff]
        %v406 = vld [vmem:[#allocation3 + $0x490] sm:$0xff]
        %v407 = vld [vmem:[#allocation3 + $0x498] sm:$0xff]
        %v408 = vld [vmem:[#allocation3 + $0x4a0] sm:$0xf]
        %v409 = vld [vmem:[#allocation3 + $0x4a4] sm:$0xff]
        %v410 = vld [vmem:[#allocation3 + $0x4ac] sm:$0xff]
        %v411 = vld [vmem:[#allocation3 + $0x4b4] sm:$0xff]
        %v412 = vld [vmem:[#allocation3 + $0x4bc] sm:$0xff]
        %v413 = vld [vmem:[#allocation3 + $0x4c4] sm:$0xf]
        %v414 = vld [vmem:[#allocation3 + $0x4c8] sm:$0xff]
        %v415 = vld [vmem:[#allocation3 + $0x4d0] sm:$0xff]
        %v416 = vld [vmem:[#allocation3 + $0x4d8] sm:$0xff]
        %v417 = vld [vmem:[#allocation3 + $0x4e0] sm:$0xff]
        %v418 = vld [vmem:[#allocation3 + $0x4e8] sm:$0xf]
        %v419 = vld [vmem:[#allocation3 + $0x4ec] sm:$0xff]
        %v420 = vld [vmem:[#allocation3 + $0x4f4] sm:$0xff]
        %v421 = vld [vmem:[#allocation3 + $0x4fc] sm:$0xff]
        %v422 = vld [vmem:[#allocation3 + $0x504] sm:$0xff]
        %v423 = vld [vmem:[#allocation3 + $0x50c] sm:$0xf]
        %v424 = vld [vmem:[#allocation3 + $0x510] sm:$0xff]
        %v425 = vld [vmem:[#allocation3 + $0x518] sm:$0xff]
        %v426 = vld [vmem:[#allocation3 + $0x520] sm:$0xff]
        %v427 = vld [vmem:[#allocation3 + $0x528] sm:$0xff]
        %v428 = vld [vmem:[#allocation3 + $0x530] sm:$0xf]
        %v429 = vld [vmem:[#allocation3 + $0x534] sm:$0xff]
        %v430 = vld [vmem:[#allocation3 + $0x53c] sm:$0xff]
        %v431 = vld [vmem:[#allocation3 + $0x544] sm:$0xff]
        %v432 = vld [vmem:[#allocation3 + $0x54c] sm:$0xff]
        %v433 = vld [vmem:[#allocation3 + $0x554] sm:$0xf]
        %v434 = vld [vmem:[#allocation3 + $0x558] sm:$0xff]
        %v435 = vld [vmem:[#allocation3 + $0x560] sm:$0xff]
        %v436 = vld [vmem:[#allocation3 + $0x568] sm:$0xff]
        %v437 = vld [vmem:[#allocation3 + $0x570] sm:$0xff]
        %v438 = vld [vmem:[#allocation3 + $0x578] sm:$0xf]
        %v439 = vld [vmem:[#allocation3 + $0x57c] sm:$0xff]
        %v440 = vld [vmem:[#allocation3 + $0x584] sm:$0xff]
        %v441 = vld [vmem:[#allocation3 + $0x58c] sm:$0xff]
        %v442 = vld [vmem:[#allocation3 + $0x594] sm:$0xff]
        %v443 = vld [vmem:[#allocation3 + $0x59c] sm:$0xf]
        %v444 = vld [vmem:[#allocation3 + $0x5a0] sm:$0xff]
        %v445 = vld [vmem:[#allocation3 + $0x5a8] sm:$0xff]
        %v446 = vld [vmem:[#allocation3 + $0x5b0] sm:$0xff]
        %v447 = vld [vmem:[#allocation3 + $0x5b8] sm:$0xff]
        %v448 = vld [vmem:[#allocation3 + $0x5c0] sm:$0xf]
        %v449 = vld [vmem:[#allocation3 + $0x5c4] sm:$0xff]
        %v450 = vld [vmem:[#allocation3 + $0x5cc] sm:$0xff]
        %v451 = vld [vmem:[#allocation3 + $0x5d4] sm:$0xff]
        %v452 = vld [vmem:[#allocation3 + $0x5dc] sm:$0xff]
        %v453 = vld [vmem:[#allocation3 + $0x5e4] sm:$0xf]
        %v454 = vld [vmem:[#allocation3 + $0x5e8] sm:$0xff]
        %v455 = vld [vmem:[#allocation3 + $0x5f0] sm:$0xff]
        %v456 = vld [vmem:[#allocation3 + $0x5f8] sm:$0xff]
        %v457 = vld [vmem:[#allocation3 + $0x600] sm:$0xff]
        %v458 = vld [vmem:[#allocation3 + $0x608] sm:$0xf]
        %v459 = vld [vmem:[#allocation3 + $0x60c] sm:$0xff]
        %v460 = vld [vmem:[#allocation3 + $0x614] sm:$0xff]
        %v461 = vld [vmem:[#allocation3 + $0x61c] sm:$0xff]
        %v462 = vld [vmem:[#allocation3 + $0x624] sm:$0xff]
        %v463 = vld [vmem:[#allocation3 + $0x62c] sm:$0xf]
        %v464 = vld [vmem:[#allocation3 + $0x630] sm:$0xff]
        %v465 = vld [vmem:[#allocation3 + $0x638] sm:$0xff]
        %v466 = vld [vmem:[#allocation3 + $0x640] sm:$0xff]
        %v467 = vld [vmem:[#allocation3 + $0x648] sm:$0xff]
        %v468 = vld [vmem:[#allocation3 + $0x650] sm:$0xf]
        %v469 = vld [vmem:[#allocation3 + $0x654] sm:$0xff]
        %v470 = vld [vmem:[#allocation3 + $0x65c] sm:$0xff]
        %v471 = vld [vmem:[#allocation3 + $0x664] sm:$0xff]
        %v472 = vld [vmem:[#allocation3 + $0x66c] sm:$0xff]
        %v473 = vld [vmem:[#allocation3 + $0x674] sm:$0xf]
        %v474 = vld [vmem:[#allocation3 + $0x678] sm:$0xff]
        %v475 = vld [vmem:[#allocation3 + $0x680] sm:$0xff]
        %v476 = vld [vmem:[#allocation3 + $0x688] sm:$0xff]
        %v477 = vld [vmem:[#allocation3 + $0x690] sm:$0xff]
        %v478 = vld [vmem:[#allocation3 + $0x698] sm:$0xf]
        %v479 = vld [vmem:[#allocation3 + $0x69c] sm:$0xff]
        %v480 = vld [vmem:[#allocation3 + $0x6a4] sm:$0xff]
        %v481 = vld [vmem:[#allocation3 + $0x6ac] sm:$0xff]
        %v482 = vld [vmem:[#allocation3 + $0x6b4] sm:$0xff]
        %v483 = vld [vmem:[#allocation3 + $0x6bc] sm:$0xf]
        %v516 = vunpack.c.l.b16 %v212
        %v517 = vunpack.c.h.b16 %v212
        %v518 = vunpack.c.l.b16 %v213
        %v519 = vunpack.c.l.b16 %v214
        %v520 = vunpack.c.h.b16 %v214
        %v521 = vunpack.c.l.b16 %v215
        %v522 = vunpack.c.l.b16 %v216
        %v523 = vunpack.c.h.b16 %v216
        %v524 = vunpack.c.l.b16 %v217
        %v525 = vunpack.c.l.b16 %v218
        %v526 = vunpack.c.h.b16 %v218
        %v527 = vunpack.c.l.b16 %v219
        %v528 = vunpack.c.l.b16 %v220
        %v529 = vunpack.c.h.b16 %v220
        %v530 = vunpack.c.l.b16 %v221
        %v531 = vunpack.c.l.b16 %v222
        %v532 = vunpack.c.h.b16 %v222
        %v533 = vunpack.c.l.b16 %v223
        %v534 = vunpack.c.l.b16 %v224
        %v535 = vunpack.c.h.b16 %v224
        %v536 = vunpack.c.l.b16 %v225
        %v537 = vunpack.c.l.b16 %v226
        %v538 = vunpack.c.h.b16 %v226
        %v539 = vunpack.c.l.b16 %v227
        %v540 = vunpack.c.l.b16 %v228
        %v541 = vunpack.c.h.b16 %v228
        %v542 = vunpack.c.l.b16 %v229
        %v543 = vunpack.c.l.b16 %v230
        %v544 = vunpack.c.h.b16 %v230
        %v545 = vunpack.c.l.b16 %v231
        %v546 = vunpack.c.l.b16 %v232
        %v547 = vunpack.c.h.b16 %v232
        %v548 = vunpack.c.l.b16 %v233
        %v549 = vunpack.c.l.b16 %v234
        %v550 = vunpack.c.h.b16 %v234
        %v551 = vunpack.c.l.b16 %v235
        %v552 = vunpack.c.l.b16 %v236
        %v553 = vunpack.c.h.b16 %v236
        %v554 = vunpack.c.l.b16 %v237
        %v555 = vunpack.c.l.b16 %v238
        %v556 = vunpack.c.h.b16 %v238
        %v557 = vunpack.c.l.b16 %v239
        %v558 = vunpack.c.l.b16 %v240
        %v559 = vunpack.c.h.b16 %v240
        %v560 = vunpack.c.l.b16 %v241
        %v561 = vunpack.c.l.b16 %v242
        %v562 = vunpack.c.h.b16 %v242
        %v563 = vunpack.c.l.b16 %v243
        %v564 = vpack.c.b16 %v519, %v516
        %v565 = vpack.c.b16 %v520, %v517
        %v566 = vpack.c.b16 %v521, %v518
        %v567 = vpack.c.b16 %v525, %v522
        %v568 = vpack.c.b16 %v526, %v523
        %v569 = vpack.c.b16 %v527, %v524
        %v570 = vpack.c.b16 %v531, %v528
        %v571 = vpack.c.b16 %v532, %v529
        %v572 = vpack.c.b16 %v533, %v530
        %v573 = vpack.c.b16 %v537, %v534
        %v574 = vpack.c.b16 %v538, %v535
        %v575 = vpack.c.b16 %v539, %v536
        %v576 = vpack.c.b16 %v543, %v540
        %v577 = vpack.c.b16 %v544, %v541
        %v578 = vpack.c.b16 %v545, %v542
        %v579 = vpack.c.b16 %v549, %v546
        %v580 = vpack.c.b16 %v550, %v547
        %v581 = vpack.c.b16 %v551, %v548
        %v582 = vpack.c.b16 %v555, %v552
        %v583 = vpack.c.b16 %v556, %v553
        %v584 = vpack.c.b16 %v557, %v554
        %v585 = vpack.c.b16 %v561, %v558
        %v586 = vpack.c.b16 %v562, %v559
        %v587 = vpack.c.b16 %v563, %v560
        %v852 = vunpack.c.l.b16 %v244
        %v853 = vunpack.c.h.b16 %v244
        %v854 = vunpack.c.l.b16 %v245
        %v855 = vunpack.c.h.b16 %v245
        %v856 = vunpack.c.l.b16 %v246
        %v857 = vunpack.c.h.b16 %v246
        %v858 = vunpack.c.l.b16 %v247
        %v859 = vunpack.c.h.b16 %v247
        %v860 = vunpack.c.l.b16 %v248
        %v861 = vunpack.c.l.b16 %v249
        %v862 = vunpack.c.h.b16 %v249
        %v863 = vunpack.c.l.b16 %v250
        %v864 = vunpack.c.h.b16 %v250
        %v865 = vunpack.c.l.b16 %v251
        %v866 = vunpack.c.h.b16 %v251
        %v867 = vunpack.c.l.b16 %v252
        %v868 = vunpack.c.h.b16 %v252
        %v869 = vunpack.c.l.b16 %v253
        %v870 = vunpack.c.l.b16 %v254
        %v871 = vunpack.c.h.b16 %v254
        %v872 = vunpack.c.l.b16 %v255
        %v873 = vunpack.c.h.b16 %v255
        %v874 = vunpack.c.l.b16 %v256
        %v875 = vunpack.c.h.b16 %v256
        %v876 = vunpack.c.l.b16 %v257
        %v877 = vunpack.c.h.b16 %v257
        %v878 = vunpack.c.l.b16 %v258
        %v879 = vunpack.c.l.b16 %v259
        %v880 = vunpack.c.h.b16 %v259
        %v881 = vunpack.c.l.b16 %v260
        %v882 = vunpack.c.h.b16 %v260
        %v883 = vunpack.c.l.b16 %v261
        %v884 = vunpack.c.h.b16 %v261
        %v885 = vunpack.c.l.b16 %v262
        %v886 = vunpack.c.h.b16 %v262
        %v887 = vunpack.c.l.b16 %v263
        %v888 = vunpack.c.l.b16 %v264
        %v889 = vunpack.c.h.b16 %v264
        %v890 = vunpack.c.l.b16 %v265
        %v891 = vunpack.c.h.b16 %v265
        %v892 = vunpack.c.l.b16 %v266
        %v893 = vunpack.c.h.b16 %v266
        %v894 = vunpack.c.l.b16 %v267
        %v895 = vunpack.c.h.b16 %v267
        %v896 = vunpack.c.l.b16 %v268
        %v897 = vunpack.c.l.b16 %v269
        %v898 = vunpack.c.h.b16 %v269
        %v899 = vunpack.c.l.b16 %v270
        %v900 = vunpack.c.h.b16 %v270
        %v901 = vunpack.c.l.b16 %v271
        %v902 = vunpack.c.h.b16 %v271
        %v903 = vunpack.c.l.b16 %v272
        %v904 = vunpack.c.h.b16 %v272
        %v905 = vunpack.c.l.b16 %v273
        %v906 = vunpack.c.l.b16 %v274
        %v907 = vunpack.c.h.b16 %v274
        %v908 = vunpack.c.l.b16 %v275
        %v909 = vunpack.c.h.b16 %v275
        %v910 = vunpack.c.l.b16 %v276
        %v911 = vunpack.c.h.b16 %v276
        %v912 = vunpack.c.l.b16 %v277
        %v913 = vunpack.c.h.b16 %v277
        %v914 = vunpack.c.l.b16 %v278
        %v915 = vunpack.c.l.b16 %v279
        %v916 = vunpack.c.h.b16 %v279
        %v917 = vunpack.c.l.b16 %v280
        %v918 = vunpack.c.h.b16 %v280
        %v919 = vunpack.c.l.b16 %v281
        %v920 = vunpack.c.h.b16 %v281
        %v921 = vunpack.c.l.b16 %v282
        %v922 = vunpack.c.h.b16 %v282
        %v923 = vunpack.c.l.b16 %v283
        %v924 = vunpack.c.l.b16 %v284
        %v925 = vunpack.c.h.b16 %v284
        %v926 = vunpack.c.l.b16 %v285
        %v927 = vunpack.c.h.b16 %v285
        %v928 = vunpack.c.l.b16 %v286
        %v929 = vunpack.c.h.b16 %v286
        %v930 = vunpack.c.l.b16 %v287
        %v931 = vunpack.c.h.b16 %v287
        %v932 = vunpack.c.l.b16 %v288
        %v933 = vunpack.c.l.b16 %v289
        %v934 = vunpack.c.h.b16 %v289
        %v935 = vunpack.c.l.b16 %v290
        %v936 = vunpack.c.h.b16 %v290
        %v937 = vunpack.c.l.b16 %v291
        %v938 = vunpack.c.h.b16 %v291
        %v939 = vunpack.c.l.b16 %v292
        %v940 = vunpack.c.h.b16 %v292
        %v941 = vunpack.c.l.b16 %v293
        %v942 = vunpack.c.l.b16 %v294
        %v943 = vunpack.c.h.b16 %v294
        %v944 = vunpack.c.l.b16 %v295
        %v945 = vunpack.c.h.b16 %v295
        %v946 = vunpack.c.l.b16 %v296
        %v947 = vunpack.c.h.b16 %v296
        %v948 = vunpack.c.l.b16 %v297
        %v949 = vunpack.c.h.b16 %v297
        %v950 = vunpack.c.l.b16 %v298
        %v951 = vunpack.c.l.b16 %v299
        %v952 = vunpack.c.h.b16 %v299
        %v953 = vunpack.c.l.b16 %v300
        %v954 = vunpack.c.h.b16 %v300
        %v955 = vunpack.c.l.b16 %v301
        %v956 = vunpack.c.h.b16 %v301
        %v957 = vunpack.c.l.b16 %v302
        %v958 = vunpack.c.h.b16 %v302
        %v959 = vunpack.c.l.b16 %v303
        %v960 = vunpack.c.l.b16 %v304
        %v961 = vunpack.c.h.b16 %v304
        %v962 = vunpack.c.l.b16 %v305
        %v963 = vunpack.c.h.b16 %v305
        %v964 = vunpack.c.l.b16 %v306
        %v965 = vunpack.c.h.b16 %v306
        %v966 = vunpack.c.l.b16 %v307
        %v967 = vunpack.c.h.b16 %v307
        %v968 = vunpack.c.l.b16 %v308
        %v969 = vunpack.c.l.b16 %v309
        %v970 = vunpack.c.h.b16 %v309
        %v971 = vunpack.c.l.b16 %v310
        %v972 = vunpack.c.h.b16 %v310
        %v973 = vunpack.c.l.b16 %v311
        %v974 = vunpack.c.h.b16 %v311
        %v975 = vunpack.c.l.b16 %v312
        %v976 = vunpack.c.h.b16 %v312
        %v977 = vunpack.c.l.b16 %v313
        %v978 = vunpack.c.l.b16 %v314
        %v979 = vunpack.c.h.b16 %v314
        %v980 = vunpack.c.l.b16 %v315
        %v981 = vunpack.c.h.b16 %v315
        %v982 = vunpack.c.l.b16 %v316
        %v983 = vunpack.c.h.b16 %v316
        %v984 = vunpack.c.l.b16 %v317
        %v985 = vunpack.c.h.b16 %v317
        %v986 = vunpack.c.l.b16 %v318
        %v987 = vunpack.c.l.b16 %v319
        %v988 = vunpack.c.h.b16 %v319
        %v989 = vunpack.c.l.b16 %v320
        %v990 = vunpack.c.h.b16 %v320
        %v991 = vunpack.c.l.b16 %v321
        %v992 = vunpack.c.h.b16 %v321
        %v993 = vunpack.c.l.b16 %v322
        %v994 = vunpack.c.h.b16 %v322
        %v995 = vunpack.c.l.b16 %v323
        %v996 = vunpack.c.l.b16 %v324
        %v997 = vunpack.c.h.b16 %v324
        %v998 = vunpack.c.l.b16 %v325
        %v999 = vunpack.c.h.b16 %v325
        %v1000 = vunpack.c.l.b16 %v326
        %v1001 = vunpack.c.h.b16 %v326
        %v1002 = vunpack.c.l.b16 %v327
        %v1003 = vunpack.c.h.b16 %v327
        %v1004 = vunpack.c.l.b16 %v328
        %v1005 = vunpack.c.l.b16 %v329
        %v1006 = vunpack.c.h.b16 %v329
        %v1007 = vunpack.c.l.b16 %v330
        %v1008 = vunpack.c.h.b16 %v330
        %v1009 = vunpack.c.l.b16 %v331
        %v1010 = vunpack.c.h.b16 %v331
        %v1011 = vunpack.c.l.b16 %v332
        %v1012 = vunpack.c.h.b16 %v332
        %v1013 = vunpack.c.l.b16 %v333
        %v1014 = vunpack.c.l.b16 %v334
        %v1015 = vunpack.c.h.b16 %v334
        %v1016 = vunpack.c.l.b16 %v335
        %v1017 = vunpack.c.h.b16 %v335
        %v1018 = vunpack.c.l.b16 %v336
        %v1019 = vunpack.c.h.b16 %v336
        %v1020 = vunpack.c.l.b16 %v337
        %v1021 = vunpack.c.h.b16 %v337
        %v1022 = vunpack.c.l.b16 %v338
        %v1023 = vunpack.c.l.b16 %v339
        %v1024 = vunpack.c.h.b16 %v339
        %v1025 = vunpack.c.l.b16 %v340
        %v1026 = vunpack.c.h.b16 %v340
        %v1027 = vunpack.c.l.b16 %v341
        %v1028 = vunpack.c.h.b16 %v341
        %v1029 = vunpack.c.l.b16 %v342
        %v1030 = vunpack.c.h.b16 %v342
        %v1031 = vunpack.c.l.b16 %v343
        %v1032 = vunpack.c.l.b16 %v344
        %v1033 = vunpack.c.h.b16 %v344
        %v1034 = vunpack.c.l.b16 %v345
        %v1035 = vunpack.c.h.b16 %v345
        %v1036 = vunpack.c.l.b16 %v346
        %v1037 = vunpack.c.h.b16 %v346
        %v1038 = vunpack.c.l.b16 %v347
        %v1039 = vunpack.c.h.b16 %v347
        %v1040 = vunpack.c.l.b16 %v348
        %v1041 = vunpack.c.l.b16 %v349
        %v1042 = vunpack.c.h.b16 %v349
        %v1043 = vunpack.c.l.b16 %v350
        %v1044 = vunpack.c.h.b16 %v350
        %v1045 = vunpack.c.l.b16 %v351
        %v1046 = vunpack.c.h.b16 %v351
        %v1047 = vunpack.c.l.b16 %v352
        %v1048 = vunpack.c.h.b16 %v352
        %v1049 = vunpack.c.l.b16 %v353
        %v1050 = vunpack.c.l.b16 %v354
        %v1051 = vunpack.c.h.b16 %v354
        %v1052 = vunpack.c.l.b16 %v355
        %v1053 = vunpack.c.h.b16 %v355
        %v1054 = vunpack.c.l.b16 %v356
        %v1055 = vunpack.c.h.b16 %v356
        %v1056 = vunpack.c.l.b16 %v357
        %v1057 = vunpack.c.h.b16 %v357
        %v1058 = vunpack.c.l.b16 %v358
        %v1059 = vunpack.c.l.b16 %v359
        %v1060 = vunpack.c.h.b16 %v359
        %v1061 = vunpack.c.l.b16 %v360
        %v1062 = vunpack.c.h.b16 %v360
        %v1063 = vunpack.c.l.b16 %v361
        %v1064 = vunpack.c.h.b16 %v361
        %v1065 = vunpack.c.l.b16 %v362
        %v1066 = vunpack.c.h.b16 %v362
        %v1067 = vunpack.c.l.b16 %v363
        %v1068 = vunpack.c.l.b16 %v364
        %v1069 = vunpack.c.h.b16 %v364
        %v1070 = vunpack.c.l.b16 %v365
        %v1071 = vunpack.c.h.b16 %v365
        %v1072 = vunpack.c.l.b16 %v366
        %v1073 = vunpack.c.h.b16 %v366
        %v1074 = vunpack.c.l.b16 %v367
        %v1075 = vunpack.c.h.b16 %v367
        %v1076 = vunpack.c.l.b16 %v368
        %v1077 = vunpack.c.l.b16 %v369
        %v1078 = vunpack.c.h.b16 %v369
        %v1079 = vunpack.c.l.b16 %v370
        %v1080 = vunpack.c.h.b16 %v370
        %v1081 = vunpack.c.l.b16 %v371
        %v1082 = vunpack.c.h.b16 %v371
        %v1083 = vunpack.c.l.b16 %v372
        %v1084 = vunpack.c.h.b16 %v372
        %v1085 = vunpack.c.l.b16 %v373
        %v1086 = vunpack.c.l.b16 %v374
        %v1087 = vunpack.c.h.b16 %v374
        %v1088 = vunpack.c.l.b16 %v375
        %v1089 = vunpack.c.h.b16 %v375
        %v1090 = vunpack.c.l.b16 %v376
        %v1091 = vunpack.c.h.b16 %v376
        %v1092 = vunpack.c.l.b16 %v377
        %v1093 = vunpack.c.h.b16 %v377
        %v1094 = vunpack.c.l.b16 %v378
        %v1095 = vunpack.c.l.b16 %v379
        %v1096 = vunpack.c.h.b16 %v379
        %v1097 = vunpack.c.l.b16 %v380
        %v1098 = vunpack.c.h.b16 %v380
        %v1099 = vunpack.c.l.b16 %v381
        %v1100 = vunpack.c.h.b16 %v381
        %v1101 = vunpack.c.l.b16 %v382
        %v1102 = vunpack.c.h.b16 %v382
        %v1103 = vunpack.c.l.b16 %v383
        %v1104 = vunpack.c.l.b16 %v384
        %v1105 = vunpack.c.h.b16 %v384
        %v1106 = vunpack.c.l.b16 %v385
        %v1107 = vunpack.c.h.b16 %v385
        %v1108 = vunpack.c.l.b16 %v386
        %v1109 = vunpack.c.h.b16 %v386
        %v1110 = vunpack.c.l.b16 %v387
        %v1111 = vunpack.c.h.b16 %v387
        %v1112 = vunpack.c.l.b16 %v388
        %v1113 = vunpack.c.l.b16 %v389
        %v1114 = vunpack.c.h.b16 %v389
        %v1115 = vunpack.c.l.b16 %v390
        %v1116 = vunpack.c.h.b16 %v390
        %v1117 = vunpack.c.l.b16 %v391
        %v1118 = vunpack.c.h.b16 %v391
        %v1119 = vunpack.c.l.b16 %v392
        %v1120 = vunpack.c.h.b16 %v392
        %v1121 = vunpack.c.l.b16 %v393
        %v1122 = vunpack.c.l.b16 %v394
        %v1123 = vunpack.c.h.b16 %v394
        %v1124 = vunpack.c.l.b16 %v395
        %v1125 = vunpack.c.h.b16 %v395
        %v1126 = vunpack.c.l.b16 %v396
        %v1127 = vunpack.c.h.b16 %v396
        %v1128 = vunpack.c.l.b16 %v397
        %v1129 = vunpack.c.h.b16 %v397
        %v1130 = vunpack.c.l.b16 %v398
        %v1131 = vunpack.c.l.b16 %v399
        %v1132 = vunpack.c.h.b16 %v399
        %v1133 = vunpack.c.l.b16 %v400
        %v1134 = vunpack.c.h.b16 %v400
        %v1135 = vunpack.c.l.b16 %v401
        %v1136 = vunpack.c.h.b16 %v401
        %v1137 = vunpack.c.l.b16 %v402
        %v1138 = vunpack.c.h.b16 %v402
        %v1139 = vunpack.c.l.b16 %v403
        %v1140 = vunpack.c.l.b16 %v404
        %v1141 = vunpack.c.h.b16 %v404
        %v1142 = vunpack.c.l.b16 %v405
        %v1143 = vunpack.c.h.b16 %v405
        %v1144 = vunpack.c.l.b16 %v406
        %v1145 = vunpack.c.h.b16 %v406
        %v1146 = vunpack.c.l.b16 %v407
        %v1147 = vunpack.c.h.b16 %v407
        %v1148 = vunpack.c.l.b16 %v408
        %v1149 = vunpack.c.l.b16 %v409
        %v1150 = vunpack.c.h.b16 %v409
        %v1151 = vunpack.c.l.b16 %v410
        %v1152 = vunpack.c.h.b16 %v410
        %v1153 = vunpack.c.l.b16 %v411
        %v1154 = vunpack.c.h.b16 %v411
        %v1155 = vunpack.c.l.b16 %v412
        %v1156 = vunpack.c.h.b16 %v412
        %v1157 = vunpack.c.l.b16 %v413
        %v1158 = vunpack.c.l.b16 %v414
        %v1159 = vunpack.c.h.b16 %v414
        %v1160 = vunpack.c.l.b16 %v415
        %v1161 = vunpack.c.h.b16 %v415
        %v1162 = vunpack.c.l.b16 %v416
        %v1163 = vunpack.c.h.b16 %v416
        %v1164 = vunpack.c.l.b16 %v417
        %v1165 = vunpack.c.h.b16 %v417
        %v1166 = vunpack.c.l.b16 %v418
        %v1167 = vunpack.c.l.b16 %v419
        %v1168 = vunpack.c.h.b16 %v419
        %v1169 = vunpack.c.l.b16 %v420
        %v1170 = vunpack.c.h.b16 %v420
        %v1171 = vunpack.c.l.b16 %v421
        %v1172 = vunpack.c.h.b16 %v421
        %v1173 = vunpack.c.l.b16 %v422
        %v1174 = vunpack.c.h.b16 %v422
        %v1175 = vunpack.c.l.b16 %v423
        %v1176 = vunpack.c.l.b16 %v424
        %v1177 = vunpack.c.h.b16 %v424
        %v1178 = vunpack.c.l.b16 %v425
        %v1179 = vunpack.c.h.b16 %v425
        %v1180 = vunpack.c.l.b16 %v426
        %v1181 = vunpack.c.h.b16 %v426
        %v1182 = vunpack.c.l.b16 %v427
        %v1183 = vunpack.c.h.b16 %v427
        %v1184 = vunpack.c.l.b16 %v428
        %v1185 = vunpack.c.l.b16 %v429
        %v1186 = vunpack.c.h.b16 %v429
        %v1187 = vunpack.c.l.b16 %v430
        %v1188 = vunpack.c.h.b16 %v430
        %v1189 = vunpack.c.l.b16 %v431
        %v1190 = vunpack.c.h.b16 %v431
        %v1191 = vunpack.c.l.b16 %v432
        %v1192 = vunpack.c.h.b16 %v432
        %v1193 = vunpack.c.l.b16 %v433
        %v1194 = vunpack.c.l.b16 %v434
        %v1195 = vunpack.c.h.b16 %v434
        %v1196 = vunpack.c.l.b16 %v435
        %v1197 = vunpack.c.h.b16 %v435
        %v1198 = vunpack.c.l.b16 %v436
        %v1199 = vunpack.c.h.b16 %v436
        %v1200 = vunpack.c.l.b16 %v437
        %v1201 = vunpack.c.h.b16 %v437
        %v1202 = vunpack.c.l.b16 %v438
        %v1203 = vunpack.c.l.b16 %v439
        %v1204 = vunpack.c.h.b16 %v439
        %v1205 = vunpack.c.l.b16 %v440
        %v1206 = vunpack.c.h.b16 %v440
        %v1207 = vunpack.c.l.b16 %v441
        %v1208 = vunpack.c.h.b16 %v441
        %v1209 = vunpack.c.l.b16 %v442
        %v1210 = vunpack.c.h.b16 %v442
        %v1211 = vunpack.c.l.b16 %v443
        %v1212 = vunpack.c.l.b16 %v444
        %v1213 = vunpack.c.h.b16 %v444
        %v1214 = vunpack.c.l.b16 %v445
        %v1215 = vunpack.c.h.b16 %v445
        %v1216 = vunpack.c.l.b16 %v446
        %v1217 = vunpack.c.h.b16 %v446
        %v1218 = vunpack.c.l.b16 %v447
        %v1219 = vunpack.c.h.b16 %v447
        %v1220 = vunpack.c.l.b16 %v448
        %v1221 = vunpack.c.l.b16 %v449
        %v1222 = vunpack.c.h.b16 %v449
        %v1223 = vunpack.c.l.b16 %v450
        %v1224 = vunpack.c.h.b16 %v450
        %v1225 = vunpack.c.l.b16 %v451
        %v1226 = vunpack.c.h.b16 %v451
        %v1227 = vunpack.c.l.b16 %v452
        %v1228 = vunpack.c.h.b16 %v452
        %v1229 = vunpack.c.l.b16 %v453
        %v1230 = vunpack.c.l.b16 %v454
        %v1231 = vunpack.c.h.b16 %v454
        %v1232 = vunpack.c.l.b16 %v455
        %v1233 = vunpack.c.h.b16 %v455
        %v1234 = vunpack.c.l.b16 %v456
        %v1235 = vunpack.c.h.b16 %v456
        %v1236 = vunpack.c.l.b16 %v457
        %v1237 = vunpack.c.h.b16 %v457
        %v1238 = vunpack.c.l.b16 %v458
        %v1239 = vunpack.c.l.b16 %v459
        %v1240 = vunpack.c.h.b16 %v459
        %v1241 = vunpack.c.l.b16 %v460
        %v1242 = vunpack.c.h.b16 %v460
        %v1243 = vunpack.c.l.b16 %v461
        %v1244 = vunpack.c.h.b16 %v461
        %v1245 = vunpack.c.l.b16 %v462
        %v1246 = vunpack.c.h.b16 %v462
        %v1247 = vunpack.c.l.b16 %v463
        %v1248 = vunpack.c.l.b16 %v464
        %v1249 = vunpack.c.h.b16 %v464
        %v1250 = vunpack.c.l.b16 %v465
        %v1251 = vunpack.c.h.b16 %v465
        %v1252 = vunpack.c.l.b16 %v466
        %v1253 = vunpack.c.h.b16 %v466
        %v1254 = vunpack.c.l.b16 %v467
        %v1255 = vunpack.c.h.b16 %v467
        %v1256 = vunpack.c.l.b16 %v468
        %v1257 = vunpack.c.l.b16 %v469
        %v1258 = vunpack.c.h.b16 %v469
        %v1259 = vunpack.c.l.b16 %v470
        %v1260 = vunpack.c.h.b16 %v470
        %v1261 = vunpack.c.l.b16 %v471
        %v1262 = vunpack.c.h.b16 %v471
        %v1263 = vunpack.c.l.b16 %v472
        %v1264 = vunpack.c.h.b16 %v472
        %v1265 = vunpack.c.l.b16 %v473
        %v1266 = vunpack.c.l.b16 %v474
        %v1267 = vunpack.c.h.b16 %v474
        %v1268 = vunpack.c.l.b16 %v475
        %v1269 = vunpack.c.h.b16 %v475
        %v1270 = vunpack.c.l.b16 %v476
        %v1271 = vunpack.c.h.b16 %v476
        %v1272 = vunpack.c.l.b16 %v477
        %v1273 = vunpack.c.h.b16 %v477
        %v1274 = vunpack.c.l.b16 %v478
        %v1275 = vunpack.c.l.b16 %v479
        %v1276 = vunpack.c.h.b16 %v479
        %v1277 = vunpack.c.l.b16 %v480
        %v1278 = vunpack.c.h.b16 %v480
        %v1279 = vunpack.c.l.b16 %v481
        %v1280 = vunpack.c.h.b16 %v481
        %v1281 = vunpack.c.l.b16 %v482
        %v1282 = vunpack.c.h.b16 %v482
        %v1283 = vunpack.c.l.b16 %v483
        %v1284 = vpack.c.b16 %v861, %v852
        %v1285 = vpack.c.b16 %v862, %v853
        %v1286 = vpack.c.b16 %v863, %v854
        %v1287 = vpack.c.b16 %v864, %v855
        %v1288 = vpack.c.b16 %v865, %v856
        %v1289 = vpack.c.b16 %v866, %v857
        %v1290 = vpack.c.b16 %v867, %v858
        %v1291 = vpack.c.b16 %v868, %v859
        %v1292 = vpack.c.b16 %v869, %v860
        %v1293 = vpack.c.b16 %v879, %v870
        %v1294 = vpack.c.b16 %v880, %v871
        %v1295 = vpack.c.b16 %v881, %v872
        %v1296 = vpack.c.b16 %v882, %v873
        %v1297 = vpack.c.b16 %v883, %v874
        %v1298 = vpack.c.b16 %v884, %v875
        %v1299 = vpack.c.b16 %v885, %v876
        %v1300 = vpack.c.b16 %v886, %v877
        %v1301 = vpack.c.b16 %v887, %v878
        %v1302 = vpack.c.b16 %v897, %v888
        %v1303 = vpack.c.b16 %v898, %v889
        %v1304 = vpack.c.b16 %v899, %v890
        %v1305 = vpack.c.b16 %v900, %v891
        %v1306 = vpack.c.b16 %v901, %v892
        %v1307 = vpack.c.b16 %v902, %v893
        %v1308 = vpack.c.b16 %v903, %v894
        %v1309 = vpack.c.b16 %v904, %v895
        %v1310 = vpack.c.b16 %v905, %v896
        %v1311 = vpack.c.b16 %v915, %v906
        %v1312 = vpack.c.b16 %v916, %v907
        %v1313 = vpack.c.b16 %v917, %v908
        %v1314 = vpack.c.b16 %v918, %v909
        %v1315 = vpack.c.b16 %v919, %v910
        %v1316 = vpack.c.b16 %v920, %v911
        %v1317 = vpack.c.b16 %v921, %v912
        %v1318 = vpack.c.b16 %v922, %v913
        %v1319 = vpack.c.b16 %v923, %v914
        %v1320 = vpack.c.b16 %v933, %v924
        %v1321 = vpack.c.b16 %v934, %v925
        %v1322 = vpack.c.b16 %v935, %v926
        %v1323 = vpack.c.b16 %v936, %v927
        %v1324 = vpack.c.b16 %v937, %v928
        %v1325 = vpack.c.b16 %v938, %v929
        %v1326 = vpack.c.b16 %v939, %v930
        %v1327 = vpack.c.b16 %v940, %v931
        %v1328 = vpack.c.b16 %v941, %v932
        %v1329 = vpack.c.b16 %v951, %v942
        %v1330 = vpack.c.b16 %v952, %v943
        %v1331 = vpack.c.b16 %v953, %v944
        %v1332 = vpack.c.b16 %v954, %v945
        %v1333 = vpack.c.b16 %v955, %v946
        %v1334 = vpack.c.b16 %v956, %v947
        %v1335 = vpack.c.b16 %v957, %v948
        %v1336 = vpack.c.b16 %v958, %v949
        %v1337 = vpack.c.b16 %v959, %v950
        %v1338 = vpack.c.b16 %v969, %v960
        %v1339 = vpack.c.b16 %v970, %v961
        %v1340 = vpack.c.b16 %v971, %v962
        %v1341 = vpack.c.b16 %v972, %v963
        %v1342 = vpack.c.b16 %v973, %v964
        %v1343 = vpack.c.b16 %v974, %v965
        %v1344 = vpack.c.b16 %v975, %v966
        %v1345 = vpack.c.b16 %v976, %v967
        %v1346 = vpack.c.b16 %v977, %v968
        %v1347 = vpack.c.b16 %v987, %v978
        %v1348 = vpack.c.b16 %v988, %v979
        %v1349 = vpack.c.b16 %v989, %v980
        %v1350 = vpack.c.b16 %v990, %v981
        %v1351 = vpack.c.b16 %v991, %v982
        %v1352 = vpack.c.b16 %v992, %v983
        %v1353 = vpack.c.b16 %v993, %v984
        %v1354 = vpack.c.b16 %v994, %v985
        %v1355 = vpack.c.b16 %v995, %v986
        %v1356 = vpack.c.b16 %v1005, %v996
        %v1357 = vpack.c.b16 %v1006, %v997
        %v1358 = vpack.c.b16 %v1007, %v998
        %v1359 = vpack.c.b16 %v1008, %v999
        %v1360 = vpack.c.b16 %v1009, %v1000
        %v1361 = vpack.c.b16 %v1010, %v1001
        %v1362 = vpack.c.b16 %v1011, %v1002
        %v1363 = vpack.c.b16 %v1012, %v1003
        %v1364 = vpack.c.b16 %v1013, %v1004
        %v1365 = vpack.c.b16 %v1023, %v1014
        %v1366 = vpack.c.b16 %v1024, %v1015
        %v1367 = vpack.c.b16 %v1025, %v1016
        %v1368 = vpack.c.b16 %v1026, %v1017
        %v1369 = vpack.c.b16 %v1027, %v1018
        %v1370 = vpack.c.b16 %v1028, %v1019
        %v1371 = vpack.c.b16 %v1029, %v1020
        %v1372 = vpack.c.b16 %v1030, %v1021
        %v1373 = vpack.c.b16 %v1031, %v1022
        %v1374 = vpack.c.b16 %v1041, %v1032
        %v1375 = vpack.c.b16 %v1042, %v1033
        %v1376 = vpack.c.b16 %v1043, %v1034
        %v1377 = vpack.c.b16 %v1044, %v1035
        %v1378 = vpack.c.b16 %v1045, %v1036
        %v1379 = vpack.c.b16 %v1046, %v1037
        %v1380 = vpack.c.b16 %v1047, %v1038
        %v1381 = vpack.c.b16 %v1048, %v1039
        %v1382 = vpack.c.b16 %v1049, %v1040
        %v1383 = vpack.c.b16 %v1059, %v1050
        %v1384 = vpack.c.b16 %v1060, %v1051
        %v1385 = vpack.c.b16 %v1061, %v1052
        %v1386 = vpack.c.b16 %v1062, %v1053
        %v1387 = vpack.c.b16 %v1063, %v1054
        %v1388 = vpack.c.b16 %v1064, %v1055
        %v1389 = vpack.c.b16 %v1065, %v1056
        %v1390 = vpack.c.b16 %v1066, %v1057
        %v1391 = vpack.c.b16 %v1067, %v1058
        %v1392 = vpack.c.b16 %v1077, %v1068
        %v1393 = vpack.c.b16 %v1078, %v1069
        %v1394 = vpack.c.b16 %v1079, %v1070
        %v1395 = vpack.c.b16 %v1080, %v1071
        %v1396 = vpack.c.b16 %v1081, %v1072
        %v1397 = vpack.c.b16 %v1082, %v1073
        %v1398 = vpack.c.b16 %v1083, %v1074
        %v1399 = vpack.c.b16 %v1084, %v1075
        %v1400 = vpack.c.b16 %v1085, %v1076
        %v1401 = vpack.c.b16 %v1095, %v1086
        %v1402 = vpack.c.b16 %v1096, %v1087
        %v1403 = vpack.c.b16 %v1097, %v1088
        %v1404 = vpack.c.b16 %v1098, %v1089
        %v1405 = vpack.c.b16 %v1099, %v1090
        %v1406 = vpack.c.b16 %v1100, %v1091
        %v1407 = vpack.c.b16 %v1101, %v1092
        %v1408 = vpack.c.b16 %v1102, %v1093
        %v1409 = vpack.c.b16 %v1103, %v1094
        %v1410 = vpack.c.b16 %v1113, %v1104
        %v1411 = vpack.c.b16 %v1114, %v1105
        %v1412 = vpack.c.b16 %v1115, %v1106
        %v1413 = vpack.c.b16 %v1116, %v1107
        %v1414 = vpack.c.b16 %v1117, %v1108
        %v1415 = vpack.c.b16 %v1118, %v1109
        %v1416 = vpack.c.b16 %v1119, %v1110
        %v1417 = vpack.c.b16 %v1120, %v1111
        %v1418 = vpack.c.b16 %v1121, %v1112
        %v1419 = vpack.c.b16 %v1131, %v1122
        %v1420 = vpack.c.b16 %v1132, %v1123
        %v1421 = vpack.c.b16 %v1133, %v1124
        %v1422 = vpack.c.b16 %v1134, %v1125
        %v1423 = vpack.c.b16 %v1135, %v1126
        %v1424 = vpack.c.b16 %v1136, %v1127
        %v1425 = vpack.c.b16 %v1137, %v1128
        %v1426 = vpack.c.b16 %v1138, %v1129
        %v1427 = vpack.c.b16 %v1139, %v1130
        %v1428 = vpack.c.b16 %v1149, %v1140
        %v1429 = vpack.c.b16 %v1150, %v1141
        %v1430 = vpack.c.b16 %v1151, %v1142
        %v1431 = vpack.c.b16 %v1152, %v1143
        %v1432 = vpack.c.b16 %v1153, %v1144
        %v1433 = vpack.c.b16 %v1154, %v1145
        %v1434 = vpack.c.b16 %v1155, %v1146
        %v1435 = vpack.c.b16 %v1156, %v1147
        %v1436 = vpack.c.b16 %v1157, %v1148
        %v1437 = vpack.c.b16 %v1167, %v1158
        %v1438 = vpack.c.b16 %v1168, %v1159
        %v1439 = vpack.c.b16 %v1169, %v1160
        %v1440 = vpack.c.b16 %v1170, %v1161
        %v1441 = vpack.c.b16 %v1171, %v1162
        %v1442 = vpack.c.b16 %v1172, %v1163
        %v1443 = vpack.c.b16 %v1173, %v1164
        %v1444 = vpack.c.b16 %v1174, %v1165
        %v1445 = vpack.c.b16 %v1175, %v1166
        %v1446 = vpack.c.b16 %v1185, %v1176
        %v1447 = vpack.c.b16 %v1186, %v1177
        %v1448 = vpack.c.b16 %v1187, %v1178
        %v1449 = vpack.c.b16 %v1188, %v1179
        %v1450 = vpack.c.b16 %v1189, %v1180
        %v1451 = vpack.c.b16 %v1190, %v1181
        %v1452 = vpack.c.b16 %v1191, %v1182
        %v1453 = vpack.c.b16 %v1192, %v1183
        %v1454 = vpack.c.b16 %v1193, %v1184
        %v1455 = vpack.c.b16 %v1203, %v1194
        %v1456 = vpack.c.b16 %v1204, %v1195
        %v1457 = vpack.c.b16 %v1205, %v1196
        %v1458 = vpack.c.b16 %v1206, %v1197
        %v1459 = vpack.c.b16 %v1207, %v1198
        %v1460 = vpack.c.b16 %v1208, %v1199
        %v1461 = vpack.c.b16 %v1209, %v1200
        %v1462 = vpack.c.b16 %v1210, %v1201
        %v1463 = vpack.c.b16 %v1211, %v1202
        %v1464 = vpack.c.b16 %v1221, %v1212
        %v1465 = vpack.c.b16 %v1222, %v1213
        %v1466 = vpack.c.b16 %v1223, %v1214
        %v1467 = vpack.c.b16 %v1224, %v1215
        %v1468 = vpack.c.b16 %v1225, %v1216
        %v1469 = vpack.c.b16 %v1226, %v1217
        %v1470 = vpack.c.b16 %v1227, %v1218
        %v1471 = vpack.c.b16 %v1228, %v1219
        %v1472 = vpack.c.b16 %v1229, %v1220
        %v1473 = vpack.c.b16 %v1239, %v1230
        %v1474 = vpack.c.b16 %v1240, %v1231
        %v1475 = vpack.c.b16 %v1241, %v1232
        %v1476 = vpack.c.b16 %v1242, %v1233
        %v1477 = vpack.c.b16 %v1243, %v1234
        %v1478 = vpack.c.b16 %v1244, %v1235
        %v1479 = vpack.c.b16 %v1245, %v1236
        %v1480 = vpack.c.b16 %v1246, %v1237
        %v1481 = vpack.c.b16 %v1247, %v1238
        %v1482 = vpack.c.b16 %v1257, %v1248
        %v1483 = vpack.c.b16 %v1258, %v1249
        %v1484 = vpack.c.b16 %v1259, %v1250
        %v1485 = vpack.c.b16 %v1260, %v1251
        %v1486 = vpack.c.b16 %v1261, %v1252
        %v1487 = vpack.c.b16 %v1262, %v1253
        %v1488 = vpack.c.b16 %v1263, %v1254
        %v1489 = vpack.c.b16 %v1264, %v1255
        %v1490 = vpack.c.b16 %v1265, %v1256
        %v1491 = vpack.c.b16 %v1275, %v1266
        %v1492 = vpack.c.b16 %v1276, %v1267
        %v1493 = vpack.c.b16 %v1277, %v1268
        %v1494 = vpack.c.b16 %v1278, %v1269
        %v1495 = vpack.c.b16 %v1279, %v1270
        %v1496 = vpack.c.b16 %v1280, %v1271
        %v1497 = vpack.c.b16 %v1281, %v1272
        %v1498 = vpack.c.b16 %v1282, %v1273
        %v1499 = vpack.c.b16 %v1283, %v1274
        %1716 = vmatprep.subr.bf16.mxu0 %v1285
        %1717 = vmatpush1.bf16.msra.mxu0 %v1284
        %1718 = vmatprep.subr.bf16.mxu0 %v1294
        %1719 = vmatpush1.bf16.msra.mxu0 %v1293
        %1720 = vmatprep.subr.bf16.mxu0 %v1303
        %1721 = vmatpush1.bf16.msra.mxu0 %v1302
        %1722 = vmatprep.subr.bf16.mxu0 %v1312
        %1723 = vmatpush1.bf16.msra.mxu0 %v1311
        %1724 = vmatprep.subr.bf16.mxu0 %v1321
        %1725 = vmatpush1.bf16.msra.mxu0 %v1320
        %1726 = vmatprep.subr.bf16.mxu0 %v1330
        %1727 = vmatpush1.bf16.msra.mxu0 %v1329
        %1728 = vmatprep.subr.bf16.mxu0 %v1339
        %1729 = vmatpush1.bf16.msra.mxu0 %v1338
        %1730 = vmatprep.subr.bf16.mxu0 %v1348
        %1731 = vmatpush1.bf16.msra.mxu0 %v1347
        %1732 = vmatprep.subr.bf16.mxu0 %v1357
        %1733 = vmatpush1.bf16.msra.mxu0 %v1356
        %1734 = vmatprep.subr.bf16.mxu0 %v1366
        %1735 = vmatpush1.bf16.msra.mxu0 %v1365
        %1736 = vmatprep.subr.bf16.mxu0 %v1375
        %1737 = vmatpush1.bf16.msra.mxu0 %v1374
        %1738 = vmatprep.subr.bf16.mxu0 %v1384
        %1739 = vmatpush1.bf16.msra.mxu0 %v1383
        %1740 = vmatprep.subr.bf16.mxu0 %v1393
        %1741 = vmatpush1.bf16.msra.mxu0 %v1392
        %1742 = vmatprep.subr.bf16.mxu0 %v1402
        %1743 = vmatpush1.bf16.msra.mxu0 %v1401
        %1744 = vmatprep.subr.bf16.mxu0 %v1411
        %1745 = vmatpush1.bf16.msra.mxu0 %v1410
        %1746 = vmatprep.subr.bf16.mxu0 %v1420
        %1747 = vmatpush1.bf16.msra.mxu0 %v1419
        %1748 = vmatprep.mubr.bf16.mxu0 %v565
        %1749 = vmatmul.mubr.bf16.gmra.mrb[0].mxu0 %v564
        %v1750 = vpop.f32.mrb[0].mxu0
        %v1751 = vadd.f32 0.0, %v1750
        %v1752 = vpop.f32.mrb[0].mxu0
        %v1753 = vadd.f32 0.0, %v1752
        %v1754 = vpop.f32.mrb[0].mxu0
        %v1755 = vadd.f32 0.0, %v1754
        %v1756 = vpop.f32.mrb[0].mxu0
        %v1757 = vadd.f32 0.0, %v1756
        %1758 = vmatprep.mubr.bf16.mxu0 %v568
        %1759 = vmatmul.mubr.bf16.gmra.mrb[0].mxu0 %v567
        %v1760 = vpop.f32.mrb[0].mxu0
        %v1761 = vadd.f32 0.0, %v1760
        %v1762 = vpop.f32.mrb[0].mxu0
        %v1763 = vadd.f32 0.0, %v1762
        %v1764 = vpop.f32.mrb[0].mxu0
        %v1765 = vadd.f32 0.0, %v1764
        %v1766 = vpop.f32.mrb[0].mxu0
        %v1767 = vadd.f32 0.0, %v1766
        %1768 = vmatprep.mubr.bf16.mxu0 %v571
        %1769 = vmatmul.mubr.bf16.gmra.mrb[0].mxu0 %v570
        %v1770 = vpop.f32.mrb[0].mxu0
        %v1771 = vadd.f32 0.0, %v1770
        %v1772 = vpop.f32.mrb[0].mxu0
        %v1773 = vadd.f32 0.0, %v1772
        %v1774 = vpop.f32.mrb[0].mxu0
        %v1775 = vadd.f32 0.0, %v1774
        %v1776 = vpop.f32.mrb[0].mxu0
        %v1777 = vadd.f32 0.0, %v1776
        %1778 = vmatprep.mubr.bf16.mxu0 %v574
        %1779 = vmatmul.mubr.bf16.gmra.mrb[0].mxu0 %v573
        %v1780 = vpop.f32.mrb[0].mxu0
        %v1781 = vadd.f32 0.0, %v1780
        %v1782 = vpop.f32.mrb[0].mxu0
        %v1783 = vadd.f32 0.0, %v1782
        %v1784 = vpop.f32.mrb[0].mxu0
        %v1785 = vadd.f32 0.0, %v1784
        %v1786 = vpop.f32.mrb[0].mxu0
        %v1787 = vadd.f32 0.0, %v1786
        %1788 = vmatprep.mubr.bf16.mxu0 %v577
        %1789 = vmatmul.mubr.bf16.gmra.mrb[0].mxu0 %v576
        %v1790 = vpop.f32.mrb[0].mxu0
        %v1791 = vadd.f32 0.0, %v1790
        %v1792 = vpop.f32.mrb[0].mxu0
        %v1793 = vadd.f32 0.0, %v1792
        %v1794 = vpop.f32.mrb[0].mxu0
        %v1795 = vadd.f32 0.0, %v1794
        %v1796 = vpop.f32.mrb[0].mxu0
        %v1797 = vadd.f32 0.0, %v1796
        %1798 = vmatprep.mubr.bf16.mxu0 %v580
        %1799 = vmatmul.mubr.bf16.gmra.mrb[0].mxu0 %v579
        %v1800 = vpop.f32.mrb[0].mxu0
        %v1801 = vadd.f32 0.0, %v1800
        %v1802 = vpop.f32.mrb[0].mxu0
        %v1803 = vadd.f32 0.0, %v1802
        %v1804 = vpop.f32.mrb[0].mxu0
        %v1805 = vadd.f32 0.0, %v1804
        %v1806 = vpop.f32.mrb[0].mxu0
        %v1807 = vadd.f32 0.0, %v1806
        %1808 = vmatprep.mubr.bf16.mxu0 %v583
        %1809 = vmatmul.mubr.bf16.gmra.mrb[0].mxu0 %v582
        %v1810 = vpop.f32.mrb[0].mxu0
        %v1811 = vadd.f32 0.0, %v1810
        %v1812 = vpop.f32.mrb[0].mxu0
        %v1813 = vadd.f32 0.0, %v1812
        %v1814 = vpop.f32.mrb[0].mxu0
        %v1815 = vadd.f32 0.0, %v1814
        %v1816 = vpop.f32.mrb[0].mxu0
        %v1817 = vadd.f32 0.0, %v1816
        %1818 = vmatprep.mubr.bf16.mxu0 %v586
        %1819 = vmatmul.mubr.bf16.gmra.mrb[0].mxu0 %v585
        %v1820 = vpop.f32.mrb[0].mxu0
        %v1821 = vadd.f32 0.0, %v1820
        %v1822 = vpop.f32.mrb[0].mxu0
        %v1823 = vadd.f32 0.0, %v1822
        %v1824 = vpop.f32.mrb[0].mxu0
        %v1825 = vadd.f32 0.0, %v1824
        %v1826 = vpop.f32.mrb[0].mxu0
        %v1827 = vadd.f32 0.0, %v1826
        %1828 = vdwg.mxu0
        %1829 = vmatprep.subr.bf16.mxu0 %v1429
        %1830 = vmatpush1.bf16.msra.mxu0 %v1428
        %1831 = vmatprep.subr.bf16.mxu0 %v1438
        %1832 = vmatpush1.bf16.msra.mxu0 %v1437
        %1833 = vmatprep.subr.bf16.mxu0 %v1447
        %1834 = vmatpush1.bf16.msra.mxu0 %v1446
        %1835 = vmatprep.subr.bf16.mxu0 %v1456
        %1836 = vmatpush1.bf16.msra.mxu0 %v1455
        %1837 = vmatprep.subr.bf16.mxu0 %v1465
        %1838 = vmatpush1.bf16.msra.mxu0 %v1464
        %1839 = vmatprep.subr.bf16.mxu0 %v1474
        %1840 = vmatpush1.bf16.msra.mxu0 %v1473
        %1841 = vmatprep.subr.bf16.mxu0 %v1483
        %1842 = vmatpush1.bf16.msra.mxu0 %v1482
        %1843 = vmatprep.subr.bf16.mxu0 %v1492
        %1844 = vmatpush1.bf16.msra.mxu0 %v1491
        %1845 = vmatprep.subr.bf16.mxu0 0
        %1846 = vmatpush1.bf16.msra.mxu0 0
        %1847 = vmatprep.subr.bf16.mxu0 0
        %1848 = vmatpush1.bf16.msra.mxu0 0
        %1849 = vmatprep.subr.bf16.mxu0 0
        %1850 = vmatpush1.bf16.msra.mxu0 0
        %1851 = vmatprep.subr.bf16.mxu0 0
        %1852 = vmatpush1.bf16.msra.mxu0 0
        %1853 = vmatprep.subr.bf16.mxu0 0
        %1854 = vmatpush1.bf16.msra.mxu0 0
        %1855 = vmatprep.subr.bf16.mxu0 0
        %1856 = vmatpush1.bf16.msra.mxu0 0
        %1857 = vmatprep.subr.bf16.mxu0 0
        %1858 = vmatpush1.bf16.msra.mxu0 0
        %1859 = vmatprep.subr.bf16.mxu0 0
        %1860 = vmatpush1.bf16.msra.mxu0 0
        %1861 = vmatprep.mubr.bf16.mxu0 0
        %1862 = vmatmul.mubr.bf16.gmra.mrb[0].mxu0 %v566
        %v1863 = vpop.f32.mrb[0].mxu0
        %v1864 = vadd.f32 %v1751, %v1863
        %v1865 = vpop.f32.mrb[0].mxu0
        %v1866 = vadd.f32 %v1753, %v1865
        %v1867 = vpop.f32.mrb[0].mxu0
        %v1868 = vadd.f32 %v1755, %v1867
        %v1869 = vpop.f32.mrb[0].mxu0
        %v1870 = vadd.f32 %v1757, %v1869
        %1871 = vmatprep.mubr.bf16.mxu0 0
        %1872 = vmatmul.mubr.bf16.gmra.mrb[0].mxu0 %v569
        %v1873 = vpop.f32.mrb[0].mxu0
        %v1874 = vadd.f32 %v1761, %v1873
        %v1875 = vpop.f32.mrb[0].mxu0
        %v1876 = vadd.f32 %v1763, %v1875
        %v1877 = vpop.f32.mrb[0].mxu0
        %v1878 = vadd.f32 %v1765, %v1877
        %v1879 = vpop.f32.mrb[0].mxu0
        %v1880 = vadd.f32 %v1767, %v1879
        %1881 = vmatprep.mubr.bf16.mxu0 0
        %1882 = vmatmul.mubr.bf16.gmra.mrb[0].mxu0 %v572
        %v1883 = vpop.f32.mrb[0].mxu0
        %v1884 = vadd.f32 %v1771, %v1883
        %v1885 = vpop.f32.mrb[0].mxu0
        %v1886 = vadd.f32 %v1773, %v1885
        %v1887 = vpop.f32.mrb[0].mxu0
        %v1888 = vadd.f32 %v1775, %v1887
        %v1889 = vpop.f32.mrb[0].mxu0
        %v1890 = vadd.f32 %v1777, %v1889
        %1891 = vmatprep.mubr.bf16.mxu0 0
        %1892 = vmatmul.mubr.bf16.gmra.mrb[0].mxu0 %v575
        %v1893 = vpop.f32.mrb[0].mxu0
        %v1894 = vadd.f32 %v1781, %v1893
        %v1895 = vpop.f32.mrb[0].mxu0
        %v1896 = vadd.f32 %v1783, %v1895
        %v1897 = vpop.f32.mrb[0].mxu0
        %v1898 = vadd.f32 %v1785, %v1897
        %v1899 = vpop.f32.mrb[0].mxu0
        %v1900 = vadd.f32 %v1787, %v1899
        %1901 = vmatprep.mubr.bf16.mxu0 0
        %1902 = vmatmul.mubr.bf16.gmra.mrb[0].mxu0 %v578
        %v1903 = vpop.f32.mrb[0].mxu0
        %v1904 = vadd.f32 %v1791, %v1903
        %v1905 = vpop.f32.mrb[0].mxu0
        %v1906 = vadd.f32 %v1793, %v1905
        %v1907 = vpop.f32.mrb[0].mxu0
        %v1908 = vadd.f32 %v1795, %v1907
        %v1909 = vpop.f32.mrb[0].mxu0
        %v1910 = vadd.f32 %v1797, %v1909
        %1911 = vmatprep.mubr.bf16.mxu0 0
        %1912 = vmatmul.mubr.bf16.gmra.mrb[0].mxu0 %v581
        %v1913 = vpop.f32.mrb[0].mxu0
        %v1914 = vadd.f32 %v1801, %v1913
        %v1915 = vpop.f32.mrb[0].mxu0
        %v1916 = vadd.f32 %v1803, %v1915
        %v1917 = vpop.f32.mrb[0].mxu0
        %v1918 = vadd.f32 %v1805, %v1917
        %v1919 = vpop.f32.mrb[0].mxu0
        %v1920 = vadd.f32 %v1807, %v1919
        %1921 = vmatprep.mubr.bf16.mxu0 0
        %1922 = vmatmul.mubr.bf16.gmra.mrb[0].mxu0 %v584
        %v1923 = vpop.f32.mrb[0].mxu0
        %v1924 = vadd.f32 %v1811, %v1923
        %v1925 = vpop.f32.mrb[0].mxu0
        %v1926 = vadd.f32 %v1813, %v1925
        %v1927 = vpop.f32.mrb[0].mxu0
        %v1928 = vadd.f32 %v1815, %v1927
        %v1929 = vpop.f32.mrb[0].mxu0
        %v1930 = vadd.f32 %v1817, %v1929
        %1931 = vmatprep.mubr.bf16.mxu0 0
        %1932 = vmatmul.mubr.bf16.gmra.mrb[0].mxu0 %v587
        %v1933 = vpop.f32.mrb[0].mxu0
        %v1934 = vadd.f32 %v1821, %v1933
        %v1935 = vpop.f32.mrb[0].mxu0
        %v1936 = vadd.f32 %v1823, %v1935
        %v1937 = vpop.f32.mrb[0].mxu0
        %v1938 = vadd.f32 %v1825, %v1937
        %v1939 = vpop.f32.mrb[0].mxu0
        %v1940 = vadd.f32 %v1827, %v1939
        %1941 = vdwg.mxu0
        %1942 = vmatprep.subr.bf16.mxu0 %v1287
        %1943 = vmatpush1.bf16.msra.mxu0 %v1286
        %1944 = vmatprep.subr.bf16.mxu0 %v1296
        %1945 = vmatpush1.bf16.msra.mxu0 %v1295
        %1946 = vmatprep.subr.bf16.mxu0 %v1305
        %1947 = vmatpush1.bf16.msra.mxu0 %v1304
        %1948 = vmatprep.subr.bf16.mxu0 %v1314
        %1949 = vmatpush1.bf16.msra.mxu0 %v1313
        %1950 = vmatprep.subr.bf16.mxu0 %v1323
        %1951 = vmatpush1.bf16.msra.mxu0 %v1322
        %1952 = vmatprep.subr.bf16.mxu0 %v1332
        %1953 = vmatpush1.bf16.msra.mxu0 %v1331
        %1954 = vmatprep.subr.bf16.mxu0 %v1341
        %1955 = vmatpush1.bf16.msra.mxu0 %v1340
        %1956 = vmatprep.subr.bf16.mxu0 %v1350
        %1957 = vmatpush1.bf16.msra.mxu0 %v1349
        %1958 = vmatprep.subr.bf16.mxu0 %v1359
        %1959 = vmatpush1.bf16.msra.mxu0 %v1358
        %1960 = vmatprep.subr.bf16.mxu0 %v1368
        %1961 = vmatpush1.bf16.msra.mxu0 %v1367
        %1962 = vmatprep.subr.bf16.mxu0 %v1377
        %1963 = vmatpush1.bf16.msra.mxu0 %v1376
        %1964 = vmatprep.subr.bf16.mxu0 %v1386
        %1965 = vmatpush1.bf16.msra.mxu0 %v1385
        %1966 = vmatprep.subr.bf16.mxu0 %v1395
        %1967 = vmatpush1.bf16.msra.mxu0 %v1394
        %1968 = vmatprep.subr.bf16.mxu0 %v1404
        %1969 = vmatpush1.bf16.msra.mxu0 %v1403
        %1970 = vmatprep.subr.bf16.mxu0 %v1413
        %1971 = vmatpush1.bf16.msra.mxu0 %v1412
        %1972 = vmatprep.subr.bf16.mxu0 %v1422
        %1973 = vmatpush1.bf16.msra.mxu0 %v1421
        %1974 = vmatprep.mubr.bf16.mxu0 %v565
        %1975 = vmatmul.mubr.bf16.gmra.mrb[0].mxu0 %v564
        %v1976 = vpop.f32.mrb[0].mxu0
        %v1977 = vadd.f32 0.0, %v1976
        %v1978 = vpop.f32.mrb[0].mxu0
        %v1979 = vadd.f32 0.0, %v1978
        %v1980 = vpop.f32.mrb[0].mxu0
        %v1981 = vadd.f32 0.0, %v1980
        %v1982 = vpop.f32.mrb[0].mxu0
        %v1983 = vadd.f32 0.0, %v1982
        %1984 = vmatprep.mubr.bf16.mxu0 %v568
        %1985 = vmatmul.mubr.bf16.gmra.mrb[0].mxu0 %v567
        %v1986 = vpop.f32.mrb[0].mxu0
        %v1987 = vadd.f32 0.0, %v1986
        %v1988 = vpop.f32.mrb[0].mxu0
        %v1989 = vadd.f32 0.0, %v1988
        %v1990 = vpop.f32.mrb[0].mxu0
        %v1991 = vadd.f32 0.0, %v1990
        %v1992 = vpop.f32.mrb[0].mxu0
        %v1993 = vadd.f32 0.0, %v1992
        %1994 = vmatprep.mubr.bf16.mxu0 %v571
        %1995 = vmatmul.mubr.bf16.gmra.mrb[0].mxu0 %v570
        %v1996 = vpop.f32.mrb[0].mxu0
        %v1997 = vadd.f32 0.0, %v1996
        %v1998 = vpop.f32.mrb[0].mxu0
        %v1999 = vadd.f32 0.0, %v1998
        %v2000 = vpop.f32.mrb[0].mxu0
        %v2001 = vadd.f32 0.0, %v2000
        %v2002 = vpop.f32.mrb[0].mxu0
        %v2003 = vadd.f32 0.0, %v2002
        %2004 = vmatprep.mubr.bf16.mxu0 %v574
        %2005 = vmatmul.mubr.bf16.gmra.mrb[0].mxu0 %v573
        %v2006 = vpop.f32.mrb[0].mxu0
        %v2007 = vadd.f32 0.0, %v2006
        %v2008 = vpop.f32.mrb[0].mxu0
        %v2009 = vadd.f32 0.0, %v2008
        %v2010 = vpop.f32.mrb[0].mxu0
        %v2011 = vadd.f32 0.0, %v2010
        %v2012 = vpop.f32.mrb[0].mxu0
        %v2013 = vadd.f32 0.0, %v2012
        %2014 = vmatprep.mubr.bf16.mxu0 %v577
        %2015 = vmatmul.mubr.bf16.gmra.mrb[0].mxu0 %v576
        %v2016 = vpop.f32.mrb[0].mxu0
        %v2017 = vadd.f32 0.0, %v2016
        %v2018 = vpop.f32.mrb[0].mxu0
        %v2019 = vadd.f32 0.0, %v2018
        %v2020 = vpop.f32.mrb[0].mxu0
        %v2021 = vadd.f32 0.0, %v2020
        %v2022 = vpop.f32.mrb[0].mxu0
        %v2023 = vadd.f32 0.0, %v2022
        %2024 = vmatprep.mubr.bf16.mxu0 %v580
        %2025 = vmatmul.mubr.bf16.gmra.mrb[0].mxu0 %v579
        %v2026 = vpop.f32.mrb[0].mxu0
        %v2027 = vadd.f32 0.0, %v2026
        %v2028 = vpop.f32.mrb[0].mxu0
        %v2029 = vadd.f32 0.0, %v2028
        %v2030 = vpop.f32.mrb[0].mxu0
        %v2031 = vadd.f32 0.0, %v2030
        %v2032 = vpop.f32.mrb[0].mxu0
        %v2033 = vadd.f32 0.0, %v2032
        %2034 = vmatprep.mubr.bf16.mxu0 %v583
        %2035 = vmatmul.mubr.bf16.gmra.mrb[0].mxu0 %v582
        %v2036 = vpop.f32.mrb[0].mxu0
        %v2037 = vadd.f32 0.0, %v2036
        %v2038 = vpop.f32.mrb[0].mxu0
        %v2039 = vadd.f32 0.0, %v2038
        %v2040 = vpop.f32.mrb[0].mxu0
        %v2041 = vadd.f32 0.0, %v2040
        %v2042 = vpop.f32.mrb[0].mxu0
        %v2043 = vadd.f32 0.0, %v2042
        %2044 = vmatprep.mubr.bf16.mxu0 %v586
        %2045 = vmatmul.mubr.bf16.gmra.mrb[0].mxu0 %v585
        %v2046 = vpop.f32.mrb[0].mxu0
        %v2047 = vadd.f32 0.0, %v2046
        %v2048 = vpop.f32.mrb[0].mxu0
        %v2049 = vadd.f32 0.0, %v2048
        %v2050 = vpop.f32.mrb[0].mxu0
        %v2051 = vadd.f32 0.0, %v2050
        %v2052 = vpop.f32.mrb[0].mxu0
        %v2053 = vadd.f32 0.0, %v2052
        %2054 = vdwg.mxu0
        %2055 = vmatprep.subr.bf16.mxu0 %v1431
        %2056 = vmatpush1.bf16.msra.mxu0 %v1430
        %2057 = vmatprep.subr.bf16.mxu0 %v1440
        %2058 = vmatpush1.bf16.msra.mxu0 %v1439
        %2059 = vmatprep.subr.bf16.mxu0 %v1449
        %2060 = vmatpush1.bf16.msra.mxu0 %v1448
        %2061 = vmatprep.subr.bf16.mxu0 %v1458
        %2062 = vmatpush1.bf16.msra.mxu0 %v1457
        %2063 = vmatprep.subr.bf16.mxu0 %v1467
        %2064 = vmatpush1.bf16.msra.mxu0 %v1466
        %2065 = vmatprep.subr.bf16.mxu0 %v1476
        %2066 = vmatpush1.bf16.msra.mxu0 %v1475
        %2067 = vmatprep.subr.bf16.mxu0 %v1485
        %2068 = vmatpush1.bf16.msra.mxu0 %v1484
        %2069 = vmatprep.subr.bf16.mxu0 %v1494
        %2070 = vmatpush1.bf16.msra.mxu0 %v1493
        %2071 = vmatprep.subr.bf16.mxu0 0
        %2072 = vmatpush1.bf16.msra.mxu0 0
        %2073 = vmatprep.subr.bf16.mxu0 0
        %2074 = vmatpush1.bf16.msra.mxu0 0
        %2075 = vmatprep.subr.bf16.mxu0 0
        %2076 = vmatpush1.bf16.msra.mxu0 0
        %2077 = vmatprep.subr.bf16.mxu0 0
        %2078 = vmatpush1.bf16.msra.mxu0 0
        %2079 = vmatprep.subr.bf16.mxu0 0
        %2080 = vmatpush1.bf16.msra.mxu0 0
        %2081 = vmatprep.subr.bf16.mxu0 0
        %2082 = vmatpush1.bf16.msra.mxu0 0
        %2083 = vmatprep.subr.bf16.mxu0 0
        %2084 = vmatpush1.bf16.msra.mxu0 0
        %2085 = vmatprep.subr.bf16.mxu0 0
        %2086 = vmatpush1.bf16.msra.mxu0 0
        %2087 = vmatprep.mubr.bf16.mxu0 0
        %2088 = vmatmul.mubr.bf16.gmra.mrb[0].mxu0 %v566
        %v2089 = vpop.f32.mrb[0].mxu0
        %v2090 = vadd.f32 %v1977, %v2089
        %v2091 = vpop.f32.mrb[0].mxu0
        %v2092 = vadd.f32 %v1979, %v2091
        %v2093 = vpop.f32.mrb[0].mxu0
        %v2094 = vadd.f32 %v1981, %v2093
        %v2095 = vpop.f32.mrb[0].mxu0
        %v2096 = vadd.f32 %v1983, %v2095
        %2097 = vmatprep.mubr.bf16.mxu0 0
        %2098 = vmatmul.mubr.bf16.gmra.mrb[0].mxu0 %v569
        %v2099 = vpop.f32.mrb[0].mxu0
        %v2100 = vadd.f32 %v1987, %v2099
        %v2101 = vpop.f32.mrb[0].mxu0
        %v2102 = vadd.f32 %v1989, %v2101
        %v2103 = vpop.f32.mrb[0].mxu0
        %v2104 = vadd.f32 %v1991, %v2103
        %v2105 = vpop.f32.mrb[0].mxu0
        %v2106 = vadd.f32 %v1993, %v2105
        %2107 = vmatprep.mubr.bf16.mxu0 0
        %2108 = vmatmul.mubr.bf16.gmra.mrb[0].mxu0 %v572
        %v2109 = vpop.f32.mrb[0].mxu0
        %v2110 = vadd.f32 %v1997, %v2109
        %v2111 = vpop.f32.mrb[0].mxu0
        %v2112 = vadd.f32 %v1999, %v2111
        %v2113 = vpop.f32.mrb[0].mxu0
        %v2114 = vadd.f32 %v2001, %v2113
        %v2115 = vpop.f32.mrb[0].mxu0
        %v2116 = vadd.f32 %v2003, %v2115
        %2117 = vmatprep.mubr.bf16.mxu0 0
        %2118 = vmatmul.mubr.bf16.gmra.mrb[0].mxu0 %v575
        %v2119 = vpop.f32.mrb[0].mxu0
        %v2120 = vadd.f32 %v2007, %v2119
        %v2121 = vpop.f32.mrb[0].mxu0
        %v2122 = vadd.f32 %v2009, %v2121
        %v2123 = vpop.f32.mrb[0].mxu0
        %v2124 = vadd.f32 %v2011, %v2123
        %v2125 = vpop.f32.mrb[0].mxu0
        %v2126 = vadd.f32 %v2013, %v2125
        %2127 = vmatprep.mubr.bf16.mxu0 0
        %2128 = vmatmul.mubr.bf16.gmra.mrb[0].mxu0 %v578
        %v2129 = vpop.f32.mrb[0].mxu0
        %v2130 = vadd.f32 %v2017, %v2129
        %v2131 = vpop.f32.mrb[0].mxu0
        %v2132 = vadd.f32 %v2019, %v2131
        %v2133 = vpop.f32.mrb[0].mxu0
        %v2134 = vadd.f32 %v2021, %v2133
        %v2135 = vpop.f32.mrb[0].mxu0
        %v2136 = vadd.f32 %v2023, %v2135
        %2137 = vmatprep.mubr.bf16.mxu0 0
        %2138 = vmatmul.mubr.bf16.gmra.mrb[0].mxu0 %v581
        %v2139 = vpop.f32.mrb[0].mxu0
        %v2140 = vadd.f32 %v2027, %v2139
        %v2141 = vpop.f32.mrb[0].mxu0
        %v2142 = vadd.f32 %v2029, %v2141
        %v2143 = vpop.f32.mrb[0].mxu0
        %v2144 = vadd.f32 %v2031, %v2143
        %v2145 = vpop.f32.mrb[0].mxu0
        %v2146 = vadd.f32 %v2033, %v2145
        %2147 = vmatprep.mubr.bf16.mxu0 0
        %2148 = vmatmul.mubr.bf16.gmra.mrb[0].mxu0 %v584
        %v2149 = vpop.f32.mrb[0].mxu0
        %v2150 = vadd.f32 %v2037, %v2149
        %v2151 = vpop.f32.mrb[0].mxu0
        %v2152 = vadd.f32 %v2039, %v2151
        %v2153 = vpop.f32.mrb[0].mxu0
        %v2154 = vadd.f32 %v2041, %v2153
        %v2155 = vpop.f32.mrb[0].mxu0
        %v2156 = vadd.f32 %v2043, %v2155
        %2157 = vmatprep.mubr.bf16.mxu0 0
        %2158 = vmatmul.mubr.bf16.gmra.mrb[0].mxu0 %v587
        %v2159 = vpop.f32.mrb[0].mxu0
        %v2160 = vadd.f32 %v2047, %v2159
        %v2161 = vpop.f32.mrb[0].mxu0
        %v2162 = vadd.f32 %v2049, %v2161
        %v2163 = vpop.f32.mrb[0].mxu0
        %v2164 = vadd.f32 %v2051, %v2163
        %v2165 = vpop.f32.mrb[0].mxu0
        %v2166 = vadd.f32 %v2053, %v2165
        %2167 = vdwg.mxu0
        %2168 = vmatprep.subr.bf16.mxu0 %v1289
        %2169 = vmatpush1.bf16.msra.mxu0 %v1288
        %2170 = vmatprep.subr.bf16.mxu0 %v1298
        %2171 = vmatpush1.bf16.msra.mxu0 %v1297
        %2172 = vmatprep.subr.bf16.mxu0 %v1307
        %2173 = vmatpush1.bf16.msra.mxu0 %v1306
        %2174 = vmatprep.subr.bf16.mxu0 %v1316
        %2175 = vmatpush1.bf16.msra.mxu0 %v1315
        %2176 = vmatprep.subr.bf16.mxu0 %v1325
        %2177 = vmatpush1.bf16.msra.mxu0 %v1324
        %2178 = vmatprep.subr.bf16.mxu0 %v1334
        %2179 = vmatpush1.bf16.msra.mxu0 %v1333
        %2180 = vmatprep.subr.bf16.mxu0 %v1343
        %2181 = vmatpush1.bf16.msra.mxu0 %v1342
        %2182 = vmatprep.subr.bf16.mxu0 %v1352
        %2183 = vmatpush1.bf16.msra.mxu0 %v1351
        %2184 = vmatprep.subr.bf16.mxu0 %v1361
        %2185 = vmatpush1.bf16.msra.mxu0 %v1360
        %2186 = vmatprep.subr.bf16.mxu0 %v1370
        %2187 = vmatpush1.bf16.msra.mxu0 %v1369
        %2188 = vmatprep.subr.bf16.mxu0 %v1379
        %2189 = vmatpush1.bf16.msra.mxu0 %v1378
        %2190 = vmatprep.subr.bf16.mxu0 %v1388
        %2191 = vmatpush1.bf16.msra.mxu0 %v1387
        %2192 = vmatprep.subr.bf16.mxu0 %v1397
        %2193 = vmatpush1.bf16.msra.mxu0 %v1396
        %2194 = vmatprep.subr.bf16.mxu0 %v1406
        %2195 = vmatpush1.bf16.msra.mxu0 %v1405
        %2196 = vmatprep.subr.bf16.mxu0 %v1415
        %2197 = vmatpush1.bf16.msra.mxu0 %v1414
        %2198 = vmatprep.subr.bf16.mxu0 %v1424
        %2199 = vmatpush1.bf16.msra.mxu0 %v1423
        %2200 = vmatprep.mubr.bf16.mxu0 %v565
        %2201 = vmatmul.mubr.bf16.gmra.mrb[0].mxu0 %v564
        %v2202 = vpop.f32.mrb[0].mxu0
        %v2203 = vadd.f32 0.0, %v2202
        %v2204 = vpop.f32.mrb[0].mxu0
        %v2205 = vadd.f32 0.0, %v2204
        %v2206 = vpop.f32.mrb[0].mxu0
        %v2207 = vadd.f32 0.0, %v2206
        %v2208 = vpop.f32.mrb[0].mxu0
        %v2209 = vadd.f32 0.0, %v2208
        %2210 = vmatprep.mubr.bf16.mxu0 %v568
        %2211 = vmatmul.mubr.bf16.gmra.mrb[0].mxu0 %v567
        %v2212 = vpop.f32.mrb[0].mxu0
        %v2213 = vadd.f32 0.0, %v2212
        %v2214 = vpop.f32.mrb[0].mxu0
        %v2215 = vadd.f32 0.0, %v2214
        %v2216 = vpop.f32.mrb[0].mxu0
        %v2217 = vadd.f32 0.0, %v2216
        %v2218 = vpop.f32.mrb[0].mxu0
        %v2219 = vadd.f32 0.0, %v2218
        %2220 = vmatprep.mubr.bf16.mxu0 %v571
        %2221 = vmatmul.mubr.bf16.gmra.mrb[0].mxu0 %v570
        %v2222 = vpop.f32.mrb[0].mxu0
        %v2223 = vadd.f32 0.0, %v2222
        %v2224 = vpop.f32.mrb[0].mxu0
        %v2225 = vadd.f32 0.0, %v2224
        %v2226 = vpop.f32.mrb[0].mxu0
        %v2227 = vadd.f32 0.0, %v2226
        %v2228 = vpop.f32.mrb[0].mxu0
        %v2229 = vadd.f32 0.0, %v2228
        %2230 = vmatprep.mubr.bf16.mxu0 %v574
        %2231 = vmatmul.mubr.bf16.gmra.mrb[0].mxu0 %v573
        %v2232 = vpop.f32.mrb[0].mxu0
        %v2233 = vadd.f32 0.0, %v2232
        %v2234 = vpop.f32.mrb[0].mxu0
        %v2235 = vadd.f32 0.0, %v2234
        %v2236 = vpop.f32.mrb[0].mxu0
        %v2237 = vadd.f32 0.0, %v2236
        %v2238 = vpop.f32.mrb[0].mxu0
        %v2239 = vadd.f32 0.0, %v2238
        %2240 = vmatprep.mubr.bf16.mxu0 %v577
        %2241 = vmatmul.mubr.bf16.gmra.mrb[0].mxu0 %v576
        %v2242 = vpop.f32.mrb[0].mxu0
        %v2243 = vadd.f32 0.0, %v2242
        %v2244 = vpop.f32.mrb[0].mxu0
        %v2245 = vadd.f32 0.0, %v2244
        %v2246 = vpop.f32.mrb[0].mxu0
        %v2247 = vadd.f32 0.0, %v2246
        %v2248 = vpop.f32.mrb[0].mxu0
        %v2249 = vadd.f32 0.0, %v2248
        %2250 = vmatprep.mubr.bf16.mxu0 %v580
        %2251 = vmatmul.mubr.bf16.gmra.mrb[0].mxu0 %v579
        %v2252 = vpop.f32.mrb[0].mxu0
        %v2253 = vadd.f32 0.0, %v2252
        %v2254 = vpop.f32.mrb[0].mxu0
        %v2255 = vadd.f32 0.0, %v2254
        %v2256 = vpop.f32.mrb[0].mxu0
        %v2257 = vadd.f32 0.0, %v2256
        %v2258 = vpop.f32.mrb[0].mxu0
        %v2259 = vadd.f32 0.0, %v2258
        %2260 = vmatprep.mubr.bf16.mxu0 %v583
        %2261 = vmatmul.mubr.bf16.gmra.mrb[0].mxu0 %v582
        %v2262 = vpop.f32.mrb[0].mxu0
        %v2263 = vadd.f32 0.0, %v2262
        %v2264 = vpop.f32.mrb[0].mxu0
        %v2265 = vadd.f32 0.0, %v2264
        %v2266 = vpop.f32.mrb[0].mxu0
        %v2267 = vadd.f32 0.0, %v2266
        %v2268 = vpop.f32.mrb[0].mxu0
        %v2269 = vadd.f32 0.0, %v2268
        %2270 = vmatprep.mubr.bf16.mxu0 %v586
        %2271 = vmatmul.mubr.bf16.gmra.mrb[0].mxu0 %v585
        %v2272 = vpop.f32.mrb[0].mxu0
        %v2273 = vadd.f32 0.0, %v2272
        %v2274 = vpop.f32.mrb[0].mxu0
        %v2275 = vadd.f32 0.0, %v2274
        %v2276 = vpop.f32.mrb[0].mxu0
        %v2277 = vadd.f32 0.0, %v2276
        %v2278 = vpop.f32.mrb[0].mxu0
        %v2279 = vadd.f32 0.0, %v2278
        %2280 = vdwg.mxu0
        %2281 = vmatprep.subr.bf16.mxu0 %v1433
        %2282 = vmatpush1.bf16.msra.mxu0 %v1432
        %2283 = vmatprep.subr.bf16.mxu0 %v1442
        %2284 = vmatpush1.bf16.msra.mxu0 %v1441
        %2285 = vmatprep.subr.bf16.mxu0 %v1451
        %2286 = vmatpush1.bf16.msra.mxu0 %v1450
        %2287 = vmatprep.subr.bf16.mxu0 %v1460
        %2288 = vmatpush1.bf16.msra.mxu0 %v1459
        %2289 = vmatprep.subr.bf16.mxu0 %v1469
        %2290 = vmatpush1.bf16.msra.mxu0 %v1468
        %2291 = vmatprep.subr.bf16.mxu0 %v1478
        %2292 = vmatpush1.bf16.msra.mxu0 %v1477
        %2293 = vmatprep.subr.bf16.mxu0 %v1487
        %2294 = vmatpush1.bf16.msra.mxu0 %v1486
        %2295 = vmatprep.subr.bf16.mxu0 %v1496
        %2296 = vmatpush1.bf16.msra.mxu0 %v1495
        %2297 = vmatprep.subr.bf16.mxu0 0
        %2298 = vmatpush1.bf16.msra.mxu0 0
        %2299 = vmatprep.subr.bf16.mxu0 0
        %2300 = vmatpush1.bf16.msra.mxu0 0
        %2301 = vmatprep.subr.bf16.mxu0 0
        %2302 = vmatpush1.bf16.msra.mxu0 0
        %2303 = vmatprep.subr.bf16.mxu0 0
        %2304 = vmatpush1.bf16.msra.mxu0 0
        %2305 = vmatprep.subr.bf16.mxu0 0
        %2306 = vmatpush1.bf16.msra.mxu0 0
        %2307 = vmatprep.subr.bf16.mxu0 0
        %2308 = vmatpush1.bf16.msra.mxu0 0
        %2309 = vmatprep.subr.bf16.mxu0 0
        %2310 = vmatpush1.bf16.msra.mxu0 0
        %2311 = vmatprep.subr.bf16.mxu0 0
        %2312 = vmatpush1.bf16.msra.mxu0 0
        %2313 = vmatprep.mubr.bf16.mxu0 0
        %2314 = vmatmul.mubr.bf16.gmra.mrb[0].mxu0 %v566
        %v2315 = vpop.f32.mrb[0].mxu0
        %v2316 = vadd.f32 %v2203, %v2315
        %v2317 = vpop.f32.mrb[0].mxu0
        %v2318 = vadd.f32 %v2205, %v2317
        %v2319 = vpop.f32.mrb[0].mxu0
        %v2320 = vadd.f32 %v2207, %v2319
        %v2321 = vpop.f32.mrb[0].mxu0
        %v2322 = vadd.f32 %v2209, %v2321
        %2323 = vmatprep.mubr.bf16.mxu0 0
        %2324 = vmatmul.mubr.bf16.gmra.mrb[0].mxu0 %v569
        %v2325 = vpop.f32.mrb[0].mxu0
        %v2326 = vadd.f32 %v2213, %v2325
        %v2327 = vpop.f32.mrb[0].mxu0
        %v2328 = vadd.f32 %v2215, %v2327
        %v2329 = vpop.f32.mrb[0].mxu0
        %v2330 = vadd.f32 %v2217, %v2329
        %v2331 = vpop.f32.mrb[0].mxu0
        %v2332 = vadd.f32 %v2219, %v2331
        %2333 = vmatprep.mubr.bf16.mxu0 0
        %2334 = vmatmul.mubr.bf16.gmra.mrb[0].mxu0 %v572
        %v2335 = vpop.f32.mrb[0].mxu0
        %v2336 = vadd.f32 %v2223, %v2335
        %v2337 = vpop.f32.mrb[0].mxu0
        %v2338 = vadd.f32 %v2225, %v2337
        %v2339 = vpop.f32.mrb[0].mxu0
        %v2340 = vadd.f32 %v2227, %v2339
        %v2341 = vpop.f32.mrb[0].mxu0
        %v2342 = vadd.f32 %v2229, %v2341
        %2343 = vmatprep.mubr.bf16.mxu0 0
        %2344 = vmatmul.mubr.bf16.gmra.mrb[0].mxu0 %v575
        %v2345 = vpop.f32.mrb[0].mxu0
        %v2346 = vadd.f32 %v2233, %v2345
        %v2347 = vpop.f32.mrb[0].mxu0
        %v2348 = vadd.f32 %v2235, %v2347
        %v2349 = vpop.f32.mrb[0].mxu0
        %v2350 = vadd.f32 %v2237, %v2349
        %v2351 = vpop.f32.mrb[0].mxu0
        %v2352 = vadd.f32 %v2239, %v2351
        %2353 = vmatprep.mubr.bf16.mxu0 0
        %2354 = vmatmul.mubr.bf16.gmra.mrb[0].mxu0 %v578
        %v2355 = vpop.f32.mrb[0].mxu0
        %v2356 = vadd.f32 %v2243, %v2355
        %v2357 = vpop.f32.mrb[0].mxu0
        %v2358 = vadd.f32 %v2245, %v2357
        %v2359 = vpop.f32.mrb[0].mxu0
        %v2360 = vadd.f32 %v2247, %v2359
        %v2361 = vpop.f32.mrb[0].mxu0
        %v2362 = vadd.f32 %v2249, %v2361
        %2363 = vmatprep.mubr.bf16.mxu0 0
        %2364 = vmatmul.mubr.bf16.gmra.mrb[0].mxu0 %v581
        %v2365 = vpop.f32.mrb[0].mxu0
        %v2366 = vadd.f32 %v2253, %v2365
        %v2367 = vpop.f32.mrb[0].mxu0
        %v2368 = vadd.f32 %v2255, %v2367
        %v2369 = vpop.f32.mrb[0].mxu0
        %v2370 = vadd.f32 %v2257, %v2369
        %v2371 = vpop.f32.mrb[0].mxu0
        %v2372 = vadd.f32 %v2259, %v2371
        %2373 = vmatprep.mubr.bf16.mxu0 0
        %2374 = vmatmul.mubr.bf16.gmra.mrb[0].mxu0 %v584
        %v2375 = vpop.f32.mrb[0].mxu0
        %v2376 = vadd.f32 %v2263, %v2375
        %v2377 = vpop.f32.mrb[0].mxu0
        %v2378 = vadd.f32 %v2265, %v2377
        %v2379 = vpop.f32.mrb[0].mxu0
        %v2380 = vadd.f32 %v2267, %v2379
        %v2381 = vpop.f32.mrb[0].mxu0
        %v2382 = vadd.f32 %v2269, %v2381
        %2383 = vmatprep.mubr.bf16.mxu0 0
        %2384 = vmatmul.mubr.bf16.gmra.mrb[0].mxu0 %v587
        %v2385 = vpop.f32.mrb[0].mxu0
        %v2386 = vadd.f32 %v2273, %v2385
        %v2387 = vpop.f32.mrb[0].mxu0
        %v2388 = vadd.f32 %v2275, %v2387
        %v2389 = vpop.f32.mrb[0].mxu0
        %v2390 = vadd.f32 %v2277, %v2389
        %v2391 = vpop.f32.mrb[0].mxu0
        %v2392 = vadd.f32 %v2279, %v2391
        %2393 = vdwg.mxu0
        %2394 = vmatprep.subr.bf16.mxu0 %v1291
        %2395 = vmatpush1.bf16.msra.mxu0 %v1290
        %2396 = vmatprep.subr.bf16.mxu0 %v1300
        %2397 = vmatpush1.bf16.msra.mxu0 %v1299
        %2398 = vmatprep.subr.bf16.mxu0 %v1309
        %2399 = vmatpush1.bf16.msra.mxu0 %v1308
        %2400 = vmatprep.subr.bf16.mxu0 %v1318
        %2401 = vmatpush1.bf16.msra.mxu0 %v1317
        %2402 = vmatprep.subr.bf16.mxu0 %v1327
        %2403 = vmatpush1.bf16.msra.mxu0 %v1326
        %2404 = vmatprep.subr.bf16.mxu0 %v1336
        %2405 = vmatpush1.bf16.msra.mxu0 %v1335
        %2406 = vmatprep.subr.bf16.mxu0 %v1345
        %2407 = vmatpush1.bf16.msra.mxu0 %v1344
        %2408 = vmatprep.subr.bf16.mxu0 %v1354
        %2409 = vmatpush1.bf16.msra.mxu0 %v1353
        %2410 = vmatprep.subr.bf16.mxu0 %v1363
        %2411 = vmatpush1.bf16.msra.mxu0 %v1362
        %2412 = vmatprep.subr.bf16.mxu0 %v1372
        %2413 = vmatpush1.bf16.msra.mxu0 %v1371
        %2414 = vmatprep.subr.bf16.mxu0 %v1381
        %2415 = vmatpush1.bf16.msra.mxu0 %v1380
        %2416 = vmatprep.subr.bf16.mxu0 %v1390
        %2417 = vmatpush1.bf16.msra.mxu0 %v1389
        %2418 = vmatprep.subr.bf16.mxu0 %v1399
        %2419 = vmatpush1.bf16.msra.mxu0 %v1398
        %2420 = vmatprep.subr.bf16.mxu0 %v1408
        %2421 = vmatpush1.bf16.msra.mxu0 %v1407
        %2422 = vmatprep.subr.bf16.mxu0 %v1417
        %2423 = vmatpush1.bf16.msra.mxu0 %v1416
        %2424 = vmatprep.subr.bf16.mxu0 %v1426
        %2425 = vmatpush1.bf16.msra.mxu0 %v1425
        %2426 = vmatprep.mubr.bf16.mxu0 %v565
        %2427 = vmatmul.mubr.bf16.gmra.mrb[0].mxu0 %v564
        %v2428 = vpop.f32.mrb[0].mxu0
        %v2429 = vadd.f32 0.0, %v2428
        %v2430 = vpop.f32.mrb[0].mxu0
        %v2431 = vadd.f32 0.0, %v2430
        %v2432 = vpop.f32.mrb[0].mxu0
        %v2433 = vadd.f32 0.0, %v2432
        %v2434 = vpop.f32.mrb[0].mxu0
        %v2435 = vadd.f32 0.0, %v2434
        %2436 = vmatprep.mubr.bf16.mxu0 %v568
        %2437 = vmatmul.mubr.bf16.gmra.mrb[0].mxu0 %v567
        %v2438 = vpop.f32.mrb[0].mxu0
        %v2439 = vadd.f32 0.0, %v2438
        %v2440 = vpop.f32.mrb[0].mxu0
        %v2441 = vadd.f32 0.0, %v2440
        %v2442 = vpop.f32.mrb[0].mxu0
        %v2443 = vadd.f32 0.0, %v2442
        %v2444 = vpop.f32.mrb[0].mxu0
        %v2445 = vadd.f32 0.0, %v2444
        %2446 = vmatprep.mubr.bf16.mxu0 %v571
        %2447 = vmatmul.mubr.bf16.gmra.mrb[0].mxu0 %v570
        %v2448 = vpop.f32.mrb[0].mxu0
        %v2449 = vadd.f32 0.0, %v2448
        %v2450 = vpop.f32.mrb[0].mxu0
        %v2451 = vadd.f32 0.0, %v2450
        %v2452 = vpop.f32.mrb[0].mxu0
        %v2453 = vadd.f32 0.0, %v2452
        %v2454 = vpop.f32.mrb[0].mxu0
        %v2455 = vadd.f32 0.0, %v2454
        %2456 = vmatprep.mubr.bf16.mxu0 %v574
        %2457 = vmatmul.mubr.bf16.gmra.mrb[0].mxu0 %v573
        %v2458 = vpop.f32.mrb[0].mxu0
        %v2459 = vadd.f32 0.0, %v2458
        %v2460 = vpop.f32.mrb[0].mxu0
        %v2461 = vadd.f32 0.0, %v2460
        %v2462 = vpop.f32.mrb[0].mxu0
        %v2463 = vadd.f32 0.0, %v2462
        %v2464 = vpop.f32.mrb[0].mxu0
        %v2465 = vadd.f32 0.0, %v2464
        %2466 = vmatprep.mubr.bf16.mxu0 %v577
        %2467 = vmatmul.mubr.bf16.gmra.mrb[0].mxu0 %v576
        %v2468 = vpop.f32.mrb[0].mxu0
        %v2469 = vadd.f32 0.0, %v2468
        %v2470 = vpop.f32.mrb[0].mxu0
        %v2471 = vadd.f32 0.0, %v2470
        %v2472 = vpop.f32.mrb[0].mxu0
        %v2473 = vadd.f32 0.0, %v2472
        %v2474 = vpop.f32.mrb[0].mxu0
        %v2475 = vadd.f32 0.0, %v2474
        %2476 = vmatprep.mubr.bf16.mxu0 %v580
        %2477 = vmatmul.mubr.bf16.gmra.mrb[0].mxu0 %v579
        %v2478 = vpop.f32.mrb[0].mxu0
        %v2479 = vadd.f32 0.0, %v2478
        %v2480 = vpop.f32.mrb[0].mxu0
        %v2481 = vadd.f32 0.0, %v2480
        %v2482 = vpop.f32.mrb[0].mxu0
        %v2483 = vadd.f32 0.0, %v2482
        %v2484 = vpop.f32.mrb[0].mxu0
        %v2485 = vadd.f32 0.0, %v2484
        %2486 = vmatprep.mubr.bf16.mxu0 %v583
        %2487 = vmatmul.mubr.bf16.gmra.mrb[0].mxu0 %v582
        %v2488 = vpop.f32.mrb[0].mxu0
        %v2489 = vadd.f32 0.0, %v2488
        %v2490 = vpop.f32.mrb[0].mxu0
        %v2491 = vadd.f32 0.0, %v2490
        %v2492 = vpop.f32.mrb[0].mxu0
        %v2493 = vadd.f32 0.0, %v2492
        %v2494 = vpop.f32.mrb[0].mxu0
        %v2495 = vadd.f32 0.0, %v2494
        %2496 = vmatprep.mubr.bf16.mxu0 %v586
        %2497 = vmatmul.mubr.bf16.gmra.mrb[0].mxu0 %v585
        %v2498 = vpop.f32.mrb[0].mxu0
        %v2499 = vadd.f32 0.0, %v2498
        %v2500 = vpop.f32.mrb[0].mxu0
        %v2501 = vadd.f32 0.0, %v2500
        %v2502 = vpop.f32.mrb[0].mxu0
        %v2503 = vadd.f32 0.0, %v2502
        %v2504 = vpop.f32.mrb[0].mxu0
        %v2505 = vadd.f32 0.0, %v2504
        %2506 = vdwg.mxu0
        %2507 = vmatprep.subr.bf16.mxu0 %v1435
        %2508 = vmatpush1.bf16.msra.mxu0 %v1434
        %2509 = vmatprep.subr.bf16.mxu0 %v1444
        %2510 = vmatpush1.bf16.msra.mxu0 %v1443
        %2511 = vmatprep.subr.bf16.mxu0 %v1453
        %2512 = vmatpush1.bf16.msra.mxu0 %v1452
        %2513 = vmatprep.subr.bf16.mxu0 %v1462
        %2514 = vmatpush1.bf16.msra.mxu0 %v1461
        %2515 = vmatprep.subr.bf16.mxu0 %v1471
        %2516 = vmatpush1.bf16.msra.mxu0 %v1470
        %2517 = vmatprep.subr.bf16.mxu0 %v1480
        %2518 = vmatpush1.bf16.msra.mxu0 %v1479
        %2519 = vmatprep.subr.bf16.mxu0 %v1489
        %2520 = vmatpush1.bf16.msra.mxu0 %v1488
        %2521 = vmatprep.subr.bf16.mxu0 %v1498
        %2522 = vmatpush1.bf16.msra.mxu0 %v1497
        %2523 = vmatprep.subr.bf16.mxu0 0
        %2524 = vmatpush1.bf16.msra.mxu0 0
        %2525 = vmatprep.subr.bf16.mxu0 0
        %2526 = vmatpush1.bf16.msra.mxu0 0
        %2527 = vmatprep.subr.bf16.mxu0 0
        %2528 = vmatpush1.bf16.msra.mxu0 0
        %2529 = vmatprep.subr.bf16.mxu0 0
        %2530 = vmatpush1.bf16.msra.mxu0 0
        %2531 = vmatprep.subr.bf16.mxu0 0
        %2532 = vmatpush1.bf16.msra.mxu0 0
        %2533 = vmatprep.subr.bf16.mxu0 0
        %2534 = vmatpush1.bf16.msra.mxu0 0
        %2535 = vmatprep.subr.bf16.mxu0 0
        %2536 = vmatpush1.bf16.msra.mxu0 0
        %2537 = vmatprep.subr.bf16.mxu0 0
        %2538 = vmatpush1.bf16.msra.mxu0 0
        %2539 = vmatprep.mubr.bf16.mxu0 0
        %2540 = vmatmul.mubr.bf16.gmra.mrb[0].mxu0 %v566
        %v2541 = vpop.f32.mrb[0].mxu0
        %v2542 = vadd.f32 %v2429, %v2541
        %v2543 = vpop.f32.mrb[0].mxu0
        %v2544 = vadd.f32 %v2431, %v2543
        %v2545 = vpop.f32.mrb[0].mxu0
        %v2546 = vadd.f32 %v2433, %v2545
        %v2547 = vpop.f32.mrb[0].mxu0
        %v2548 = vadd.f32 %v2435, %v2547
        %2549 = vmatprep.mubr.bf16.mxu0 0
        %2550 = vmatmul.mubr.bf16.gmra.mrb[0].mxu0 %v569
        %v2551 = vpop.f32.mrb[0].mxu0
        %v2552 = vadd.f32 %v2439, %v2551
        %v2553 = vpop.f32.mrb[0].mxu0
        %v2554 = vadd.f32 %v2441, %v2553
        %v2555 = vpop.f32.mrb[0].mxu0
        %v2556 = vadd.f32 %v2443, %v2555
        %v2557 = vpop.f32.mrb[0].mxu0
        %v2558 = vadd.f32 %v2445, %v2557
        %2559 = vmatprep.mubr.bf16.mxu0 0
        %2560 = vmatmul.mubr.bf16.gmra.mrb[0].mxu0 %v572
        %v2561 = vpop.f32.mrb[0].mxu0
        %v2562 = vadd.f32 %v2449, %v2561
        %v2563 = vpop.f32.mrb[0].mxu0
        %v2564 = vadd.f32 %v2451, %v2563
        %v2565 = vpop.f32.mrb[0].mxu0
        %v2566 = vadd.f32 %v2453, %v2565
        %v2567 = vpop.f32.mrb[0].mxu0
        %v2568 = vadd.f32 %v2455, %v2567
        %2569 = vmatprep.mubr.bf16.mxu0 0
        %2570 = vmatmul.mubr.bf16.gmra.mrb[0].mxu0 %v575
        %v2571 = vpop.f32.mrb[0].mxu0
        %v2572 = vadd.f32 %v2459, %v2571
        %v2573 = vpop.f32.mrb[0].mxu0
        %v2574 = vadd.f32 %v2461, %v2573
        %v2575 = vpop.f32.mrb[0].mxu0
        %v2576 = vadd.f32 %v2463, %v2575
        %v2577 = vpop.f32.mrb[0].mxu0
        %v2578 = vadd.f32 %v2465, %v2577
        %2579 = vmatprep.mubr.bf16.mxu0 0
        %2580 = vmatmul.mubr.bf16.gmra.mrb[0].mxu0 %v578
        %v2581 = vpop.f32.mrb[0].mxu0
        %v2582 = vadd.f32 %v2469, %v2581
        %v2583 = vpop.f32.mrb[0].mxu0
        %v2584 = vadd.f32 %v2471, %v2583
        %v2585 = vpop.f32.mrb[0].mxu0
        %v2586 = vadd.f32 %v2473, %v2585
        %v2587 = vpop.f32.mrb[0].mxu0
        %v2588 = vadd.f32 %v2475, %v2587
        %2589 = vmatprep.mubr.bf16.mxu0 0
        %2590 = vmatmul.mubr.bf16.gmra.mrb[0].mxu0 %v581
        %v2591 = vpop.f32.mrb[0].mxu0
        %v2592 = vadd.f32 %v2479, %v2591
        %v2593 = vpop.f32.mrb[0].mxu0
        %v2594 = vadd.f32 %v2481, %v2593
        %v2595 = vpop.f32.mrb[0].mxu0
        %v2596 = vadd.f32 %v2483, %v2595
        %v2597 = vpop.f32.mrb[0].mxu0
        %v2598 = vadd.f32 %v2485, %v2597
        %2599 = vmatprep.mubr.bf16.mxu0 0
        %2600 = vmatmul.mubr.bf16.gmra.mrb[0].mxu0 %v584
        %v2601 = vpop.f32.mrb[0].mxu0
        %v2602 = vadd.f32 %v2489, %v2601
        %v2603 = vpop.f32.mrb[0].mxu0
        %v2604 = vadd.f32 %v2491, %v2603
        %v2605 = vpop.f32.mrb[0].mxu0
        %v2606 = vadd.f32 %v2493, %v2605
        %v2607 = vpop.f32.mrb[0].mxu0
        %v2608 = vadd.f32 %v2495, %v2607
        %2609 = vmatprep.mubr.bf16.mxu0 0
        %2610 = vmatmul.mubr.bf16.gmra.mrb[0].mxu0 %v587
        %v2611 = vpop.f32.mrb[0].mxu0
        %v2612 = vadd.f32 %v2499, %v2611
        %v2613 = vpop.f32.mrb[0].mxu0
        %v2614 = vadd.f32 %v2501, %v2613
        %v2615 = vpop.f32.mrb[0].mxu0
        %v2616 = vadd.f32 %v2503, %v2615
        %v2617 = vpop.f32.mrb[0].mxu0
        %v2618 = vadd.f32 %v2505, %v2617
        %2619 = vdwg.mxu0
        %2620 = vmatprep.subr.bf16.mxu0 0
        %2621 = vmatpush1.bf16.msra.mxu0 %v1292
        %2622 = vmatprep.subr.bf16.mxu0 0
        %2623 = vmatpush1.bf16.msra.mxu0 %v1301
        %2624 = vmatprep.subr.bf16.mxu0 0
        %2625 = vmatpush1.bf16.msra.mxu0 %v1310
        %2626 = vmatprep.subr.bf16.mxu0 0
        %2627 = vmatpush1.bf16.msra.mxu0 %v1319
        %2628 = vmatprep.subr.bf16.mxu0 0
        %2629 = vmatpush1.bf16.msra.mxu0 %v1328
        %2630 = vmatprep.subr.bf16.mxu0 0
        %2631 = vmatpush1.bf16.msra.mxu0 %v1337
        %2632 = vmatprep.subr.bf16.mxu0 0
        %2633 = vmatpush1.bf16.msra.mxu0 %v1346
        %2634 = vmatprep.subr.bf16.mxu0 0
        %2635 = vmatpush1.bf16.msra.mxu0 %v1355
        %2636 = vmatprep.subr.bf16.mxu0 0
        %2637 = vmatpush1.bf16.msra.mxu0 %v1364
        %2638 = vmatprep.subr.bf16.mxu0 0
        %2639 = vmatpush1.bf16.msra.mxu0 %v1373
        %2640 = vmatprep.subr.bf16.mxu0 0
        %2641 = vmatpush1.bf16.msra.mxu0 %v1382
        %2642 = vmatprep.subr.bf16.mxu0 0
        %2643 = vmatpush1.bf16.msra.mxu0 %v1391
        %2644 = vmatprep.subr.bf16.mxu0 0
        %2645 = vmatpush1.bf16.msra.mxu0 %v1400
        %2646 = vmatprep.subr.bf16.mxu0 0
        %2647 = vmatpush1.bf16.msra.mxu0 %v1409
        %2648 = vmatprep.subr.bf16.mxu0 0
        %2649 = vmatpush1.bf16.msra.mxu0 %v1418
        %2650 = vmatprep.subr.bf16.mxu0 0
        %2651 = vmatpush1.bf16.msra.mxu0 %v1427
        %2652 = vmatprep.mubr.bf16.mxu0 %v565
        %2653 = vmatmul.mubr.bf16.gmra.mrb[0].mxu0 %v564
        %v2654 = vpop.f32.mrb[0].mxu0
        %v2655 = vadd.f32 0.0, %v2654
        %v2656 = vpop.f32.mrb[0].mxu0
        %v2657 = vpop.f32.mrb[0].mxu0
        %v2658 = vadd.f32 0.0, %v2657
        %v2659 = vpop.f32.mrb[0].mxu0
        %2660 = vmatprep.mubr.bf16.mxu0 %v568
        %2661 = vmatmul.mubr.bf16.gmra.mrb[0].mxu0 %v567
        %v2662 = vpop.f32.mrb[0].mxu0
        %v2663 = vadd.f32 0.0, %v2662
        %v2664 = vpop.f32.mrb[0].mxu0
        %v2665 = vpop.f32.mrb[0].mxu0
        %v2666 = vadd.f32 0.0, %v2665
        %v2667 = vpop.f32.mrb[0].mxu0
        %2668 = vmatprep.mubr.bf16.mxu0 %v571
        %2669 = vmatmul.mubr.bf16.gmra.mrb[0].mxu0 %v570
        %v2670 = vpop.f32.mrb[0].mxu0
        %v2671 = vadd.f32 0.0, %v2670
        %v2672 = vpop.f32.mrb[0].mxu0
        %v2673 = vpop.f32.mrb[0].mxu0
        %v2674 = vadd.f32 0.0, %v2673
        %v2675 = vpop.f32.mrb[0].mxu0
        %2676 = vmatprep.mubr.bf16.mxu0 %v574
        %2677 = vmatmul.mubr.bf16.gmra.mrb[0].mxu0 %v573
        %v2678 = vpop.f32.mrb[0].mxu0
        %v2679 = vadd.f32 0.0, %v2678
        %v2680 = vpop.f32.mrb[0].mxu0
        %v2681 = vpop.f32.mrb[0].mxu0
        %v2682 = vadd.f32 0.0, %v2681
        %v2683 = vpop.f32.mrb[0].mxu0
        %2684 = vmatprep.mubr.bf16.mxu0 %v577
        %2685 = vmatmul.mubr.bf16.gmra.mrb[0].mxu0 %v576
        %v2686 = vpop.f32.mrb[0].mxu0
        %v2687 = vadd.f32 0.0, %v2686
        %v2688 = vpop.f32.mrb[0].mxu0
        %v2689 = vpop.f32.mrb[0].mxu0
        %v2690 = vadd.f32 0.0, %v2689
        %v2691 = vpop.f32.mrb[0].mxu0
        %2692 = vmatprep.mubr.bf16.mxu0 %v580
        %2693 = vmatmul.mubr.bf16.gmra.mrb[0].mxu0 %v579
        %v2694 = vpop.f32.mrb[0].mxu0
        %v2695 = vadd.f32 0.0, %v2694
        %v2696 = vpop.f32.mrb[0].mxu0
        %v2697 = vpop.f32.mrb[0].mxu0
        %v2698 = vadd.f32 0.0, %v2697
        %v2699 = vpop.f32.mrb[0].mxu0
        %2700 = vmatprep.mubr.bf16.mxu0 %v583
        %2701 = vmatmul.mubr.bf16.gmra.mrb[0].mxu0 %v582
        %v2702 = vpop.f32.mrb[0].mxu0
        %v2703 = vadd.f32 0.0, %v2702
        %v2704 = vpop.f32.mrb[0].mxu0
        %v2705 = vpop.f32.mrb[0].mxu0
        %v2706 = vadd.f32 0.0, %v2705
        %v2707 = vpop.f32.mrb[0].mxu0
        %2708 = vmatprep.mubr.bf16.mxu0 %v586
        %2709 = vmatmul.mubr.bf16.gmra.mrb[0].mxu0 %v585
        %v2710 = vpop.f32.mrb[0].mxu0
        %v2711 = vadd.f32 0.0, %v2710
        %v2712 = vpop.f32.mrb[0].mxu0
        %v2713 = vpop.f32.mrb[0].mxu0
        %v2714 = vadd.f32 0.0, %v2713
        %v2715 = vpop.f32.mrb[0].mxu0
        %2716 = vdwg.mxu0
        %2717 = vmatprep.subr.bf16.mxu0 0
        %2718 = vmatpush1.bf16.msra.mxu0 %v1436
        %2719 = vmatprep.subr.bf16.mxu0 0
        %2720 = vmatpush1.bf16.msra.mxu0 %v1445
        %2721 = vmatprep.subr.bf16.mxu0 0
        %2722 = vmatpush1.bf16.msra.mxu0 %v1454
        %2723 = vmatprep.subr.bf16.mxu0 0
        %2724 = vmatpush1.bf16.msra.mxu0 %v1463
        %2725 = vmatprep.subr.bf16.mxu0 0
        %2726 = vmatpush1.bf16.msra.mxu0 %v1472
        %2727 = vmatprep.subr.bf16.mxu0 0
        %2728 = vmatpush1.bf16.msra.mxu0 %v1481
        %2729 = vmatprep.subr.bf16.mxu0 0
        %2730 = vmatpush1.bf16.msra.mxu0 %v1490
        %2731 = vmatprep.subr.bf16.mxu0 0
        %2732 = vmatpush1.bf16.msra.mxu0 %v1499
        %2733 = vmatprep.subr.bf16.mxu0 0
        %2734 = vmatpush1.bf16.msra.mxu0 0
        %2735 = vmatprep.subr.bf16.mxu0 0
        %2736 = vmatpush1.bf16.msra.mxu0 0
        %2737 = vmatprep.subr.bf16.mxu0 0
        %2738 = vmatpush1.bf16.msra.mxu0 0
        %2739 = vmatprep.subr.bf16.mxu0 0
        %2740 = vmatpush1.bf16.msra.mxu0 0
        %2741 = vmatprep.subr.bf16.mxu0 0
        %2742 = vmatpush1.bf16.msra.mxu0 0
        %2743 = vmatprep.subr.bf16.mxu0 0
        %2744 = vmatpush1.bf16.msra.mxu0 0
        %2745 = vmatprep.subr.bf16.mxu0 0
        %2746 = vmatpush1.bf16.msra.mxu0 0
        %2747 = vmatprep.subr.bf16.mxu0 0
        %2748 = vmatpush1.bf16.msra.mxu0 0
        %2749 = vmatprep.mubr.bf16.mxu0 0
        %2750 = vmatmul.mubr.bf16.gmra.mrb[0].mxu0 %v566
        %v2751 = vpop.f32.mrb[0].mxu0
        %v2752 = vadd.f32 %v2655, %v2751
        %v2753 = vpop.f32.mrb[0].mxu0
        %v2754 = vpop.f32.mrb[0].mxu0
        %v2755 = vadd.f32 %v2658, %v2754
        %v2756 = vpop.f32.mrb[0].mxu0
        %2757 = vmatprep.mubr.bf16.mxu0 0
        %2758 = vmatmul.mubr.bf16.gmra.mrb[0].mxu0 %v569
        %v2759 = vpop.f32.mrb[0].mxu0
        %v2760 = vadd.f32 %v2663, %v2759
        %v2761 = vpop.f32.mrb[0].mxu0
        %v2762 = vpop.f32.mrb[0].mxu0
        %v2763 = vadd.f32 %v2666, %v2762
        %v2764 = vpop.f32.mrb[0].mxu0
        %2765 = vmatprep.mubr.bf16.mxu0 0
        %2766 = vmatmul.mubr.bf16.gmra.mrb[0].mxu0 %v572
        %v2767 = vpop.f32.mrb[0].mxu0
        %v2768 = vadd.f32 %v2671, %v2767
        %v2769 = vpop.f32.mrb[0].mxu0
        %v2770 = vpop.f32.mrb[0].mxu0
        %v2771 = vadd.f32 %v2674, %v2770
        %v2772 = vpop.f32.mrb[0].mxu0
        %2773 = vmatprep.mubr.bf16.mxu0 0
        %2774 = vmatmul.mubr.bf16.gmra.mrb[0].mxu0 %v575
        %v2775 = vpop.f32.mrb[0].mxu0
        %v2776 = vadd.f32 %v2679, %v2775
        %v2777 = vpop.f32.mrb[0].mxu0
        %v2778 = vpop.f32.mrb[0].mxu0
        %v2779 = vadd.f32 %v2682, %v2778
        %v2780 = vpop.f32.mrb[0].mxu0
        %2781 = vmatprep.mubr.bf16.mxu0 0
        %2782 = vmatmul.mubr.bf16.gmra.mrb[0].mxu0 %v578
        %v2783 = vpop.f32.mrb[0].mxu0
        %v2784 = vadd.f32 %v2687, %v2783
        %v2785 = vpop.f32.mrb[0].mxu0
        %v2786 = vpop.f32.mrb[0].mxu0
        %v2787 = vadd.f32 %v2690, %v2786
        %v2788 = vpop.f32.mrb[0].mxu0
        %2789 = vmatprep.mubr.bf16.mxu0 0
        %2790 = vmatmul.mubr.bf16.gmra.mrb[0].mxu0 %v581
        %v2791 = vpop.f32.mrb[0].mxu0
        %v2792 = vadd.f32 %v2695, %v2791
        %v2793 = vpop.f32.mrb[0].mxu0
        %v2794 = vpop.f32.mrb[0].mxu0
        %v2795 = vadd.f32 %v2698, %v2794
        %v2796 = vpop.f32.mrb[0].mxu0
        %2797 = vmatprep.mubr.bf16.mxu0 0
        %2798 = vmatmul.mubr.bf16.gmra.mrb[0].mxu0 %v584
        %v2799 = vpop.f32.mrb[0].mxu0
        %v2800 = vadd.f32 %v2703, %v2799
        %v2801 = vpop.f32.mrb[0].mxu0
        %v2802 = vpop.f32.mrb[0].mxu0
        %v2803 = vadd.f32 %v2706, %v2802
        %v2804 = vpop.f32.mrb[0].mxu0
        %2805 = vmatprep.mubr.bf16.mxu0 0
        %2806 = vmatmul.mubr.bf16.gmra.mrb[0].mxu0 %v587
        %v2807 = vpop.f32.mrb[0].mxu0
        %v2808 = vadd.f32 %v2711, %v2807
        %v2809 = vpop.f32.mrb[0].mxu0
        %v2810 = vpop.f32.mrb[0].mxu0
        %v2811 = vadd.f32 %v2714, %v2810
        %v2812 = vpop.f32.mrb[0].mxu0
        %2813 = vdwg.mxu0
        %v2814 = vpack.c.bf16 %v1868, %v1864
        %v2815 = vpack.c.bf16 %v1870, %v1866
        %v2816 = vpack.c.bf16 %v2094, %v2090
        %v2817 = vpack.c.bf16 %v2096, %v2092
        %v2818 = vpack.c.bf16 %v2320, %v2316
        %v2819 = vpack.c.bf16 %v2322, %v2318
        %v2820 = vpack.c.bf16 %v2546, %v2542
        %v2821 = vpack.c.bf16 %v2548, %v2544
        %v2822 = vpack.c.bf16 %v2755, %v2752
        %v2823 = vpack.c.bf16 %v1878, %v1874
        %v2824 = vpack.c.bf16 %v1880, %v1876
        %v2825 = vpack.c.bf16 %v2104, %v2100
        %v2826 = vpack.c.bf16 %v2106, %v2102
        %v2827 = vpack.c.bf16 %v2330, %v2326
        %v2828 = vpack.c.bf16 %v2332, %v2328
        %v2829 = vpack.c.bf16 %v2556, %v2552
        %v2830 = vpack.c.bf16 %v2558, %v2554
        %v2831 = vpack.c.bf16 %v2763, %v2760
        %v2832 = vpack.c.bf16 %v1888, %v1884
        %v2833 = vpack.c.bf16 %v1890, %v1886
        %v2834 = vpack.c.bf16 %v2114, %v2110
        %v2835 = vpack.c.bf16 %v2116, %v2112
        %v2836 = vpack.c.bf16 %v2340, %v2336
        %v2837 = vpack.c.bf16 %v2342, %v2338
        %v2838 = vpack.c.bf16 %v2566, %v2562
        %v2839 = vpack.c.bf16 %v2568, %v2564
        %v2840 = vpack.c.bf16 %v2771, %v2768
        %v2841 = vpack.c.bf16 %v1898, %v1894
        %v2842 = vpack.c.bf16 %v1900, %v1896
        %v2843 = vpack.c.bf16 %v2124, %v2120
        %v2844 = vpack.c.bf16 %v2126, %v2122
        %v2845 = vpack.c.bf16 %v2350, %v2346
        %v2846 = vpack.c.bf16 %v2352, %v2348
        %v2847 = vpack.c.bf16 %v2576, %v2572
        %v2848 = vpack.c.bf16 %v2578, %v2574
        %v2849 = vpack.c.bf16 %v2779, %v2776
        %v2850 = vpack.c.bf16 %v1908, %v1904
        %v2851 = vpack.c.bf16 %v1910, %v1906
        %v2852 = vpack.c.bf16 %v2134, %v2130
        %v2853 = vpack.c.bf16 %v2136, %v2132
        %v2854 = vpack.c.bf16 %v2360, %v2356
        %v2855 = vpack.c.bf16 %v2362, %v2358
        %v2856 = vpack.c.bf16 %v2586, %v2582
        %v2857 = vpack.c.bf16 %v2588, %v2584
        %v2858 = vpack.c.bf16 %v2787, %v2784
        %v2859 = vpack.c.bf16 %v1918, %v1914
        %v2860 = vpack.c.bf16 %v1920, %v1916
        %v2861 = vpack.c.bf16 %v2144, %v2140
        %v2862 = vpack.c.bf16 %v2146, %v2142
        %v2863 = vpack.c.bf16 %v2370, %v2366
        %v2864 = vpack.c.bf16 %v2372, %v2368
        %v2865 = vpack.c.bf16 %v2596, %v2592
        %v2866 = vpack.c.bf16 %v2598, %v2594
        %v2867 = vpack.c.bf16 %v2795, %v2792
        %v2868 = vpack.c.bf16 %v1928, %v1924
        %v2869 = vpack.c.bf16 %v1930, %v1926
        %v2870 = vpack.c.bf16 %v2154, %v2150
        %v2871 = vpack.c.bf16 %v2156, %v2152
        %v2872 = vpack.c.bf16 %v2380, %v2376
        %v2873 = vpack.c.bf16 %v2382, %v2378
        %v2874 = vpack.c.bf16 %v2606, %v2602
        %v2875 = vpack.c.bf16 %v2608, %v2604
        %v2876 = vpack.c.bf16 %v2803, %v2800
        %v2877 = vpack.c.bf16 %v1938, %v1934
        %v2878 = vpack.c.bf16 %v1940, %v1936
        %v2879 = vpack.c.bf16 %v2164, %v2160
        %v2880 = vpack.c.bf16 %v2166, %v2162
        %v2881 = vpack.c.bf16 %v2390, %v2386
        %v2882 = vpack.c.bf16 %v2392, %v2388
        %v2883 = vpack.c.bf16 %v2616, %v2612
        %v2884 = vpack.c.bf16 %v2618, %v2614
        %v2885 = vpack.c.bf16 %v2811, %v2808
        %v2886 = vld [vmem:[%s2] sm:$0xff]
        %v2887 = vld [vmem:[%s2 + $0x8] sm:$0xf]
        %v2888 = vld [vmem:[%s2 + $0xc] sm:$0xff]
        %v2889 = vld [vmem:[%s2 + $0x14] sm:$0xf]
        %v2890 = vld [vmem:[%s2 + $0x18] sm:$0xff]
        %v2891 = vld [vmem:[%s2 + $0x20] sm:$0xf]
        %v2892 = vld [vmem:[%s2 + $0x24] sm:$0xff]
        %v2893 = vld [vmem:[%s2 + $0x2c] sm:$0xf]
        %v2894 = vld [vmem:[%s2 + $0x30] sm:$0xff]
        %v2895 = vld [vmem:[%s2 + $0x38] sm:$0xf]
        %v2896 = vld [vmem:[%s2 + $0x3c] sm:$0xff]
        %v2897 = vld [vmem:[%s2 + $0x44] sm:$0xf]
        %v2898 = vld [vmem:[%s2 + $0x48] sm:$0xff]
        %v2899 = vld [vmem:[%s2 + $0x50] sm:$0xf]
        %v2900 = vld [vmem:[%s2 + $0x54] sm:$0xff]
        %v2901 = vld [vmem:[%s2 + $0x5c] sm:$0xf]
        %v2902 = vld [vmem:[%s2 + $0x60] sm:$0xff]
        %v2903 = vld [vmem:[%s2 + $0x68] sm:$0xf]
        %v2904 = vld [vmem:[%s2 + $0x6c] sm:$0xff]
        %v2905 = vld [vmem:[%s2 + $0x74] sm:$0xf]
        %v2906 = vld [vmem:[%s2 + $0x78] sm:$0xff]
        %v2907 = vld [vmem:[%s2 + $0x80] sm:$0xf]
        %v2908 = vld [vmem:[%s2 + $0x84] sm:$0xff]
        %v2909 = vld [vmem:[%s2 + $0x8c] sm:$0xf]
        %v2910 = vld [vmem:[%s2 + $0x90] sm:$0xff]
        %v2911 = vld [vmem:[%s2 + $0x98] sm:$0xf]
        %v2912 = vld [vmem:[%s2 + $0x9c] sm:$0xff]
        %v2913 = vld [vmem:[%s2 + $0xa4] sm:$0xf]
        %v2914 = vld [vmem:[%s2 + $0xa8] sm:$0xff]
        %v2915 = vld [vmem:[%s2 + $0xb0] sm:$0xf]
        %v2916 = vld [vmem:[%s2 + $0xb4] sm:$0xff]
        %v2917 = vld [vmem:[%s2 + $0xbc] sm:$0xf]
        %v2918 = vld [vmem:[%s2 + $0xc0] sm:$0xff]
        %v2919 = vld [vmem:[%s2 + $0xc8] sm:$0xf]
        %v2920 = vld [vmem:[%s2 + $0xcc] sm:$0xff]
        %v2921 = vld [vmem:[%s2 + $0xd4] sm:$0xf]
        %v2922 = vld [vmem:[%s2 + $0xd8] sm:$0xff]
        %v2923 = vld [vmem:[%s2 + $0xe0] sm:$0xf]
        %v2924 = vld [vmem:[%s2 + $0xe4] sm:$0xff]
        %v2925 = vld [vmem:[%s2 + $0xec] sm:$0xf]
        %v2926 = vld [vmem:[%s2 + $0xf0] sm:$0xff]
        %v2927 = vld [vmem:[%s2 + $0xf8] sm:$0xf]
        %v2928 = vld [vmem:[%s2 + $0xfc] sm:$0xff]
        %v2929 = vld [vmem:[%s2 + $0x104] sm:$0xf]
        %v2930 = vld [vmem:[%s2 + $0x108] sm:$0xff]
        %v2931 = vld [vmem:[%s2 + $0x110] sm:$0xf]
        %v2932 = vld [vmem:[%s2 + $0x114] sm:$0xff]
        %v2933 = vld [vmem:[%s2 + $0x11c] sm:$0xf]
        %v2934 = vld [vmem:[%s2 + $0x120] sm:$0xff]
        %v2935 = vld [vmem:[%s2 + $0x128] sm:$0xf]
        %v2936 = vld [vmem:[%s2 + $0x12c] sm:$0xff]
        %v2937 = vld [vmem:[%s2 + $0x134] sm:$0xf]
        %v2938 = vld [vmem:[%s2 + $0x138] sm:$0xff]
        %v2939 = vld [vmem:[%s2 + $0x140] sm:$0xf]
        %v2940 = vld [vmem:[%s2 + $0x144] sm:$0xff]
        %v2941 = vld [vmem:[%s2 + $0x14c] sm:$0xf]
        %v2942 = vld [vmem:[%s2 + $0x150] sm:$0xff]
        %v2943 = vld [vmem:[%s2 + $0x158] sm:$0xf]
        %v2944 = vld [vmem:[%s2 + $0x15c] sm:$0xff]
        %v2945 = vld [vmem:[%s2 + $0x164] sm:$0xf]
        %v2946 = vld [vmem:[%s2 + $0x168] sm:$0xff]
        %v2947 = vld [vmem:[%s2 + $0x170] sm:$0xf]
        %v2948 = vld [vmem:[%s2 + $0x174] sm:$0xff]
        %v2949 = vld [vmem:[%s2 + $0x17c] sm:$0xf]
        %v2950 = vld [vmem:[%s2 + $0x180] sm:$0xff]
        %v2951 = vld [vmem:[%s2 + $0x188] sm:$0xf]
        %v2952 = vld [vmem:[%s2 + $0x18c] sm:$0xff]
        %v2953 = vld [vmem:[%s2 + $0x194] sm:$0xf]
        %v2954 = vld [vmem:[%s2 + $0x198] sm:$0xff]
        %v2955 = vld [vmem:[%s2 + $0x1a0] sm:$0xf]
        %v2956 = vld [vmem:[%s2 + $0x1a4] sm:$0xff]
        %v2957 = vld [vmem:[%s2 + $0x1ac] sm:$0xf]
        %v2958 = vld [vmem:[%s2 + $0x1b0] sm:$0xff]
        %v2959 = vld [vmem:[%s2 + $0x1b8] sm:$0xf]
        %v2960 = vld [vmem:[%s2 + $0x1bc] sm:$0xff]
        %v2961 = vld [vmem:[%s2 + $0x1c4] sm:$0xf]
        %v2962 = vld [vmem:[%s2 + $0x1c8] sm:$0xff]
        %v2963 = vld [vmem:[%s2 + $0x1d0] sm:$0xf]
        %v2964 = vld [vmem:[%s2 + $0x1d4] sm:$0xff]
        %v2965 = vld [vmem:[%s2 + $0x1dc] sm:$0xf]
        %v2966 = vld [vmem:[%s2 + $0x1e0] sm:$0xff]
        %v2967 = vld [vmem:[%s2 + $0x1e8] sm:$0xf]
        %v2968 = vld [vmem:[%s2 + $0x1ec] sm:$0xff]
        %v2969 = vld [vmem:[%s2 + $0x1f4] sm:$0xf]
        %v2970 = vld [vmem:[%s2 + $0x1f8] sm:$0xff]
        %v2971 = vld [vmem:[%s2 + $0x200] sm:$0xf]
        %v2972 = vld [vmem:[%s2 + $0x204] sm:$0xff]
        %v2973 = vld [vmem:[%s2 + $0x20c] sm:$0xf]
        %v2974 = vld [vmem:[%s2 + $0x210] sm:$0xff]
        %v2975 = vld [vmem:[%s2 + $0x218] sm:$0xf]
        %v2976 = vld [vmem:[%s2 + $0x21c] sm:$0xff]
        %v2977 = vld [vmem:[%s2 + $0x224] sm:$0xf]
        %v2978 = vld [vmem:[%s2 + $0x228] sm:$0xff]
        %v2979 = vld [vmem:[%s2 + $0x230] sm:$0xf]
        %v2980 = vld [vmem:[%s2 + $0x234] sm:$0xff]
        %v2981 = vld [vmem:[%s2 + $0x23c] sm:$0xf]
        %v2982 = vld [vmem:[%s3] sm:$0x7]
        %v2983 = vlaneseq
        %v2984 = vshrl.u32 %v2983, 7
        %v2985 = vadd.s32 %v2984, 8
        %v2986 = vadd.s32 %v2984, 16
        %v2987 = vadd.s32 %v2984, 24
        %v2988 = vadd.s32 %v2984, 32
        %v2989 = vadd.s32 %v2984, 40
        %v2990 = vadd.s32 %v2984, 48
        %v2991 = vadd.s32 %v2984, 56
        %v2992 = vadd.s32 %v2984, 64
        %v2993 = vadd.s32 %v2984, 72
        %v2994 = vadd.s32 %v2984, 80
        %v2995 = vadd.s32 %v2984, 88
        %v2996 = vadd.s32 %v2984, 96
        %v2997 = vadd.s32 %v2984, 104
        %v2998 = vadd.s32 %v2984, 112
        %v2999 = vadd.s32 %v2984, 120
        %v3000 = vlaneseq
        %v3001 = vand.u32 %v3000, 127
        %vm3002 = vcmp.le.s32.totalorder %v3001, %v2984
        %vm3003 = vcmp.le.s32.totalorder %v3001, %v2985
        %vm3004 = vcmp.le.s32.totalorder %v3001, %v2986
        %vm3005 = vcmp.le.s32.totalorder %v3001, %v2987
        %vm3006 = vcmp.le.s32.totalorder %v3001, %v2988
        %vm3007 = vcmp.le.s32.totalorder %v3001, %v2989
        %vm3008 = vcmp.le.s32.totalorder %v3001, %v2990
        %vm3009 = vcmp.le.s32.totalorder %v3001, %v2991
        %vm3010 = vcmp.le.s32.totalorder %v3001, %v2992
        %vm3011 = vcmp.le.s32.totalorder %v3001, %v2993
        %vm3012 = vcmp.le.s32.totalorder %v3001, %v2994
        %vm3013 = vcmp.le.s32.totalorder %v3001, %v2995
        %vm3014 = vcmp.le.s32.totalorder %v3001, %v2996
        %vm3015 = vcmp.le.s32.totalorder %v3001, %v2997
        %vm3016 = vcmp.le.s32.totalorder %v3001, %v2998
        %vm3017 = vcmp.le.s32.totalorder %v3001, %v2999
        %vm3018 = vcmask 523264
        %v3020 = vsel %vm3018, %v2814, 0
        %v3023 = vsel %vm3018, %v2823, 0
        %v3026 = vsel %vm3018, %v2832, 0
        %v3029 = vsel %vm3018, %v2841, 0
        %v3032 = vsel %vm3018, %v2850, 0
        %v3035 = vsel %vm3018, %v2859, 0
        %v3038 = vsel %vm3018, %v2868, 0
        %v3041 = vsel %vm3018, %v2877, 0
        %v3044 = vsel %vm3018, %v2815, 0
        %v3047 = vsel %vm3018, %v2824, 0
        %v3050 = vsel %vm3018, %v2833, 0
        %v3053 = vsel %vm3018, %v2842, 0
        %v3056 = vsel %vm3018, %v2851, 0
        %v3059 = vsel %vm3018, %v2860, 0
        %v3062 = vsel %vm3018, %v2869, 0
        %v3065 = vsel %vm3018, %v2878, 0
        %3067 = vmatprep.subr.bf16.mxu0 0
        %3068 = vmatpush1.bf16.xpose.msra.mxu0 %v3044
        %3069 = vmatprep.subr.bf16.mxu0 0
        %3070 = vmatpush1.bf16.xpose.msra.mxu0 %v3047
        %3071 = vmatprep.subr.bf16.mxu0 0
        %3072 = vmatpush1.bf16.xpose.msra.mxu0 %v3050
        %3073 = vmatprep.subr.bf16.mxu0 0
        %3074 = vmatpush1.bf16.xpose.msra.mxu0 %v3053
        %3075 = vmatprep.subr.bf16.mxu0 0
        %3076 = vmatpush1.bf16.xpose.msra.mxu0 %v3056
        %3077 = vmatprep.subr.bf16.mxu0 0
        %3078 = vmatpush1.bf16.xpose.msra.mxu0 %v3059
        %3079 = vmatprep.subr.bf16.mxu0 0
        %3080 = vmatpush1.bf16.xpose.msra.mxu0 %v3062
        %3081 = vmatprep.subr.bf16.mxu0 0
        %3082 = vmatpush1.bf16.xpose.msra.mxu0 %v3065
        %3083 = vmatprep.subr.bf16.mxu0 0
        %3084 = vmatpush1.bf16.xpose.msra.mxu0 0
        %3085 = vmatprep.subr.bf16.mxu0 0
        %3086 = vmatpush1.bf16.xpose.msra.mxu0 0
        %3087 = vmatprep.subr.bf16.mxu0 0
        %3088 = vmatpush1.bf16.xpose.msra.mxu0 0
        %3089 = vmatprep.subr.bf16.mxu0 0
        %3090 = vmatpush1.bf16.xpose.msra.mxu0 0
        %3091 = vmatprep.subr.bf16.mxu0 0
        %3092 = vmatpush1.bf16.xpose.msra.mxu0 0
        %3093 = vmatprep.subr.bf16.mxu0 0
        %3094 = vmatpush1.bf16.xpose.msra.mxu0 0
        %3095 = vmatprep.subr.bf16.mxu0 0
        %3096 = vmatpush1.bf16.xpose.msra.mxu0 0
        %3097 = vmatprep.subr.bf16.mxu0 0
        %3098 = vmatpush1.bf16.xpose.msra.mxu0 0
        %3099 = vmatprep.mubr.bf16.mxu0 0
        %3100 = vmatmul.mubr.bf16.gmra.mrb[0].mxu0 %v3020
        %v3101 = vpop.f32.mrb[0].mxu0
        %v3102 = vadd.f32 0.0, %v3101
        %v3103 = vpop.f32.mrb[0].mxu0
        %v3104 = vpop.f32.mrb[0].mxu0
        %v3105 = vadd.f32 0.0, %v3104
        %v3106 = vpop.f32.mrb[0].mxu0
        %3107 = vmatprep.mubr.bf16.mxu0 0
        %3108 = vmatmul.mubr.bf16.gmra.mrb[0].mxu0 %v3023
        %v3109 = vpop.f32.mrb[0].mxu0
        %v3110 = vadd.f32 0.0, %v3109
        %v3111 = vpop.f32.mrb[0].mxu0
        %v3112 = vpop.f32.mrb[0].mxu0
        %v3113 = vadd.f32 0.0, %v3112
        %v3114 = vpop.f32.mrb[0].mxu0
        %3115 = vmatprep.mubr.bf16.mxu0 0
        %3116 = vmatmul.mubr.bf16.gmra.mrb[0].mxu0 %v3026
        %v3117 = vpop.f32.mrb[0].mxu0
        %v3118 = vadd.f32 0.0, %v3117
        %v3119 = vpop.f32.mrb[0].mxu0
        %v3120 = vpop.f32.mrb[0].mxu0
        %v3121 = vadd.f32 0.0, %v3120
        %v3122 = vpop.f32.mrb[0].mxu0
        %3123 = vmatprep.mubr.bf16.mxu0 0
        %3124 = vmatmul.mubr.bf16.gmra.mrb[0].mxu0 %v3029
        %v3125 = vpop.f32.mrb[0].mxu0
        %v3126 = vadd.f32 0.0, %v3125
        %v3127 = vpop.f32.mrb[0].mxu0
        %v3128 = vpop.f32.mrb[0].mxu0
        %v3129 = vadd.f32 0.0, %v3128
        %v3130 = vpop.f32.mrb[0].mxu0
        %3131 = vmatprep.mubr.bf16.mxu0 0
        %3132 = vmatmul.mubr.bf16.gmra.mrb[0].mxu0 %v3032
        %v3133 = vpop.f32.mrb[0].mxu0
        %v3134 = vadd.f32 0.0, %v3133
        %v3135 = vpop.f32.mrb[0].mxu0
        %v3136 = vpop.f32.mrb[0].mxu0
        %v3137 = vadd.f32 0.0, %v3136
        %v3138 = vpop.f32.mrb[0].mxu0
        %3139 = vmatprep.mubr.bf16.mxu0 0
        %3140 = vmatmul.mubr.bf16.gmra.mrb[0].mxu0 %v3035
        %v3141 = vpop.f32.mrb[0].mxu0
        %v3142 = vadd.f32 0.0, %v3141
        %v3143 = vpop.f32.mrb[0].mxu0
        %v3144 = vpop.f32.mrb[0].mxu0
        %v3145 = vadd.f32 0.0, %v3144
        %v3146 = vpop.f32.mrb[0].mxu0
        %3147 = vmatprep.mubr.bf16.mxu0 0
        %3148 = vmatmul.mubr.bf16.gmra.mrb[0].mxu0 %v3038
        %v3149 = vpop.f32.mrb[0].mxu0
        %v3150 = vadd.f32 0.0, %v3149
        %v3151 = vpop.f32.mrb[0].mxu0
        %v3152 = vpop.f32.mrb[0].mxu0
        %v3153 = vadd.f32 0.0, %v3152
        %v3154 = vpop.f32.mrb[0].mxu0
        %3155 = vmatprep.mubr.bf16.mxu0 0
        %3156 = vmatmul.mubr.bf16.gmra.mrb[0].mxu0 %v3041
        %v3157 = vpop.f32.mrb[0].mxu0
        %v3158 = vadd.f32 0.0, %v3157
        %v3159 = vpop.f32.mrb[0].mxu0
        %v3160 = vpop.f32.mrb[0].mxu0
        %v3161 = vadd.f32 0.0, %v3160
        %v3162 = vpop.f32.mrb[0].mxu0
        %3163 = vdwg.mxu0
        %v3164 = vsel %vm3002, %v3102, -inf
        %v3165 = vsel %vm3003, %v3105, -inf
        %v3166 = vsel %vm3004, %v3110, -inf
        %v3167 = vsel %vm3005, %v3113, -inf
        %v3168 = vsel %vm3006, %v3118, -inf
        %v3169 = vsel %vm3007, %v3121, -inf
        %v3170 = vsel %vm3008, %v3126, -inf
        %v3171 = vsel %vm3009, %v3129, -inf
        %v3172 = vsel %vm3010, %v3134, -inf
        %v3173 = vsel %vm3011, %v3137, -inf
        %v3174 = vsel %vm3012, %v3142, -inf
        %v3175 = vsel %vm3013, %v3145, -inf
        %v3176 = vsel %vm3014, %v3150, -inf
        %v3177 = vsel %vm3015, %v3153, -inf
        %v3178 = vsel %vm3016, %v3158, -inf
        %v3179 = vsel %vm3017, %v3161, -inf
        %3180 = vmax.xlane.f32.xlu0 %v3164
        %v3181 = vpop.xlane.xlu0 %3180
        %3182 = vmax.xlane.f32.xlu0 %v3165
        %v3183 = vpop.xlane.xlu0 %3182
        %3184 = vmax.xlane.f32.xlu0 %v3166
        %v3185 = vpop.xlane.xlu0 %3184
        %3186 = vmax.xlane.f32.xlu0 %v3167
        %v3187 = vpop.xlane.xlu0 %3186
        %3188 = vmax.xlane.f32.xlu0 %v3168
        %v3189 = vpop.xlane.xlu0 %3188
        %3190 = vmax.xlane.f32.xlu0 %v3169
        %v3191 = vpop.xlane.xlu0 %3190
        %3192 = vmax.xlane.f32.xlu0 %v3170
        %v3193 = vpop.xlane.xlu0 %3192
        %3194 = vmax.xlane.f32.xlu0 %v3171
        %v3195 = vpop.xlane.xlu0 %3194
        %3196 = vmax.xlane.f32.xlu0 %v3172
        %v3197 = vpop.xlane.xlu0 %3196
        %3198 = vmax.xlane.f32.xlu0 %v3173
        %v3199 = vpop.xlane.xlu0 %3198
        %3200 = vmax.xlane.f32.xlu0 %v3174
        %v3201 = vpop.xlane.xlu0 %3200
        %3202 = vmax.xlane.f32.xlu0 %v3175
        %v3203 = vpop.xlane.xlu0 %3202
        %3204 = vmax.xlane.f32.xlu0 %v3176
        %v3205 = vpop.xlane.xlu0 %3204
        %3206 = vmax.xlane.f32.xlu0 %v3177
        %v3207 = vpop.xlane.xlu0 %3206
        %3208 = vmax.xlane.f32.xlu0 %v3178
        %v3209 = vpop.xlane.xlu0 %3208
        %3210 = vmax.xlane.f32.xlu0 %v3179
        %v3211 = vpop.xlane.xlu0 %3210
        %v3212 = vsub.f32 %v3164, %v3181
        %v3213 = vsub.f32 %v3165, %v3183
        %v3214 = vsub.f32 %v3166, %v3185
        %v3215 = vsub.f32 %v3167, %v3187
        %v3216 = vsub.f32 %v3168, %v3189
        %v3217 = vsub.f32 %v3169, %v3191
        %v3218 = vsub.f32 %v3170, %v3193
        %v3219 = vsub.f32 %v3171, %v3195
        %v3220 = vsub.f32 %v3172, %v3197
        %v3221 = vsub.f32 %v3173, %v3199
        %v3222 = vsub.f32 %v3174, %v3201
        %v3223 = vsub.f32 %v3175, %v3203
        %v3224 = vsub.f32 %v3176, %v3205
        %v3225 = vsub.f32 %v3177, %v3207
        %v3226 = vsub.f32 %v3178, %v3209
        %v3227 = vsub.f32 %v3179, %v3211
        %v3228 = vmul.f32 %v3212, 1.442695
        %v3229 = vpow.pop %v3228
        %v3230 = vmul.f32 %v3213, 1.442695
        %v3231 = vpow.pop %v3230
        %v3232 = vmul.f32 %v3214, 1.442695
        %v3233 = vpow.pop %v3232
        %v3234 = vmul.f32 %v3215, 1.442695
        %v3235 = vpow.pop %v3234
        %v3236 = vmul.f32 %v3216, 1.442695
        %v3237 = vpow.pop %v3236
        %v3238 = vmul.f32 %v3217, 1.442695
        %v3239 = vpow.pop %v3238
        %v3240 = vmul.f32 %v3218, 1.442695
        %v3241 = vpow.pop %v3240
        %v3242 = vmul.f32 %v3219, 1.442695
        %v3243 = vpow.pop %v3242
        %v3244 = vmul.f32 %v3220, 1.442695
        %v3245 = vpow.pop %v3244
        %v3246 = vmul.f32 %v3221, 1.442695
        %v3247 = vpow.pop %v3246
        %v3248 = vmul.f32 %v3222, 1.442695
        %v3249 = vpow.pop %v3248
        %v3250 = vmul.f32 %v3223, 1.442695
        %v3251 = vpow.pop %v3250
        %v3252 = vmul.f32 %v3224, 1.442695
        %v3253 = vpow.pop %v3252
        %v3254 = vmul.f32 %v3225, 1.442695
        %v3255 = vpow.pop %v3254
        %v3256 = vmul.f32 %v3226, 1.442695
        %v3257 = vpow.pop %v3256
        %v3258 = vmul.f32 %v3227, 1.442695
        %v3259 = vpow.pop %v3258
        %3260 = vadd.xlane.f32.xlu0 %v3229
        %v3261 = vpop.xlane.xlu0 %3260
        %3262 = vadd.xlane.f32.xlu0 %v3231
        %v3263 = vpop.xlane.xlu0 %3262
        %3264 = vadd.xlane.f32.xlu0 %v3233
        %v3265 = vpop.xlane.xlu0 %3264
        %3266 = vadd.xlane.f32.xlu0 %v3235
        %v3267 = vpop.xlane.xlu0 %3266
        %3268 = vadd.xlane.f32.xlu0 %v3237
        %v3269 = vpop.xlane.xlu0 %3268
        %3270 = vadd.xlane.f32.xlu0 %v3239
        %v3271 = vpop.xlane.xlu0 %3270
        %3272 = vadd.xlane.f32.xlu0 %v3241
        %v3273 = vpop.xlane.xlu0 %3272
        %3274 = vadd.xlane.f32.xlu0 %v3243
        %v3275 = vpop.xlane.xlu0 %3274
        %3276 = vadd.xlane.f32.xlu0 %v3245
        %v3277 = vpop.xlane.xlu0 %3276
        %3278 = vadd.xlane.f32.xlu0 %v3247
        %v3279 = vpop.xlane.xlu0 %3278
        %3280 = vadd.xlane.f32.xlu0 %v3249
        %v3281 = vpop.xlane.xlu0 %3280
        %3282 = vadd.xlane.f32.xlu0 %v3251
        %v3283 = vpop.xlane.xlu0 %3282
        %3284 = vadd.xlane.f32.xlu0 %v3253
        %v3285 = vpop.xlane.xlu0 %3284
        %3286 = vadd.xlane.f32.xlu0 %v3255
        %v3287 = vpop.xlane.xlu0 %3286
        %3288 = vadd.xlane.f32.xlu0 %v3257
        %v3289 = vpop.xlane.xlu0 %3288
        %3290 = vadd.xlane.f32.xlu0 %v3259
        %v3291 = vpop.xlane.xlu0 %3290
        %v3292 = vrcp.pop %v3261
        %v3293 = vrcp.pop %v3263
        %v3294 = vrcp.pop %v3265
        %v3295 = vrcp.pop %v3267
        %v3296 = vrcp.pop %v3269
        %v3297 = vrcp.pop %v3271
        %v3298 = vrcp.pop %v3273
        %v3299 = vrcp.pop %v3275
        %v3300 = vrcp.pop %v3277
        %v3301 = vrcp.pop %v3279
        %v3302 = vrcp.pop %v3281
        %v3303 = vrcp.pop %v3283
        %v3304 = vrcp.pop %v3285
        %v3305 = vrcp.pop %v3287
        %v3306 = vrcp.pop %v3289
        %v3307 = vrcp.pop %v3291
        %v3308 = vmul.f32 %v3229, %v3292
        %v3309 = vmul.f32 %v3231, %v3293
        %v3310 = vmul.f32 %v3233, %v3294
        %v3311 = vmul.f32 %v3235, %v3295
        %v3312 = vmul.f32 %v3237, %v3296
        %v3313 = vmul.f32 %v3239, %v3297
        %v3314 = vmul.f32 %v3241, %v3298
        %v3315 = vmul.f32 %v3243, %v3299
        %v3316 = vmul.f32 %v3245, %v3300
        %v3317 = vmul.f32 %v3247, %v3301
        %v3318 = vmul.f32 %v3249, %v3302
        %v3319 = vmul.f32 %v3251, %v3303
        %v3320 = vmul.f32 %v3253, %v3304
        %v3321 = vmul.f32 %v3255, %v3305
        %v3322 = vmul.f32 %v3257, %v3306
        %v3323 = vmul.f32 %v3259, %v3307
        %v3324 = vpack.c.bf16 %v3309, %v3308
        %v3325 = vpack.c.bf16 %v3311, %v3310
        %v3326 = vpack.c.bf16 %v3313, %v3312
        %v3327 = vpack.c.bf16 %v3315, %v3314
        %v3328 = vpack.c.bf16 %v3317, %v3316
        %v3329 = vpack.c.bf16 %v3319, %v3318
        %v3330 = vpack.c.bf16 %v3321, %v3320
        %v3331 = vpack.c.bf16 %v3323, %v3322
        %3332 = vmatprep.subr.bf16.mxu0 0
        %3333 = vmatpush1.bf16.msra.mxu0 %v2816
        %3334 = vmatprep.subr.bf16.mxu0 0
        %3335 = vmatpush1.bf16.msra.mxu0 %v2825
        %3336 = vmatprep.subr.bf16.mxu0 0
        %3337 = vmatpush1.bf16.msra.mxu0 %v2834
        %3338 = vmatprep.subr.bf16.mxu0 0
        %3339 = vmatpush1.bf16.msra.mxu0 %v2843
        %3340 = vmatprep.subr.bf16.mxu0 0
        %3341 = vmatpush1.bf16.msra.mxu0 %v2852
        %3342 = vmatprep.subr.bf16.mxu0 0
        %3343 = vmatpush1.bf16.msra.mxu0 %v2861
        %3344 = vmatprep.subr.bf16.mxu0 0
        %3345 = vmatpush1.bf16.msra.mxu0 %v2870
        %3346 = vmatprep.subr.bf16.mxu0 0
        %3347 = vmatpush1.bf16.msra.mxu0 %v2879
        %3348 = vmatprep.subr.bf16.mxu0 0
        %3349 = vmatpush1.bf16.msra.mxu0 0
        %3350 = vmatprep.subr.bf16.mxu0 0
        %3351 = vmatpush1.bf16.msra.mxu0 0
        %3352 = vmatprep.subr.bf16.mxu0 0
        %3353 = vmatpush1.bf16.msra.mxu0 0
        %3354 = vmatprep.subr.bf16.mxu0 0
        %3355 = vmatpush1.bf16.msra.mxu0 0
        %3356 = vmatprep.subr.bf16.mxu0 0
        %3357 = vmatpush1.bf16.msra.mxu0 0
        %3358 = vmatprep.subr.bf16.mxu0 0
        %3359 = vmatpush1.bf16.msra.mxu0 0
        %3360 = vmatprep.subr.bf16.mxu0 0
        %3361 = vmatpush1.bf16.msra.mxu0 0
        %3362 = vmatprep.subr.bf16.mxu0 0
        %3363 = vmatpush1.bf16.msra.mxu0 0
        %3364 = vmatprep.mubr.bf16.mxu0 0
        %3365 = vmatmul.mubr.bf16.gmra.mrb[0].mxu0 %v3324
        %v3366 = vpop.f32.mrb[0].mxu0
        %v3367 = vadd.f32 0.0, %v3366
        %v3368 = vpop.f32.mrb[0].mxu0
        %v3369 = vpop.f32.mrb[0].mxu0
        %v3370 = vadd.f32 0.0, %v3369
        %v3371 = vpop.f32.mrb[0].mxu0
        %3372 = vmatprep.mubr.bf16.mxu0 0
        %3373 = vmatmul.mubr.bf16.gmra.mrb[0].mxu0 %v3325
        %v3374 = vpop.f32.mrb[0].mxu0
        %v3375 = vadd.f32 0.0, %v3374
        %v3376 = vpop.f32.mrb[0].mxu0
        %v3377 = vpop.f32.mrb[0].mxu0
        %v3378 = vadd.f32 0.0, %v3377
        %v3379 = vpop.f32.mrb[0].mxu0
        %3380 = vmatprep.mubr.bf16.mxu0 0
        %3381 = vmatmul.mubr.bf16.gmra.mrb[0].mxu0 %v3326
        %v3382 = vpop.f32.mrb[0].mxu0
        %v3383 = vadd.f32 0.0, %v3382
        %v3384 = vpop.f32.mrb[0].mxu0
        %v3385 = vpop.f32.mrb[0].mxu0
        %v3386 = vadd.f32 0.0, %v3385
        %v3387 = vpop.f32.mrb[0].mxu0
        %3388 = vmatprep.mubr.bf16.mxu0 0
        %3389 = vmatmul.mubr.bf16.gmra.mrb[0].mxu0 %v3327
        %v3390 = vpop.f32.mrb[0].mxu0
        %v3391 = vadd.f32 0.0, %v3390
        %v3392 = vpop.f32.mrb[0].mxu0
        %v3393 = vpop.f32.mrb[0].mxu0
        %v3394 = vadd.f32 0.0, %v3393
        %v3395 = vpop.f32.mrb[0].mxu0
        %3396 = vmatprep.mubr.bf16.mxu0 0
        %3397 = vmatmul.mubr.bf16.gmra.mrb[0].mxu0 %v3328
        %v3398 = vpop.f32.mrb[0].mxu0
        %v3399 = vadd.f32 0.0, %v3398
        %v3400 = vpop.f32.mrb[0].mxu0
        %v3401 = vpop.f32.mrb[0].mxu0
        %v3402 = vadd.f32 0.0, %v3401
        %v3403 = vpop.f32.mrb[0].mxu0
        %3404 = vmatprep.mubr.bf16.mxu0 0
        %3405 = vmatmul.mubr.bf16.gmra.mrb[0].mxu0 %v3329
        %v3406 = vpop.f32.mrb[0].mxu0
        %v3407 = vadd.f32 0.0, %v3406
        %v3408 = vpop.f32.mrb[0].mxu0
        %v3409 = vpop.f32.mrb[0].mxu0
        %v3410 = vadd.f32 0.0, %v3409
        %v3411 = vpop.f32.mrb[0].mxu0
        %3412 = vmatprep.mubr.bf16.mxu0 0
        %3413 = vmatmul.mubr.bf16.gmra.mrb[0].mxu0 %v3330
        %v3414 = vpop.f32.mrb[0].mxu0
        %v3415 = vadd.f32 0.0, %v3414
        %v3416 = vpop.f32.mrb[0].mxu0
        %v3417 = vpop.f32.mrb[0].mxu0
        %v3418 = vadd.f32 0.0, %v3417
        %v3419 = vpop.f32.mrb[0].mxu0
        %3420 = vmatprep.mubr.bf16.mxu0 0
        %3421 = vmatmul.mubr.bf16.gmra.mrb[0].mxu0 %v3331
        %v3422 = vpop.f32.mrb[0].mxu0
        %v3423 = vadd.f32 0.0, %v3422
        %v3424 = vpop.f32.mrb[0].mxu0
        %v3425 = vpop.f32.mrb[0].mxu0
        %v3426 = vadd.f32 0.0, %v3425
        %v3427 = vpop.f32.mrb[0].mxu0
        %3428 = vdwg.mxu0
        %3437 = vrot.lane.b32.xlu0 %v2814, 64
        %v3438 = vpop.permute.xlu0 %3437
        %3439 = vrot.lane.b32.xlu0 %v2823, 64
        %v3440 = vpop.permute.xlu0 %3439
        %3441 = vrot.lane.b32.xlu0 %v2832, 64
        %v3442 = vpop.permute.xlu0 %3441
        %3443 = vrot.lane.b32.xlu0 %v2841, 64
        %v3444 = vpop.permute.xlu0 %3443
        %3445 = vrot.lane.b32.xlu0 %v2850, 64
        %v3446 = vpop.permute.xlu0 %3445
        %3447 = vrot.lane.b32.xlu0 %v2859, 64
        %v3448 = vpop.permute.xlu0 %3447
        %3449 = vrot.lane.b32.xlu0 %v2868, 64
        %v3450 = vpop.permute.xlu0 %3449
        %3451 = vrot.lane.b32.xlu0 %v2877, 64
        %v3452 = vpop.permute.xlu0 %3451
        %3461 = vrot.lane.b32.xlu0 %v2815, 64
        %v3462 = vpop.permute.xlu0 %3461
        %3463 = vrot.lane.b32.xlu0 %v2824, 64
        %v3464 = vpop.permute.xlu0 %3463
        %3465 = vrot.lane.b32.xlu0 %v2833, 64
        %v3466 = vpop.permute.xlu0 %3465
        %3467 = vrot.lane.b32.xlu0 %v2842, 64
        %v3468 = vpop.permute.xlu0 %3467
        %3469 = vrot.lane.b32.xlu0 %v2851, 64
        %v3470 = vpop.permute.xlu0 %3469
        %3471 = vrot.lane.b32.xlu0 %v2860, 64
        %v3472 = vpop.permute.xlu0 %3471
        %3473 = vrot.lane.b32.xlu0 %v2869, 64
        %v3474 = vpop.permute.xlu0 %3473
        %3475 = vrot.lane.b32.xlu0 %v2878, 64
        %v3476 = vpop.permute.xlu0 %3475
        %v3478 = vsel %vm3018, %v3438, 0
        %v3481 = vsel %vm3018, %v3440, 0
        %v3484 = vsel %vm3018, %v3442, 0
        %v3487 = vsel %vm3018, %v3444, 0
        %v3490 = vsel %vm3018, %v3446, 0
        %v3493 = vsel %vm3018, %v3448, 0
        %v3496 = vsel %vm3018, %v3450, 0
        %v3499 = vsel %vm3018, %v3452, 0
        %v3502 = vsel %vm3018, %v3462, 0
        %v3505 = vsel %vm3018, %v3464, 0
        %v3508 = vsel %vm3018, %v3466, 0
        %v3511 = vsel %vm3018, %v3468, 0
        %v3514 = vsel %vm3018, %v3470, 0
        %v3517 = vsel %vm3018, %v3472, 0
        %v3520 = vsel %vm3018, %v3474, 0
        %v3523 = vsel %vm3018, %v3476, 0
        %3525 = vmatprep.subr.bf16.mxu0 0
        %3526 = vmatpush1.bf16.xpose.msra.mxu0 %v3502
        %3527 = vmatprep.subr.bf16.mxu0 0
        %3528 = vmatpush1.bf16.xpose.msra.mxu0 %v3505
        %3529 = vmatprep.subr.bf16.mxu0 0
        %3530 = vmatpush1.bf16.xpose.msra.mxu0 %v3508
        %3531 = vmatprep.subr.bf16.mxu0 0
        %3532 = vmatpush1.bf16.xpose.msra.mxu0 %v3511
        %3533 = vmatprep.subr.bf16.mxu0 0
        %3534 = vmatpush1.bf16.xpose.msra.mxu0 %v3514
        %3535 = vmatprep.subr.bf16.mxu0 0
        %3536 = vmatpush1.bf16.xpose.msra.mxu0 %v3517
        %3537 = vmatprep.subr.bf16.mxu0 0
        %3538 = vmatpush1.bf16.xpose.msra.mxu0 %v3520
        %3539 = vmatprep.subr.bf16.mxu0 0
        %3540 = vmatpush1.bf16.xpose.msra.mxu0 %v3523
        %3541 = vmatprep.subr.bf16.mxu0 0
        %3542 = vmatpush1.bf16.xpose.msra.mxu0 0
        %3543 = vmatprep.subr.bf16.mxu0 0
        %3544 = vmatpush1.bf16.xpose.msra.mxu0 0
        %3545 = vmatprep.subr.bf16.mxu0 0
        %3546 = vmatpush1.bf16.xpose.msra.mxu0 0
        %3547 = vmatprep.subr.bf16.mxu0 0
        %3548 = vmatpush1.bf16.xpose.msra.mxu0 0
        %3549 = vmatprep.subr.bf16.mxu0 0
        %3550 = vmatpush1.bf16.xpose.msra.mxu0 0
        %3551 = vmatprep.subr.bf16.mxu0 0
        %3552 = vmatpush1.bf16.xpose.msra.mxu0 0
        %3553 = vmatprep.subr.bf16.mxu0 0
        %3554 = vmatpush1.bf16.xpose.msra.mxu0 0
        %3555 = vmatprep.subr.bf16.mxu0 0
        %3556 = vmatpush1.bf16.xpose.msra.mxu0 0
        %3557 = vmatprep.mubr.bf16.mxu0 0
        %3558 = vmatmul.mubr.bf16.gmra.mrb[0].mxu0 %v3478
        %v3559 = vpop.f32.mrb[0].mxu0
        %v3560 = vadd.f32 0.0, %v3559
        %v3561 = vpop.f32.mrb[0].mxu0
        %v3562 = vpop.f32.mrb[0].mxu0
        %v3563 = vadd.f32 0.0, %v3562
        %v3564 = vpop.f32.mrb[0].mxu0
        %3565 = vmatprep.mubr.bf16.mxu0 0
        %3566 = vmatmul.mubr.bf16.gmra.mrb[0].mxu0 %v3481
        %v3567 = vpop.f32.mrb[0].mxu0
        %v3568 = vadd.f32 0.0, %v3567
        %v3569 = vpop.f32.mrb[0].mxu0
        %v3570 = vpop.f32.mrb[0].mxu0
        %v3571 = vadd.f32 0.0, %v3570
        %v3572 = vpop.f32.mrb[0].mxu0
        %3573 = vmatprep.mubr.bf16.mxu0 0
        %3574 = vmatmul.mubr.bf16.gmra.mrb[0].mxu0 %v3484
        %v3575 = vpop.f32.mrb[0].mxu0
        %v3576 = vadd.f32 0.0, %v3575
        %v3577 = vpop.f32.mrb[0].mxu0
        %v3578 = vpop.f32.mrb[0].mxu0
        %v3579 = vadd.f32 0.0, %v3578
        %v3580 = vpop.f32.mrb[0].mxu0
        %3581 = vmatprep.mubr.bf16.mxu0 0
        %3582 = vmatmul.mubr.bf16.gmra.mrb[0].mxu0 %v3487
        %v3583 = vpop.f32.mrb[0].mxu0
        %v3584 = vadd.f32 0.0, %v3583
        %v3585 = vpop.f32.mrb[0].mxu0
        %v3586 = vpop.f32.mrb[0].mxu0
        %v3587 = vadd.f32 0.0, %v3586
        %v3588 = vpop.f32.mrb[0].mxu0
        %3589 = vmatprep.mubr.bf16.mxu0 0
        %3590 = vmatmul.mubr.bf16.gmra.mrb[0].mxu0 %v3490
        %v3591 = vpop.f32.mrb[0].mxu0
        %v3592 = vadd.f32 0.0, %v3591
        %v3593 = vpop.f32.mrb[0].mxu0
        %v3594 = vpop.f32.mrb[0].mxu0
        %v3595 = vadd.f32 0.0, %v3594
        %v3596 = vpop.f32.mrb[0].mxu0
        %3597 = vmatprep.mubr.bf16.mxu0 0
        %3598 = vmatmul.mubr.bf16.gmra.mrb[0].mxu0 %v3493
        %v3599 = vpop.f32.mrb[0].mxu0
        %v3600 = vadd.f32 0.0, %v3599
        %v3601 = vpop.f32.mrb[0].mxu0
        %v3602 = vpop.f32.mrb[0].mxu0
        %v3603 = vadd.f32 0.0, %v3602
        %v3604 = vpop.f32.mrb[0].mxu0
        %3605 = vmatprep.mubr.bf16.mxu0 0
        %3606 = vmatmul.mubr.bf16.gmra.mrb[0].mxu0 %v3496
        %v3607 = vpop.f32.mrb[0].mxu0
        %v3608 = vadd.f32 0.0, %v3607
        %v3609 = vpop.f32.mrb[0].mxu0
        %v3610 = vpop.f32.mrb[0].mxu0
        %v3611 = vadd.f32 0.0, %v3610
        %v3612 = vpop.f32.mrb[0].mxu0
        %3613 = vmatprep.mubr.bf16.mxu0 0
        %3614 = vmatmul.mubr.bf16.gmra.mrb[0].mxu0 %v3499
        %v3615 = vpop.f32.mrb[0].mxu0
        %v3616 = vadd.f32 0.0, %v3615
        %v3617 = vpop.f32.mrb[0].mxu0
        %v3618 = vpop.f32.mrb[0].mxu0
        %v3619 = vadd.f32 0.0, %v3618
        %v3620 = vpop.f32.mrb[0].mxu0
        %3621 = vdwg.mxu0
        %v3622 = vsel %vm3002, %v3560, -inf
        %v3623 = vsel %vm3003, %v3563, -inf
        %v3624 = vsel %vm3004, %v3568, -inf
        %v3625 = vsel %vm3005, %v3571, -inf
        %v3626 = vsel %vm3006, %v3576, -inf
        %v3627 = vsel %vm3007, %v3579, -inf
        %v3628 = vsel %vm3008, %v3584, -inf
        %v3629 = vsel %vm3009, %v3587, -inf
        %v3630 = vsel %vm3010, %v3592, -inf
        %v3631 = vsel %vm3011, %v3595, -inf
        %v3632 = vsel %vm3012, %v3600, -inf
        %v3633 = vsel %vm3013, %v3603, -inf
        %v3634 = vsel %vm3014, %v3608, -inf
        %v3635 = vsel %vm3015, %v3611, -inf
        %v3636 = vsel %vm3016, %v3616, -inf
        %v3637 = vsel %vm3017, %v3619, -inf
        %3638 = vmax.xlane.f32.xlu0 %v3622
        %v3639 = vpop.xlane.xlu0 %3638
        %3640 = vmax.xlane.f32.xlu0 %v3623
        %v3641 = vpop.xlane.xlu0 %3640
        %3642 = vmax.xlane.f32.xlu0 %v3624
        %v3643 = vpop.xlane.xlu0 %3642
        %3644 = vmax.xlane.f32.xlu0 %v3625
        %v3645 = vpop.xlane.xlu0 %3644
        %3646 = vmax.xlane.f32.xlu0 %v3626
        %v3647 = vpop.xlane.xlu0 %3646
        %3648 = vmax.xlane.f32.xlu0 %v3627
        %v3649 = vpop.xlane.xlu0 %3648
        %3650 = vmax.xlane.f32.xlu0 %v3628
        %v3651 = vpop.xlane.xlu0 %3650
        %3652 = vmax.xlane.f32.xlu0 %v3629
        %v3653 = vpop.xlane.xlu0 %3652
        %3654 = vmax.xlane.f32.xlu0 %v3630
        %v3655 = vpop.xlane.xlu0 %3654
        %3656 = vmax.xlane.f32.xlu0 %v3631
        %v3657 = vpop.xlane.xlu0 %3656
        %3658 = vmax.xlane.f32.xlu0 %v3632
        %v3659 = vpop.xlane.xlu0 %3658
        %3660 = vmax.xlane.f32.xlu0 %v3633
        %v3661 = vpop.xlane.xlu0 %3660
        %3662 = vmax.xlane.f32.xlu0 %v3634
        %v3663 = vpop.xlane.xlu0 %3662
        %3664 = vmax.xlane.f32.xlu0 %v3635
        %v3665 = vpop.xlane.xlu0 %3664
        %3666 = vmax.xlane.f32.xlu0 %v3636
        %v3667 = vpop.xlane.xlu0 %3666
        %3668 = vmax.xlane.f32.xlu0 %v3637
        %v3669 = vpop.xlane.xlu0 %3668
        %v3670 = vsub.f32 %v3622, %v3639
        %v3671 = vsub.f32 %v3623, %v3641
        %v3672 = vsub.f32 %v3624, %v3643
        %v3673 = vsub.f32 %v3625, %v3645
        %v3674 = vsub.f32 %v3626, %v3647
        %v3675 = vsub.f32 %v3627, %v3649
        %v3676 = vsub.f32 %v3628, %v3651
        %v3677 = vsub.f32 %v3629, %v3653
        %v3678 = vsub.f32 %v3630, %v3655
        %v3679 = vsub.f32 %v3631, %v3657
        %v3680 = vsub.f32 %v3632, %v3659
        %v3681 = vsub.f32 %v3633, %v3661
        %v3682 = vsub.f32 %v3634, %v3663
        %v3683 = vsub.f32 %v3635, %v3665
        %v3684 = vsub.f32 %v3636, %v3667
        %v3685 = vsub.f32 %v3637, %v3669
        %v3686 = vmul.f32 %v3670, 1.442695
        %v3687 = vpow.pop %v3686
        %v3688 = vmul.f32 %v3671, 1.442695
        %v3689 = vpow.pop %v3688
        %v3690 = vmul.f32 %v3672, 1.442695
        %v3691 = vpow.pop %v3690
        %v3692 = vmul.f32 %v3673, 1.442695
        %v3693 = vpow.pop %v3692
        %v3694 = vmul.f32 %v3674, 1.442695
        %v3695 = vpow.pop %v3694
        %v3696 = vmul.f32 %v3675, 1.442695
        %v3697 = vpow.pop %v3696
        %v3698 = vmul.f32 %v3676, 1.442695
        %v3699 = vpow.pop %v3698
        %v3700 = vmul.f32 %v3677, 1.442695
        %v3701 = vpow.pop %v3700
        %v3702 = vmul.f32 %v3678, 1.442695
        %v3703 = vpow.pop %v3702
        %v3704 = vmul.f32 %v3679, 1.442695
        %v3705 = vpow.pop %v3704
        %v3706 = vmul.f32 %v3680, 1.442695
        %v3707 = vpow.pop %v3706
        %v3708 = vmul.f32 %v3681, 1.442695
        %v3709 = vpow.pop %v3708
        %v3710 = vmul.f32 %v3682, 1.442695
        %v3711 = vpow.pop %v3710
        %v3712 = vmul.f32 %v3683, 1.442695
        %v3713 = vpow.pop %v3712
        %v3714 = vmul.f32 %v3684, 1.442695
        %v3715 = vpow.pop %v3714
        %v3716 = vmul.f32 %v3685, 1.442695
        %v3717 = vpow.pop %v3716
        %3718 = vadd.xlane.f32.xlu0 %v3687
        %v3719 = vpop.xlane.xlu0 %3718
        %3720 = vadd.xlane.f32.xlu0 %v3689
        %v3721 = vpop.xlane.xlu0 %3720
        %3722 = vadd.xlane.f32.xlu0 %v3691
        %v3723 = vpop.xlane.xlu0 %3722
        %3724 = vadd.xlane.f32.xlu0 %v3693
        %v3725 = vpop.xlane.xlu0 %3724
        %3726 = vadd.xlane.f32.xlu0 %v3695
        %v3727 = vpop.xlane.xlu0 %3726
        %3728 = vadd.xlane.f32.xlu0 %v3697
        %v3729 = vpop.xlane.xlu0 %3728
        %3730 = vadd.xlane.f32.xlu0 %v3699
        %v3731 = vpop.xlane.xlu0 %3730
        %3732 = vadd.xlane.f32.xlu0 %v3701
        %v3733 = vpop.xlane.xlu0 %3732
        %3734 = vadd.xlane.f32.xlu0 %v3703
        %v3735 = vpop.xlane.xlu0 %3734
        %3736 = vadd.xlane.f32.xlu0 %v3705
        %v3737 = vpop.xlane.xlu0 %3736
        %3738 = vadd.xlane.f32.xlu0 %v3707
        %v3739 = vpop.xlane.xlu0 %3738
        %3740 = vadd.xlane.f32.xlu0 %v3709
        %v3741 = vpop.xlane.xlu0 %3740
        %3742 = vadd.xlane.f32.xlu0 %v3711
        %v3743 = vpop.xlane.xlu0 %3742
        %3744 = vadd.xlane.f32.xlu0 %v3713
        %v3745 = vpop.xlane.xlu0 %3744
        %3746 = vadd.xlane.f32.xlu0 %v3715
        %v3747 = vpop.xlane.xlu0 %3746
        %3748 = vadd.xlane.f32.xlu0 %v3717
        %v3749 = vpop.xlane.xlu0 %3748
        %v3750 = vrcp.pop %v3719
        %v3751 = vrcp.pop %v3721
        %v3752 = vrcp.pop %v3723
        %v3753 = vrcp.pop %v3725
        %v3754 = vrcp.pop %v3727
        %v3755 = vrcp.pop %v3729
        %v3756 = vrcp.pop %v3731
        %v3757 = vrcp.pop %v3733
        %v3758 = vrcp.pop %v3735
        %v3759 = vrcp.pop %v3737
        %v3760 = vrcp.pop %v3739
        %v3761 = vrcp.pop %v3741
        %v3762 = vrcp.pop %v3743
        %v3763 = vrcp.pop %v3745
        %v3764 = vrcp.pop %v3747
        %v3765 = vrcp.pop %v3749
        %v3766 = vmul.f32 %v3687, %v3750
        %v3767 = vmul.f32 %v3689, %v3751
        %v3768 = vmul.f32 %v3691, %v3752
        %v3769 = vmul.f32 %v3693, %v3753
        %v3770 = vmul.f32 %v3695, %v3754
        %v3771 = vmul.f32 %v3697, %v3755
        %v3772 = vmul.f32 %v3699, %v3756
        %v3773 = vmul.f32 %v3701, %v3757
        %v3774 = vmul.f32 %v3703, %v3758
        %v3775 = vmul.f32 %v3705, %v3759
        %v3776 = vmul.f32 %v3707, %v3760
        %v3777 = vmul.f32 %v3709, %v3761
        %v3778 = vmul.f32 %v3711, %v3762
        %v3779 = vmul.f32 %v3713, %v3763
        %v3780 = vmul.f32 %v3715, %v3764
        %v3781 = vmul.f32 %v3717, %v3765
        %v3782 = vpack.c.bf16 %v3767, %v3766
        %v3783 = vpack.c.bf16 %v3769, %v3768
        %v3784 = vpack.c.bf16 %v3771, %v3770
        %v3785 = vpack.c.bf16 %v3773, %v3772
        %v3786 = vpack.c.bf16 %v3775, %v3774
        %v3787 = vpack.c.bf16 %v3777, %v3776
        %v3788 = vpack.c.bf16 %v3779, %v3778
        %v3789 = vpack.c.bf16 %v3781, %v3780
        %3798 = vrot.lane.b32.xlu0 %v2816, 64
        %v3799 = vpop.permute.xlu0 %3798
        %3800 = vrot.lane.b32.xlu0 %v2825, 64
        %v3801 = vpop.permute.xlu0 %3800
        %3802 = vrot.lane.b32.xlu0 %v2834, 64
        %v3803 = vpop.permute.xlu0 %3802
        %3804 = vrot.lane.b32.xlu0 %v2843, 64
        %v3805 = vpop.permute.xlu0 %3804
        %3806 = vrot.lane.b32.xlu0 %v2852, 64
        %v3807 = vpop.permute.xlu0 %3806
        %3808 = vrot.lane.b32.xlu0 %v2861, 64
        %v3809 = vpop.permute.xlu0 %3808
        %3810 = vrot.lane.b32.xlu0 %v2870, 64
        %v3811 = vpop.permute.xlu0 %3810
        %3812 = vrot.lane.b32.xlu0 %v2879, 64
        %v3813 = vpop.permute.xlu0 %3812
        %3822 = vmatprep.subr.bf16.mxu0 0
        %3823 = vmatpush1.bf16.msra.mxu0 %v3799
        %3824 = vmatprep.subr.bf16.mxu0 0
        %3825 = vmatpush1.bf16.msra.mxu0 %v3801
        %3826 = vmatprep.subr.bf16.mxu0 0
        %3827 = vmatpush1.bf16.msra.mxu0 %v3803
        %3828 = vmatprep.subr.bf16.mxu0 0
        %3829 = vmatpush1.bf16.msra.mxu0 %v3805
        %3830 = vmatprep.subr.bf16.mxu0 0
        %3831 = vmatpush1.bf16.msra.mxu0 %v3807
        %3832 = vmatprep.subr.bf16.mxu0 0
        %3833 = vmatpush1.bf16.msra.mxu0 %v3809
        %3834 = vmatprep.subr.bf16.mxu0 0
        %3835 = vmatpush1.bf16.msra.mxu0 %v3811
        %3836 = vmatprep.subr.bf16.mxu0 0
        %3837 = vmatpush1.bf16.msra.mxu0 %v3813
        %3838 = vmatprep.subr.bf16.mxu0 0
        %3839 = vmatpush1.bf16.msra.mxu0 0
        %3840 = vmatprep.subr.bf16.mxu0 0
        %3841 = vmatpush1.bf16.msra.mxu0 0
        %3842 = vmatprep.subr.bf16.mxu0 0
        %3843 = vmatpush1.bf16.msra.mxu0 0
        %3844 = vmatprep.subr.bf16.mxu0 0
        %3845 = vmatpush1.bf16.msra.mxu0 0
        %3846 = vmatprep.subr.bf16.mxu0 0
        %3847 = vmatpush1.bf16.msra.mxu0 0
        %3848 = vmatprep.subr.bf16.mxu0 0
        %3849 = vmatpush1.bf16.msra.mxu0 0
        %3850 = vmatprep.subr.bf16.mxu0 0
        %3851 = vmatpush1.bf16.msra.mxu0 0
        %3852 = vmatprep.subr.bf16.mxu0 0
        %3853 = vmatpush1.bf16.msra.mxu0 0
        %3854 = vmatprep.mubr.bf16.mxu0 0
        %3855 = vmatmul.mubr.bf16.gmra.mrb[0].mxu0 %v3782
        %v3856 = vpop.f32.mrb[0].mxu0
        %v3857 = vadd.f32 0.0, %v3856
        %v3858 = vpop.f32.mrb[0].mxu0
        %v3859 = vpop.f32.mrb[0].mxu0
        %v3860 = vadd.f32 0.0, %v3859
        %v3861 = vpop.f32.mrb[0].mxu0
        %3862 = vmatprep.mubr.bf16.mxu0 0
        %3863 = vmatmul.mubr.bf16.gmra.mrb[0].mxu0 %v3783
        %v3864 = vpop.f32.mrb[0].mxu0
        %v3865 = vadd.f32 0.0, %v3864
        %v3866 = vpop.f32.mrb[0].mxu0
        %v3867 = vpop.f32.mrb[0].mxu0
        %v3868 = vadd.f32 0.0, %v3867
        %v3869 = vpop.f32.mrb[0].mxu0
        %3870 = vmatprep.mubr.bf16.mxu0 0
        %3871 = vmatmul.mubr.bf16.gmra.mrb[0].mxu0 %v3784
        %v3872 = vpop.f32.mrb[0].mxu0
        %v3873 = vadd.f32 0.0, %v3872
        %v3874 = vpop.f32.mrb[0].mxu0
        %v3875 = vpop.f32.mrb[0].mxu0
        %v3876 = vadd.f32 0.0, %v3875
        %v3877 = vpop.f32.mrb[0].mxu0
        %3878 = vmatprep.mubr.bf16.mxu0 0
        %3879 = vmatmul.mubr.bf16.gmra.mrb[0].mxu0 %v3785
        %v3880 = vpop.f32.mrb[0].mxu0
        %v3881 = vadd.f32 0.0, %v3880
        %v3882 = vpop.f32.mrb[0].mxu0
        %v3883 = vpop.f32.mrb[0].mxu0
        %v3884 = vadd.f32 0.0, %v3883
        %v3885 = vpop.f32.mrb[0].mxu0
        %3886 = vmatprep.mubr.bf16.mxu0 0
        %3887 = vmatmul.mubr.bf16.gmra.mrb[0].mxu0 %v3786
        %v3888 = vpop.f32.mrb[0].mxu0
        %v3889 = vadd.f32 0.0, %v3888
        %v3890 = vpop.f32.mrb[0].mxu0
        %v3891 = vpop.f32.mrb[0].mxu0
        %v3892 = vadd.f32 0.0, %v3891
        %v3893 = vpop.f32.mrb[0].mxu0
        %3894 = vmatprep.mubr.bf16.mxu0 0
        %3895 = vmatmul.mubr.bf16.gmra.mrb[0].mxu0 %v3787
        %v3896 = vpop.f32.mrb[0].mxu0
        %v3897 = vadd.f32 0.0, %v3896
        %v3898 = vpop.f32.mrb[0].mxu0
        %v3899 = vpop.f32.mrb[0].mxu0
        %v3900 = vadd.f32 0.0, %v3899
        %v3901 = vpop.f32.mrb[0].mxu0
        %3902 = vmatprep.mubr.bf16.mxu0 0
        %3903 = vmatmul.mubr.bf16.gmra.mrb[0].mxu0 %v3788
        %v3904 = vpop.f32.mrb[0].mxu0
        %v3905 = vadd.f32 0.0, %v3904
        %v3906 = vpop.f32.mrb[0].mxu0
        %v3907 = vpop.f32.mrb[0].mxu0
        %v3908 = vadd.f32 0.0, %v3907
        %v3909 = vpop.f32.mrb[0].mxu0
        %3910 = vmatprep.mubr.bf16.mxu0 0
        %3911 = vmatmul.mubr.bf16.gmra.mrb[0].mxu0 %v3789
        %v3912 = vpop.f32.mrb[0].mxu0
        %v3913 = vadd.f32 0.0, %v3912
        %v3914 = vpop.f32.mrb[0].mxu0
        %v3915 = vpop.f32.mrb[0].mxu0
        %v3916 = vadd.f32 0.0, %v3915
        %v3917 = vpop.f32.mrb[0].mxu0
        %3918 = vdwg.mxu0
        %3935 = vrot.lane.b32.xlu0 %v3857, 64
        %v3936 = vpop.permute.xlu0 %3935
        %3937 = vrot.lane.b32.xlu0 %v3860, 64
        %v3938 = vpop.permute.xlu0 %3937
        %3939 = vrot.lane.b32.xlu0 %v3865, 64
        %v3940 = vpop.permute.xlu0 %3939
        %3941 = vrot.lane.b32.xlu0 %v3868, 64
        %v3942 = vpop.permute.xlu0 %3941
        %3943 = vrot.lane.b32.xlu0 %v3873, 64
        %v3944 = vpop.permute.xlu0 %3943
        %3945 = vrot.lane.b32.xlu0 %v3876, 64
        %v3946 = vpop.permute.xlu0 %3945
        %3947 = vrot.lane.b32.xlu0 %v3881, 64
        %v3948 = vpop.permute.xlu0 %3947
        %3949 = vrot.lane.b32.xlu0 %v3884, 64
        %v3950 = vpop.permute.xlu0 %3949
        %3951 = vrot.lane.b32.xlu0 %v3889, 64
        %v3952 = vpop.permute.xlu0 %3951
        %3953 = vrot.lane.b32.xlu0 %v3892, 64
        %v3954 = vpop.permute.xlu0 %3953
        %3955 = vrot.lane.b32.xlu0 %v3897, 64
        %v3956 = vpop.permute.xlu0 %3955
        %3957 = vrot.lane.b32.xlu0 %v3900, 64
        %v3958 = vpop.permute.xlu0 %3957
        %3959 = vrot.lane.b32.xlu0 %v3905, 64
        %v3960 = vpop.permute.xlu0 %3959
        %3961 = vrot.lane.b32.xlu0 %v3908, 64
        %v3962 = vpop.permute.xlu0 %3961
        %3963 = vrot.lane.b32.xlu0 %v3913, 64
        %v3964 = vpop.permute.xlu0 %3963
        %3965 = vrot.lane.b32.xlu0 %v3916, 64
        %v3966 = vpop.permute.xlu0 %3965
        %v3983 = vsel %vm3018, %v3367, %v3936
        %v3984 = vsel %vm3018, %v3370, %v3938
        %v3985 = vsel %vm3018, %v3375, %v3940
        %v3986 = vsel %vm3018, %v3378, %v3942
        %v3987 = vsel %vm3018, %v3383, %v3944
        %v3988 = vsel %vm3018, %v3386, %v3946
        %v3989 = vsel %vm3018, %v3391, %v3948
        %v3990 = vsel %vm3018, %v3394, %v3950
        %v3991 = vsel %vm3018, %v3399, %v3952
        %v3992 = vsel %vm3018, %v3402, %v3954
        %v3993 = vsel %vm3018, %v3407, %v3956
        %v3994 = vsel %vm3018, %v3410, %v3958
        %v3995 = vsel %vm3018, %v3415, %v3960
        %v3996 = vsel %vm3018, %v3418, %v3962
        %v3997 = vsel %vm3018, %v3423, %v3964
        %v3998 = vsel %vm3018, %v3426, %v3966
        %v3999 = vpack.c.bf16 %v3984, %v3983
        %v4000 = vpack.c.bf16 %v3986, %v3985
        %v4001 = vpack.c.bf16 %v3988, %v3987
        %v4002 = vpack.c.bf16 %v3990, %v3989
        %v4003 = vpack.c.bf16 %v3992, %v3991
        %v4004 = vpack.c.bf16 %v3994, %v3993
        %v4005 = vpack.c.bf16 %v3996, %v3995
        %v4006 = vpack.c.bf16 %v3998, %v3997
        %4007 = vst [vmem:[#allocation2] sm:$0xff] %v3999
        %4008 = vst [vmem:[#allocation2 + $0x18] sm:$0xff] %v4000
        %4009 = vst [vmem:[#allocation2 + $0x30] sm:$0xff] %v4001
        %4010 = vst [vmem:[#allocation2 + $0x48] sm:$0xff] %v4002
        %4011 = vst [vmem:[#allocation2 + $0x60] sm:$0xff] %v4003
        %4012 = vst [vmem:[#allocation2 + $0x78] sm:$0xff] %v4004
        %4013 = vst [vmem:[#allocation2 + $0x90] sm:$0xff] %v4005
        %4014 = vst [vmem:[#allocation2 + $0xa8] sm:$0xff] %v4006
        %v4016 = vsel %vm3018, %v2817, 0
        %v4019 = vsel %vm3018, %v2826, 0
        %v4022 = vsel %vm3018, %v2835, 0
        %v4025 = vsel %vm3018, %v2844, 0
        %v4028 = vsel %vm3018, %v2853, 0
        %v4031 = vsel %vm3018, %v2862, 0
        %v4034 = vsel %vm3018, %v2871, 0
        %v4037 = vsel %vm3018, %v2880, 0
        %v4040 = vsel %vm3018, %v2818, 0
        %v4043 = vsel %vm3018, %v2827, 0
        %v4046 = vsel %vm3018, %v2836, 0
        %v4049 = vsel %vm3018, %v2845, 0
        %v4052 = vsel %vm3018, %v2854, 0
        %v4055 = vsel %vm3018, %v2863, 0
        %v4058 = vsel %vm3018, %v2872, 0
        %v4061 = vsel %vm3018, %v2881, 0
        %4063 = vmatprep.subr.bf16.mxu0 0
        %4064 = vmatpush1.bf16.xpose.msra.mxu0 %v4040
        %4065 = vmatprep.subr.bf16.mxu0 0
        %4066 = vmatpush1.bf16.xpose.msra.mxu0 %v4043
        %4067 = vmatprep.subr.bf16.mxu0 0
        %4068 = vmatpush1.bf16.xpose.msra.mxu0 %v4046
        %4069 = vmatprep.subr.bf16.mxu0 0
        %4070 = vmatpush1.bf16.xpose.msra.mxu0 %v4049
        %4071 = vmatprep.subr.bf16.mxu0 0
        %4072 = vmatpush1.bf16.xpose.msra.mxu0 %v4052
        %4073 = vmatprep.subr.bf16.mxu0 0
        %4074 = vmatpush1.bf16.xpose.msra.mxu0 %v4055
        %4075 = vmatprep.subr.bf16.mxu0 0
        %4076 = vmatpush1.bf16.xpose.msra.mxu0 %v4058
        %4077 = vmatprep.subr.bf16.mxu0 0
        %4078 = vmatpush1.bf16.xpose.msra.mxu0 %v4061
        %4079 = vmatprep.subr.bf16.mxu0 0
        %4080 = vmatpush1.bf16.xpose.msra.mxu0 0
        %4081 = vmatprep.subr.bf16.mxu0 0
        %4082 = vmatpush1.bf16.xpose.msra.mxu0 0
        %4083 = vmatprep.subr.bf16.mxu0 0
        %4084 = vmatpush1.bf16.xpose.msra.mxu0 0
        %4085 = vmatprep.subr.bf16.mxu0 0
        %4086 = vmatpush1.bf16.xpose.msra.mxu0 0
        %4087 = vmatprep.subr.bf16.mxu0 0
        %4088 = vmatpush1.bf16.xpose.msra.mxu0 0
        %4089 = vmatprep.subr.bf16.mxu0 0
        %4090 = vmatpush1.bf16.xpose.msra.mxu0 0
        %4091 = vmatprep.subr.bf16.mxu0 0
        %4092 = vmatpush1.bf16.xpose.msra.mxu0 0
        %4093 = vmatprep.subr.bf16.mxu0 0
        %4094 = vmatpush1.bf16.xpose.msra.mxu0 0
        %4095 = vmatprep.mubr.bf16.mxu0 0
        %4096 = vmatmul.mubr.bf16.gmra.mrb[0].mxu0 %v4016
        %v4097 = vpop.f32.mrb[0].mxu0
        %v4098 = vadd.f32 0.0, %v4097
        %v4099 = vpop.f32.mrb[0].mxu0
        %v4100 = vpop.f32.mrb[0].mxu0
        %v4101 = vadd.f32 0.0, %v4100
        %v4102 = vpop.f32.mrb[0].mxu0
        %4103 = vmatprep.mubr.bf16.mxu0 0
        %4104 = vmatmul.mubr.bf16.gmra.mrb[0].mxu0 %v4019
        %v4105 = vpop.f32.mrb[0].mxu0
        %v4106 = vadd.f32 0.0, %v4105
        %v4107 = vpop.f32.mrb[0].mxu0
        %v4108 = vpop.f32.mrb[0].mxu0
        %v4109 = vadd.f32 0.0, %v4108
        %v4110 = vpop.f32.mrb[0].mxu0
        %4111 = vmatprep.mubr.bf16.mxu0 0
        %4112 = vmatmul.mubr.bf16.gmra.mrb[0].mxu0 %v4022
        %v4113 = vpop.f32.mrb[0].mxu0
        %v4114 = vadd.f32 0.0, %v4113
        %v4115 = vpop.f32.mrb[0].mxu0
        %v4116 = vpop.f32.mrb[0].mxu0
        %v4117 = vadd.f32 0.0, %v4116
        %v4118 = vpop.f32.mrb[0].mxu0
        %4119 = vmatprep.mubr.bf16.mxu0 0
        %4120 = vmatmul.mubr.bf16.gmra.mrb[0].mxu0 %v4025
        %v4121 = vpop.f32.mrb[0].mxu0
        %v4122 = vadd.f32 0.0, %v4121
        %v4123 = vpop.f32.mrb[0].mxu0
        %v4124 = vpop.f32.mrb[0].mxu0
        %v4125 = vadd.f32 0.0, %v4124
        %v4126 = vpop.f32.mrb[0].mxu0
        %4127 = vmatprep.mubr.bf16.mxu0 0
        %4128 = vmatmul.mubr.bf16.gmra.mrb[0].mxu0 %v4028
        %v4129 = vpop.f32.mrb[0].mxu0
        %v4130 = vadd.f32 0.0, %v4129
        %v4131 = vpop.f32.mrb[0].mxu0
        %v4132 = vpop.f32.mrb[0].mxu0
        %v4133 = vadd.f32 0.0, %v4132
        %v4134 = vpop.f32.mrb[0].mxu0
        %4135 = vmatprep.mubr.bf16.mxu0 0
        %4136 = vmatmul.mubr.bf16.gmra.mrb[0].mxu0 %v4031
        %v4137 = vpop.f32.mrb[0].mxu0
        %v4138 = vadd.f32 0.0, %v4137
        %v4139 = vpop.f32.mrb[0].mxu0
        %v4140 = vpop.f32.mrb[0].mxu0
        %v4141 = vadd.f32 0.0, %v4140
        %v4142 = vpop.f32.mrb[0].mxu0
        %4143 = vmatprep.mubr.bf16.mxu0 0
        %4144 = vmatmul.mubr.bf16.gmra.mrb[0].mxu0 %v4034
        %v4145 = vpop.f32.mrb[0].mxu0
        %v4146 = vadd.f32 0.0, %v4145
        %v4147 = vpop.f32.mrb[0].mxu0
        %v4148 = vpop.f32.mrb[0].mxu0
        %v4149 = vadd.f32 0.0, %v4148
        %v4150 = vpop.f32.mrb[0].mxu0
        %4151 = vmatprep.mubr.bf16.mxu0 0
        %4152 = vmatmul.mubr.bf16.gmra.mrb[0].mxu0 %v4037
        %v4153 = vpop.f32.mrb[0].mxu0
        %v4154 = vadd.f32 0.0, %v4153
        %v4155 = vpop.f32.mrb[0].mxu0
        %v4156 = vpop.f32.mrb[0].mxu0
        %v4157 = vadd.f32 0.0, %v4156
        %v4158 = vpop.f32.mrb[0].mxu0
        %4159 = vdwg.mxu0
        %v4160 = vsel %vm3002, %v4098, -inf
        %v4161 = vsel %vm3003, %v4101, -inf
        %v4162 = vsel %vm3004, %v4106, -inf
        %v4163 = vsel %vm3005, %v4109, -inf
        %v4164 = vsel %vm3006, %v4114, -inf
        %v4165 = vsel %vm3007, %v4117, -inf
        %v4166 = vsel %vm3008, %v4122, -inf
        %v4167 = vsel %vm3009, %v4125, -inf
        %v4168 = vsel %vm3010, %v4130, -inf
        %v4169 = vsel %vm3011, %v4133, -inf
        %v4170 = vsel %vm3012, %v4138, -inf
        %v4171 = vsel %vm3013, %v4141, -inf
        %v4172 = vsel %vm3014, %v4146, -inf
        %v4173 = vsel %vm3015, %v4149, -inf
        %v4174 = vsel %vm3016, %v4154, -inf
        %v4175 = vsel %vm3017, %v4157, -inf
        %4176 = vmax.xlane.f32.xlu0 %v4160
        %v4177 = vpop.xlane.xlu0 %4176
        %4178 = vmax.xlane.f32.xlu0 %v4161
        %v4179 = vpop.xlane.xlu0 %4178
        %4180 = vmax.xlane.f32.xlu0 %v4162
        %v4181 = vpop.xlane.xlu0 %4180
        %4182 = vmax.xlane.f32.xlu0 %v4163
        %v4183 = vpop.xlane.xlu0 %4182
        %4184 = vmax.xlane.f32.xlu0 %v4164
        %v4185 = vpop.xlane.xlu0 %4184
        %4186 = vmax.xlane.f32.xlu0 %v4165
        %v4187 = vpop.xlane.xlu0 %4186
        %4188 = vmax.xlane.f32.xlu0 %v4166
        %v4189 = vpop.xlane.xlu0 %4188
        %4190 = vmax.xlane.f32.xlu0 %v4167
        %v4191 = vpop.xlane.xlu0 %4190
        %4192 = vmax.xlane.f32.xlu0 %v4168
        %v4193 = vpop.xlane.xlu0 %4192
        %4194 = vmax.xlane.f32.xlu0 %v4169
        %v4195 = vpop.xlane.xlu0 %4194
        %4196 = vmax.xlane.f32.xlu0 %v4170
        %v4197 = vpop.xlane.xlu0 %4196
        %4198 = vmax.xlane.f32.xlu0 %v4171
        %v4199 = vpop.xlane.xlu0 %4198
        %4200 = vmax.xlane.f32.xlu0 %v4172
        %v4201 = vpop.xlane.xlu0 %4200
        %4202 = vmax.xlane.f32.xlu0 %v4173
        %v4203 = vpop.xlane.xlu0 %4202
        %4204 = vmax.xlane.f32.xlu0 %v4174
        %v4205 = vpop.xlane.xlu0 %4204
        %4206 = vmax.xlane.f32.xlu0 %v4175
        %v4207 = vpop.xlane.xlu0 %4206
        %v4208 = vsub.f32 %v4160, %v4177
        %v4209 = vsub.f32 %v4161, %v4179
        %v4210 = vsub.f32 %v4162, %v4181
        %v4211 = vsub.f32 %v4163, %v4183
        %v4212 = vsub.f32 %v4164, %v4185
        %v4213 = vsub.f32 %v4165, %v4187
        %v4214 = vsub.f32 %v4166, %v4189
        %v4215 = vsub.f32 %v4167, %v4191
        %v4216 = vsub.f32 %v4168, %v4193
        %v4217 = vsub.f32 %v4169, %v4195
        %v4218 = vsub.f32 %v4170, %v4197
        %v4219 = vsub.f32 %v4171, %v4199
        %v4220 = vsub.f32 %v4172, %v4201
        %v4221 = vsub.f32 %v4173, %v4203
        %v4222 = vsub.f32 %v4174, %v4205
        %v4223 = vsub.f32 %v4175, %v4207
        %v4224 = vmul.f32 %v4208, 1.442695
        %v4225 = vpow.pop %v4224
        %v4226 = vmul.f32 %v4209, 1.442695
        %v4227 = vpow.pop %v4226
        %v4228 = vmul.f32 %v4210, 1.442695
        %v4229 = vpow.pop %v4228
        %v4230 = vmul.f32 %v4211, 1.442695
        %v4231 = vpow.pop %v4230
        %v4232 = vmul.f32 %v4212, 1.442695
        %v4233 = vpow.pop %v4232
        %v4234 = vmul.f32 %v4213, 1.442695
        %v4235 = vpow.pop %v4234
        %v4236 = vmul.f32 %v4214, 1.442695
        %v4237 = vpow.pop %v4236
        %v4238 = vmul.f32 %v4215, 1.442695
        %v4239 = vpow.pop %v4238
        %v4240 = vmul.f32 %v4216, 1.442695
        %v4241 = vpow.pop %v4240
        %v4242 = vmul.f32 %v4217, 1.442695
        %v4243 = vpow.pop %v4242
        %v4244 = vmul.f32 %v4218, 1.442695
        %v4245 = vpow.pop %v4244
        %v4246 = vmul.f32 %v4219, 1.442695
        %v4247 = vpow.pop %v4246
        %v4248 = vmul.f32 %v4220, 1.442695
        %v4249 = vpow.pop %v4248
        %v4250 = vmul.f32 %v4221, 1.442695
        %v4251 = vpow.pop %v4250
        %v4252 = vmul.f32 %v4222, 1.442695
        %v4253 = vpow.pop %v4252
        %v4254 = vmul.f32 %v4223, 1.442695
        %v4255 = vpow.pop %v4254
        %4256 = vadd.xlane.f32.xlu0 %v4225
        %v4257 = vpop.xlane.xlu0 %4256
        %4258 = vadd.xlane.f32.xlu0 %v4227
        %v4259 = vpop.xlane.xlu0 %4258
        %4260 = vadd.xlane.f32.xlu0 %v4229
        %v4261 = vpop.xlane.xlu0 %4260
        %4262 = vadd.xlane.f32.xlu0 %v4231
        %v4263 = vpop.xlane.xlu0 %4262
        %4264 = vadd.xlane.f32.xlu0 %v4233
        %v4265 = vpop.xlane.xlu0 %4264
        %4266 = vadd.xlane.f32.xlu0 %v4235
        %v4267 = vpop.xlane.xlu0 %4266
        %4268 = vadd.xlane.f32.xlu0 %v4237
        %v4269 = vpop.xlane.xlu0 %4268
        %4270 = vadd.xlane.f32.xlu0 %v4239
        %v4271 = vpop.xlane.xlu0 %4270
        %4272 = vadd.xlane.f32.xlu0 %v4241
        %v4273 = vpop.xlane.xlu0 %4272
        %4274 = vadd.xlane.f32.xlu0 %v4243
        %v4275 = vpop.xlane.xlu0 %4274
        %4276 = vadd.xlane.f32.xlu0 %v4245
        %v4277 = vpop.xlane.xlu0 %4276
        %4278 = vadd.xlane.f32.xlu0 %v4247
        %v4279 = vpop.xlane.xlu0 %4278
        %4280 = vadd.xlane.f32.xlu0 %v4249
        %v4281 = vpop.xlane.xlu0 %4280
        %4282 = vadd.xlane.f32.xlu0 %v4251
        %v4283 = vpop.xlane.xlu0 %4282
        %4284 = vadd.xlane.f32.xlu0 %v4253
        %v4285 = vpop.xlane.xlu0 %4284
        %4286 = vadd.xlane.f32.xlu0 %v4255
        %v4287 = vpop.xlane.xlu0 %4286
        %v4288 = vrcp.pop %v4257
        %v4289 = vrcp.pop %v4259
        %v4290 = vrcp.pop %v4261
        %v4291 = vrcp.pop %v4263
        %v4292 = vrcp.pop %v4265
        %v4293 = vrcp.pop %v4267
        %v4294 = vrcp.pop %v4269
        %v4295 = vrcp.pop %v4271
        %v4296 = vrcp.pop %v4273
        %v4297 = vrcp.pop %v4275
        %v4298 = vrcp.pop %v4277
        %v4299 = vrcp.pop %v4279
        %v4300 = vrcp.pop %v4281
        %v4301 = vrcp.pop %v4283
        %v4302 = vrcp.pop %v4285
        %v4303 = vrcp.pop %v4287
        %v4304 = vmul.f32 %v4225, %v4288
        %v4305 = vmul.f32 %v4227, %v4289
        %v4306 = vmul.f32 %v4229, %v4290
        %v4307 = vmul.f32 %v4231, %v4291
        %v4308 = vmul.f32 %v4233, %v4292
        %v4309 = vmul.f32 %v4235, %v4293
        %v4310 = vmul.f32 %v4237, %v4294
        %v4311 = vmul.f32 %v4239, %v4295
        %v4312 = vmul.f32 %v4241, %v4296
        %v4313 = vmul.f32 %v4243, %v4297
        %v4314 = vmul.f32 %v4245, %v4298
        %v4315 = vmul.f32 %v4247, %v4299
        %v4316 = vmul.f32 %v4249, %v4300
        %v4317 = vmul.f32 %v4251, %v4301
        %v4318 = vmul.f32 %v4253, %v4302
        %v4319 = vmul.f32 %v4255, %v4303
        %v4320 = vpack.c.bf16 %v4305, %v4304
        %v4321 = vpack.c.bf16 %v4307, %v4306
        %v4322 = vpack.c.bf16 %v4309, %v4308
        %v4323 = vpack.c.bf16 %v4311, %v4310
        %v4324 = vpack.c.bf16 %v4313, %v4312
        %v4325 = vpack.c.bf16 %v4315, %v4314
        %v4326 = vpack.c.bf16 %v4317, %v4316
        %v4327 = vpack.c.bf16 %v4319, %v4318
        %4328 = vmatprep.subr.bf16.mxu0 0
        %4329 = vmatpush1.bf16.msra.mxu0 %v2819
        %4330 = vmatprep.subr.bf16.mxu0 0
        %4331 = vmatpush1.bf16.msra.mxu0 %v2828
        %4332 = vmatprep.subr.bf16.mxu0 0
        %4333 = vmatpush1.bf16.msra.mxu0 %v2837
        %4334 = vmatprep.subr.bf16.mxu0 0
        %4335 = vmatpush1.bf16.msra.mxu0 %v2846
        %4336 = vmatprep.subr.bf16.mxu0 0
        %4337 = vmatpush1.bf16.msra.mxu0 %v2855
        %4338 = vmatprep.subr.bf16.mxu0 0
        %4339 = vmatpush1.bf16.msra.mxu0 %v2864
        %4340 = vmatprep.subr.bf16.mxu0 0
        %4341 = vmatpush1.bf16.msra.mxu0 %v2873
        %4342 = vmatprep.subr.bf16.mxu0 0
        %4343 = vmatpush1.bf16.msra.mxu0 %v2882
        %4344 = vmatprep.subr.bf16.mxu0 0
        %4345 = vmatpush1.bf16.msra.mxu0 0
        %4346 = vmatprep.subr.bf16.mxu0 0
        %4347 = vmatpush1.bf16.msra.mxu0 0
        %4348 = vmatprep.subr.bf16.mxu0 0
        %4349 = vmatpush1.bf16.msra.mxu0 0
        %4350 = vmatprep.subr.bf16.mxu0 0
        %4351 = vmatpush1.bf16.msra.mxu0 0
        %4352 = vmatprep.subr.bf16.mxu0 0
        %4353 = vmatpush1.bf16.msra.mxu0 0
        %4354 = vmatprep.subr.bf16.mxu0 0
        %4355 = vmatpush1.bf16.msra.mxu0 0
        %4356 = vmatprep.subr.bf16.mxu0 0
        %4357 = vmatpush1.bf16.msra.mxu0 0
        %4358 = vmatprep.subr.bf16.mxu0 0
        %4359 = vmatpush1.bf16.msra.mxu0 0
        %4360 = vmatprep.mubr.bf16.mxu0 0
        %4361 = vmatmul.mubr.bf16.gmra.mrb[0].mxu0 %v4320
        %v4362 = vpop.f32.mrb[0].mxu0
        %v4363 = vadd.f32 0.0, %v4362
        %v4364 = vpop.f32.mrb[0].mxu0
        %v4365 = vpop.f32.mrb[0].mxu0
        %v4366 = vadd.f32 0.0, %v4365
        %v4367 = vpop.f32.mrb[0].mxu0
        %4368 = vmatprep.mubr.bf16.mxu0 0
        %4369 = vmatmul.mubr.bf16.gmra.mrb[0].mxu0 %v4321
        %v4370 = vpop.f32.mrb[0].mxu0
        %v4371 = vadd.f32 0.0, %v4370
        %v4372 = vpop.f32.mrb[0].mxu0
        %v4373 = vpop.f32.mrb[0].mxu0
        %v4374 = vadd.f32 0.0, %v4373
        %v4375 = vpop.f32.mrb[0].mxu0
        %4376 = vmatprep.mubr.bf16.mxu0 0
        %4377 = vmatmul.mubr.bf16.gmra.mrb[0].mxu0 %v4322
        %v4378 = vpop.f32.mrb[0].mxu0
        %v4379 = vadd.f32 0.0, %v4378
        %v4380 = vpop.f32.mrb[0].mxu0
        %v4381 = vpop.f32.mrb[0].mxu0
        %v4382 = vadd.f32 0.0, %v4381
        %v4383 = vpop.f32.mrb[0].mxu0
        %4384 = vmatprep.mubr.bf16.mxu0 0
        %4385 = vmatmul.mubr.bf16.gmra.mrb[0].mxu0 %v4323
        %v4386 = vpop.f32.mrb[0].mxu0
        %v4387 = vadd.f32 0.0, %v4386
        %v4388 = vpop.f32.mrb[0].mxu0
        %v4389 = vpop.f32.mrb[0].mxu0
        %v4390 = vadd.f32 0.0, %v4389
        %v4391 = vpop.f32.mrb[0].mxu0
        %4392 = vmatprep.mubr.bf16.mxu0 0
        %4393 = vmatmul.mubr.bf16.gmra.mrb[0].mxu0 %v4324
        %v4394 = vpop.f32.mrb[0].mxu0
        %v4395 = vadd.f32 0.0, %v4394
        %v4396 = vpop.f32.mrb[0].mxu0
        %v4397 = vpop.f32.mrb[0].mxu0
        %v4398 = vadd.f32 0.0, %v4397
        %v4399 = vpop.f32.mrb[0].mxu0
        %4400 = vmatprep.mubr.bf16.mxu0 0
        %4401 = vmatmul.mubr.bf16.gmra.mrb[0].mxu0 %v4325
        %v4402 = vpop.f32.mrb[0].mxu0
        %v4403 = vadd.f32 0.0, %v4402
        %v4404 = vpop.f32.mrb[0].mxu0
        %v4405 = vpop.f32.mrb[0].mxu0
        %v4406 = vadd.f32 0.0, %v4405
        %v4407 = vpop.f32.mrb[0].mxu0
        %4408 = vmatprep.mubr.bf16.mxu0 0
        %4409 = vmatmul.mubr.bf16.gmra.mrb[0].mxu0 %v4326
        %v4410 = vpop.f32.mrb[0].mxu0
        %v4411 = vadd.f32 0.0, %v4410
        %v4412 = vpop.f32.mrb[0].mxu0
        %v4413 = vpop.f32.mrb[0].mxu0
        %v4414 = vadd.f32 0.0, %v4413
        %v4415 = vpop.f32.mrb[0].mxu0
        %4416 = vmatprep.mubr.bf16.mxu0 0
        %4417 = vmatmul.mubr.bf16.gmra.mrb[0].mxu0 %v4327
        %v4418 = vpop.f32.mrb[0].mxu0
        %v4419 = vadd.f32 0.0, %v4418
        %v4420 = vpop.f32.mrb[0].mxu0
        %v4421 = vpop.f32.mrb[0].mxu0
        %v4422 = vadd.f32 0.0, %v4421
        %v4423 = vpop.f32.mrb[0].mxu0
        %4424 = vdwg.mxu0
        %4433 = vrot.lane.b32.xlu0 %v2817, 64
        %v4434 = vpop.permute.xlu0 %4433
        %4435 = vrot.lane.b32.xlu0 %v2826, 64
        %v4436 = vpop.permute.xlu0 %4435
        %4437 = vrot.lane.b32.xlu0 %v2835, 64
        %v4438 = vpop.permute.xlu0 %4437
        %4439 = vrot.lane.b32.xlu0 %v2844, 64
        %v4440 = vpop.permute.xlu0 %4439
        %4441 = vrot.lane.b32.xlu0 %v2853, 64
        %v4442 = vpop.permute.xlu0 %4441
        %4443 = vrot.lane.b32.xlu0 %v2862, 64
        %v4444 = vpop.permute.xlu0 %4443
        %4445 = vrot.lane.b32.xlu0 %v2871, 64
        %v4446 = vpop.permute.xlu0 %4445
        %4447 = vrot.lane.b32.xlu0 %v2880, 64
        %v4448 = vpop.permute.xlu0 %4447
        %4457 = vrot.lane.b32.xlu0 %v2818, 64
        %v4458 = vpop.permute.xlu0 %4457
        %4459 = vrot.lane.b32.xlu0 %v2827, 64
        %v4460 = vpop.permute.xlu0 %4459
        %4461 = vrot.lane.b32.xlu0 %v2836, 64
        %v4462 = vpop.permute.xlu0 %4461
        %4463 = vrot.lane.b32.xlu0 %v2845, 64
        %v4464 = vpop.permute.xlu0 %4463
        %4465 = vrot.lane.b32.xlu0 %v2854, 64
        %v4466 = vpop.permute.xlu0 %4465
        %4467 = vrot.lane.b32.xlu0 %v2863, 64
        %v4468 = vpop.permute.xlu0 %4467
        %4469 = vrot.lane.b32.xlu0 %v2872, 64
        %v4470 = vpop.permute.xlu0 %4469
        %4471 = vrot.lane.b32.xlu0 %v2881, 64
        %v4472 = vpop.permute.xlu0 %4471
        %v4474 = vsel %vm3018, %v4434, 0
        %v4477 = vsel %vm3018, %v4436, 0
        %v4480 = vsel %vm3018, %v4438, 0
        %v4483 = vsel %vm3018, %v4440, 0
        %v4486 = vsel %vm3018, %v4442, 0
        %v4489 = vsel %vm3018, %v4444, 0
        %v4492 = vsel %vm3018, %v4446, 0
        %v4495 = vsel %vm3018, %v4448, 0
        %v4498 = vsel %vm3018, %v4458, 0
        %v4501 = vsel %vm3018, %v4460, 0
        %v4504 = vsel %vm3018, %v4462, 0
        %v4507 = vsel %vm3018, %v4464, 0
        %v4510 = vsel %vm3018, %v4466, 0
        %v4513 = vsel %vm3018, %v4468, 0
        %v4516 = vsel %vm3018, %v4470, 0
        %v4519 = vsel %vm3018, %v4472, 0
        %4521 = vmatprep.subr.bf16.mxu0 0
        %4522 = vmatpush1.bf16.xpose.msra.mxu0 %v4498
        %4523 = vmatprep.subr.bf16.mxu0 0
        %4524 = vmatpush1.bf16.xpose.msra.mxu0 %v4501
        %4525 = vmatprep.subr.bf16.mxu0 0
        %4526 = vmatpush1.bf16.xpose.msra.mxu0 %v4504
        %4527 = vmatprep.subr.bf16.mxu0 0
        %4528 = vmatpush1.bf16.xpose.msra.mxu0 %v4507
        %4529 = vmatprep.subr.bf16.mxu0 0
        %4530 = vmatpush1.bf16.xpose.msra.mxu0 %v4510
        %4531 = vmatprep.subr.bf16.mxu0 0
        %4532 = vmatpush1.bf16.xpose.msra.mxu0 %v4513
        %4533 = vmatprep.subr.bf16.mxu0 0
        %4534 = vmatpush1.bf16.xpose.msra.mxu0 %v4516
        %4535 = vmatprep.subr.bf16.mxu0 0
        %4536 = vmatpush1.bf16.xpose.msra.mxu0 %v4519
        %4537 = vmatprep.subr.bf16.mxu0 0
        %4538 = vmatpush1.bf16.xpose.msra.mxu0 0
        %4539 = vmatprep.subr.bf16.mxu0 0
        %4540 = vmatpush1.bf16.xpose.msra.mxu0 0
        %4541 = vmatprep.subr.bf16.mxu0 0
        %4542 = vmatpush1.bf16.xpose.msra.mxu0 0
        %4543 = vmatprep.subr.bf16.mxu0 0
        %4544 = vmatpush1.bf16.xpose.msra.mxu0 0
        %4545 = vmatprep.subr.bf16.mxu0 0
        %4546 = vmatpush1.bf16.xpose.msra.mxu0 0
        %4547 = vmatprep.subr.bf16.mxu0 0
        %4548 = vmatpush1.bf16.xpose.msra.mxu0 0
        %4549 = vmatprep.subr.bf16.mxu0 0
        %4550 = vmatpush1.bf16.xpose.msra.mxu0 0
        %4551 = vmatprep.subr.bf16.mxu0 0
        %4552 = vmatpush1.bf16.xpose.msra.mxu0 0
        %4553 = vmatprep.mubr.bf16.mxu0 0
        %4554 = vmatmul.mubr.bf16.gmra.mrb[0].mxu0 %v4474
        %v4555 = vpop.f32.mrb[0].mxu0
        %v4556 = vadd.f32 0.0, %v4555
        %v4557 = vpop.f32.mrb[0].mxu0
        %v4558 = vpop.f32.mrb[0].mxu0
        %v4559 = vadd.f32 0.0, %v4558
        %v4560 = vpop.f32.mrb[0].mxu0
        %4561 = vmatprep.mubr.bf16.mxu0 0
        %4562 = vmatmul.mubr.bf16.gmra.mrb[0].mxu0 %v4477
        %v4563 = vpop.f32.mrb[0].mxu0
        %v4564 = vadd.f32 0.0, %v4563
        %v4565 = vpop.f32.mrb[0].mxu0
        %v4566 = vpop.f32.mrb[0].mxu0
        %v4567 = vadd.f32 0.0, %v4566
        %v4568 = vpop.f32.mrb[0].mxu0
        %4569 = vmatprep.mubr.bf16.mxu0 0
        %4570 = vmatmul.mubr.bf16.gmra.mrb[0].mxu0 %v4480
        %v4571 = vpop.f32.mrb[0].mxu0
        %v4572 = vadd.f32 0.0, %v4571
        %v4573 = vpop.f32.mrb[0].mxu0
        %v4574 = vpop.f32.mrb[0].mxu0
        %v4575 = vadd.f32 0.0, %v4574
        %v4576 = vpop.f32.mrb[0].mxu0
        %4577 = vmatprep.mubr.bf16.mxu0 0
        %4578 = vmatmul.mubr.bf16.gmra.mrb[0].mxu0 %v4483
        %v4579 = vpop.f32.mrb[0].mxu0
        %v4580 = vadd.f32 0.0, %v4579
        %v4581 = vpop.f32.mrb[0].mxu0
        %v4582 = vpop.f32.mrb[0].mxu0
        %v4583 = vadd.f32 0.0, %v4582
        %v4584 = vpop.f32.mrb[0].mxu0
        %4585 = vmatprep.mubr.bf16.mxu0 0
        %4586 = vmatmul.mubr.bf16.gmra.mrb[0].mxu0 %v4486
        %v4587 = vpop.f32.mrb[0].mxu0
        %v4588 = vadd.f32 0.0, %v4587
        %v4589 = vpop.f32.mrb[0].mxu0
        %v4590 = vpop.f32.mrb[0].mxu0
        %v4591 = vadd.f32 0.0, %v4590
        %v4592 = vpop.f32.mrb[0].mxu0
        %4593 = vmatprep.mubr.bf16.mxu0 0
        %4594 = vmatmul.mubr.bf16.gmra.mrb[0].mxu0 %v4489
        %v4595 = vpop.f32.mrb[0].mxu0
        %v4596 = vadd.f32 0.0, %v4595
        %v4597 = vpop.f32.mrb[0].mxu0
        %v4598 = vpop.f32.mrb[0].mxu0
        %v4599 = vadd.f32 0.0, %v4598
        %v4600 = vpop.f32.mrb[0].mxu0
        %4601 = vmatprep.mubr.bf16.mxu0 0
        %4602 = vmatmul.mubr.bf16.gmra.mrb[0].mxu0 %v4492
        %v4603 = vpop.f32.mrb[0].mxu0
        %v4604 = vadd.f32 0.0, %v4603
        %v4605 = vpop.f32.mrb[0].mxu0
        %v4606 = vpop.f32.mrb[0].mxu0
        %v4607 = vadd.f32 0.0, %v4606
        %v4608 = vpop.f32.mrb[0].mxu0
        %4609 = vmatprep.mubr.bf16.mxu0 0
        %4610 = vmatmul.mubr.bf16.gmra.mrb[0].mxu0 %v4495
        %v4611 = vpop.f32.mrb[0].mxu0
        %v4612 = vadd.f32 0.0, %v4611
        %v4613 = vpop.f32.mrb[0].mxu0
        %v4614 = vpop.f32.mrb[0].mxu0
        %v4615 = vadd.f32 0.0, %v4614
        %v4616 = vpop.f32.mrb[0].mxu0
        %4617 = vdwg.mxu0
        %v4618 = vsel %vm3002, %v4556, -inf
        %v4619 = vsel %vm3003, %v4559, -inf
        %v4620 = vsel %vm3004, %v4564, -inf
        %v4621 = vsel %vm3005, %v4567, -inf
        %v4622 = vsel %vm3006, %v4572, -inf
        %v4623 = vsel %vm3007, %v4575, -inf
        %v4624 = vsel %vm3008, %v4580, -inf
        %v4625 = vsel %vm3009, %v4583, -inf
        %v4626 = vsel %vm3010, %v4588, -inf
        %v4627 = vsel %vm3011, %v4591, -inf
        %v4628 = vsel %vm3012, %v4596, -inf
        %v4629 = vsel %vm3013, %v4599, -inf
        %v4630 = vsel %vm3014, %v4604, -inf
        %v4631 = vsel %vm3015, %v4607, -inf
        %v4632 = vsel %vm3016, %v4612, -inf
        %v4633 = vsel %vm3017, %v4615, -inf
        %4634 = vmax.xlane.f32.xlu0 %v4618
        %v4635 = vpop.xlane.xlu0 %4634
        %4636 = vmax.xlane.f32.xlu0 %v4619
        %v4637 = vpop.xlane.xlu0 %4636
        %4638 = vmax.xlane.f32.xlu0 %v4620
        %v4639 = vpop.xlane.xlu0 %4638
        %4640 = vmax.xlane.f32.xlu0 %v4621
        %v4641 = vpop.xlane.xlu0 %4640
        %4642 = vmax.xlane.f32.xlu0 %v4622
        %v4643 = vpop.xlane.xlu0 %4642
        %4644 = vmax.xlane.f32.xlu0 %v4623
        %v4645 = vpop.xlane.xlu0 %4644
        %4646 = vmax.xlane.f32.xlu0 %v4624
        %v4647 = vpop.xlane.xlu0 %4646
        %4648 = vmax.xlane.f32.xlu0 %v4625
        %v4649 = vpop.xlane.xlu0 %4648
        %4650 = vmax.xlane.f32.xlu0 %v4626
        %v4651 = vpop.xlane.xlu0 %4650
        %4652 = vmax.xlane.f32.xlu0 %v4627
        %v4653 = vpop.xlane.xlu0 %4652
        %4654 = vmax.xlane.f32.xlu0 %v4628
        %v4655 = vpop.xlane.xlu0 %4654
        %4656 = vmax.xlane.f32.xlu0 %v4629
        %v4657 = vpop.xlane.xlu0 %4656
        %4658 = vmax.xlane.f32.xlu0 %v4630
        %v4659 = vpop.xlane.xlu0 %4658
        %4660 = vmax.xlane.f32.xlu0 %v4631
        %v4661 = vpop.xlane.xlu0 %4660
        %4662 = vmax.xlane.f32.xlu0 %v4632
        %v4663 = vpop.xlane.xlu0 %4662
        %4664 = vmax.xlane.f32.xlu0 %v4633
        %v4665 = vpop.xlane.xlu0 %4664
        %v4666 = vsub.f32 %v4618, %v4635
        %v4667 = vsub.f32 %v4619, %v4637
        %v4668 = vsub.f32 %v4620, %v4639
        %v4669 = vsub.f32 %v4621, %v4641
        %v4670 = vsub.f32 %v4622, %v4643
        %v4671 = vsub.f32 %v4623, %v4645
        %v4672 = vsub.f32 %v4624, %v4647
        %v4673 = vsub.f32 %v4625, %v4649
        %v4674 = vsub.f32 %v4626, %v4651
        %v4675 = vsub.f32 %v4627, %v4653
        %v4676 = vsub.f32 %v4628, %v4655
        %v4677 = vsub.f32 %v4629, %v4657
        %v4678 = vsub.f32 %v4630, %v4659
        %v4679 = vsub.f32 %v4631, %v4661
        %v4680 = vsub.f32 %v4632, %v4663
        %v4681 = vsub.f32 %v4633, %v4665
        %v4682 = vmul.f32 %v4666, 1.442695
        %v4683 = vpow.pop %v4682
        %v4684 = vmul.f32 %v4667, 1.442695
        %v4685 = vpow.pop %v4684
        %v4686 = vmul.f32 %v4668, 1.442695
        %v4687 = vpow.pop %v4686
        %v4688 = vmul.f32 %v4669, 1.442695
        %v4689 = vpow.pop %v4688
        %v4690 = vmul.f32 %v4670, 1.442695
        %v4691 = vpow.pop %v4690
        %v4692 = vmul.f32 %v4671, 1.442695
        %v4693 = vpow.pop %v4692
        %v4694 = vmul.f32 %v4672, 1.442695
        %v4695 = vpow.pop %v4694
        %v4696 = vmul.f32 %v4673, 1.442695
        %v4697 = vpow.pop %v4696
        %v4698 = vmul.f32 %v4674, 1.442695
        %v4699 = vpow.pop %v4698
        %v4700 = vmul.f32 %v4675, 1.442695
        %v4701 = vpow.pop %v4700
        %v4702 = vmul.f32 %v4676, 1.442695
        %v4703 = vpow.pop %v4702
        %v4704 = vmul.f32 %v4677, 1.442695
        %v4705 = vpow.pop %v4704
        %v4706 = vmul.f32 %v4678, 1.442695
        %v4707 = vpow.pop %v4706
        %v4708 = vmul.f32 %v4679, 1.442695
        %v4709 = vpow.pop %v4708
        %v4710 = vmul.f32 %v4680, 1.442695
        %v4711 = vpow.pop %v4710
        %v4712 = vmul.f32 %v4681, 1.442695
        %v4713 = vpow.pop %v4712
        %4714 = vadd.xlane.f32.xlu0 %v4683
        %v4715 = vpop.xlane.xlu0 %4714
        %4716 = vadd.xlane.f32.xlu0 %v4685
        %v4717 = vpop.xlane.xlu0 %4716
        %4718 = vadd.xlane.f32.xlu0 %v4687
        %v4719 = vpop.xlane.xlu0 %4718
        %4720 = vadd.xlane.f32.xlu0 %v4689
        %v4721 = vpop.xlane.xlu0 %4720
        %4722 = vadd.xlane.f32.xlu0 %v4691
        %v4723 = vpop.xlane.xlu0 %4722
        %4724 = vadd.xlane.f32.xlu0 %v4693
        %v4725 = vpop.xlane.xlu0 %4724
        %4726 = vadd.xlane.f32.xlu0 %v4695
        %v4727 = vpop.xlane.xlu0 %4726
        %4728 = vadd.xlane.f32.xlu0 %v4697
        %v4729 = vpop.xlane.xlu0 %4728
        %4730 = vadd.xlane.f32.xlu0 %v4699
        %v4731 = vpop.xlane.xlu0 %4730
        %4732 = vadd.xlane.f32.xlu0 %v4701
        %v4733 = vpop.xlane.xlu0 %4732
        %4734 = vadd.xlane.f32.xlu0 %v4703
        %v4735 = vpop.xlane.xlu0 %4734
        %4736 = vadd.xlane.f32.xlu0 %v4705
        %v4737 = vpop.xlane.xlu0 %4736
        %4738 = vadd.xlane.f32.xlu0 %v4707
        %v4739 = vpop.xlane.xlu0 %4738
        %4740 = vadd.xlane.f32.xlu0 %v4709
        %v4741 = vpop.xlane.xlu0 %4740
        %4742 = vadd.xlane.f32.xlu0 %v4711
        %v4743 = vpop.xlane.xlu0 %4742
        %4744 = vadd.xlane.f32.xlu0 %v4713
        %v4745 = vpop.xlane.xlu0 %4744
        %v4746 = vrcp.pop %v4715
        %v4747 = vrcp.pop %v4717
        %v4748 = vrcp.pop %v4719
        %v4749 = vrcp.pop %v4721
        %v4750 = vrcp.pop %v4723
        %v4751 = vrcp.pop %v4725
        %v4752 = vrcp.pop %v4727
        %v4753 = vrcp.pop %v4729
        %v4754 = vrcp.pop %v4731
        %v4755 = vrcp.pop %v4733
        %v4756 = vrcp.pop %v4735
        %v4757 = vrcp.pop %v4737
        %v4758 = vrcp.pop %v4739
        %v4759 = vrcp.pop %v4741
        %v4760 = vrcp.pop %v4743
        %v4761 = vrcp.pop %v4745
        %v4762 = vmul.f32 %v4683, %v4746
        %v4763 = vmul.f32 %v4685, %v4747
        %v4764 = vmul.f32 %v4687, %v4748
        %v4765 = vmul.f32 %v4689, %v4749
        %v4766 = vmul.f32 %v4691, %v4750
        %v4767 = vmul.f32 %v4693, %v4751
        %v4768 = vmul.f32 %v4695, %v4752
        %v4769 = vmul.f32 %v4697, %v4753
        %v4770 = vmul.f32 %v4699, %v4754
        %v4771 = vmul.f32 %v4701, %v4755
        %v4772 = vmul.f32 %v4703, %v4756
        %v4773 = vmul.f32 %v4705, %v4757
        %v4774 = vmul.f32 %v4707, %v4758
        %v4775 = vmul.f32 %v4709, %v4759
        %v4776 = vmul.f32 %v4711, %v4760
        %v4777 = vmul.f32 %v4713, %v4761
        %v4778 = vpack.c.bf16 %v4763, %v4762
        %v4779 = vpack.c.bf16 %v4765, %v4764
        %v4780 = vpack.c.bf16 %v4767, %v4766
        %v4781 = vpack.c.bf16 %v4769, %v4768
        %v4782 = vpack.c.bf16 %v4771, %v4770
        %v4783 = vpack.c.bf16 %v4773, %v4772
        %v4784 = vpack.c.bf16 %v4775, %v4774
        %v4785 = vpack.c.bf16 %v4777, %v4776
        %4794 = vrot.lane.b32.xlu0 %v2819, 64
        %v4795 = vpop.permute.xlu0 %4794
        %4796 = vrot.lane.b32.xlu0 %v2828, 64
        %v4797 = vpop.permute.xlu0 %4796
        %4798 = vrot.lane.b32.xlu0 %v2837, 64
        %v4799 = vpop.permute.xlu0 %4798
        %4800 = vrot.lane.b32.xlu0 %v2846, 64
        %v4801 = vpop.permute.xlu0 %4800
        %4802 = vrot.lane.b32.xlu0 %v2855, 64
        %v4803 = vpop.permute.xlu0 %4802
        %4804 = vrot.lane.b32.xlu0 %v2864, 64
        %v4805 = vpop.permute.xlu0 %4804
        %4806 = vrot.lane.b32.xlu0 %v2873, 64
        %v4807 = vpop.permute.xlu0 %4806
        %4808 = vrot.lane.b32.xlu0 %v2882, 64
        %v4809 = vpop.permute.xlu0 %4808
        %4818 = vmatprep.subr.bf16.mxu0 0
        %4819 = vmatpush1.bf16.msra.mxu0 %v4795
        %4820 = vmatprep.subr.bf16.mxu0 0
        %4821 = vmatpush1.bf16.msra.mxu0 %v4797
        %4822 = vmatprep.subr.bf16.mxu0 0
        %4823 = vmatpush1.bf16.msra.mxu0 %v4799
        %4824 = vmatprep.subr.bf16.mxu0 0
        %4825 = vmatpush1.bf16.msra.mxu0 %v4801
        %4826 = vmatprep.subr.bf16.mxu0 0
        %4827 = vmatpush1.bf16.msra.mxu0 %v4803
        %4828 = vmatprep.subr.bf16.mxu0 0
        %4829 = vmatpush1.bf16.msra.mxu0 %v4805
        %4830 = vmatprep.subr.bf16.mxu0 0
        %4831 = vmatpush1.bf16.msra.mxu0 %v4807
        %4832 = vmatprep.subr.bf16.mxu0 0
        %4833 = vmatpush1.bf16.msra.mxu0 %v4809
        %4834 = vmatprep.subr.bf16.mxu0 0
        %4835 = vmatpush1.bf16.msra.mxu0 0
        %4836 = vmatprep.subr.bf16.mxu0 0
        %4837 = vmatpush1.bf16.msra.mxu0 0
        %4838 = vmatprep.subr.bf16.mxu0 0
        %4839 = vmatpush1.bf16.msra.mxu0 0
        %4840 = vmatprep.subr.bf16.mxu0 0
        %4841 = vmatpush1.bf16.msra.mxu0 0
        %4842 = vmatprep.subr.bf16.mxu0 0
        %4843 = vmatpush1.bf16.msra.mxu0 0
        %4844 = vmatprep.subr.bf16.mxu0 0
        %4845 = vmatpush1.bf16.msra.mxu0 0
        %4846 = vmatprep.subr.bf16.mxu0 0
        %4847 = vmatpush1.bf16.msra.mxu0 0
        %4848 = vmatprep.subr.bf16.mxu0 0
        %4849 = vmatpush1.bf16.msra.mxu0 0
        %4850 = vmatprep.mubr.bf16.mxu0 0
        %4851 = vmatmul.mubr.bf16.gmra.mrb[0].mxu0 %v4778
        %v4852 = vpop.f32.mrb[0].mxu0
        %v4853 = vadd.f32 0.0, %v4852
        %v4854 = vpop.f32.mrb[0].mxu0
        %v4855 = vpop.f32.mrb[0].mxu0
        %v4856 = vadd.f32 0.0, %v4855
        %v4857 = vpop.f32.mrb[0].mxu0
        %4858 = vmatprep.mubr.bf16.mxu0 0
        %4859 = vmatmul.mubr.bf16.gmra.mrb[0].mxu0 %v4779
        %v4860 = vpop.f32.mrb[0].mxu0
        %v4861 = vadd.f32 0.0, %v4860
        %v4862 = vpop.f32.mrb[0].mxu0
        %v4863 = vpop.f32.mrb[0].mxu0
        %v4864 = vadd.f32 0.0, %v4863
        %v4865 = vpop.f32.mrb[0].mxu0
        %4866 = vmatprep.mubr.bf16.mxu0 0
        %4867 = vmatmul.mubr.bf16.gmra.mrb[0].mxu0 %v4780
        %v4868 = vpop.f32.mrb[0].mxu0
        %v4869 = vadd.f32 0.0, %v4868
        %v4870 = vpop.f32.mrb[0].mxu0
        %v4871 = vpop.f32.mrb[0].mxu0
        %v4872 = vadd.f32 0.0, %v4871
        %v4873 = vpop.f32.mrb[0].mxu0
        %4874 = vmatprep.mubr.bf16.mxu0 0
        %4875 = vmatmul.mubr.bf16.gmra.mrb[0].mxu0 %v4781
        %v4876 = vpop.f32.mrb[0].mxu0
        %v4877 = vadd.f32 0.0, %v4876
        %v4878 = vpop.f32.mrb[0].mxu0
        %v4879 = vpop.f32.mrb[0].mxu0
        %v4880 = vadd.f32 0.0, %v4879
        %v4881 = vpop.f32.mrb[0].mxu0
        %4882 = vmatprep.mubr.bf16.mxu0 0
        %4883 = vmatmul.mubr.bf16.gmra.mrb[0].mxu0 %v4782
        %v4884 = vpop.f32.mrb[0].mxu0
        %v4885 = vadd.f32 0.0, %v4884
        %v4886 = vpop.f32.mrb[0].mxu0
        %v4887 = vpop.f32.mrb[0].mxu0
        %v4888 = vadd.f32 0.0, %v4887
        %v4889 = vpop.f32.mrb[0].mxu0
        %4890 = vmatprep.mubr.bf16.mxu0 0
        %4891 = vmatmul.mubr.bf16.gmra.mrb[0].mxu0 %v4783
        %v4892 = vpop.f32.mrb[0].mxu0
        %v4893 = vadd.f32 0.0, %v4892
        %v4894 = vpop.f32.mrb[0].mxu0
        %v4895 = vpop.f32.mrb[0].mxu0
        %v4896 = vadd.f32 0.0, %v4895
        %v4897 = vpop.f32.mrb[0].mxu0
        %4898 = vmatprep.mubr.bf16.mxu0 0
        %4899 = vmatmul.mubr.bf16.gmra.mrb[0].mxu0 %v4784
        %v4900 = vpop.f32.mrb[0].mxu0
        %v4901 = vadd.f32 0.0, %v4900
        %v4902 = vpop.f32.mrb[0].mxu0
        %v4903 = vpop.f32.mrb[0].mxu0
        %v4904 = vadd.f32 0.0, %v4903
        %v4905 = vpop.f32.mrb[0].mxu0
        %4906 = vmatprep.mubr.bf16.mxu0 0
        %4907 = vmatmul.mubr.bf16.gmra.mrb[0].mxu0 %v4785
        %v4908 = vpop.f32.mrb[0].mxu0
        %v4909 = vadd.f32 0.0, %v4908
        %v4910 = vpop.f32.mrb[0].mxu0
        %v4911 = vpop.f32.mrb[0].mxu0
        %v4912 = vadd.f32 0.0, %v4911
        %v4913 = vpop.f32.mrb[0].mxu0
        %4914 = vdwg.mxu0
        %4931 = vrot.lane.b32.xlu0 %v4853, 64
        %v4932 = vpop.permute.xlu0 %4931
        %4933 = vrot.lane.b32.xlu0 %v4856, 64
        %v4934 = vpop.permute.xlu0 %4933
        %4935 = vrot.lane.b32.xlu0 %v4861, 64
        %v4936 = vpop.permute.xlu0 %4935
        %4937 = vrot.lane.b32.xlu0 %v4864, 64
        %v4938 = vpop.permute.xlu0 %4937
        %4939 = vrot.lane.b32.xlu0 %v4869, 64
        %v4940 = vpop.permute.xlu0 %4939
        %4941 = vrot.lane.b32.xlu0 %v4872, 64
        %v4942 = vpop.permute.xlu0 %4941
        %4943 = vrot.lane.b32.xlu0 %v4877, 64
        %v4944 = vpop.permute.xlu0 %4943
        %4945 = vrot.lane.b32.xlu0 %v4880, 64
        %v4946 = vpop.permute.xlu0 %4945
        %4947 = vrot.lane.b32.xlu0 %v4885, 64
        %v4948 = vpop.permute.xlu0 %4947
        %4949 = vrot.lane.b32.xlu0 %v4888, 64
        %v4950 = vpop.permute.xlu0 %4949
        %4951 = vrot.lane.b32.xlu0 %v4893, 64
        %v4952 = vpop.permute.xlu0 %4951
        %4953 = vrot.lane.b32.xlu0 %v4896, 64
        %v4954 = vpop.permute.xlu0 %4953
        %4955 = vrot.lane.b32.xlu0 %v4901, 64
        %v4956 = vpop.permute.xlu0 %4955
        %4957 = vrot.lane.b32.xlu0 %v4904, 64
        %v4958 = vpop.permute.xlu0 %4957
        %4959 = vrot.lane.b32.xlu0 %v4909, 64
        %v4960 = vpop.permute.xlu0 %4959
        %4961 = vrot.lane.b32.xlu0 %v4912, 64
        %v4962 = vpop.permute.xlu0 %4961
        %v4979 = vsel %vm3018, %v4363, %v4932
        %v4980 = vsel %vm3018, %v4366, %v4934
        %v4981 = vsel %vm3018, %v4371, %v4936
        %v4982 = vsel %vm3018, %v4374, %v4938
        %v4983 = vsel %vm3018, %v4379, %v4940
        %v4984 = vsel %vm3018, %v4382, %v4942
        %v4985 = vsel %vm3018, %v4387, %v4944
        %v4986 = vsel %vm3018, %v4390, %v4946
        %v4987 = vsel %vm3018, %v4395, %v4948
        %v4988 = vsel %vm3018, %v4398, %v4950
        %v4989 = vsel %vm3018, %v4403, %v4952
        %v4990 = vsel %vm3018, %v4406, %v4954
        %v4991 = vsel %vm3018, %v4411, %v4956
        %v4992 = vsel %vm3018, %v4414, %v4958
        %v4993 = vsel %vm3018, %v4419, %v4960
        %v4994 = vsel %vm3018, %v4422, %v4962
        %v4995 = vpack.c.bf16 %v4980, %v4979
        %v4996 = vpack.c.bf16 %v4982, %v4981
        %v4997 = vpack.c.bf16 %v4984, %v4983
        %v4998 = vpack.c.bf16 %v4986, %v4985
        %v4999 = vpack.c.bf16 %v4988, %v4987
        %v5000 = vpack.c.bf16 %v4990, %v4989
        %v5001 = vpack.c.bf16 %v4992, %v4991
        %v5002 = vpack.c.bf16 %v4994, %v4993
        %5003 = vst [vmem:[#allocation2 + $0x8] sm:$0xff] %v4995
        %5004 = vst [vmem:[#allocation2 + $0x20] sm:$0xff] %v4996
        %5005 = vst [vmem:[#allocation2 + $0x38] sm:$0xff] %v4997
        %5006 = vst [vmem:[#allocation2 + $0x50] sm:$0xff] %v4998
        %5007 = vst [vmem:[#allocation2 + $0x68] sm:$0xff] %v4999
        %5008 = vst [vmem:[#allocation2 + $0x80] sm:$0xff] %v5000
        %5009 = vst [vmem:[#allocation2 + $0x98] sm:$0xff] %v5001
        %5010 = vst [vmem:[#allocation2 + $0xb0] sm:$0xff] %v5002
        %v5012 = vsel %vm3018, %v2820, 0
        %v5015 = vsel %vm3018, %v2829, 0
        %v5018 = vsel %vm3018, %v2838, 0
        %v5021 = vsel %vm3018, %v2847, 0
        %v5024 = vsel %vm3018, %v2856, 0
        %v5027 = vsel %vm3018, %v2865, 0
        %v5030 = vsel %vm3018, %v2874, 0
        %v5033 = vsel %vm3018, %v2883, 0
        %v5036 = vsel %vm3018, %v2821, 0
        %v5039 = vsel %vm3018, %v2830, 0
        %v5042 = vsel %vm3018, %v2839, 0
        %v5045 = vsel %vm3018, %v2848, 0
        %v5048 = vsel %vm3018, %v2857, 0
        %v5051 = vsel %vm3018, %v2866, 0
        %v5054 = vsel %vm3018, %v2875, 0
        %v5057 = vsel %vm3018, %v2884, 0
        %5059 = vmatprep.subr.bf16.mxu0 0
        %5060 = vmatpush1.bf16.xpose.msra.mxu0 %v5036
        %5061 = vmatprep.subr.bf16.mxu0 0
        %5062 = vmatpush1.bf16.xpose.msra.mxu0 %v5039
        %5063 = vmatprep.subr.bf16.mxu0 0
        %5064 = vmatpush1.bf16.xpose.msra.mxu0 %v5042
        %5065 = vmatprep.subr.bf16.mxu0 0
        %5066 = vmatpush1.bf16.xpose.msra.mxu0 %v5045
        %5067 = vmatprep.subr.bf16.mxu0 0
        %5068 = vmatpush1.bf16.xpose.msra.mxu0 %v5048
        %5069 = vmatprep.subr.bf16.mxu0 0
        %5070 = vmatpush1.bf16.xpose.msra.mxu0 %v5051
        %5071 = vmatprep.subr.bf16.mxu0 0
        %5072 = vmatpush1.bf16.xpose.msra.mxu0 %v5054
        %5073 = vmatprep.subr.bf16.mxu0 0
        %5074 = vmatpush1.bf16.xpose.msra.mxu0 %v5057
        %5075 = vmatprep.subr.bf16.mxu0 0
        %5076 = vmatpush1.bf16.xpose.msra.mxu0 0
        %5077 = vmatprep.subr.bf16.mxu0 0
        %5078 = vmatpush1.bf16.xpose.msra.mxu0 0
        %5079 = vmatprep.subr.bf16.mxu0 0
        %5080 = vmatpush1.bf16.xpose.msra.mxu0 0
        %5081 = vmatprep.subr.bf16.mxu0 0
        %5082 = vmatpush1.bf16.xpose.msra.mxu0 0
        %5083 = vmatprep.subr.bf16.mxu0 0
        %5084 = vmatpush1.bf16.xpose.msra.mxu0 0
        %5085 = vmatprep.subr.bf16.mxu0 0
        %5086 = vmatpush1.bf16.xpose.msra.mxu0 0
        %5087 = vmatprep.subr.bf16.mxu0 0
        %5088 = vmatpush1.bf16.xpose.msra.mxu0 0
        %5089 = vmatprep.subr.bf16.mxu0 0
        %5090 = vmatpush1.bf16.xpose.msra.mxu0 0
        %5091 = vmatprep.mubr.bf16.mxu0 0
        %5092 = vmatmul.mubr.bf16.gmra.mrb[0].mxu0 %v5012
        %v5093 = vpop.f32.mrb[0].mxu0
        %v5094 = vadd.f32 0.0, %v5093
        %v5095 = vpop.f32.mrb[0].mxu0
        %v5096 = vpop.f32.mrb[0].mxu0
        %v5097 = vadd.f32 0.0, %v5096
        %v5098 = vpop.f32.mrb[0].mxu0
        %5099 = vmatprep.mubr.bf16.mxu0 0
        %5100 = vmatmul.mubr.bf16.gmra.mrb[0].mxu0 %v5015
        %v5101 = vpop.f32.mrb[0].mxu0
        %v5102 = vadd.f32 0.0, %v5101
        %v5103 = vpop.f32.mrb[0].mxu0
        %v5104 = vpop.f32.mrb[0].mxu0
        %v5105 = vadd.f32 0.0, %v5104
        %v5106 = vpop.f32.mrb[0].mxu0
        %5107 = vmatprep.mubr.bf16.mxu0 0
        %5108 = vmatmul.mubr.bf16.gmra.mrb[0].mxu0 %v5018
        %v5109 = vpop.f32.mrb[0].mxu0
        %v5110 = vadd.f32 0.0, %v5109
        %v5111 = vpop.f32.mrb[0].mxu0
        %v5112 = vpop.f32.mrb[0].mxu0
        %v5113 = vadd.f32 0.0, %v5112
        %v5114 = vpop.f32.mrb[0].mxu0
        %5115 = vmatprep.mubr.bf16.mxu0 0
        %5116 = vmatmul.mubr.bf16.gmra.mrb[0].mxu0 %v5021
        %v5117 = vpop.f32.mrb[0].mxu0
        %v5118 = vadd.f32 0.0, %v5117
        %v5119 = vpop.f32.mrb[0].mxu0
        %v5120 = vpop.f32.mrb[0].mxu0
        %v5121 = vadd.f32 0.0, %v5120
        %v5122 = vpop.f32.mrb[0].mxu0
        %5123 = vmatprep.mubr.bf16.mxu0 0
        %5124 = vmatmul.mubr.bf16.gmra.mrb[0].mxu0 %v5024
        %v5125 = vpop.f32.mrb[0].mxu0
        %v5126 = vadd.f32 0.0, %v5125
        %v5127 = vpop.f32.mrb[0].mxu0
        %v5128 = vpop.f32.mrb[0].mxu0
        %v5129 = vadd.f32 0.0, %v5128
        %v5130 = vpop.f32.mrb[0].mxu0
        %5131 = vmatprep.mubr.bf16.mxu0 0
        %5132 = vmatmul.mubr.bf16.gmra.mrb[0].mxu0 %v5027
        %v5133 = vpop.f32.mrb[0].mxu0
        %v5134 = vadd.f32 0.0, %v5133
        %v5135 = vpop.f32.mrb[0].mxu0
        %v5136 = vpop.f32.mrb[0].mxu0
        %v5137 = vadd.f32 0.0, %v5136
        %v5138 = vpop.f32.mrb[0].mxu0
        %5139 = vmatprep.mubr.bf16.mxu0 0
        %5140 = vmatmul.mubr.bf16.gmra.mrb[0].mxu0 %v5030
        %v5141 = vpop.f32.mrb[0].mxu0
        %v5142 = vadd.f32 0.0, %v5141
        %v5143 = vpop.f32.mrb[0].mxu0
        %v5144 = vpop.f32.mrb[0].mxu0
        %v5145 = vadd.f32 0.0, %v5144
        %v5146 = vpop.f32.mrb[0].mxu0
        %5147 = vmatprep.mubr.bf16.mxu0 0
        %5148 = vmatmul.mubr.bf16.gmra.mrb[0].mxu0 %v5033
        %v5149 = vpop.f32.mrb[0].mxu0
        %v5150 = vadd.f32 0.0, %v5149
        %v5151 = vpop.f32.mrb[0].mxu0
        %v5152 = vpop.f32.mrb[0].mxu0
        %v5153 = vadd.f32 0.0, %v5152
        %v5154 = vpop.f32.mrb[0].mxu0
        %5155 = vdwg.mxu0
        %v5156 = vsel %vm3002, %v5094, -inf
        %v5157 = vsel %vm3003, %v5097, -inf
        %v5158 = vsel %vm3004, %v5102, -inf
        %v5159 = vsel %vm3005, %v5105, -inf
        %v5160 = vsel %vm3006, %v5110, -inf
        %v5161 = vsel %vm3007, %v5113, -inf
        %v5162 = vsel %vm3008, %v5118, -inf
        %v5163 = vsel %vm3009, %v5121, -inf
        %v5164 = vsel %vm3010, %v5126, -inf
        %v5165 = vsel %vm3011, %v5129, -inf
        %v5166 = vsel %vm3012, %v5134, -inf
        %v5167 = vsel %vm3013, %v5137, -inf
        %v5168 = vsel %vm3014, %v5142, -inf
        %v5169 = vsel %vm3015, %v5145, -inf
        %v5170 = vsel %vm3016, %v5150, -inf
        %v5171 = vsel %vm3017, %v5153, -inf
        %5172 = vmax.xlane.f32.xlu0 %v5156
        %v5173 = vpop.xlane.xlu0 %5172
        %5174 = vmax.xlane.f32.xlu0 %v5157
        %v5175 = vpop.xlane.xlu0 %5174
        %5176 = vmax.xlane.f32.xlu0 %v5158
        %v5177 = vpop.xlane.xlu0 %5176
        %5178 = vmax.xlane.f32.xlu0 %v5159
        %v5179 = vpop.xlane.xlu0 %5178
        %5180 = vmax.xlane.f32.xlu0 %v5160
        %v5181 = vpop.xlane.xlu0 %5180
        %5182 = vmax.xlane.f32.xlu0 %v5161
        %v5183 = vpop.xlane.xlu0 %5182
        %5184 = vmax.xlane.f32.xlu0 %v5162
        %v5185 = vpop.xlane.xlu0 %5184
        %5186 = vmax.xlane.f32.xlu0 %v5163
        %v5187 = vpop.xlane.xlu0 %5186
        %5188 = vmax.xlane.f32.xlu0 %v5164
        %v5189 = vpop.xlane.xlu0 %5188
        %5190 = vmax.xlane.f32.xlu0 %v5165
        %v5191 = vpop.xlane.xlu0 %5190
        %5192 = vmax.xlane.f32.xlu0 %v5166
        %v5193 = vpop.xlane.xlu0 %5192
        %5194 = vmax.xlane.f32.xlu0 %v5167
        %v5195 = vpop.xlane.xlu0 %5194
        %5196 = vmax.xlane.f32.xlu0 %v5168
        %v5197 = vpop.xlane.xlu0 %5196
        %5198 = vmax.xlane.f32.xlu0 %v5169
        %v5199 = vpop.xlane.xlu0 %5198
        %5200 = vmax.xlane.f32.xlu0 %v5170
        %v5201 = vpop.xlane.xlu0 %5200
        %5202 = vmax.xlane.f32.xlu0 %v5171
        %v5203 = vpop.xlane.xlu0 %5202
        %v5204 = vsub.f32 %v5156, %v5173
        %v5205 = vsub.f32 %v5157, %v5175
        %v5206 = vsub.f32 %v5158, %v5177
        %v5207 = vsub.f32 %v5159, %v5179
        %v5208 = vsub.f32 %v5160, %v5181
        %v5209 = vsub.f32 %v5161, %v5183
        %v5210 = vsub.f32 %v5162, %v5185
        %v5211 = vsub.f32 %v5163, %v5187
        %v5212 = vsub.f32 %v5164, %v5189
        %v5213 = vsub.f32 %v5165, %v5191
        %v5214 = vsub.f32 %v5166, %v5193
        %v5215 = vsub.f32 %v5167, %v5195
        %v5216 = vsub.f32 %v5168, %v5197
        %v5217 = vsub.f32 %v5169, %v5199
        %v5218 = vsub.f32 %v5170, %v5201
        %v5219 = vsub.f32 %v5171, %v5203
        %v5220 = vmul.f32 %v5204, 1.442695
        %v5221 = vpow.pop %v5220
        %v5222 = vmul.f32 %v5205, 1.442695
        %v5223 = vpow.pop %v5222
        %v5224 = vmul.f32 %v5206, 1.442695
        %v5225 = vpow.pop %v5224
        %v5226 = vmul.f32 %v5207, 1.442695
        %v5227 = vpow.pop %v5226
        %v5228 = vmul.f32 %v5208, 1.442695
        %v5229 = vpow.pop %v5228
        %v5230 = vmul.f32 %v5209, 1.442695
        %v5231 = vpow.pop %v5230
        %v5232 = vmul.f32 %v5210, 1.442695
        %v5233 = vpow.pop %v5232
        %v5234 = vmul.f32 %v5211, 1.442695
        %v5235 = vpow.pop %v5234
        %v5236 = vmul.f32 %v5212, 1.442695
        %v5237 = vpow.pop %v5236
        %v5238 = vmul.f32 %v5213, 1.442695
        %v5239 = vpow.pop %v5238
        %v5240 = vmul.f32 %v5214, 1.442695
        %v5241 = vpow.pop %v5240
        %v5242 = vmul.f32 %v5215, 1.442695
        %v5243 = vpow.pop %v5242
        %v5244 = vmul.f32 %v5216, 1.442695
        %v5245 = vpow.pop %v5244
        %v5246 = vmul.f32 %v5217, 1.442695
        %v5247 = vpow.pop %v5246
        %v5248 = vmul.f32 %v5218, 1.442695
        %v5249 = vpow.pop %v5248
        %v5250 = vmul.f32 %v5219, 1.442695
        %v5251 = vpow.pop %v5250
        %5252 = vadd.xlane.f32.xlu0 %v5221
        %v5253 = vpop.xlane.xlu0 %5252
        %5254 = vadd.xlane.f32.xlu0 %v5223
        %v5255 = vpop.xlane.xlu0 %5254
        %5256 = vadd.xlane.f32.xlu0 %v5225
        %v5257 = vpop.xlane.xlu0 %5256
        %5258 = vadd.xlane.f32.xlu0 %v5227
        %v5259 = vpop.xlane.xlu0 %5258
        %5260 = vadd.xlane.f32.xlu0 %v5229
        %v5261 = vpop.xlane.xlu0 %5260
        %5262 = vadd.xlane.f32.xlu0 %v5231
        %v5263 = vpop.xlane.xlu0 %5262
        %5264 = vadd.xlane.f32.xlu0 %v5233
        %v5265 = vpop.xlane.xlu0 %5264
        %5266 = vadd.xlane.f32.xlu0 %v5235
        %v5267 = vpop.xlane.xlu0 %5266
        %5268 = vadd.xlane.f32.xlu0 %v5237
        %v5269 = vpop.xlane.xlu0 %5268
        %5270 = vadd.xlane.f32.xlu0 %v5239
        %v5271 = vpop.xlane.xlu0 %5270
        %5272 = vadd.xlane.f32.xlu0 %v5241
        %v5273 = vpop.xlane.xlu0 %5272
        %5274 = vadd.xlane.f32.xlu0 %v5243
        %v5275 = vpop.xlane.xlu0 %5274
        %5276 = vadd.xlane.f32.xlu0 %v5245
        %v5277 = vpop.xlane.xlu0 %5276
        %5278 = vadd.xlane.f32.xlu0 %v5247
        %v5279 = vpop.xlane.xlu0 %5278
        %5280 = vadd.xlane.f32.xlu0 %v5249
        %v5281 = vpop.xlane.xlu0 %5280
        %5282 = vadd.xlane.f32.xlu0 %v5251
        %v5283 = vpop.xlane.xlu0 %5282
        %v5284 = vrcp.pop %v5253
        %v5285 = vrcp.pop %v5255
        %v5286 = vrcp.pop %v5257
        %v5287 = vrcp.pop %v5259
        %v5288 = vrcp.pop %v5261
        %v5289 = vrcp.pop %v5263
        %v5290 = vrcp.pop %v5265
        %v5291 = vrcp.pop %v5267
        %v5292 = vrcp.pop %v5269
        %v5293 = vrcp.pop %v5271
        %v5294 = vrcp.pop %v5273
        %v5295 = vrcp.pop %v5275
        %v5296 = vrcp.pop %v5277
        %v5297 = vrcp.pop %v5279
        %v5298 = vrcp.pop %v5281
        %v5299 = vrcp.pop %v5283
        %v5300 = vmul.f32 %v5221, %v5284
        %v5301 = vmul.f32 %v5223, %v5285
        %v5302 = vmul.f32 %v5225, %v5286
        %v5303 = vmul.f32 %v5227, %v5287
        %v5304 = vmul.f32 %v5229, %v5288
        %v5305 = vmul.f32 %v5231, %v5289
        %v5306 = vmul.f32 %v5233, %v5290
        %v5307 = vmul.f32 %v5235, %v5291
        %v5308 = vmul.f32 %v5237, %v5292
        %v5309 = vmul.f32 %v5239, %v5293
        %v5310 = vmul.f32 %v5241, %v5294
        %v5311 = vmul.f32 %v5243, %v5295
        %v5312 = vmul.f32 %v5245, %v5296
        %v5313 = vmul.f32 %v5247, %v5297
        %v5314 = vmul.f32 %v5249, %v5298
        %v5315 = vmul.f32 %v5251, %v5299
        %v5316 = vpack.c.bf16 %v5301, %v5300
        %v5317 = vpack.c.bf16 %v5303, %v5302
        %v5318 = vpack.c.bf16 %v5305, %v5304
        %v5319 = vpack.c.bf16 %v5307, %v5306
        %v5320 = vpack.c.bf16 %v5309, %v5308
        %v5321 = vpack.c.bf16 %v5311, %v5310
        %v5322 = vpack.c.bf16 %v5313, %v5312
        %v5323 = vpack.c.bf16 %v5315, %v5314
        %5324 = vmatprep.subr.bf16.mxu0 0
        %5325 = vmatpush1.bf16.msra.mxu0 %v2822
        %5326 = vmatprep.subr.bf16.mxu0 0
        %5327 = vmatpush1.bf16.msra.mxu0 %v2831
        %5328 = vmatprep.subr.bf16.mxu0 0
        %5329 = vmatpush1.bf16.msra.mxu0 %v2840
        %5330 = vmatprep.subr.bf16.mxu0 0
        %5331 = vmatpush1.bf16.msra.mxu0 %v2849
        %5332 = vmatprep.subr.bf16.mxu0 0
        %5333 = vmatpush1.bf16.msra.mxu0 %v2858
        %5334 = vmatprep.subr.bf16.mxu0 0
        %5335 = vmatpush1.bf16.msra.mxu0 %v2867
        %5336 = vmatprep.subr.bf16.mxu0 0
        %5337 = vmatpush1.bf16.msra.mxu0 %v2876
        %5338 = vmatprep.subr.bf16.mxu0 0
        %5339 = vmatpush1.bf16.msra.mxu0 %v2885
        %5340 = vmatprep.subr.bf16.mxu0 0
        %5341 = vmatpush1.bf16.msra.mxu0 0
        %5342 = vmatprep.subr.bf16.mxu0 0
        %5343 = vmatpush1.bf16.msra.mxu0 0
        %5344 = vmatprep.subr.bf16.mxu0 0
        %5345 = vmatpush1.bf16.msra.mxu0 0
        %5346 = vmatprep.subr.bf16.mxu0 0
        %5347 = vmatpush1.bf16.msra.mxu0 0
        %5348 = vmatprep.subr.bf16.mxu0 0
        %5349 = vmatpush1.bf16.msra.mxu0 0
        %5350 = vmatprep.subr.bf16.mxu0 0
        %5351 = vmatpush1.bf16.msra.mxu0 0
        %5352 = vmatprep.subr.bf16.mxu0 0
        %5353 = vmatpush1.bf16.msra.mxu0 0
        %5354 = vmatprep.subr.bf16.mxu0 0
        %5355 = vmatpush1.bf16.msra.mxu0 0
        %5356 = vmatprep.mubr.bf16.mxu0 0
        %5357 = vmatmul.mubr.bf16.gmra.mrb[0].mxu0 %v5316
        %v5358 = vpop.f32.mrb[0].mxu0
        %v5359 = vadd.f32 0.0, %v5358
        %v5360 = vpop.f32.mrb[0].mxu0
        %v5361 = vpop.f32.mrb[0].mxu0
        %v5362 = vadd.f32 0.0, %v5361
        %v5363 = vpop.f32.mrb[0].mxu0
        %5364 = vmatprep.mubr.bf16.mxu0 0
        %5365 = vmatmul.mubr.bf16.gmra.mrb[0].mxu0 %v5317
        %v5366 = vpop.f32.mrb[0].mxu0
        %v5367 = vadd.f32 0.0, %v5366
        %v5368 = vpop.f32.mrb[0].mxu0
        %v5369 = vpop.f32.mrb[0].mxu0
        %v5370 = vadd.f32 0.0, %v5369
        %v5371 = vpop.f32.mrb[0].mxu0
        %5372 = vmatprep.mubr.bf16.mxu0 0
        %5373 = vmatmul.mubr.bf16.gmra.mrb[0].mxu0 %v5318
        %v5374 = vpop.f32.mrb[0].mxu0
        %v5375 = vadd.f32 0.0, %v5374
        %v5376 = vpop.f32.mrb[0].mxu0
        %v5377 = vpop.f32.mrb[0].mxu0
        %v5378 = vadd.f32 0.0, %v5377
        %v5379 = vpop.f32.mrb[0].mxu0
        %5380 = vmatprep.mubr.bf16.mxu0 0
        %5381 = vmatmul.mubr.bf16.gmra.mrb[0].mxu0 %v5319
        %v5382 = vpop.f32.mrb[0].mxu0
        %v5383 = vadd.f32 0.0, %v5382
        %v5384 = vpop.f32.mrb[0].mxu0
        %v5385 = vpop.f32.mrb[0].mxu0
        %v5386 = vadd.f32 0.0, %v5385
        %v5387 = vpop.f32.mrb[0].mxu0
        %5388 = vmatprep.mubr.bf16.mxu0 0
        %5389 = vmatmul.mubr.bf16.gmra.mrb[0].mxu0 %v5320
        %v5390 = vpop.f32.mrb[0].mxu0
        %v5391 = vadd.f32 0.0, %v5390
        %v5392 = vpop.f32.mrb[0].mxu0
        %v5393 = vpop.f32.mrb[0].mxu0
        %v5394 = vadd.f32 0.0, %v5393
        %v5395 = vpop.f32.mrb[0].mxu0
        %5396 = vmatprep.mubr.bf16.mxu0 0
        %5397 = vmatmul.mubr.bf16.gmra.mrb[0].mxu0 %v5321
        %v5398 = vpop.f32.mrb[0].mxu0
        %v5399 = vadd.f32 0.0, %v5398
        %v5400 = vpop.f32.mrb[0].mxu0
        %v5401 = vpop.f32.mrb[0].mxu0
        %v5402 = vadd.f32 0.0, %v5401
        %v5403 = vpop.f32.mrb[0].mxu0
        %5404 = vmatprep.mubr.bf16.mxu0 0
        %5405 = vmatmul.mubr.bf16.gmra.mrb[0].mxu0 %v5322
        %v5406 = vpop.f32.mrb[0].mxu0
        %v5407 = vadd.f32 0.0, %v5406
        %v5408 = vpop.f32.mrb[0].mxu0
        %v5409 = vpop.f32.mrb[0].mxu0
        %v5410 = vadd.f32 0.0, %v5409
        %v5411 = vpop.f32.mrb[0].mxu0
        %5412 = vmatprep.mubr.bf16.mxu0 0
        %5413 = vmatmul.mubr.bf16.gmra.mrb[0].mxu0 %v5323
        %v5414 = vpop.f32.mrb[0].mxu0
        %v5415 = vadd.f32 0.0, %v5414
        %v5416 = vpop.f32.mrb[0].mxu0
        %v5417 = vpop.f32.mrb[0].mxu0
        %v5418 = vadd.f32 0.0, %v5417
        %v5419 = vpop.f32.mrb[0].mxu0
        %5420 = vdwg.mxu0
        %5429 = vrot.lane.b32.xlu0 %v2820, 64
        %v5430 = vpop.permute.xlu0 %5429
        %5431 = vrot.lane.b32.xlu0 %v2829, 64
        %v5432 = vpop.permute.xlu0 %5431
        %5433 = vrot.lane.b32.xlu0 %v2838, 64
        %v5434 = vpop.permute.xlu0 %5433
        %5435 = vrot.lane.b32.xlu0 %v2847, 64
        %v5436 = vpop.permute.xlu0 %5435
        %5437 = vrot.lane.b32.xlu0 %v2856, 64
        %v5438 = vpop.permute.xlu0 %5437
        %5439 = vrot.lane.b32.xlu0 %v2865, 64
        %v5440 = vpop.permute.xlu0 %5439
        %5441 = vrot.lane.b32.xlu0 %v2874, 64
        %v5442 = vpop.permute.xlu0 %5441
        %5443 = vrot.lane.b32.xlu0 %v2883, 64
        %v5444 = vpop.permute.xlu0 %5443
        %5453 = vrot.lane.b32.xlu0 %v2821, 64
        %v5454 = vpop.permute.xlu0 %5453
        %5455 = vrot.lane.b32.xlu0 %v2830, 64
        %v5456 = vpop.permute.xlu0 %5455
        %5457 = vrot.lane.b32.xlu0 %v2839, 64
        %v5458 = vpop.permute.xlu0 %5457
        %5459 = vrot.lane.b32.xlu0 %v2848, 64
        %v5460 = vpop.permute.xlu0 %5459
        %5461 = vrot.lane.b32.xlu0 %v2857, 64
        %v5462 = vpop.permute.xlu0 %5461
        %5463 = vrot.lane.b32.xlu0 %v2866, 64
        %v5464 = vpop.permute.xlu0 %5463
        %5465 = vrot.lane.b32.xlu0 %v2875, 64
        %v5466 = vpop.permute.xlu0 %5465
        %5467 = vrot.lane.b32.xlu0 %v2884, 64
        %v5468 = vpop.permute.xlu0 %5467
        %v5470 = vsel %vm3018, %v5430, 0
        %v5473 = vsel %vm3018, %v5432, 0
        %v5476 = vsel %vm3018, %v5434, 0
        %v5479 = vsel %vm3018, %v5436, 0
        %v5482 = vsel %vm3018, %v5438, 0
        %v5485 = vsel %vm3018, %v5440, 0
        %v5488 = vsel %vm3018, %v5442, 0
        %v5491 = vsel %vm3018, %v5444, 0
        %v5494 = vsel %vm3018, %v5454, 0
        %v5497 = vsel %vm3018, %v5456, 0
        %v5500 = vsel %vm3018, %v5458, 0
        %v5503 = vsel %vm3018, %v5460, 0
        %v5506 = vsel %vm3018, %v5462, 0
        %v5509 = vsel %vm3018, %v5464, 0
        %v5512 = vsel %vm3018, %v5466, 0
        %v5515 = vsel %vm3018, %v5468, 0
        %5517 = vmatprep.subr.bf16.mxu0 0
        %5518 = vmatpush1.bf16.xpose.msra.mxu0 %v5494
        %5519 = vmatprep.subr.bf16.mxu0 0
        %5520 = vmatpush1.bf16.xpose.msra.mxu0 %v5497
        %5521 = vmatprep.subr.bf16.mxu0 0
        %5522 = vmatpush1.bf16.xpose.msra.mxu0 %v5500
        %5523 = vmatprep.subr.bf16.mxu0 0
        %5524 = vmatpush1.bf16.xpose.msra.mxu0 %v5503
        %5525 = vmatprep.subr.bf16.mxu0 0
        %5526 = vmatpush1.bf16.xpose.msra.mxu0 %v5506
        %5527 = vmatprep.subr.bf16.mxu0 0
        %5528 = vmatpush1.bf16.xpose.msra.mxu0 %v5509
        %5529 = vmatprep.subr.bf16.mxu0 0
        %5530 = vmatpush1.bf16.xpose.msra.mxu0 %v5512
        %5531 = vmatprep.subr.bf16.mxu0 0
        %5532 = vmatpush1.bf16.xpose.msra.mxu0 %v5515
        %5533 = vmatprep.subr.bf16.mxu0 0
        %5534 = vmatpush1.bf16.xpose.msra.mxu0 0
        %5535 = vmatprep.subr.bf16.mxu0 0
        %5536 = vmatpush1.bf16.xpose.msra.mxu0 0
        %5537 = vmatprep.subr.bf16.mxu0 0
        %5538 = vmatpush1.bf16.xpose.msra.mxu0 0
        %5539 = vmatprep.subr.bf16.mxu0 0
        %5540 = vmatpush1.bf16.xpose.msra.mxu0 0
        %5541 = vmatprep.subr.bf16.mxu0 0
        %5542 = vmatpush1.bf16.xpose.msra.mxu0 0
        %5543 = vmatprep.subr.bf16.mxu0 0
        %5544 = vmatpush1.bf16.xpose.msra.mxu0 0
        %5545 = vmatprep.subr.bf16.mxu0 0
        %5546 = vmatpush1.bf16.xpose.msra.mxu0 0
        %5547 = vmatprep.subr.bf16.mxu0 0
        %5548 = vmatpush1.bf16.xpose.msra.mxu0 0
        %5549 = vmatprep.mubr.bf16.mxu0 0
        %5550 = vmatmul.mubr.bf16.gmra.mrb[0].mxu0 %v5470
        %v5551 = vpop.f32.mrb[0].mxu0
        %v5552 = vadd.f32 0.0, %v5551
        %v5553 = vpop.f32.mrb[0].mxu0
        %v5554 = vpop.f32.mrb[0].mxu0
        %v5555 = vadd.f32 0.0, %v5554
        %v5556 = vpop.f32.mrb[0].mxu0
        %5557 = vmatprep.mubr.bf16.mxu0 0
        %5558 = vmatmul.mubr.bf16.gmra.mrb[0].mxu0 %v5473
        %v5559 = vpop.f32.mrb[0].mxu0
        %v5560 = vadd.f32 0.0, %v5559
        %v5561 = vpop.f32.mrb[0].mxu0
        %v5562 = vpop.f32.mrb[0].mxu0
        %v5563 = vadd.f32 0.0, %v5562
        %v5564 = vpop.f32.mrb[0].mxu0
        %5565 = vmatprep.mubr.bf16.mxu0 0
        %5566 = vmatmul.mubr.bf16.gmra.mrb[0].mxu0 %v5476
        %v5567 = vpop.f32.mrb[0].mxu0
        %v5568 = vadd.f32 0.0, %v5567
        %v5569 = vpop.f32.mrb[0].mxu0
        %v5570 = vpop.f32.mrb[0].mxu0
        %v5571 = vadd.f32 0.0, %v5570
        %v5572 = vpop.f32.mrb[0].mxu0
        %5573 = vmatprep.mubr.bf16.mxu0 0
        %5574 = vmatmul.mubr.bf16.gmra.mrb[0].mxu0 %v5479
        %v5575 = vpop.f32.mrb[0].mxu0
        %v5576 = vadd.f32 0.0, %v5575
        %v5577 = vpop.f32.mrb[0].mxu0
        %v5578 = vpop.f32.mrb[0].mxu0
        %v5579 = vadd.f32 0.0, %v5578
        %v5580 = vpop.f32.mrb[0].mxu0
        %5581 = vmatprep.mubr.bf16.mxu0 0
        %5582 = vmatmul.mubr.bf16.gmra.mrb[0].mxu0 %v5482
        %v5583 = vpop.f32.mrb[0].mxu0
        %v5584 = vadd.f32 0.0, %v5583
        %v5585 = vpop.f32.mrb[0].mxu0
        %v5586 = vpop.f32.mrb[0].mxu0
        %v5587 = vadd.f32 0.0, %v5586
        %v5588 = vpop.f32.mrb[0].mxu0
        %5589 = vmatprep.mubr.bf16.mxu0 0
        %5590 = vmatmul.mubr.bf16.gmra.mrb[0].mxu0 %v5485
        %v5591 = vpop.f32.mrb[0].mxu0
        %v5592 = vadd.f32 0.0, %v5591
        %v5593 = vpop.f32.mrb[0].mxu0
        %v5594 = vpop.f32.mrb[0].mxu0
        %v5595 = vadd.f32 0.0, %v5594
        %v5596 = vpop.f32.mrb[0].mxu0
        %5597 = vmatprep.mubr.bf16.mxu0 0
        %5598 = vmatmul.mubr.bf16.gmra.mrb[0].mxu0 %v5488
        %v5599 = vpop.f32.mrb[0].mxu0
        %v5600 = vadd.f32 0.0, %v5599
        %v5601 = vpop.f32.mrb[0].mxu0
        %v5602 = vpop.f32.mrb[0].mxu0
        %v5603 = vadd.f32 0.0, %v5602
        %v5604 = vpop.f32.mrb[0].mxu0
        %5605 = vmatprep.mubr.bf16.mxu0 0
        %5606 = vmatmul.mubr.bf16.gmra.mrb[0].mxu0 %v5491
        %v5607 = vpop.f32.mrb[0].mxu0
        %v5608 = vadd.f32 0.0, %v5607
        %v5609 = vpop.f32.mrb[0].mxu0
        %v5610 = vpop.f32.mrb[0].mxu0
        %v5611 = vadd.f32 0.0, %v5610
        %v5612 = vpop.f32.mrb[0].mxu0
        %5613 = vdwg.mxu0
        %v5614 = vsel %vm3002, %v5552, -inf
        %v5615 = vsel %vm3003, %v5555, -inf
        %v5616 = vsel %vm3004, %v5560, -inf
        %v5617 = vsel %vm3005, %v5563, -inf
        %v5618 = vsel %vm3006, %v5568, -inf
        %v5619 = vsel %vm3007, %v5571, -inf
        %v5620 = vsel %vm3008, %v5576, -inf
        %v5621 = vsel %vm3009, %v5579, -inf
        %v5622 = vsel %vm3010, %v5584, -inf
        %v5623 = vsel %vm3011, %v5587, -inf
        %v5624 = vsel %vm3012, %v5592, -inf
        %v5625 = vsel %vm3013, %v5595, -inf
        %v5626 = vsel %vm3014, %v5600, -inf
        %v5627 = vsel %vm3015, %v5603, -inf
        %v5628 = vsel %vm3016, %v5608, -inf
        %v5629 = vsel %vm3017, %v5611, -inf
        %5630 = vmax.xlane.f32.xlu0 %v5614
        %v5631 = vpop.xlane.xlu0 %5630
        %5632 = vmax.xlane.f32.xlu0 %v5615
        %v5633 = vpop.xlane.xlu0 %5632
        %5634 = vmax.xlane.f32.xlu0 %v5616
        %v5635 = vpop.xlane.xlu0 %5634
        %5636 = vmax.xlane.f32.xlu0 %v5617
        %v5637 = vpop.xlane.xlu0 %5636
        %5638 = vmax.xlane.f32.xlu0 %v5618
        %v5639 = vpop.xlane.xlu0 %5638
        %5640 = vmax.xlane.f32.xlu0 %v5619
        %v5641 = vpop.xlane.xlu0 %5640
        %5642 = vmax.xlane.f32.xlu0 %v5620
        %v5643 = vpop.xlane.xlu0 %5642
        %5644 = vmax.xlane.f32.xlu0 %v5621
        %v5645 = vpop.xlane.xlu0 %5644
        %5646 = vmax.xlane.f32.xlu0 %v5622
        %v5647 = vpop.xlane.xlu0 %5646
        %5648 = vmax.xlane.f32.xlu0 %v5623
        %v5649 = vpop.xlane.xlu0 %5648
        %5650 = vmax.xlane.f32.xlu0 %v5624
        %v5651 = vpop.xlane.xlu0 %5650
        %5652 = vmax.xlane.f32.xlu0 %v5625
        %v5653 = vpop.xlane.xlu0 %5652
        %5654 = vmax.xlane.f32.xlu0 %v5626
        %v5655 = vpop.xlane.xlu0 %5654
        %5656 = vmax.xlane.f32.xlu0 %v5627
        %v5657 = vpop.xlane.xlu0 %5656
        %5658 = vmax.xlane.f32.xlu0 %v5628
        %v5659 = vpop.xlane.xlu0 %5658
        %5660 = vmax.xlane.f32.xlu0 %v5629
        %v5661 = vpop.xlane.xlu0 %5660
        %v5662 = vsub.f32 %v5614, %v5631
        %v5663 = vsub.f32 %v5615, %v5633
        %v5664 = vsub.f32 %v5616, %v5635
        %v5665 = vsub.f32 %v5617, %v5637
        %v5666 = vsub.f32 %v5618, %v5639
        %v5667 = vsub.f32 %v5619, %v5641
        %v5668 = vsub.f32 %v5620, %v5643
        %v5669 = vsub.f32 %v5621, %v5645
        %v5670 = vsub.f32 %v5622, %v5647
        %v5671 = vsub.f32 %v5623, %v5649
        %v5672 = vsub.f32 %v5624, %v5651
        %v5673 = vsub.f32 %v5625, %v5653
        %v5674 = vsub.f32 %v5626, %v5655
        %v5675 = vsub.f32 %v5627, %v5657
        %v5676 = vsub.f32 %v5628, %v5659
        %v5677 = vsub.f32 %v5629, %v5661
        %v5678 = vmul.f32 %v5662, 1.442695
        %v5679 = vpow.pop %v5678
        %v5680 = vmul.f32 %v5663, 1.442695
        %v5681 = vpow.pop %v5680
        %v5682 = vmul.f32 %v5664, 1.442695
        %v5683 = vpow.pop %v5682
        %v5684 = vmul.f32 %v5665, 1.442695
        %v5685 = vpow.pop %v5684
        %v5686 = vmul.f32 %v5666, 1.442695
        %v5687 = vpow.pop %v5686
        %v5688 = vmul.f32 %v5667, 1.442695
        %v5689 = vpow.pop %v5688
        %v5690 = vmul.f32 %v5668, 1.442695
        %v5691 = vpow.pop %v5690
        %v5692 = vmul.f32 %v5669, 1.442695
        %v5693 = vpow.pop %v5692
        %v5694 = vmul.f32 %v5670, 1.442695
        %v5695 = vpow.pop %v5694
        %v5696 = vmul.f32 %v5671, 1.442695
        %v5697 = vpow.pop %v5696
        %v5698 = vmul.f32 %v5672, 1.442695
        %v5699 = vpow.pop %v5698
        %v5700 = vmul.f32 %v5673, 1.442695
        %v5701 = vpow.pop %v5700
        %v5702 = vmul.f32 %v5674, 1.442695
        %v5703 = vpow.pop %v5702
        %v5704 = vmul.f32 %v5675, 1.442695
        %v5705 = vpow.pop %v5704
        %v5706 = vmul.f32 %v5676, 1.442695
        %v5707 = vpow.pop %v5706
        %v5708 = vmul.f32 %v5677, 1.442695
        %v5709 = vpow.pop %v5708
        %5710 = vadd.xlane.f32.xlu0 %v5679
        %v5711 = vpop.xlane.xlu0 %5710
        %5712 = vadd.xlane.f32.xlu0 %v5681
        %v5713 = vpop.xlane.xlu0 %5712
        %5714 = vadd.xlane.f32.xlu0 %v5683
        %v5715 = vpop.xlane.xlu0 %5714
        %5716 = vadd.xlane.f32.xlu0 %v5685
        %v5717 = vpop.xlane.xlu0 %5716
        %5718 = vadd.xlane.f32.xlu0 %v5687
        %v5719 = vpop.xlane.xlu0 %5718
        %5720 = vadd.xlane.f32.xlu0 %v5689
        %v5721 = vpop.xlane.xlu0 %5720
        %5722 = vadd.xlane.f32.xlu0 %v5691
        %v5723 = vpop.xlane.xlu0 %5722
        %5724 = vadd.xlane.f32.xlu0 %v5693
        %v5725 = vpop.xlane.xlu0 %5724
        %5726 = vadd.xlane.f32.xlu0 %v5695
        %v5727 = vpop.xlane.xlu0 %5726
        %5728 = vadd.xlane.f32.xlu0 %v5697
        %v5729 = vpop.xlane.xlu0 %5728
        %5730 = vadd.xlane.f32.xlu0 %v5699
        %v5731 = vpop.xlane.xlu0 %5730
        %5732 = vadd.xlane.f32.xlu0 %v5701
        %v5733 = vpop.xlane.xlu0 %5732
        %5734 = vadd.xlane.f32.xlu0 %v5703
        %v5735 = vpop.xlane.xlu0 %5734
        %5736 = vadd.xlane.f32.xlu0 %v5705
        %v5737 = vpop.xlane.xlu0 %5736
        %5738 = vadd.xlane.f32.xlu0 %v5707
        %v5739 = vpop.xlane.xlu0 %5738
        %5740 = vadd.xlane.f32.xlu0 %v5709
        %v5741 = vpop.xlane.xlu0 %5740
        %v5742 = vrcp.pop %v5711
        %v5743 = vrcp.pop %v5713
        %v5744 = vrcp.pop %v5715
        %v5745 = vrcp.pop %v5717
        %v5746 = vrcp.pop %v5719
        %v5747 = vrcp.pop %v5721
        %v5748 = vrcp.pop %v5723
        %v5749 = vrcp.pop %v5725
        %v5750 = vrcp.pop %v5727
        %v5751 = vrcp.pop %v5729
        %v5752 = vrcp.pop %v5731
        %v5753 = vrcp.pop %v5733
        %v5754 = vrcp.pop %v5735
        %v5755 = vrcp.pop %v5737
        %v5756 = vrcp.pop %v5739
        %v5757 = vrcp.pop %v5741
        %v5758 = vmul.f32 %v5679, %v5742
        %v5759 = vmul.f32 %v5681, %v5743
        %v5760 = vmul.f32 %v5683, %v5744
        %v5761 = vmul.f32 %v5685, %v5745
        %v5762 = vmul.f32 %v5687, %v5746
        %v5763 = vmul.f32 %v5689, %v5747
        %v5764 = vmul.f32 %v5691, %v5748
        %v5765 = vmul.f32 %v5693, %v5749
        %v5766 = vmul.f32 %v5695, %v5750
        %v5767 = vmul.f32 %v5697, %v5751
        %v5768 = vmul.f32 %v5699, %v5752
        %v5769 = vmul.f32 %v5701, %v5753
        %v5770 = vmul.f32 %v5703, %v5754
        %v5771 = vmul.f32 %v5705, %v5755
        %v5772 = vmul.f32 %v5707, %v5756
        %v5773 = vmul.f32 %v5709, %v5757
        %v5774 = vpack.c.bf16 %v5759, %v5758
        %v5775 = vpack.c.bf16 %v5761, %v5760
        %v5776 = vpack.c.bf16 %v5763, %v5762
        %v5777 = vpack.c.bf16 %v5765, %v5764
        %v5778 = vpack.c.bf16 %v5767, %v5766
        %v5779 = vpack.c.bf16 %v5769, %v5768
        %v5780 = vpack.c.bf16 %v5771, %v5770
        %v5781 = vpack.c.bf16 %v5773, %v5772
        %5790 = vrot.lane.b32.xlu0 %v2822, 64
        %v5791 = vpop.permute.xlu0 %5790
        %5792 = vrot.lane.b32.xlu0 %v2831, 64
        %v5793 = vpop.permute.xlu0 %5792
        %5794 = vrot.lane.b32.xlu0 %v2840, 64
        %v5795 = vpop.permute.xlu0 %5794
        %5796 = vrot.lane.b32.xlu0 %v2849, 64
        %v5797 = vpop.permute.xlu0 %5796
        %5798 = vrot.lane.b32.xlu0 %v2858, 64
        %v5799 = vpop.permute.xlu0 %5798
        %5800 = vrot.lane.b32.xlu0 %v2867, 64
        %v5801 = vpop.permute.xlu0 %5800
        %5802 = vrot.lane.b32.xlu0 %v2876, 64
        %v5803 = vpop.permute.xlu0 %5802
        %5804 = vrot.lane.b32.xlu0 %v2885, 64
        %v5805 = vpop.permute.xlu0 %5804
        %5814 = vmatprep.subr.bf16.mxu0 0
        %5815 = vmatpush1.bf16.msra.mxu0 %v5791
        %5816 = vmatprep.subr.bf16.mxu0 0
        %5817 = vmatpush1.bf16.msra.mxu0 %v5793
        %5818 = vmatprep.subr.bf16.mxu0 0
        %5819 = vmatpush1.bf16.msra.mxu0 %v5795
        %5820 = vmatprep.subr.bf16.mxu0 0
        %5821 = vmatpush1.bf16.msra.mxu0 %v5797
        %5822 = vmatprep.subr.bf16.mxu0 0
        %5823 = vmatpush1.bf16.msra.mxu0 %v5799
        %5824 = vmatprep.subr.bf16.mxu0 0
        %5825 = vmatpush1.bf16.msra.mxu0 %v5801
        %5826 = vmatprep.subr.bf16.mxu0 0
        %5827 = vmatpush1.bf16.msra.mxu0 %v5803
        %5828 = vmatprep.subr.bf16.mxu0 0
        %5829 = vmatpush1.bf16.msra.mxu0 %v5805
        %5830 = vmatprep.subr.bf16.mxu0 0
        %5831 = vmatpush1.bf16.msra.mxu0 0
        %5832 = vmatprep.subr.bf16.mxu0 0
        %5833 = vmatpush1.bf16.msra.mxu0 0
        %5834 = vmatprep.subr.bf16.mxu0 0
        %5835 = vmatpush1.bf16.msra.mxu0 0
        %5836 = vmatprep.subr.bf16.mxu0 0
        %5837 = vmatpush1.bf16.msra.mxu0 0
        %5838 = vmatprep.subr.bf16.mxu0 0
        %5839 = vmatpush1.bf16.msra.mxu0 0
        %5840 = vmatprep.subr.bf16.mxu0 0
        %5841 = vmatpush1.bf16.msra.mxu0 0
        %5842 = vmatprep.subr.bf16.mxu0 0
        %5843 = vmatpush1.bf16.msra.mxu0 0
        %5844 = vmatprep.subr.bf16.mxu0 0
        %5845 = vmatpush1.bf16.msra.mxu0 0
        %5846 = vmatprep.mubr.bf16.mxu0 0
        %5847 = vmatmul.mubr.bf16.gmra.mrb[0].mxu0 %v5774
        %v5848 = vpop.f32.mrb[0].mxu0
        %v5849 = vadd.f32 0.0, %v5848
        %v5850 = vpop.f32.mrb[0].mxu0
        %v5851 = vpop.f32.mrb[0].mxu0
        %v5852 = vadd.f32 0.0, %v5851
        %v5853 = vpop.f32.mrb[0].mxu0
        %5854 = vmatprep.mubr.bf16.mxu0 0
        %5855 = vmatmul.mubr.bf16.gmra.mrb[0].mxu0 %v5775
        %v5856 = vpop.f32.mrb[0].mxu0
        %v5857 = vadd.f32 0.0, %v5856
        %v5858 = vpop.f32.mrb[0].mxu0
        %v5859 = vpop.f32.mrb[0].mxu0
        %v5860 = vadd.f32 0.0, %v5859
        %v5861 = vpop.f32.mrb[0].mxu0
        %5862 = vmatprep.mubr.bf16.mxu0 0
        %5863 = vmatmul.mubr.bf16.gmra.mrb[0].mxu0 %v5776
        %v5864 = vpop.f32.mrb[0].mxu0
        %v5865 = vadd.f32 0.0, %v5864
        %v5866 = vpop.f32.mrb[0].mxu0
        %v5867 = vpop.f32.mrb[0].mxu0
        %v5868 = vadd.f32 0.0, %v5867
        %v5869 = vpop.f32.mrb[0].mxu0
        %5870 = vmatprep.mubr.bf16.mxu0 0
        %5871 = vmatmul.mubr.bf16.gmra.mrb[0].mxu0 %v5777
        %v5872 = vpop.f32.mrb[0].mxu0
        %v5873 = vadd.f32 0.0, %v5872
        %v5874 = vpop.f32.mrb[0].mxu0
        %v5875 = vpop.f32.mrb[0].mxu0
        %v5876 = vadd.f32 0.0, %v5875
        %v5877 = vpop.f32.mrb[0].mxu0
        %5878 = vmatprep.mubr.bf16.mxu0 0
        %5879 = vmatmul.mubr.bf16.gmra.mrb[0].mxu0 %v5778
        %v5880 = vpop.f32.mrb[0].mxu0
        %v5881 = vadd.f32 0.0, %v5880
        %v5882 = vpop.f32.mrb[0].mxu0
        %v5883 = vpop.f32.mrb[0].mxu0
        %v5884 = vadd.f32 0.0, %v5883
        %v5885 = vpop.f32.mrb[0].mxu0
        %5886 = vmatprep.mubr.bf16.mxu0 0
        %5887 = vmatmul.mubr.bf16.gmra.mrb[0].mxu0 %v5779
        %v5888 = vpop.f32.mrb[0].mxu0
        %v5889 = vadd.f32 0.0, %v5888
        %v5890 = vpop.f32.mrb[0].mxu0
        %v5891 = vpop.f32.mrb[0].mxu0
        %v5892 = vadd.f32 0.0, %v5891
        %v5893 = vpop.f32.mrb[0].mxu0
        %5894 = vmatprep.mubr.bf16.mxu0 0
        %5895 = vmatmul.mubr.bf16.gmra.mrb[0].mxu0 %v5780
        %v5896 = vpop.f32.mrb[0].mxu0
        %v5897 = vadd.f32 0.0, %v5896
        %v5898 = vpop.f32.mrb[0].mxu0
        %v5899 = vpop.f32.mrb[0].mxu0
        %v5900 = vadd.f32 0.0, %v5899
        %v5901 = vpop.f32.mrb[0].mxu0
        %5902 = vmatprep.mubr.bf16.mxu0 0
        %5903 = vmatmul.mubr.bf16.gmra.mrb[0].mxu0 %v5781
        %v5904 = vpop.f32.mrb[0].mxu0
        %v5905 = vadd.f32 0.0, %v5904
        %v5906 = vpop.f32.mrb[0].mxu0
        %v5907 = vpop.f32.mrb[0].mxu0
        %v5908 = vadd.f32 0.0, %v5907
        %v5909 = vpop.f32.mrb[0].mxu0
        %5910 = vdwg.mxu0
        %5927 = vrot.lane.b32.xlu0 %v5849, 64
        %v5928 = vpop.permute.xlu0 %5927
        %5929 = vrot.lane.b32.xlu0 %v5852, 64
        %v5930 = vpop.permute.xlu0 %5929
        %5931 = vrot.lane.b32.xlu0 %v5857, 64
        %v5932 = vpop.permute.xlu0 %5931
        %5933 = vrot.lane.b32.xlu0 %v5860, 64
        %v5934 = vpop.permute.xlu0 %5933
        %5935 = vrot.lane.b32.xlu0 %v5865, 64
        %v5936 = vpop.permute.xlu0 %5935
        %5937 = vrot.lane.b32.xlu0 %v5868, 64
        %v5938 = vpop.permute.xlu0 %5937
        %5939 = vrot.lane.b32.xlu0 %v5873, 64
        %v5940 = vpop.permute.xlu0 %5939
        %5941 = vrot.lane.b32.xlu0 %v5876, 64
        %v5942 = vpop.permute.xlu0 %5941
        %5943 = vrot.lane.b32.xlu0 %v5881, 64
        %v5944 = vpop.permute.xlu0 %5943
        %5945 = vrot.lane.b32.xlu0 %v5884, 64
        %v5946 = vpop.permute.xlu0 %5945
        %5947 = vrot.lane.b32.xlu0 %v5889, 64
        %v5948 = vpop.permute.xlu0 %5947
        %5949 = vrot.lane.b32.xlu0 %v5892, 64
        %v5950 = vpop.permute.xlu0 %5949
        %5951 = vrot.lane.b32.xlu0 %v5897, 64
        %v5952 = vpop.permute.xlu0 %5951
        %5953 = vrot.lane.b32.xlu0 %v5900, 64
        %v5954 = vpop.permute.xlu0 %5953
        %5955 = vrot.lane.b32.xlu0 %v5905, 64
        %v5956 = vpop.permute.xlu0 %5955
        %5957 = vrot.lane.b32.xlu0 %v5908, 64
        %v5958 = vpop.permute.xlu0 %5957
        %v5975 = vsel %vm3018, %v5359, %v5928
        %v5976 = vsel %vm3018, %v5362, %v5930
        %v5977 = vsel %vm3018, %v5367, %v5932
        %v5978 = vsel %vm3018, %v5370, %v5934
        %v5979 = vsel %vm3018, %v5375, %v5936
        %v5980 = vsel %vm3018, %v5378, %v5938
        %v5981 = vsel %vm3018, %v5383, %v5940
        %v5982 = vsel %vm3018, %v5386, %v5942
        %v5983 = vsel %vm3018, %v5391, %v5944
        %v5984 = vsel %vm3018, %v5394, %v5946
        %v5985 = vsel %vm3018, %v5399, %v5948
        %v5986 = vsel %vm3018, %v5402, %v5950
        %v5987 = vsel %vm3018, %v5407, %v5952
        %v5988 = vsel %vm3018, %v5410, %v5954
        %v5989 = vsel %vm3018, %v5415, %v5956
        %v5990 = vsel %vm3018, %v5418, %v5958
        %v5991 = vpack.c.bf16 %v5976, %v5975
        %v5992 = vpack.c.bf16 %v5978, %v5977
        %v5993 = vpack.c.bf16 %v5980, %v5979
        %v5994 = vpack.c.bf16 %v5982, %v5981
        %v5995 = vpack.c.bf16 %v5984, %v5983
        %v5996 = vpack.c.bf16 %v5986, %v5985
        %v5997 = vpack.c.bf16 %v5988, %v5987
        %v5998 = vpack.c.bf16 %v5990, %v5989
        %5999 = vst [vmem:[#allocation2 + $0x10] sm:$0xff] %v5991
        %6000 = vst [vmem:[#allocation2 + $0x28] sm:$0xff] %v5992
        %6001 = vst [vmem:[#allocation2 + $0x40] sm:$0xff] %v5993
        %6002 = vst [vmem:[#allocation2 + $0x58] sm:$0xff] %v5994
        %6003 = vst [vmem:[#allocation2 + $0x70] sm:$0xff] %v5995
        %6004 = vst [vmem:[#allocation2 + $0x88] sm:$0xff] %v5996
        %6005 = vst [vmem:[#allocation2 + $0xa0] sm:$0xff] %v5997
        %6006 = vst [vmem:[#allocation2 + $0xb8] sm:$0xff] %v5998
        %v6007 = vld [vmem:[#allocation2] sm:$0xff]
        %v6008 = vld [vmem:[#allocation2 + $0x8] sm:$0xff]
        %v6009 = vld [vmem:[#allocation2 + $0x10] sm:$0xff]
        %v6010 = vld [vmem:[#allocation2 + $0x18] sm:$0xff]
        %v6011 = vld [vmem:[#allocation2 + $0x20] sm:$0xff]
        %v6012 = vld [vmem:[#allocation2 + $0x28] sm:$0xff]
        %v6013 = vld [vmem:[#allocation2 + $0x30] sm:$0xff]
        %v6014 = vld [vmem:[#allocation2 + $0x38] sm:$0xff]
        %v6015 = vld [vmem:[#allocation2 + $0x40] sm:$0xff]
        %v6016 = vld [vmem:[#allocation2 + $0x48] sm:$0xff]
        %v6017 = vld [vmem:[#allocation2 + $0x50] sm:$0xff]
        %v6018 = vld [vmem:[#allocation2 + $0x58] sm:$0xff]
        %v6019 = vld [vmem:[#allocation2 + $0x60] sm:$0xff]
        %v6020 = vld [vmem:[#allocation2 + $0x68] sm:$0xff]
        %v6021 = vld [vmem:[#allocation2 + $0x70] sm:$0xff]
        %v6022 = vld [vmem:[#allocation2 + $0x78] sm:$0xff]
        %v6023 = vld [vmem:[#allocation2 + $0x80] sm:$0xff]
        %v6024 = vld [vmem:[#allocation2 + $0x88] sm:$0xff]
        %v6025 = vld [vmem:[#allocation2 + $0x90] sm:$0xff]
        %v6026 = vld [vmem:[#allocation2 + $0x98] sm:$0xff]
        %v6027 = vld [vmem:[#allocation2 + $0xa0] sm:$0xff]
        %v6028 = vld [vmem:[#allocation2 + $0xa8] sm:$0xff]
        %v6029 = vld [vmem:[#allocation2 + $0xb0] sm:$0xff]
        %v6030 = vld [vmem:[#allocation2 + $0xb8] sm:$0xff]
        %v6032 = vlaneseq
        %v6033 = vshrl.u32 %v6032, 7
        %v6034 = vsub.s32 0, %v6033
        %v6035 = vrot.slane %v2982, %v6034
        %v6036 = vlaneseq
        %v6037 = vshrl.u32 %v6036, 7
        %v6038 = vsub.s32 1, %v6037
        %v6039 = vrot.slane %v2982, %v6038
        %v6040 = vlaneseq
        %v6041 = vshrl.u32 %v6040, 7
        %v6042 = vsub.s32 2, %v6041
        %v6043 = vrot.slane %v2982, %v6042
        %v6143 = vunpack.c.l.b16 %v2886
        %v6144 = vunpack.c.h.b16 %v2886
        %v6145 = vunpack.c.l.b16 %v2887
        %v6146 = vunpack.c.l.b16 %v2888
        %v6147 = vunpack.c.h.b16 %v2888
        %v6148 = vunpack.c.l.b16 %v2889
        %v6149 = vunpack.c.l.b16 %v2890
        %v6150 = vunpack.c.h.b16 %v2890
        %v6151 = vunpack.c.l.b16 %v2891
        %v6152 = vunpack.c.l.b16 %v2892
        %v6153 = vunpack.c.h.b16 %v2892
        %v6154 = vunpack.c.l.b16 %v2893
        %v6155 = vunpack.c.l.b16 %v2894
        %v6156 = vunpack.c.h.b16 %v2894
        %v6157 = vunpack.c.l.b16 %v2895
        %v6158 = vunpack.c.l.b16 %v2896
        %v6159 = vunpack.c.h.b16 %v2896
        %v6160 = vunpack.c.l.b16 %v2897
        %v6161 = vunpack.c.l.b16 %v2898
        %v6162 = vunpack.c.h.b16 %v2898
        %v6163 = vunpack.c.l.b16 %v2899
        %v6164 = vunpack.c.l.b16 %v2900
        %v6165 = vunpack.c.h.b16 %v2900
        %v6166 = vunpack.c.l.b16 %v2901
        %v6167 = vunpack.c.l.b16 %v2902
        %v6168 = vunpack.c.h.b16 %v2902
        %v6169 = vunpack.c.l.b16 %v2903
        %v6170 = vunpack.c.l.b16 %v2904
        %v6171 = vunpack.c.h.b16 %v2904
        %v6172 = vunpack.c.l.b16 %v2905
        %v6173 = vunpack.c.l.b16 %v2906
        %v6174 = vunpack.c.h.b16 %v2906
        %v6175 = vunpack.c.l.b16 %v2907
        %v6176 = vunpack.c.l.b16 %v2908
        %v6177 = vunpack.c.h.b16 %v2908
        %v6178 = vunpack.c.l.b16 %v2909
        %v6179 = vunpack.c.l.b16 %v2910
        %v6180 = vunpack.c.h.b16 %v2910
        %v6181 = vunpack.c.l.b16 %v2911
        %v6182 = vunpack.c.l.b16 %v2912
        %v6183 = vunpack.c.h.b16 %v2912
        %v6184 = vunpack.c.l.b16 %v2913
        %v6185 = vunpack.c.l.b16 %v2914
        %v6186 = vunpack.c.h.b16 %v2914
        %v6187 = vunpack.c.l.b16 %v2915
        %v6188 = vunpack.c.l.b16 %v2916
        %v6189 = vunpack.c.h.b16 %v2916
        %v6190 = vunpack.c.l.b16 %v2917
        %v6191 = vunpack.c.l.b16 %v2918
        %v6192 = vunpack.c.h.b16 %v2918
        %v6193 = vunpack.c.l.b16 %v2919
        %v6194 = vunpack.c.l.b16 %v2920
        %v6195 = vunpack.c.h.b16 %v2920
        %v6196 = vunpack.c.l.b16 %v2921
        %v6197 = vunpack.c.l.b16 %v2922
        %v6198 = vunpack.c.h.b16 %v2922
        %v6199 = vunpack.c.l.b16 %v2923
        %v6200 = vunpack.c.l.b16 %v2924
        %v6201 = vunpack.c.h.b16 %v2924
        %v6202 = vunpack.c.l.b16 %v2925
        %v6203 = vunpack.c.l.b16 %v2926
        %v6204 = vunpack.c.h.b16 %v2926
        %v6205 = vunpack.c.l.b16 %v2927
        %v6206 = vunpack.c.l.b16 %v2928
        %v6207 = vunpack.c.h.b16 %v2928
        %v6208 = vunpack.c.l.b16 %v2929
        %v6209 = vunpack.c.l.b16 %v2930
        %v6210 = vunpack.c.h.b16 %v2930
        %v6211 = vunpack.c.l.b16 %v2931
        %v6212 = vunpack.c.l.b16 %v2932
        %v6213 = vunpack.c.h.b16 %v2932
        %v6214 = vunpack.c.l.b16 %v2933
        %v6215 = vunpack.c.l.b16 %v2934
        %v6216 = vunpack.c.h.b16 %v2934
        %v6217 = vunpack.c.l.b16 %v2935
        %v6218 = vunpack.c.l.b16 %v2936
        %v6219 = vunpack.c.h.b16 %v2936
        %v6220 = vunpack.c.l.b16 %v2937
        %v6221 = vunpack.c.l.b16 %v2938
        %v6222 = vunpack.c.h.b16 %v2938
        %v6223 = vunpack.c.l.b16 %v2939
        %v6224 = vunpack.c.l.b16 %v2940
        %v6225 = vunpack.c.h.b16 %v2940
        %v6226 = vunpack.c.l.b16 %v2941
        %v6227 = vunpack.c.l.b16 %v2942
        %v6228 = vunpack.c.h.b16 %v2942
        %v6229 = vunpack.c.l.b16 %v2943
        %v6230 = vunpack.c.l.b16 %v2944
        %v6231 = vunpack.c.h.b16 %v2944
        %v6232 = vunpack.c.l.b16 %v2945
        %v6233 = vunpack.c.l.b16 %v2946
        %v6234 = vunpack.c.h.b16 %v2946
        %v6235 = vunpack.c.l.b16 %v2947
        %v6236 = vunpack.c.l.b16 %v2948
        %v6237 = vunpack.c.h.b16 %v2948
        %v6238 = vunpack.c.l.b16 %v2949
        %v6239 = vunpack.c.l.b16 %v2950
        %v6240 = vunpack.c.h.b16 %v2950
        %v6241 = vunpack.c.l.b16 %v2951
        %v6242 = vunpack.c.l.b16 %v2952
        %v6243 = vunpack.c.h.b16 %v2952
        %v6244 = vunpack.c.l.b16 %v2953
        %v6245 = vunpack.c.l.b16 %v2954
        %v6246 = vunpack.c.h.b16 %v2954
        %v6247 = vunpack.c.l.b16 %v2955
        %v6248 = vunpack.c.l.b16 %v2956
        %v6249 = vunpack.c.h.b16 %v2956
        %v6250 = vunpack.c.l.b16 %v2957
        %v6251 = vunpack.c.l.b16 %v2958
        %v6252 = vunpack.c.h.b16 %v2958
        %v6253 = vunpack.c.l.b16 %v2959
        %v6254 = vunpack.c.l.b16 %v2960
        %v6255 = vunpack.c.h.b16 %v2960
        %v6256 = vunpack.c.l.b16 %v2961
        %v6257 = vunpack.c.l.b16 %v2962
        %v6258 = vunpack.c.h.b16 %v2962
        %v6259 = vunpack.c.l.b16 %v2963
        %v6260 = vunpack.c.l.b16 %v2964
        %v6261 = vunpack.c.h.b16 %v2964
        %v6262 = vunpack.c.l.b16 %v2965
        %v6263 = vunpack.c.l.b16 %v2966
        %v6264 = vunpack.c.h.b16 %v2966
        %v6265 = vunpack.c.l.b16 %v2967
        %v6266 = vunpack.c.l.b16 %v2968
        %v6267 = vunpack.c.h.b16 %v2968
        %v6268 = vunpack.c.l.b16 %v2969
        %v6269 = vunpack.c.l.b16 %v2970
        %v6270 = vunpack.c.h.b16 %v2970
        %v6271 = vunpack.c.l.b16 %v2971
        %v6272 = vunpack.c.l.b16 %v2972
        %v6273 = vunpack.c.h.b16 %v2972
        %v6274 = vunpack.c.l.b16 %v2973
        %v6275 = vunpack.c.l.b16 %v2974
        %v6276 = vunpack.c.h.b16 %v2974
        %v6277 = vunpack.c.l.b16 %v2975
        %v6278 = vunpack.c.l.b16 %v2976
        %v6279 = vunpack.c.h.b16 %v2976
        %v6280 = vunpack.c.l.b16 %v2977
        %v6281 = vunpack.c.l.b16 %v2978
        %v6282 = vunpack.c.h.b16 %v2978
        %v6283 = vunpack.c.l.b16 %v2979
        %v6284 = vunpack.c.l.b16 %v2980
        %v6285 = vunpack.c.h.b16 %v2980
        %v6286 = vunpack.c.l.b16 %v2981
        %v6287 = vpack.c.b16 %v6146, %v6143
        %v6288 = vpack.c.b16 %v6147, %v6144
        %v6289 = vpack.c.b16 %v6148, %v6145
        %v6290 = vpack.c.b16 %v6152, %v6149
        %v6291 = vpack.c.b16 %v6153, %v6150
        %v6292 = vpack.c.b16 %v6154, %v6151
        %v6293 = vpack.c.b16 %v6158, %v6155
        %v6294 = vpack.c.b16 %v6159, %v6156
        %v6295 = vpack.c.b16 %v6160, %v6157
        %v6296 = vpack.c.b16 %v6164, %v6161
        %v6297 = vpack.c.b16 %v6165, %v6162
        %v6298 = vpack.c.b16 %v6166, %v6163
        %v6299 = vpack.c.b16 %v6170, %v6167
        %v6300 = vpack.c.b16 %v6171, %v6168
        %v6301 = vpack.c.b16 %v6172, %v6169
        %v6302 = vpack.c.b16 %v6176, %v6173
        %v6303 = vpack.c.b16 %v6177, %v6174
        %v6304 = vpack.c.b16 %v6178, %v6175
        %v6305 = vpack.c.b16 %v6182, %v6179
        %v6306 = vpack.c.b16 %v6183, %v6180
        %v6307 = vpack.c.b16 %v6184, %v6181
        %v6308 = vpack.c.b16 %v6188, %v6185
        %v6309 = vpack.c.b16 %v6189, %v6186
        %v6310 = vpack.c.b16 %v6190, %v6187
        %v6311 = vpack.c.b16 %v6194, %v6191
        %v6312 = vpack.c.b16 %v6195, %v6192
        %v6313 = vpack.c.b16 %v6196, %v6193
        %v6314 = vpack.c.b16 %v6200, %v6197
        %v6315 = vpack.c.b16 %v6201, %v6198
        %v6316 = vpack.c.b16 %v6202, %v6199
        %v6317 = vpack.c.b16 %v6206, %v6203
        %v6318 = vpack.c.b16 %v6207, %v6204
        %v6319 = vpack.c.b16 %v6208, %v6205
        %v6320 = vpack.c.b16 %v6212, %v6209
        %v6321 = vpack.c.b16 %v6213, %v6210
        %v6322 = vpack.c.b16 %v6214, %v6211
        %v6323 = vpack.c.b16 %v6218, %v6215
        %v6324 = vpack.c.b16 %v6219, %v6216
        %v6325 = vpack.c.b16 %v6220, %v6217
        %v6326 = vpack.c.b16 %v6224, %v6221
        %v6327 = vpack.c.b16 %v6225, %v6222
        %v6328 = vpack.c.b16 %v6226, %v6223
        %v6329 = vpack.c.b16 %v6230, %v6227
        %v6330 = vpack.c.b16 %v6231, %v6228
        %v6331 = vpack.c.b16 %v6232, %v6229
        %v6332 = vpack.c.b16 %v6236, %v6233
        %v6333 = vpack.c.b16 %v6237, %v6234
        %v6334 = vpack.c.b16 %v6238, %v6235
        %v6335 = vpack.c.b16 %v6242, %v6239
        %v6336 = vpack.c.b16 %v6243, %v6240
        %v6337 = vpack.c.b16 %v6244, %v6241
        %v6338 = vpack.c.b16 %v6248, %v6245
        %v6339 = vpack.c.b16 %v6249, %v6246
        %v6340 = vpack.c.b16 %v6250, %v6247
        %v6341 = vpack.c.b16 %v6254, %v6251
        %v6342 = vpack.c.b16 %v6255, %v6252
        %v6343 = vpack.c.b16 %v6256, %v6253
        %v6344 = vpack.c.b16 %v6260, %v6257
        %v6345 = vpack.c.b16 %v6261, %v6258
        %v6346 = vpack.c.b16 %v6262, %v6259
        %v6347 = vpack.c.b16 %v6266, %v6263
        %v6348 = vpack.c.b16 %v6267, %v6264
        %v6349 = vpack.c.b16 %v6268, %v6265
        %v6350 = vpack.c.b16 %v6272, %v6269
        %v6351 = vpack.c.b16 %v6273, %v6270
        %v6352 = vpack.c.b16 %v6274, %v6271
        %v6353 = vpack.c.b16 %v6278, %v6275
        %v6354 = vpack.c.b16 %v6279, %v6276
        %v6355 = vpack.c.b16 %v6280, %v6277
        %v6356 = vpack.c.b16 %v6284, %v6281
        %v6357 = vpack.c.b16 %v6285, %v6282
        %v6358 = vpack.c.b16 %v6286, %v6283
        %6431 = vmatprep.subr.bf16.mxu0 %v6288
        %6432 = vmatpush1.bf16.msra.mxu0 %v6287
        %6433 = vmatprep.subr.bf16.mxu0 %v6291
        %6434 = vmatpush1.bf16.msra.mxu0 %v6290
        %6435 = vmatprep.subr.bf16.mxu0 %v6294
        %6436 = vmatpush1.bf16.msra.mxu0 %v6293
        %6437 = vmatprep.subr.bf16.mxu0 %v6297
        %6438 = vmatpush1.bf16.msra.mxu0 %v6296
        %6439 = vmatprep.subr.bf16.mxu0 %v6300
        %6440 = vmatpush1.bf16.msra.mxu0 %v6299
        %6441 = vmatprep.subr.bf16.mxu0 %v6303
        %6442 = vmatpush1.bf16.msra.mxu0 %v6302
        %6443 = vmatprep.subr.bf16.mxu0 %v6306
        %6444 = vmatpush1.bf16.msra.mxu0 %v6305
        %6445 = vmatprep.subr.bf16.mxu0 %v6309
        %6446 = vmatpush1.bf16.msra.mxu0 %v6308
        %6447 = vmatprep.subr.bf16.mxu0 %v6312
        %6448 = vmatpush1.bf16.msra.mxu0 %v6311
        %6449 = vmatprep.subr.bf16.mxu0 %v6315
        %6450 = vmatpush1.bf16.msra.mxu0 %v6314
        %6451 = vmatprep.subr.bf16.mxu0 %v6318
        %6452 = vmatpush1.bf16.msra.mxu0 %v6317
        %6453 = vmatprep.subr.bf16.mxu0 %v6321
        %6454 = vmatpush1.bf16.msra.mxu0 %v6320
        %6455 = vmatprep.subr.bf16.mxu0 %v6324
        %6456 = vmatpush1.bf16.msra.mxu0 %v6323
        %6457 = vmatprep.subr.bf16.mxu0 %v6327
        %6458 = vmatpush1.bf16.msra.mxu0 %v6326
        %6459 = vmatprep.subr.bf16.mxu0 %v6330
        %6460 = vmatpush1.bf16.msra.mxu0 %v6329
        %6461 = vmatprep.subr.bf16.mxu0 %v6333
        %6462 = vmatpush1.bf16.msra.mxu0 %v6332
        %6463 = vmatprep.mubr.bf16.mxu0 %v6008
        %6464 = vmatmul.mubr.bf16.gmra.mrb[0].mxu0 %v6007
        %v6465 = vpop.f32.mrb[0].mxu0
        %v6466 = vadd.f32 %v6035, %v6465
        %v6467 = vpop.f32.mrb[0].mxu0
        %v6468 = vadd.f32 %v6039, %v6467
        %v6469 = vpop.f32.mrb[0].mxu0
        %v6470 = vadd.f32 %v6035, %v6469
        %v6471 = vpop.f32.mrb[0].mxu0
        %v6472 = vadd.f32 %v6039, %v6471
        %6473 = vmatprep.mubr.bf16.mxu0 %v6011
        %6474 = vmatmul.mubr.bf16.gmra.mrb[0].mxu0 %v6010
        %v6475 = vpop.f32.mrb[0].mxu0
        %v6476 = vadd.f32 %v6035, %v6475
        %v6477 = vpop.f32.mrb[0].mxu0
        %v6478 = vadd.f32 %v6039, %v6477
        %v6479 = vpop.f32.mrb[0].mxu0
        %v6480 = vadd.f32 %v6035, %v6479
        %v6481 = vpop.f32.mrb[0].mxu0
        %v6482 = vadd.f32 %v6039, %v6481
        %6483 = vmatprep.mubr.bf16.mxu0 %v6014
        %6484 = vmatmul.mubr.bf16.gmra.mrb[0].mxu0 %v6013
        %v6485 = vpop.f32.mrb[0].mxu0
        %v6486 = vadd.f32 %v6035, %v6485
        %v6487 = vpop.f32.mrb[0].mxu0
        %v6488 = vadd.f32 %v6039, %v6487
        %v6489 = vpop.f32.mrb[0].mxu0
        %v6490 = vadd.f32 %v6035, %v6489
        %v6491 = vpop.f32.mrb[0].mxu0
        %v6492 = vadd.f32 %v6039, %v6491
        %6493 = vmatprep.mubr.bf16.mxu0 %v6017
        %6494 = vmatmul.mubr.bf16.gmra.mrb[0].mxu0 %v6016
        %v6495 = vpop.f32.mrb[0].mxu0
        %v6496 = vadd.f32 %v6035, %v6495
        %v6497 = vpop.f32.mrb[0].mxu0
        %v6498 = vadd.f32 %v6039, %v6497
        %v6499 = vpop.f32.mrb[0].mxu0
        %v6500 = vadd.f32 %v6035, %v6499
        %v6501 = vpop.f32.mrb[0].mxu0
        %v6502 = vadd.f32 %v6039, %v6501
        %6503 = vmatprep.mubr.bf16.mxu0 %v6020
        %6504 = vmatmul.mubr.bf16.gmra.mrb[0].mxu0 %v6019
        %v6505 = vpop.f32.mrb[0].mxu0
        %v6506 = vadd.f32 %v6035, %v6505
        %v6507 = vpop.f32.mrb[0].mxu0
        %v6508 = vadd.f32 %v6039, %v6507
        %v6509 = vpop.f32.mrb[0].mxu0
        %v6510 = vadd.f32 %v6035, %v6509
        %v6511 = vpop.f32.mrb[0].mxu0
        %v6512 = vadd.f32 %v6039, %v6511
        %6513 = vmatprep.mubr.bf16.mxu0 %v6023
        %6514 = vmatmul.mubr.bf16.gmra.mrb[0].mxu0 %v6022
        %v6515 = vpop.f32.mrb[0].mxu0
        %v6516 = vadd.f32 %v6035, %v6515
        %v6517 = vpop.f32.mrb[0].mxu0
        %v6518 = vadd.f32 %v6039, %v6517
        %v6519 = vpop.f32.mrb[0].mxu0
        %v6520 = vadd.f32 %v6035, %v6519
        %v6521 = vpop.f32.mrb[0].mxu0
        %v6522 = vadd.f32 %v6039, %v6521
        %6523 = vmatprep.mubr.bf16.mxu0 %v6026
        %6524 = vmatmul.mubr.bf16.gmra.mrb[0].mxu0 %v6025
        %v6525 = vpop.f32.mrb[0].mxu0
        %v6526 = vadd.f32 %v6035, %v6525
        %v6527 = vpop.f32.mrb[0].mxu0
        %v6528 = vadd.f32 %v6039, %v6527
        %v6529 = vpop.f32.mrb[0].mxu0
        %v6530 = vadd.f32 %v6035, %v6529
        %v6531 = vpop.f32.mrb[0].mxu0
        %v6532 = vadd.f32 %v6039, %v6531
        %6533 = vmatprep.mubr.bf16.mxu0 %v6029
        %6534 = vmatmul.mubr.bf16.gmra.mrb[0].mxu0 %v6028
        %v6535 = vpop.f32.mrb[0].mxu0
        %v6536 = vadd.f32 %v6035, %v6535
        %v6537 = vpop.f32.mrb[0].mxu0
        %v6538 = vadd.f32 %v6039, %v6537
        %v6539 = vpop.f32.mrb[0].mxu0
        %v6540 = vadd.f32 %v6035, %v6539
        %v6541 = vpop.f32.mrb[0].mxu0
        %v6542 = vadd.f32 %v6039, %v6541
        %6543 = vdwg.mxu0
        %6544 = vmatprep.subr.bf16.mxu0 %v6336
        %6545 = vmatpush1.bf16.msra.mxu0 %v6335
        %6546 = vmatprep.subr.bf16.mxu0 %v6339
        %6547 = vmatpush1.bf16.msra.mxu0 %v6338
        %6548 = vmatprep.subr.bf16.mxu0 %v6342
        %6549 = vmatpush1.bf16.msra.mxu0 %v6341
        %6550 = vmatprep.subr.bf16.mxu0 %v6345
        %6551 = vmatpush1.bf16.msra.mxu0 %v6344
        %6552 = vmatprep.subr.bf16.mxu0 %v6348
        %6553 = vmatpush1.bf16.msra.mxu0 %v6347
        %6554 = vmatprep.subr.bf16.mxu0 %v6351
        %6555 = vmatpush1.bf16.msra.mxu0 %v6350
        %6556 = vmatprep.subr.bf16.mxu0 %v6354
        %6557 = vmatpush1.bf16.msra.mxu0 %v6353
        %6558 = vmatprep.subr.bf16.mxu0 %v6357
        %6559 = vmatpush1.bf16.msra.mxu0 %v6356
        %6560 = vmatprep.subr.bf16.mxu0 0
        %6561 = vmatpush1.bf16.msra.mxu0 0
        %6562 = vmatprep.subr.bf16.mxu0 0
        %6563 = vmatpush1.bf16.msra.mxu0 0
        %6564 = vmatprep.subr.bf16.mxu0 0
        %6565 = vmatpush1.bf16.msra.mxu0 0
        %6566 = vmatprep.subr.bf16.mxu0 0
        %6567 = vmatpush1.bf16.msra.mxu0 0
        %6568 = vmatprep.subr.bf16.mxu0 0
        %6569 = vmatpush1.bf16.msra.mxu0 0
        %6570 = vmatprep.subr.bf16.mxu0 0
        %6571 = vmatpush1.bf16.msra.mxu0 0
        %6572 = vmatprep.subr.bf16.mxu0 0
        %6573 = vmatpush1.bf16.msra.mxu0 0
        %6574 = vmatprep.subr.bf16.mxu0 0
        %6575 = vmatpush1.bf16.msra.mxu0 0
        %6576 = vmatprep.mubr.bf16.mxu0 0
        %6577 = vmatmul.mubr.bf16.gmra.mrb[0].mxu0 %v6009
        %v6578 = vpop.f32.mrb[0].mxu0
        %v6579 = vadd.f32 %v6466, %v6578
        %v6580 = vpop.f32.mrb[0].mxu0
        %v6581 = vadd.f32 %v6468, %v6580
        %v6582 = vpop.f32.mrb[0].mxu0
        %v6583 = vadd.f32 %v6470, %v6582
        %v6584 = vpop.f32.mrb[0].mxu0
        %v6585 = vadd.f32 %v6472, %v6584
        %6586 = vmatprep.mubr.bf16.mxu0 0
        %6587 = vmatmul.mubr.bf16.gmra.mrb[0].mxu0 %v6012
        %v6588 = vpop.f32.mrb[0].mxu0
        %v6589 = vadd.f32 %v6476, %v6588
        %v6590 = vpop.f32.mrb[0].mxu0
        %v6591 = vadd.f32 %v6478, %v6590
        %v6592 = vpop.f32.mrb[0].mxu0
        %v6593 = vadd.f32 %v6480, %v6592
        %v6594 = vpop.f32.mrb[0].mxu0
        %v6595 = vadd.f32 %v6482, %v6594
        %6596 = vmatprep.mubr.bf16.mxu0 0
        %6597 = vmatmul.mubr.bf16.gmra.mrb[0].mxu0 %v6015
        %v6598 = vpop.f32.mrb[0].mxu0
        %v6599 = vadd.f32 %v6486, %v6598
        %v6600 = vpop.f32.mrb[0].mxu0
        %v6601 = vadd.f32 %v6488, %v6600
        %v6602 = vpop.f32.mrb[0].mxu0
        %v6603 = vadd.f32 %v6490, %v6602
        %v6604 = vpop.f32.mrb[0].mxu0
        %v6605 = vadd.f32 %v6492, %v6604
        %6606 = vmatprep.mubr.bf16.mxu0 0
        %6607 = vmatmul.mubr.bf16.gmra.mrb[0].mxu0 %v6018
        %v6608 = vpop.f32.mrb[0].mxu0
        %v6609 = vadd.f32 %v6496, %v6608
        %v6610 = vpop.f32.mrb[0].mxu0
        %v6611 = vadd.f32 %v6498, %v6610
        %v6612 = vpop.f32.mrb[0].mxu0
        %v6613 = vadd.f32 %v6500, %v6612
        %v6614 = vpop.f32.mrb[0].mxu0
        %v6615 = vadd.f32 %v6502, %v6614
        %6616 = vmatprep.mubr.bf16.mxu0 0
        %6617 = vmatmul.mubr.bf16.gmra.mrb[0].mxu0 %v6021
        %v6618 = vpop.f32.mrb[0].mxu0
        %v6619 = vadd.f32 %v6506, %v6618
        %v6620 = vpop.f32.mrb[0].mxu0
        %v6621 = vadd.f32 %v6508, %v6620
        %v6622 = vpop.f32.mrb[0].mxu0
        %v6623 = vadd.f32 %v6510, %v6622
        %v6624 = vpop.f32.mrb[0].mxu0
        %v6625 = vadd.f32 %v6512, %v6624
        %6626 = vmatprep.mubr.bf16.mxu0 0
        %6627 = vmatmul.mubr.bf16.gmra.mrb[0].mxu0 %v6024
        %v6628 = vpop.f32.mrb[0].mxu0
        %v6629 = vadd.f32 %v6516, %v6628
        %v6630 = vpop.f32.mrb[0].mxu0
        %v6631 = vadd.f32 %v6518, %v6630
        %v6632 = vpop.f32.mrb[0].mxu0
        %v6633 = vadd.f32 %v6520, %v6632
        %v6634 = vpop.f32.mrb[0].mxu0
        %v6635 = vadd.f32 %v6522, %v6634
        %6636 = vmatprep.mubr.bf16.mxu0 0
        %6637 = vmatmul.mubr.bf16.gmra.mrb[0].mxu0 %v6027
        %v6638 = vpop.f32.mrb[0].mxu0
        %v6639 = vadd.f32 %v6526, %v6638
        %v6640 = vpop.f32.mrb[0].mxu0
        %v6641 = vadd.f32 %v6528, %v6640
        %v6642 = vpop.f32.mrb[0].mxu0
        %v6643 = vadd.f32 %v6530, %v6642
        %v6644 = vpop.f32.mrb[0].mxu0
        %v6645 = vadd.f32 %v6532, %v6644
        %6646 = vmatprep.mubr.bf16.mxu0 0
        %6647 = vmatmul.mubr.bf16.gmra.mrb[0].mxu0 %v6030
        %v6648 = vpop.f32.mrb[0].mxu0
        %v6649 = vadd.f32 %v6536, %v6648
        %v6650 = vpop.f32.mrb[0].mxu0
        %v6651 = vadd.f32 %v6538, %v6650
        %v6652 = vpop.f32.mrb[0].mxu0
        %v6653 = vadd.f32 %v6540, %v6652
        %v6654 = vpop.f32.mrb[0].mxu0
        %v6655 = vadd.f32 %v6542, %v6654
        %6656 = vdwg.mxu0
        %6657 = vmatprep.subr.bf16.mxu0 0
        %6658 = vmatpush1.bf16.msra.mxu0 %v6289
        %6659 = vmatprep.subr.bf16.mxu0 0
        %6660 = vmatpush1.bf16.msra.mxu0 %v6292
        %6661 = vmatprep.subr.bf16.mxu0 0
        %6662 = vmatpush1.bf16.msra.mxu0 %v6295
        %6663 = vmatprep.subr.bf16.mxu0 0
        %6664 = vmatpush1.bf16.msra.mxu0 %v6298
        %6665 = vmatprep.subr.bf16.mxu0 0
        %6666 = vmatpush1.bf16.msra.mxu0 %v6301
        %6667 = vmatprep.subr.bf16.mxu0 0
        %6668 = vmatpush1.bf16.msra.mxu0 %v6304
        %6669 = vmatprep.subr.bf16.mxu0 0
        %6670 = vmatpush1.bf16.msra.mxu0 %v6307
        %6671 = vmatprep.subr.bf16.mxu0 0
        %6672 = vmatpush1.bf16.msra.mxu0 %v6310
        %6673 = vmatprep.subr.bf16.mxu0 0
        %6674 = vmatpush1.bf16.msra.mxu0 %v6313
        %6675 = vmatprep.subr.bf16.mxu0 0
        %6676 = vmatpush1.bf16.msra.mxu0 %v6316
        %6677 = vmatprep.subr.bf16.mxu0 0
        %6678 = vmatpush1.bf16.msra.mxu0 %v6319
        %6679 = vmatprep.subr.bf16.mxu0 0
        %6680 = vmatpush1.bf16.msra.mxu0 %v6322
        %6681 = vmatprep.subr.bf16.mxu0 0
        %6682 = vmatpush1.bf16.msra.mxu0 %v6325
        %6683 = vmatprep.subr.bf16.mxu0 0
        %6684 = vmatpush1.bf16.msra.mxu0 %v6328
        %6685 = vmatprep.subr.bf16.mxu0 0
        %6686 = vmatpush1.bf16.msra.mxu0 %v6331
        %6687 = vmatprep.subr.bf16.mxu0 0
        %6688 = vmatpush1.bf16.msra.mxu0 %v6334
        %6689 = vmatprep.mubr.bf16.mxu0 %v6008
        %6690 = vmatmul.mubr.bf16.gmra.mrb[0].mxu0 %v6007
        %v6691 = vpop.f32.mrb[0].mxu0
        %v6692 = vadd.f32 %v6043, %v6691
        %v6693 = vpop.f32.mrb[0].mxu0
        %v6694 = vpop.f32.mrb[0].mxu0
        %v6695 = vadd.f32 %v6043, %v6694
        %v6696 = vpop.f32.mrb[0].mxu0
        %6697 = vmatprep.mubr.bf16.mxu0 %v6011
        %6698 = vmatmul.mubr.bf16.gmra.mrb[0].mxu0 %v6010
        %v6699 = vpop.f32.mrb[0].mxu0
        %v6700 = vadd.f32 %v6043, %v6699
        %v6701 = vpop.f32.mrb[0].mxu0
        %v6702 = vpop.f32.mrb[0].mxu0
        %v6703 = vadd.f32 %v6043, %v6702
        %v6704 = vpop.f32.mrb[0].mxu0
        %6705 = vmatprep.mubr.bf16.mxu0 %v6014
        %6706 = vmatmul.mubr.bf16.gmra.mrb[0].mxu0 %v6013
        %v6707 = vpop.f32.mrb[0].mxu0
        %v6708 = vadd.f32 %v6043, %v6707
        %v6709 = vpop.f32.mrb[0].mxu0
        %v6710 = vpop.f32.mrb[0].mxu0
        %v6711 = vadd.f32 %v6043, %v6710
        %v6712 = vpop.f32.mrb[0].mxu0
        %6713 = vmatprep.mubr.bf16.mxu0 %v6017
        %6714 = vmatmul.mubr.bf16.gmra.mrb[0].mxu0 %v6016
        %v6715 = vpop.f32.mrb[0].mxu0
        %v6716 = vadd.f32 %v6043, %v6715
        %v6717 = vpop.f32.mrb[0].mxu0
        %v6718 = vpop.f32.mrb[0].mxu0
        %v6719 = vadd.f32 %v6043, %v6718
        %v6720 = vpop.f32.mrb[0].mxu0
        %6721 = vmatprep.mubr.bf16.mxu0 %v6020
        %6722 = vmatmul.mubr.bf16.gmra.mrb[0].mxu0 %v6019
        %v6723 = vpop.f32.mrb[0].mxu0
        %v6724 = vadd.f32 %v6043, %v6723
        %v6725 = vpop.f32.mrb[0].mxu0
        %v6726 = vpop.f32.mrb[0].mxu0
        %v6727 = vadd.f32 %v6043, %v6726
        %v6728 = vpop.f32.mrb[0].mxu0
        %6729 = vmatprep.mubr.bf16.mxu0 %v6023
        %6730 = vmatmul.mubr.bf16.gmra.mrb[0].mxu0 %v6022
        %v6731 = vpop.f32.mrb[0].mxu0
        %v6732 = vadd.f32 %v6043, %v6731
        %v6733 = vpop.f32.mrb[0].mxu0
        %v6734 = vpop.f32.mrb[0].mxu0
        %v6735 = vadd.f32 %v6043, %v6734
        %v6736 = vpop.f32.mrb[0].mxu0
        %6737 = vmatprep.mubr.bf16.mxu0 %v6026
        %6738 = vmatmul.mubr.bf16.gmra.mrb[0].mxu0 %v6025
        %v6739 = vpop.f32.mrb[0].mxu0
        %v6740 = vadd.f32 %v6043, %v6739
        %v6741 = vpop.f32.mrb[0].mxu0
        %v6742 = vpop.f32.mrb[0].mxu0
        %v6743 = vadd.f32 %v6043, %v6742
        %v6744 = vpop.f32.mrb[0].mxu0
        %6745 = vmatprep.mubr.bf16.mxu0 %v6029
        %6746 = vmatmul.mubr.bf16.gmra.mrb[0].mxu0 %v6028
        %v6747 = vpop.f32.mrb[0].mxu0
        %v6748 = vadd.f32 %v6043, %v6747
        %v6749 = vpop.f32.mrb[0].mxu0
        %v6750 = vpop.f32.mrb[0].mxu0
        %v6751 = vadd.f32 %v6043, %v6750
        %v6752 = vpop.f32.mrb[0].mxu0
        %6753 = vdwg.mxu0
        %6754 = vmatprep.subr.bf16.mxu0 0
        %6755 = vmatpush1.bf16.msra.mxu0 %v6337
        %6756 = vmatprep.subr.bf16.mxu0 0
        %6757 = vmatpush1.bf16.msra.mxu0 %v6340
        %6758 = vmatprep.subr.bf16.mxu0 0
        %6759 = vmatpush1.bf16.msra.mxu0 %v6343
        %6760 = vmatprep.subr.bf16.mxu0 0
        %6761 = vmatpush1.bf16.msra.mxu0 %v6346
        %6762 = vmatprep.subr.bf16.mxu0 0
        %6763 = vmatpush1.bf16.msra.mxu0 %v6349
        %6764 = vmatprep.subr.bf16.mxu0 0
        %6765 = vmatpush1.bf16.msra.mxu0 %v6352
        %6766 = vmatprep.subr.bf16.mxu0 0
        %6767 = vmatpush1.bf16.msra.mxu0 %v6355
        %6768 = vmatprep.subr.bf16.mxu0 0
        %6769 = vmatpush1.bf16.msra.mxu0 %v6358
        %6770 = vmatprep.subr.bf16.mxu0 0
        %6771 = vmatpush1.bf16.msra.mxu0 0
        %6772 = vmatprep.subr.bf16.mxu0 0
        %6773 = vmatpush1.bf16.msra.mxu0 0
        %6774 = vmatprep.subr.bf16.mxu0 0
        %6775 = vmatpush1.bf16.msra.mxu0 0
        %6776 = vmatprep.subr.bf16.mxu0 0
        %6777 = vmatpush1.bf16.msra.mxu0 0
        %6778 = vmatprep.subr.bf16.mxu0 0
        %6779 = vmatpush1.bf16.msra.mxu0 0
        %6780 = vmatprep.subr.bf16.mxu0 0
        %6781 = vmatpush1.bf16.msra.mxu0 0
        %6782 = vmatprep.subr.bf16.mxu0 0
        %6783 = vmatpush1.bf16.msra.mxu0 0
        %6784 = vmatprep.subr.bf16.mxu0 0
        %6785 = vmatpush1.bf16.msra.mxu0 0
        %6786 = vmatprep.mubr.bf16.mxu0 0
        %6787 = vmatmul.mubr.bf16.gmra.mrb[0].mxu0 %v6009
        %v6788 = vpop.f32.mrb[0].mxu0
        %v6789 = vadd.f32 %v6692, %v6788
        %v6790 = vpop.f32.mrb[0].mxu0
        %v6791 = vpop.f32.mrb[0].mxu0
        %v6792 = vadd.f32 %v6695, %v6791
        %v6793 = vpop.f32.mrb[0].mxu0
        %6794 = vmatprep.mubr.bf16.mxu0 0
        %6795 = vmatmul.mubr.bf16.gmra.mrb[0].mxu0 %v6012
        %v6796 = vpop.f32.mrb[0].mxu0
        %v6797 = vadd.f32 %v6700, %v6796
        %v6798 = vpop.f32.mrb[0].mxu0
        %v6799 = vpop.f32.mrb[0].mxu0
        %v6800 = vadd.f32 %v6703, %v6799
        %v6801 = vpop.f32.mrb[0].mxu0
        %6802 = vmatprep.mubr.bf16.mxu0 0
        %6803 = vmatmul.mubr.bf16.gmra.mrb[0].mxu0 %v6015
        %v6804 = vpop.f32.mrb[0].mxu0
        %v6805 = vadd.f32 %v6708, %v6804
        %v6806 = vpop.f32.mrb[0].mxu0
        %v6807 = vpop.f32.mrb[0].mxu0
        %v6808 = vadd.f32 %v6711, %v6807
        %v6809 = vpop.f32.mrb[0].mxu0
        %6810 = vmatprep.mubr.bf16.mxu0 0
        %6811 = vmatmul.mubr.bf16.gmra.mrb[0].mxu0 %v6018
        %v6812 = vpop.f32.mrb[0].mxu0
        %v6813 = vadd.f32 %v6716, %v6812
        %v6814 = vpop.f32.mrb[0].mxu0
        %v6815 = vpop.f32.mrb[0].mxu0
        %v6816 = vadd.f32 %v6719, %v6815
        %v6817 = vpop.f32.mrb[0].mxu0
        %6818 = vmatprep.mubr.bf16.mxu0 0
        %6819 = vmatmul.mubr.bf16.gmra.mrb[0].mxu0 %v6021
        %v6820 = vpop.f32.mrb[0].mxu0
        %v6821 = vadd.f32 %v6724, %v6820
        %v6822 = vpop.f32.mrb[0].mxu0
        %v6823 = vpop.f32.mrb[0].mxu0
        %v6824 = vadd.f32 %v6727, %v6823
        %v6825 = vpop.f32.mrb[0].mxu0
        %6826 = vmatprep.mubr.bf16.mxu0 0
        %6827 = vmatmul.mubr.bf16.gmra.mrb[0].mxu0 %v6024
        %v6828 = vpop.f32.mrb[0].mxu0
        %v6829 = vadd.f32 %v6732, %v6828
        %v6830 = vpop.f32.mrb[0].mxu0
        %v6831 = vpop.f32.mrb[0].mxu0
        %v6832 = vadd.f32 %v6735, %v6831
        %v6833 = vpop.f32.mrb[0].mxu0
        %6834 = vmatprep.mubr.bf16.mxu0 0
        %6835 = vmatmul.mubr.bf16.gmra.mrb[0].mxu0 %v6027
        %v6836 = vpop.f32.mrb[0].mxu0
        %v6837 = vadd.f32 %v6740, %v6836
        %v6838 = vpop.f32.mrb[0].mxu0
        %v6839 = vpop.f32.mrb[0].mxu0
        %v6840 = vadd.f32 %v6743, %v6839
        %v6841 = vpop.f32.mrb[0].mxu0
        %6842 = vmatprep.mubr.bf16.mxu0 0
        %6843 = vmatmul.mubr.bf16.gmra.mrb[0].mxu0 %v6030
        %v6844 = vpop.f32.mrb[0].mxu0
        %v6845 = vadd.f32 %v6748, %v6844
        %v6846 = vpop.f32.mrb[0].mxu0
        %v6847 = vpop.f32.mrb[0].mxu0
        %v6848 = vadd.f32 %v6751, %v6847
        %v6849 = vpop.f32.mrb[0].mxu0
        %6850 = vdwg.mxu0
        %6851 = vst [vmem:[%s205] sm:$0xff] %v6579
        %6852 = vst [vmem:[%s205 + $0x8] sm:$0xff] %v6581
        %6853 = vst [vmem:[%s205 + $0x10] sm:$0xff] %v6789
        %6854 = vst [vmem:[%s205 + $0x18] sm:$0xff] %v6583
        %6855 = vst [vmem:[%s205 + $0x20] sm:$0xff] %v6585
        %6856 = vst [vmem:[%s205 + $0x28] sm:$0xff] %v6792
        %6857 = vst [vmem:[%s205 + $0x30] sm:$0xff] %v6589
        %6858 = vst [vmem:[%s205 + $0x38] sm:$0xff] %v6591
        %6859 = vst [vmem:[%s205 + $0x40] sm:$0xff] %v6797
        %6860 = vst [vmem:[%s205 + $0x48] sm:$0xff] %v6593
        %6861 = vst [vmem:[%s205 + $0x50] sm:$0xff] %v6595
        %6862 = vst [vmem:[%s205 + $0x58] sm:$0xff] %v6800
        %6863 = vst [vmem:[%s205 + $0x60] sm:$0xff] %v6599
        %6864 = vst [vmem:[%s205 + $0x68] sm:$0xff] %v6601
        %6865 = vst [vmem:[%s205 + $0x70] sm:$0xff] %v6805
        %6866 = vst [vmem:[%s205 + $0x78] sm:$0xff] %v6603
        %6867 = vst [vmem:[%s205 + $0x80] sm:$0xff] %v6605
        %6868 = vst [vmem:[%s205 + $0x88] sm:$0xff] %v6808
        %6869 = vst [vmem:[%s205 + $0x90] sm:$0xff] %v6609
        %6870 = vst [vmem:[%s205 + $0x98] sm:$0xff] %v6611
        %6871 = vst [vmem:[%s205 + $0xa0] sm:$0xff] %v6813
        %6872 = vst [vmem:[%s205 + $0xa8] sm:$0xff] %v6613
        %6873 = vst [vmem:[%s205 + $0xb0] sm:$0xff] %v6615
        %6874 = vst [vmem:[%s205 + $0xb8] sm:$0xff] %v6816
        %6875 = vst [vmem:[%s205 + $0xc0] sm:$0xff] %v6619
        %6876 = vst [vmem:[%s205 + $0xc8] sm:$0xff] %v6621
        %6877 = vst [vmem:[%s205 + $0xd0] sm:$0xff] %v6821
        %6878 = vst [vmem:[%s205 + $0xd8] sm:$0xff] %v6623
        %6879 = vst [vmem:[%s205 + $0xe0] sm:$0xff] %v6625
        %6880 = vst [vmem:[%s205 + $0xe8] sm:$0xff] %v6824
        %6881 = vst [vmem:[%s205 + $0xf0] sm:$0xff] %v6629
        %6882 = vst [vmem:[%s205 + $0xf8] sm:$0xff] %v6631
        %6883 = vst [vmem:[%s205 + $0x100] sm:$0xff] %v6829
        %6884 = vst [vmem:[%s205 + $0x108] sm:$0xff] %v6633
        %6885 = vst [vmem:[%s205 + $0x110] sm:$0xff] %v6635
        %6886 = vst [vmem:[%s205 + $0x118] sm:$0xff] %v6832
        %6887 = vst [vmem:[%s205 + $0x120] sm:$0xff] %v6639
        %6888 = vst [vmem:[%s205 + $0x128] sm:$0xff] %v6641
        %6889 = vst [vmem:[%s205 + $0x130] sm:$0xff] %v6837
        %6890 = vst [vmem:[%s205 + $0x138] sm:$0xff] %v6643
        %6891 = vst [vmem:[%s205 + $0x140] sm:$0xff] %v6645
        %6892 = vst [vmem:[%s205 + $0x148] sm:$0xff] %v6840
        %6893 = vst [vmem:[%s205 + $0x150] sm:$0xff] %v6649
        %6894 = vst [vmem:[%s205 + $0x158] sm:$0xff] %v6651
        %6895 = vst [vmem:[%s205 + $0x160] sm:$0xff] %v6845
        %6896 = vst [vmem:[%s205 + $0x168] sm:$0xff] %v6653
        %6897 = vst [vmem:[%s205 + $0x170] sm:$0xff] %v6655
        %6898 = vst [vmem:[%s205 + $0x178] sm:$0xff] %v6848
        %s6899 = sand.u32 %s116, 1
        %s6900 = scalar_lea.sflag [#allocation5], %s6899
        %s6901 = sand.u32 %s116, 1
        %s6902 = smul.addr %s6901, 384
        %s6903 = scalar_lea.vmem [#allocation6], %s6902
        // Predicated region
        $region41: #{multi_head_attention.1} parent=35 // pred_check
          %p6904 = pneg %p126
        $region42: #{multi_head_attention.1} parent=35 // pred_check_branch
          %6906 = sbr.rel (%p6904) target = $region44
        $region43: #{multi_head_attention.1} parent=35 // pred_region
          %s6908 = ssub.s32 6144, 6144
          %6909 = vsyncadd %s6900, %s6908
          %s6910 = smul.addr %s19, 48
          %s6911 = smul.addr %s6910, 128
          %s6912 = scalar_lea.hbm %s4, %s6911
          %s6913 = sshll.u32 %s6903, 4
          %s6914 = int_to_ptr.vmem [resolvable:$true] %s6913
          %6919 = dma.vmem_to_hbm [thread:$0]  %s6914, 6144, %s6912, %s6900, 384, 384, 24
        $region44: #{multi_head_attention.1} parent=35 // pred_fallthru
          _
      $region36: #{multi_head_attention.1} parent=5 // pred_fallthru
        _
      %p6920 = scmp.le.s32.totalorder 2, %s14
      // Predicated region
      $region45: #{multi_head_attention.1} parent=5 // pred_check
        %p6921 = pneg %p6920
      $region46: #{multi_head_attention.1} parent=5 // pred_check_branch
        %6923 = sbr.rel (%p6921) target = $region48
      $region47: #{multi_head_attention.1} parent=5 // pred_region
        %s6924 = ssub.s32 %s14, 2
        // Predicated region
        $region49: #{multi_head_attention.1} parent=47 // pred_check
          %p6925 = pneg %p132
        $region50: #{multi_head_attention.1} parent=47 // pred_check_branch
          %6927 = sbr.rel (%p6925) target = $region52
        $region51: #{multi_head_attention.1} parent=47 // pred_region
          %s6928 = sand.u32 %s117, 1
          %s6929 = scalar_lea.sflag [#allocation5], %s6928
          %s6930 = sand.u32 %s117, 1
          %s6931 = smul.addr %s6930, 384
          %s6932 = scalar_lea.vmem [#allocation6], %s6931
          %6933 = dma.done %s6929, 6144
        $region52: #{multi_head_attention.1} parent=47 // pred_fallthru
          _
      $region48: #{multi_head_attention.1} parent=5 // pred_fallthru
        _
    $region6: #{multi_head_attention.1} parent=1 // loop_footer
      %s18 = sadd.s32 1, %s14
    $region7: #{multi_head_attention.1} parent=1 // loop_footer_branch
      %13 = sbr.rel target = $region3
    $region8: #{multi_head_attention.1} parent=1 // loop_exit
      _
    %6934 = vsyncpa [#allocation4], 1
    %s6935 = scalar_lea.sflag [#allocation4], 1
    %6936 = vsyncpa %s6935, 1
    %6937 = vsyncpa [#allocation5], 1
    %s6938 = scalar_lea.sflag [#allocation5], 1
    %6939 = vsyncpa %s6938, 1

</llo_original>
